<compile_context>
chip_gen: v7x
topology: tpu7x:2x2x1
jax: 0.10.0
libtpu: 0.0.40
codegen_flags: <defaults>
</compile_context>

<pallas_src>
import functools

import jax
import jax.numpy as jnp
from jax import lax
from jax.experimental import pallas as pl
from jax.experimental.pallas import tpu as pltpu

OUT_CHANNELS = 64
C3_CH, C4_CH, C5_CH = 64, 160, 400  # regnet_x_400mf trunk widths
LANE = 128

_PARALLEL = pltpu.CompilerParams(dimension_semantics=("parallel",))


def _round_up(n, m):
    return ((n + m - 1) // m) * m


def _pick_row_tile(rows, target=512):
    """Largest row tile <= target that divides `rows` (fallback: ragged grid)."""
    if rows <= target:
        return rows
    for t in (target, 256, 128, 64, 32, 16, 8):
        if rows % t == 0:
            return t
    return target  # last block ragged; OOB rows are masked on write


# ----------------------------- Pallas kernels ------------------------------ #

def _conv1x1_kernel(x_ref, w_ref, b_ref, o_ref, *, relu):
    # x: (T, K) f32, w: (K, Cout) bf16, b: (1, Cout) f32 -> o: (T, Cout) f32
    # bf16 on the MXU, f32 accumulate + epilogue (v5e has no bf16 VPU).
    y = jnp.dot(x_ref[...].astype(jnp.bfloat16),
                w_ref[...].astype(jnp.bfloat16),
                preferred_element_type=jnp.float32)
    y = y + b_ref[...]
    if relu:
        y = jnp.maximum(y, 0.0)
    o_ref[...] = y.astype(o_ref.dtype)


def _conv1x1_add_kernel(x_ref, w_ref, b_ref, add_ref, o_ref):
    # lateral 1x1 conv fused with the FPN top-down merge add (f32 epilogue).
    y = jnp.dot(x_ref[...].astype(jnp.bfloat16),
                w_ref[...].astype(jnp.bfloat16),
                preferred_element_type=jnp.float32)
    o_ref[...] = (y + b_ref[...] + add_ref[...]).astype(o_ref.dtype)


def _conv3x3_kernel(x_ref, w_ref, b_ref, o_ref):
    # 3x3 conv, stride 1, padding 1 (input pre-padded), as ONE im2col matmul.
    # x: (1, H+2, W+2, C), w: (9*C, Cout) bf16, b: (1, Cout), o: (1, H, W, Cout)
    _, hp2, wp2, c = x_ref.shape
    h, w = hp2 - 2, wp2 - 2
    cout = o_ref.shape[-1]
    taps = []
    for dy in range(3):          # 9 static taps -> lane-axis concat
        for dx in range(3):
            taps.append(x_ref[:, dy:dy + h, dx:dx + w, :])
    patches = jnp.concatenate(taps, axis=-1).reshape(h * w, 9 * c)
    y = jnp.dot(patches.astype(jnp.bfloat16),
                w_ref[...].astype(jnp.bfloat16),
                preferred_element_type=jnp.float32)
    y = y + b_ref[...]
    o_ref[...] = y.reshape(1, h, w, cout).astype(o_ref.dtype)


# ----------------------------- wrappers (glue) ------------------------------ #

def conv1x1(x, w, b, *, relu=False, add=None):
    """Tiled 1x1 conv on NHWC `x`; optional fused residual `add` (NHWC, Cout)."""
    B, H, W, K = x.shape
    Cout = w.shape[1]
    rows = B * H * W
    xf = x.reshape(rows, K)
    b2 = b.reshape(1, Cout)

    tile = _pick_row_tile(rows)
    grid = (pl.cdiv(rows, tile),)
    x_spec = pl.BlockSpec((tile, K), lambda i: (i, 0))
    w_spec = pl.BlockSpec((K, Cout), lambda i: (0, 0))
    b_spec = pl.BlockSpec((1, Cout), lambda i: (0, 0))
    o_spec = pl.BlockSpec((tile, Cout), lambda i: (i, 0))

    if add is None:
        out = pl.pallas_call(
            functools.partial(_conv1x1_kernel, relu=relu),
            out_shape=jax.ShapeDtypeStruct((rows, Cout), x.dtype),
            grid=grid,
            in_specs=[x_spec, w_spec, b_spec],
            out_specs=o_spec,
            compiler_params=_PARALLEL,
        )(xf, w, b2)
    else:
        a_spec = pl.BlockSpec((tile, Cout), lambda i: (i, 0))
        out = pl.pallas_call(
            _conv1x1_add_kernel,
            out_shape=jax.ShapeDtypeStruct((rows, Cout), x.dtype),
            grid=grid,
            in_specs=[x_spec, w_spec, b_spec, a_spec],
            out_specs=o_spec,
            compiler_params=_PARALLEL,
        )(xf, w, b2, add.reshape(rows, Cout))
    return out.reshape(B, H, W, Cout)


def conv3x3(x, w, b):
    """3x3 conv, stride 1, padding 1 on NHWC `x` (PyTorch Conv2d semantics)."""
    B, H, W, C = x.shape
    Cout = w.shape[-1]
    # TODO(synk): the 1-px halo is materialized with jnp.pad (one extra small
    # HBM pass); in-kernel halo / masked-tap handling would remove it.
    xp = jnp.pad(x, ((0, 0), (1, 1), (1, 1), (0, 0)))
    out = pl.pallas_call(
        _conv3x3_kernel,
        out_shape=jax.ShapeDtypeStruct((B, H, W, Cout), x.dtype),
        grid=(B,),
        in_specs=[
            pl.BlockSpec((1, H + 2, W + 2, C), lambda bi: (bi, 0, 0, 0)),
            pl.BlockSpec((9 * C, Cout), lambda bi: (0, 0)),
            pl.BlockSpec((1, Cout), lambda bi: (0, 0)),
        ],
        out_specs=pl.BlockSpec((1, H, W, Cout), lambda bi: (bi, 0, 0, 0)),
        compiler_params=_PARALLEL,
    )(xp, w.reshape(9 * C, Cout), b.reshape(1, Cout))
    return out


def space_to_depth(x, s):
    B, H, W, C = x.shape
    x = x.reshape(B, H // s, s, W // s, s, C)
    x = x.transpose(0, 1, 3, 2, 4, 5)
    return x.reshape(B, H // s, W // s, s * s * C)


def _upsample2x_nearest(x):
    # TODO(synk): F.interpolate(scale_factor=2, mode='nearest'); kept as an XLA
    # repeat (tiny maps) rather than an in-kernel coarse->fine broadcast.
    return jnp.repeat(jnp.repeat(x, 2, axis=1), 2, axis=2)


# --------------------------- weight padding helpers -------------------------- #

def _pad_axis(x, axis, new_size):
    pad = new_size - x.shape[axis]
    if pad == 0:
        return x
    widths = [(0, 0)] * x.ndim
    widths[axis] = (0, pad)
    return jnp.pad(x, widths)


def _pad_dense(w, b, k_pad, cout_pad):
    # (K, Cout) + (Cout,) -> zero-padded bf16 (k_pad, cout_pad) / f32 (cout_pad,)
    return (_pad_axis(_pad_axis(w, 0, k_pad), 1, cout_pad).astype(jnp.bfloat16),
            _pad_axis(b, 0, cout_pad))


def _pad_patch(w, b, s, cin, cin_pad, cout_pad):
    # (s*s*cin, Cout) patch-conv weight; pad per-tap input channels and Cout so
    # rows line up with space_to_depth of the channel-padded activation.
    cout = w.shape[1]
    w = w.reshape(s, s, cin, cout)
    w = _pad_axis(_pad_axis(w, 2, cin_pad), 3, cout_pad)
    return (w.reshape(s * s * cin_pad, cout_pad).astype(jnp.bfloat16),
            _pad_axis(b, 0, cout_pad))


def _pad_conv3x3(w, b, cin_pad, cout_pad):
    # (3, 3, Cin, Cout) -> zero-padded bf16 (3, 3, cin_pad, cout_pad)
    return (_pad_axis(_pad_axis(w, 2, cin_pad), 3, cout_pad).astype(jnp.bfloat16),
            _pad_axis(b, 0, cout_pad))


# ------------------------------- parameters -------------------------------- #

def init_params(key, out_channels=OUT_CHANNELS):
    keys = jax.random.split(key, 16)

    def dense_w(k, cin, cout, scale=0.05):
        return scale * jax.random.normal(k, (cin, cout), jnp.float32)

    p = {}
    # TODO(synk): pretrained RegNet-X-400MF trunk weights are not reproducible
    # in-script; synthetic deterministic backbone stand-in with matching
    # channel widths and total strides (8 / 16 / 32).
    p["bb3_w"] = dense_w(keys[0], 8 * 8 * 3, C3_CH)
    p["bb3_b"] = jnp.zeros((C3_CH,), jnp.float32)
    p["bb4_w"] = dense_w(keys[1], 2 * 2 * C3_CH, C4_CH)
    p["bb4_b"] = jnp.zeros((C4_CH,), jnp.float32)
    p["bb5_w"] = dense_w(keys[2], 2 * 2 * C4_CH, C5_CH)
    p["bb5_b"] = jnp.zeros((C5_CH,), jnp.float32)

    # FPN params: lateral_* are 1x1 convs (Cin -> out_channels),
    # output_* are 3x3 convs (out_channels -> out_channels), as in __init__.
    for i, (name, cin) in enumerate((("c3", C3_CH), ("c4", C4_CH), ("c5", C5_CH))):
        p[f"lat_{name}_w"] = dense_w(keys[3 + 2 * i], cin, out_channels)
        p[f"lat_{name}_b"] = 0.01 * jnp.ones((out_channels,), jnp.float32)
        p[f"out_{name}_w"] = 0.05 * jax.random.normal(
            keys[4 + 2 * i], (3, 3, out_channels, out_channels), jnp.float32)
        p[f"out_{name}_b"] = 0.01 * jnp.ones((out_channels,), jnp.float32)
    return p


# -------------------------------- forward ---------------------------------- #

def detector_backbone_with_fpn(images_nchw, params, out_channels=OUT_CHANNELS):
    p = params
    x = jnp.transpose(images_nchw, (0, 2, 3, 1))  # NCHW -> NHWC
    x = _pad_axis(x, 3, 4)                        # RGB 3 -> 4 so bb3 K = 256

    c3p = _round_up(C3_CH, LANE)          # 128
    c4p = _round_up(C4_CH, LANE)          # 256
    c5p = _round_up(C5_CH, LANE)          # 512
    outp = _round_up(out_channels, LANE)  # 128

    # Zero-pad + bf16-cast weights once so every kernel sees lane-dense (x128)
    # K and Cout and half-width weight DMAs; padded channels stay exactly zero.
    bb3_w, bb3_b = _pad_patch(p["bb3_w"], p["bb3_b"], 8, 3, 4, c3p)
    bb4_w, bb4_b = _pad_patch(p["bb4_w"], p["bb4_b"], 2, C3_CH, c3p, c4p)
    bb5_w, bb5_b = _pad_patch(p["bb5_w"], p["bb5_b"], 2, C4_CH, c4p, c5p)

    lat5_w, lat5_b = _pad_dense(p["lat_c5_w"], p["lat_c5_b"], c5p, outp)
    lat4_w, lat4_b = _pad_dense(p["lat_c4_w"], p["lat_c4_b"], c4p, outp)
    lat3_w, lat3_b = _pad_dense(p["lat_c3_w"], p["lat_c3_b"], c3p, outp)
    out5_w, out5_b = _pad_conv3x3(p["out_c5_w"], p["out_c5_b"], outp, outp)
    out4_w, out4_b = _pad_conv3x3(p["out_c4_w"], p["out_c4_b"], outp, outp)
    out3_w, out3_b = _pad_conv3x3(p["out_c3_w"], p["out_c3_b"], outp, outp)

    # backbone (synthetic stand-in): c3 @ stride 8, c4 @ 16, c5 @ 32
    c3 = conv1x1(space_to_depth(x, 8), bb3_w, bb3_b, relu=True)
    c4 = conv1x1(space_to_depth(c3, 2), bb4_w, bb4_b, relu=True)
    c5 = conv1x1(space_to_depth(c4, 2), bb5_w, bb5_b, relu=True)

    # FPN top-down path (mirrors the PyTorch forward exactly)
    p5_lateral = conv1x1(c5, lat5_w, lat5_b)
    p5 = conv3x3(p5_lateral, out5_w, out5_b)
    p5_upsampled = _upsample2x_nearest(p5_lateral)

    p4_merged = conv1x1(c4, lat4_w, lat4_b, add=p5_upsampled)
    p4 = conv3x3(p4_merged, out4_w, out4_b)
    p4_upsampled = _upsample2x_nearest(p4_merged)

    p3_merged = conv1x1(c3, lat3_w, lat3_b, add=p4_upsampled)
    p3 = conv3x3(p3_merged, out3_w, out3_b)

    # strip the zero-padded channels, back to NCHW
    to_nchw = lambda t: jnp.transpose(t[..., :out_channels], (0, 3, 1, 2))
    return {"p3": to_nchw(p3), "p4": to_nchw(p4), "p5": to_nchw(p5)}


# -------------------------- pure-JAX reference ------------------------------ #

def _ref_forward(images_nchw, p):
    x = jnp.transpose(images_nchw, (0, 2, 3, 1))
    dn = ("NHWC", "HWIO", "NHWC")

    def c1(x, w, b, add=None):
        y = lax.conv_general_dilated(x, w.reshape(1, 1, *w.shape), (1, 1),
                                     "VALID", dimension_numbers=dn) + b
        return y if add is None else y + add

    def c3x3(x, w, b):
        return lax.conv_general_dilated(x, w, (1, 1), "SAME",
                                        dimension_numbers=dn) + b

    def bb(x, w, b, s):
        return jnp.maximum(space_to_depth(x, s) @ w + b, 0.0)

    c3 = bb(x, p["bb3_w"], p["bb3_b"], 8)
    c4 = bb(c3, p["bb4_w"], p["bb4_b"], 2)
    c5 = bb(c4, p["bb5_w"], p["bb5_b"], 2)

    p5_lat = c1(c5, p["lat_c5_w"], p["lat_c5_b"])
    p5 = c3x3(p5_lat, p["out_c5_w"], p["out_c5_b"])
    p4_m = c1(c4, p["lat_c4_w"], p["lat_c4_b"], add=_upsample2x_nearest(p5_lat))
    p4 = c3x3(p4_m, p["out_c4_w"], p["out_c4_b"])
    p3_m = c1(c3, p["lat_c3_w"], p["lat_c3_b"], add=_upsample2x_nearest(p4_m))
    p3 = c3x3(p3_m, p["out_c3_w"], p["out_c3_b"])

    to_nchw = lambda t: jnp.transpose(t, (0, 3, 1, 2))
    return {"p3": to_nchw(p3), "p4": to_nchw(p4), "p5": to_nchw(p5)}


# ----------------------------------- main ----------------------------------- #

if __name__ == "__main__":
    key = jax.random.PRNGKey(0)
    k_img, k_par = jax.random.split(key)

    # Small input consistent with (B, 3, H, W); H, W multiples of 32.
    images = jax.random.normal(k_img, (2, 3, 64, 64), jnp.float32)
    params = init_params(k_par)

    fwd = jax.jit(detector_backbone_with_fpn)
    feats = fwd(images, params)
    feats = jax.tree_util.tree_map(jax.block_until_ready, feats)

    # shape checks: p3 = (B, C, H/8, W/8), p4 = H/16, p5 = H/32
    assert feats["p3"].shape == (2, OUT_CHANNELS, 8, 8)
    assert feats["p4"].shape == (2, OUT_CHANNELS, 4, 4)
    assert feats["p5"].shape == (2, OUT_CHANNELS, 2, 2)

    # numerical check vs. a pure-JAX (lax.conv, f32) reference; Pallas path
    # uses bf16 MXU inputs with f32 accumulation.
    ref = jax.jit(_ref_forward)(images, params)
    for lvl in ("p3", "p4", "p5"):
        assert jnp.allclose(feats[lvl], ref[lvl], atol=3e-2, rtol=3e-2), lvl

    print("KERNEL_OK")
</pallas_src>

<mosaic_0001>
module attributes {stable_mosaic.version = 11 : i64} {
  func.func @_conv1x1_kernel(%arg0: i32, %arg1: memref<128x256xf32, #tpu.memory_space<vmem>>, %arg2: memref<256x128xbf16, #tpu.memory_space<vmem>>, %arg3: memref<1x128xf32, #tpu.memory_space<vmem>>, %arg4: memref<128x128xf32, #tpu.memory_space<vmem>>) attributes {dimension_semantics = [#tpu.dimension_semantics<parallel>], iteration_bounds = array<i64: 1>, scalar_prefetch = 0 : i64, scratch_operands = 0 : i64, tpu.core_type = #tpu.core_type<tc>, window_params = [{transform_indices = @transform_0, window_bounds = array<i64: 128, 256>}, {pipeline_mode = #tpu.pipeline_mode<synchronous>, transform_indices = @transform_1, window_bounds = array<i64: 256, 128>}, {pipeline_mode = #tpu.pipeline_mode<synchronous>, transform_indices = @transform_2, window_bounds = array<i64: 1, 128>}, {transform_indices = @transform_3, window_bounds = array<i64: 128, 128>}]} {
    %c0 = arith.constant 0 : index
    %c0_0 = arith.constant 0 : index
    %0 = vector.load %arg1[%c0, %c0_0] : memref<128x256xf32, #tpu.memory_space<vmem>>, vector<128x256xf32>
    %1 = arith.truncf %0 : vector<128x256xf32> to vector<128x256xbf16>
    %c0_1 = arith.constant 0 : index
    %c0_2 = arith.constant 0 : index
    %2 = vector.load %arg2[%c0_1, %c0_2] : memref<256x128xbf16, #tpu.memory_space<vmem>>, vector<256x128xbf16>
    %cst = arith.constant dense<0.000000e+00> : vector<128x128xf32>
    %3 = tpu.matmul %1, %2, %cst {dimension_numbers = #tpu.dot_dimension_numbers<[1], [0], [0], [1], [0, 0, 1, 1], [], []>} : vector<128x256xbf16>, vector<256x128xbf16>, vector<128x128xf32> -> vector<128x128xf32>
    %c0_3 = arith.constant 0 : index
    %c0_4 = arith.constant 0 : index
    %4 = vector.load %arg3[%c0_3, %c0_4] : memref<1x128xf32, #tpu.memory_space<vmem>>, vector<1x128xf32>
    %5 = vector.broadcast %4 : vector<1x128xf32> to vector<128x128xf32>
    %6 = arith.addf %3, %5 : vector<128x128xf32>
    %cst_5 = arith.constant 0.000000e+00 : f32
    %7 = vector.broadcast %cst_5 : f32 to vector<128x128xf32>
    %8 = arith.maximumf %6, %7 : vector<128x128xf32>
    %c0_6 = arith.constant 0 : index
    %c0_7 = arith.constant 0 : index
    %9 = vector.load %arg4[%c0_6, %c0_7] : memref<128x128xf32, #tpu.memory_space<vmem>>, vector<128x128xf32>
    tpu.vector_store %arg4[%c0_6, %c0_7], %8 {strides = array<i32>} : memref<128x128xf32, #tpu.memory_space<vmem>>, vector<128x128xf32>,
    return
  }
  func.func @transform_0(%arg0: i32) -> (i32, i32) {
    %c0_i32 = arith.constant 0 : i32
    %c0_i32_0 = arith.constant 0 : i32
    return %arg0, %c0_i32 : i32, i32
  }
  func.func @transform_1(%arg0: i32) -> (i32, i32) {
    %c0_i32 = arith.constant 0 : i32
    %c0_i32_0 = arith.constant 0 : i32
    %c0_i32_1 = arith.constant 0 : i32
    return %c0_i32, %c0_i32_0 : i32, i32
  }
  func.func @transform_2(%arg0: i32) -> (i32, i32) {
    %c0_i32 = arith.constant 0 : i32
    %c0_i32_0 = arith.constant 0 : i32
    %c0_i32_1 = arith.constant 0 : i32
    return %c0_i32, %c0_i32_0 : i32, i32
  }
  func.func @transform_3(%arg0: i32) -> (i32, i32) {
    %c0_i32 = arith.constant 0 : i32
    %c0_i32_0 = arith.constant 0 : i32
    return %arg0, %c0_i32 : i32, i32
  }
}

module attributes {stable_mosaic.version = 11 : i64} {
  func.func @_conv1x1_kernel(%arg0: i32, %arg1: memref<32x512xf32, #tpu.memory_space<vmem>>, %arg2: memref<512x256xbf16, #tpu.memory_space<vmem>>, %arg3: memref<1x256xf32, #tpu.memory_space<vmem>>, %arg4: memref<32x256xf32, #tpu.memory_space<vmem>>) attributes {dimension_semantics = [#tpu.dimension_semantics<parallel>], iteration_bounds = array<i64: 1>, scalar_prefetch = 0 : i64, scratch_operands = 0 : i64, tpu.core_type = #tpu.core_type<tc>, window_params = [{transform_indices = @transform_0, window_bounds = array<i64: 32, 512>}, {pipeline_mode = #tpu.pipeline_mode<synchronous>, transform_indices = @transform_1, window_bounds = array<i64: 512, 256>}, {pipeline_mode = #tpu.pipeline_mode<synchronous>, transform_indices = @transform_2, window_bounds = array<i64: 1, 256>}, {transform_indices = @transform_3, window_bounds = array<i64: 32, 256>}]} {
    %c0 = arith.constant 0 : index
    %c0_0 = arith.constant 0 : index
    %0 = vector.load %arg1[%c0, %c0_0] : memref<32x512xf32, #tpu.memory_space<vmem>>, vector<32x512xf32>
    %1 = arith.truncf %0 : vector<32x512xf32> to vector<32x512xbf16>
    %c0_1 = arith.constant 0 : index
    %c0_2 = arith.constant 0 : index
    %2 = vector.load %arg2[%c0_1, %c0_2] : memref<512x256xbf16, #tpu.memory_space<vmem>>, vector<512x256xbf16>
    %cst = arith.constant dense<0.000000e+00> : vector<32x256xf32>
    %3 = tpu.matmul %1, %2, %cst {dimension_numbers = #tpu.dot_dimension_numbers<[1], [0], [0], [1], [0, 0, 1, 1], [], []>} : vector<32x512xbf16>, vector<512x256xbf16>, vector<32x256xf32> -> vector<32x256xf32>
    %c0_3 = arith.constant 0 : index
    %c0_4 = arith.constant 0 : index
    %4 = vector.load %arg3[%c0_3, %c0_4] : memref<1x256xf32, #tpu.memory_space<vmem>>, vector<1x256xf32>
    %5 = vector.broadcast %4 : vector<1x256xf32> to vector<32x256xf32>
    %6 = arith.addf %3, %5 : vector<32x256xf32>
    %cst_5 = arith.constant 0.000000e+00 : f32
    %7 = vector.broadcast %cst_5 : f32 to vector<32x256xf32>
    %8 = arith.maximumf %6, %7 : vector<32x256xf32>
    %c0_6 = arith.constant 0 : index
    %c0_7 = arith.constant 0 : index
    %9 = vector.load %arg4[%c0_6, %c0_7] : memref<32x256xf32, #tpu.memory_space<vmem>>, vector<32x256xf32>
    tpu.vector_store %arg4[%c0_6, %c0_7], %8 {strides = array<i32>} : memref<32x256xf32, #tpu.memory_space<vmem>>, vector<32x256xf32>,
    return
  }
  func.func @transform_0(%arg0: i32) -> (i32, i32) {
    %c0_i32 = arith.constant 0 : i32
    %c0_i32_0 = arith.constant 0 : i32
    return %arg0, %c0_i32 : i32, i32
  }
  func.func @transform_1(%arg0: i32) -> (i32, i32) {
    %c0_i32 = arith.constant 0 : i32
    %c0_i32_0 = arith.constant 0 : i32
    %c0_i32_1 = arith.constant 0 : i32
    return %c0_i32, %c0_i32_0 : i32, i32
  }
  func.func @transform_2(%arg0: i32) -> (i32, i32) {
    %c0_i32 = arith.constant 0 : i32
    %c0_i32_0 = arith.constant 0 : i32
    %c0_i32_1 = arith.constant 0 : i32
    return %c0_i32, %c0_i32_0 : i32, i32
  }
  func.func @transform_3(%arg0: i32) -> (i32, i32) {
    %c0_i32 = arith.constant 0 : i32
    %c0_i32_0 = arith.constant 0 : i32
    return %arg0, %c0_i32 : i32, i32
  }
}

module attributes {stable_mosaic.version = 11 : i64} {
  func.func @_conv1x1_kernel(%arg0: i32, %arg1: memref<8x1024xf32, #tpu.memory_space<vmem>>, %arg2: memref<1024x512xbf16, #tpu.memory_space<vmem>>, %arg3: memref<1x512xf32, #tpu.memory_space<vmem>>, %arg4: memref<8x512xf32, #tpu.memory_space<vmem>>) attributes {dimension_semantics = [#tpu.dimension_semantics<parallel>], iteration_bounds = array<i64: 1>, scalar_prefetch = 0 : i64, scratch_operands = 0 : i64, tpu.core_type = #tpu.core_type<tc>, window_params = [{transform_indices = @transform_0, window_bounds = array<i64: 8, 1024>}, {pipeline_mode = #tpu.pipeline_mode<synchronous>, transform_indices = @transform_1, window_bounds = array<i64: 1024, 512>}, {pipeline_mode = #tpu.pipeline_mode<synchronous>, transform_indices = @transform_2, window_bounds = array<i64: 1, 512>}, {transform_indices = @transform_3, window_bounds = array<i64: 8, 512>}]} {
    %c0 = arith.constant 0 : index
    %c0_0 = arith.constant 0 : index
    %0 = vector.load %arg1[%c0, %c0_0] : memref<8x1024xf32, #tpu.memory_space<vmem>>, vector<8x1024xf32>
    %1 = arith.truncf %0 : vector<8x1024xf32> to vector<8x1024xbf16>
    %c0_1 = arith.constant 0 : index
    %c0_2 = arith.constant 0 : index
    %2 = vector.load %arg2[%c0_1, %c0_2] : memref<1024x512xbf16, #tpu.memory_space<vmem>>, vector<1024x512xbf16>
    %cst = arith.constant dense<0.000000e+00> : vector<8x512xf32>
    %3 = tpu.matmul %1, %2, %cst {dimension_numbers = #tpu.dot_dimension_numbers<[1], [0], [0], [1], [0, 0, 1, 1], [], []>} : vector<8x1024xbf16>, vector<1024x512xbf16>, vector<8x512xf32> -> vector<8x512xf32>
    %c0_3 = arith.constant 0 : index
    %c0_4 = arith.constant 0 : index
    %4 = vector.load %arg3[%c0_3, %c0_4] : memref<1x512xf32, #tpu.memory_space<vmem>>, vector<1x512xf32>
    %5 = vector.broadcast %4 : vector<1x512xf32> to vector<8x512xf32>
    %6 = arith.addf %3, %5 : vector<8x512xf32>
    %cst_5 = arith.constant 0.000000e+00 : f32
    %7 = vector.broadcast %cst_5 : f32 to vector<8x512xf32>
    %8 = arith.maximumf %6, %7 : vector<8x512xf32>
    %c0_6 = arith.constant 0 : index
    %c0_7 = arith.constant 0 : index
    %9 = vector.load %arg4[%c0_6, %c0_7] : memref<8x512xf32, #tpu.memory_space<vmem>>, vector<8x512xf32>
    tpu.vector_store %arg4[%c0_6, %c0_7], %8 {strides = array<i32>} : memref<8x512xf32, #tpu.memory_space<vmem>>, vector<8x512xf32>,
    return
  }
  func.func @transform_0(%arg0: i32) -> (i32, i32) {
    %c0_i32 = arith.constant 0 : i32
    %c0_i32_0 = arith.constant 0 : i32
    return %arg0, %c0_i32 : i32, i32
  }
  func.func @transform_1(%arg0: i32) -> (i32, i32) {
    %c0_i32 = arith.constant 0 : i32
    %c0_i32_0 = arith.constant 0 : i32
    %c0_i32_1 = arith.constant 0 : i32
    return %c0_i32, %c0_i32_0 : i32, i32
  }
  func.func @transform_2(%arg0: i32) -> (i32, i32) {
    %c0_i32 = arith.constant 0 : i32
    %c0_i32_0 = arith.constant 0 : i32
    %c0_i32_1 = arith.constant 0 : i32
    return %c0_i32, %c0_i32_0 : i32, i32
  }
  func.func @transform_3(%arg0: i32) -> (i32, i32) {
    %c0_i32 = arith.constant 0 : i32
    %c0_i32_0 = arith.constant 0 : i32
    return %arg0, %c0_i32 : i32, i32
  }
}

module attributes {stable_mosaic.version = 11 : i64} {
  func.func @_conv1x1_kernel(%arg0: i32, %arg1: memref<8x512xf32, #tpu.memory_space<vmem>>, %arg2: memref<512x128xbf16, #tpu.memory_space<vmem>>, %arg3: memref<1x128xf32, #tpu.memory_space<vmem>>, %arg4: memref<8x128xf32, #tpu.memory_space<vmem>>) attributes {dimension_semantics = [#tpu.dimension_semantics<parallel>], iteration_bounds = array<i64: 1>, scalar_prefetch = 0 : i64, scratch_operands = 0 : i64, tpu.core_type = #tpu.core_type<tc>, window_params = [{transform_indices = @transform_0, window_bounds = array<i64: 8, 512>}, {pipeline_mode = #tpu.pipeline_mode<synchronous>, transform_indices = @transform_1, window_bounds = array<i64: 512, 128>}, {pipeline_mode = #tpu.pipeline_mode<synchronous>, transform_indices = @transform_2, window_bounds = array<i64: 1, 128>}, {transform_indices = @transform_3, window_bounds = array<i64: 8, 128>}]} {
    %c0 = arith.constant 0 : index
    %c0_0 = arith.constant 0 : index
    %0 = vector.load %arg1[%c0, %c0_0] : memref<8x512xf32, #tpu.memory_space<vmem>>, vector<8x512xf32>
    %1 = arith.truncf %0 : vector<8x512xf32> to vector<8x512xbf16>
    %c0_1 = arith.constant 0 : index
    %c0_2 = arith.constant 0 : index
    %2 = vector.load %arg2[%c0_1, %c0_2] : memref<512x128xbf16, #tpu.memory_space<vmem>>, vector<512x128xbf16>
    %cst = arith.constant dense<0.000000e+00> : vector<8x128xf32>
    %3 = tpu.matmul %1, %2, %cst {dimension_numbers = #tpu.dot_dimension_numbers<[1], [0], [0], [1], [0, 0, 1, 1], [], []>} : vector<8x512xbf16>, vector<512x128xbf16>, vector<8x128xf32> -> vector<8x128xf32>
    %c0_3 = arith.constant 0 : index
    %c0_4 = arith.constant 0 : index
    %4 = vector.load %arg3[%c0_3, %c0_4] : memref<1x128xf32, #tpu.memory_space<vmem>>, vector<1x128xf32>
    %5 = vector.broadcast %4 : vector<1x128xf32> to vector<8x128xf32>
    %6 = arith.addf %3, %5 : vector<8x128xf32>
    %c0_5 = arith.constant 0 : index
    %c0_6 = arith.constant 0 : index
    %7 = vector.load %arg4[%c0_5, %c0_6] : memref<8x128xf32, #tpu.memory_space<vmem>>, vector<8x128xf32>
    tpu.vector_store %arg4[%c0_5, %c0_6], %6 {strides = array<i32>} : memref<8x128xf32, #tpu.memory_space<vmem>>, vector<8x128xf32>,
    return
  }
  func.func @transform_0(%arg0: i32) -> (i32, i32) {
    %c0_i32 = arith.constant 0 : i32
    %c0_i32_0 = arith.constant 0 : i32
    return %arg0, %c0_i32 : i32, i32
  }
  func.func @transform_1(%arg0: i32) -> (i32, i32) {
    %c0_i32 = arith.constant 0 : i32
    %c0_i32_0 = arith.constant 0 : i32
    %c0_i32_1 = arith.constant 0 : i32
    return %c0_i32, %c0_i32_0 : i32, i32
  }
  func.func @transform_2(%arg0: i32) -> (i32, i32) {
    %c0_i32 = arith.constant 0 : i32
    %c0_i32_0 = arith.constant 0 : i32
    %c0_i32_1 = arith.constant 0 : i32
    return %c0_i32, %c0_i32_0 : i32, i32
  }
  func.func @transform_3(%arg0: i32) -> (i32, i32) {
    %c0_i32 = arith.constant 0 : i32
    %c0_i32_0 = arith.constant 0 : i32
    return %arg0, %c0_i32 : i32, i32
  }
}

module attributes {stable_mosaic.version = 11 : i64} {
  func.func @_conv1x1_add_kernel(%arg0: i32, %arg1: memref<32x256xf32, #tpu.memory_space<vmem>>, %arg2: memref<256x128xbf16, #tpu.memory_space<vmem>>, %arg3: memref<1x128xf32, #tpu.memory_space<vmem>>, %arg4: memref<32x128xf32, #tpu.memory_space<vmem>>, %arg5: memref<32x128xf32, #tpu.memory_space<vmem>>) attributes {dimension_semantics = [#tpu.dimension_semantics<parallel>], iteration_bounds = array<i64: 1>, scalar_prefetch = 0 : i64, scratch_operands = 0 : i64, tpu.core_type = #tpu.core_type<tc>, window_params = [{transform_indices = @transform_0, window_bounds = array<i64: 32, 256>}, {pipeline_mode = #tpu.pipeline_mode<synchronous>, transform_indices = @transform_1, window_bounds = array<i64: 256, 128>}, {pipeline_mode = #tpu.pipeline_mode<synchronous>, transform_indices = @transform_2, window_bounds = array<i64: 1, 128>}, {transform_indices = @transform_3, window_bounds = array<i64: 32, 128>}, {transform_indices = @transform_4, window_bounds = array<i64: 32, 128>}]} {
    %c0 = arith.constant 0 : index
    %c0_0 = arith.constant 0 : index
    %0 = vector.load %arg1[%c0, %c0_0] : memref<32x256xf32, #tpu.memory_space<vmem>>, vector<32x256xf32>
    %1 = arith.truncf %0 : vector<32x256xf32> to vector<32x256xbf16>
    %c0_1 = arith.constant 0 : index
    %c0_2 = arith.constant 0 : index
    %2 = vector.load %arg2[%c0_1, %c0_2] : memref<256x128xbf16, #tpu.memory_space<vmem>>, vector<256x128xbf16>
    %cst = arith.constant dense<0.000000e+00> : vector<32x128xf32>
    %3 = tpu.matmul %1, %2, %cst {dimension_numbers = #tpu.dot_dimension_numbers<[1], [0], [0], [1], [0, 0, 1, 1], [], []>} : vector<32x256xbf16>, vector<256x128xbf16>, vector<32x128xf32> -> vector<32x128xf32>
    %c0_3 = arith.constant 0 : index
    %c0_4 = arith.constant 0 : index
    %4 = vector.load %arg3[%c0_3, %c0_4] : memref<1x128xf32, #tpu.memory_space<vmem>>, vector<1x128xf32>
    %5 = vector.broadcast %4 : vector<1x128xf32> to vector<32x128xf32>
    %6 = arith.addf %3, %5 : vector<32x128xf32>
    %c0_5 = arith.constant 0 : index
    %c0_6 = arith.constant 0 : index
    %7 = vector.load %arg4[%c0_5, %c0_6] : memref<32x128xf32, #tpu.memory_space<vmem>>, vector<32x128xf32>
    %8 = arith.addf %6, %7 : vector<32x128xf32>
    %c0_7 = arith.constant 0 : index
    %c0_8 = arith.constant 0 : index
    %9 = vector.load %arg5[%c0_7, %c0_8] : memref<32x128xf32, #tpu.memory_space<vmem>>, vector<32x128xf32>
    tpu.vector_store %arg5[%c0_7, %c0_8], %8 {strides = array<i32>} : memref<32x128xf32, #tpu.memory_space<vmem>>, vector<32x128xf32>,
    return
  }
  func.func @transform_0(%arg0: i32) -> (i32, i32) {
    %c0_i32 = arith.constant 0 : i32
    %c0_i32_0 = arith.constant 0 : i32
    return %arg0, %c0_i32 : i32, i32
  }
  func.func @transform_1(%arg0: i32) -> (i32, i32) {
    %c0_i32 = arith.constant 0 : i32
    %c0_i32_0 = arith.constant 0 : i32
    %c0_i32_1 = arith.constant 0 : i32
    return %c0_i32, %c0_i32_0 : i32, i32
  }
  func.func @transform_2(%arg0: i32) -> (i32, i32) {
    %c0_i32 = arith.constant 0 : i32
    %c0_i32_0 = arith.constant 0 : i32
    %c0_i32_1 = arith.constant 0 : i32
    return %c0_i32, %c0_i32_0 : i32, i32
  }
  func.func @transform_3(%arg0: i32) -> (i32, i32) {
    %c0_i32 = arith.constant 0 : i32
    %c0_i32_0 = arith.constant 0 : i32
    return %arg0, %c0_i32 : i32, i32
  }
  func.func @transform_4(%arg0: i32) -> (i32, i32) {
    %c0_i32 = arith.constant 0 : i32
    %c0_i32_0 = arith.constant 0 : i32
    return %arg0, %c0_i32 : i32, i32
  }
}

module attributes {stable_mosaic.version = 11 : i64} {
  func.func @_conv1x1_add_kernel(%arg0: i32, %arg1: memref<128x128xf32, #tpu.memory_space<vmem>>, %arg2: memref<128x128xbf16, #tpu.memory_space<vmem>>, %arg3: memref<1x128xf32, #tpu.memory_space<vmem>>, %arg4: memref<128x128xf32, #tpu.memory_space<vmem>>, %arg5: memref<128x128xf32, #tpu.memory_space<vmem>>) attributes {dimension_semantics = [#tpu.dimension_semantics<parallel>], iteration_bounds = array<i64: 1>, scalar_prefetch = 0 : i64, scratch_operands = 0 : i64, tpu.core_type = #tpu.core_type<tc>, window_params = [{transform_indices = @transform_0, window_bounds = array<i64: 128, 128>}, {pipeline_mode = #tpu.pipeline_mode<synchronous>, transform_indices = @transform_1, window_bounds = array<i64: 128, 128>}, {pipeline_mode = #tpu.pipeline_mode<synchronous>, transform_indices = @transform_2, window_bounds = array<i64: 1, 128>}, {transform_indices = @transform_3, window_bounds = array<i64: 128, 128>}, {transform_indices = @transform_4, window_bounds = array<i64: 128, 128>}]} {
    %c0 = arith.constant 0 : index
    %c0_0 = arith.constant 0 : index
    %0 = vector.load %arg1[%c0, %c0_0] : memref<128x128xf32, #tpu.memory_space<vmem>>, vector<128x128xf32>
    %1 = arith.truncf %0 : vector<128x128xf32> to vector<128x128xbf16>
    %c0_1 = arith.constant 0 : index
    %c0_2 = arith.constant 0 : index
    %2 = vector.load %arg2[%c0_1, %c0_2] : memref<128x128xbf16, #tpu.memory_space<vmem>>, vector<128x128xbf16>
    %cst = arith.constant dense<0.000000e+00> : vector<128x128xf32>
    %3 = tpu.matmul %1, %2, %cst {dimension_numbers = #tpu.dot_dimension_numbers<[1], [0], [0], [1], [0, 0, 1, 1], [], []>} : vector<128x128xbf16>, vector<128x128xbf16>, vector<128x128xf32> -> vector<128x128xf32>
    %c0_3 = arith.constant 0 : index
    %c0_4 = arith.constant 0 : index
    %4 = vector.load %arg3[%c0_3, %c0_4] : memref<1x128xf32, #tpu.memory_space<vmem>>, vector<1x128xf32>
    %5 = vector.broadcast %4 : vector<1x128xf32> to vector<128x128xf32>
    %6 = arith.addf %3, %5 : vector<128x128xf32>
    %c0_5 = arith.constant 0 : index
    %c0_6 = arith.constant 0 : index
    %7 = vector.load %arg4[%c0_5, %c0_6] : memref<128x128xf32, #tpu.memory_space<vmem>>, vector<128x128xf32>
    %8 = arith.addf %6, %7 : vector<128x128xf32>
    %c0_7 = arith.constant 0 : index
    %c0_8 = arith.constant 0 : index
    %9 = vector.load %arg5[%c0_7, %c0_8] : memref<128x128xf32, #tpu.memory_space<vmem>>, vector<128x128xf32>
    tpu.vector_store %arg5[%c0_7, %c0_8], %8 {strides = array<i32>} : memref<128x128xf32, #tpu.memory_space<vmem>>, vector<128x128xf32>,
    return
  }
  func.func @transform_0(%arg0: i32) -> (i32, i32) {
    %c0_i32 = arith.constant 0 : i32
    %c0_i32_0 = arith.constant 0 : i32
    return %arg0, %c0_i32 : i32, i32
  }
  func.func @transform_1(%arg0: i32) -> (i32, i32) {
    %c0_i32 = arith.constant 0 : i32
    %c0_i32_0 = arith.constant 0 : i32
    %c0_i32_1 = arith.constant 0 : i32
    return %c0_i32, %c0_i32_0 : i32, i32
  }
  func.func @transform_2(%arg0: i32) -> (i32, i32) {
    %c0_i32 = arith.constant 0 : i32
    %c0_i32_0 = arith.constant 0 : i32
    %c0_i32_1 = arith.constant 0 : i32
    return %c0_i32, %c0_i32_0 : i32, i32
  }
  func.func @transform_3(%arg0: i32) -> (i32, i32) {
    %c0_i32 = arith.constant 0 : i32
    %c0_i32_0 = arith.constant 0 : i32
    return %arg0, %c0_i32 : i32, i32
  }
  func.func @transform_4(%arg0: i32) -> (i32, i32) {
    %c0_i32 = arith.constant 0 : i32
    %c0_i32_0 = arith.constant 0 : i32
    return %arg0, %c0_i32 : i32, i32
  }
}

module attributes {stable_mosaic.version = 11 : i64} {
  func.func @_conv3x3_kernel(%arg0: i32, %arg1: memref<1x10x10x128xf32, #tpu.memory_space<vmem>>, %arg2: memref<1152x128xbf16, #tpu.memory_space<vmem>>, %arg3: memref<1x128xf32, #tpu.memory_space<vmem>>, %arg4: memref<1x8x8x128xf32, #tpu.memory_space<vmem>>) attributes {dimension_semantics = [#tpu.dimension_semantics<parallel>], iteration_bounds = array<i64: 2>, scalar_prefetch = 0 : i64, scratch_operands = 0 : i64, tpu.core_type = #tpu.core_type<tc>, window_params = [{transform_indices = @transform_0, window_bounds = array<i64: 1, 10, 10, 128>}, {pipeline_mode = #tpu.pipeline_mode<synchronous>, transform_indices = @transform_1, window_bounds = array<i64: 1152, 128>}, {pipeline_mode = #tpu.pipeline_mode<synchronous>, transform_indices = @transform_2, window_bounds = array<i64: 1, 128>}, {transform_indices = @transform_3, window_bounds = array<i64: 1, 8, 8, 128>}]} {
    %c0 = arith.constant 0 : index
    %c0_0 = arith.constant 0 : index
    %c0_1 = arith.constant 0 : index
    %c0_2 = arith.constant 0 : index
    %0 = vector.load %arg1[%c0, %c0_0, %c0_1, %c0_2] : memref<1x10x10x128xf32, #tpu.memory_space<vmem>>, vector<1x8x8x128xf32>
    %c0_3 = arith.constant 0 : index
    %c0_4 = arith.constant 0 : index
    %c1 = arith.constant 1 : index
    %c0_5 = arith.constant 0 : index
    %1 = vector.load %arg1[%c0_3, %c0_4, %c1, %c0_5] : memref<1x10x10x128xf32, #tpu.memory_space<vmem>>, vector<1x8x8x128xf32>
    %c0_6 = arith.constant 0 : index
    %c0_7 = arith.constant 0 : index
    %c2 = arith.constant 2 : index
    %c0_8 = arith.constant 0 : index
    %2 = vector.load %arg1[%c0_6, %c0_7, %c2, %c0_8] : memref<1x10x10x128xf32, #tpu.memory_space<vmem>>, vector<1x8x8x128xf32>
    %c0_9 = arith.constant 0 : index
    %c1_10 = arith.constant 1 : index
    %c0_11 = arith.constant 0 : index
    %c0_12 = arith.constant 0 : index
    %3 = vector.load %arg1[%c0_9, %c1_10, %c0_11, %c0_12] : memref<1x10x10x128xf32, #tpu.memory_space<vmem>>, vector<1x8x8x128xf32>
    %c0_13 = arith.constant 0 : index
    %c1_14 = arith.constant 1 : index
    %c1_15 = arith.constant 1 : index
    %c0_16 = arith.constant 0 : index
    %4 = vector.load %arg1[%c0_13, %c1_14, %c1_15, %c0_16] : memref<1x10x10x128xf32, #tpu.memory_space<vmem>>, vector<1x8x8x128xf32>
    %c0_17 = arith.constant 0 : index
    %c1_18 = arith.constant 1 : index
    %c2_19 = arith.constant 2 : index
    %c0_20 = arith.constant 0 : index
    %5 = vector.load %arg1[%c0_17, %c1_18, %c2_19, %c0_20] : memref<1x10x10x128xf32, #tpu.memory_space<vmem>>, vector<1x8x8x128xf32>
    %c0_21 = arith.constant 0 : index
    %c2_22 = arith.constant 2 : index
    %c0_23 = arith.constant 0 : index
    %c0_24 = arith.constant 0 : index
    %6 = vector.load %arg1[%c0_21, %c2_22, %c0_23, %c0_24] : memref<1x10x10x128xf32, #tpu.memory_space<vmem>>, vector<1x8x8x128xf32>
    %c0_25 = arith.constant 0 : index
    %c2_26 = arith.constant 2 : index
    %c1_27 = arith.constant 1 : index
    %c0_28 = arith.constant 0 : index
    %7 = vector.load %arg1[%c0_25, %c2_26, %c1_27, %c0_28] : memref<1x10x10x128xf32, #tpu.memory_space<vmem>>, vector<1x8x8x128xf32>
    %c0_29 = arith.constant 0 : index
    %c2_30 = arith.constant 2 : index
    %c2_31 = arith.constant 2 : index
    %c0_32 = arith.constant 0 : index
    %8 = vector.load %arg1[%c0_29, %c2_30, %c2_31, %c0_32] : memref<1x10x10x128xf32, #tpu.memory_space<vmem>>, vector<1x8x8x128xf32>
    %9 = tpu.concatenate %0, %1, %2, %3, %4, %5, %6, %7, %8 in 3 : vector<1x8x8x128xf32>, vector<1x8x8x128xf32>, vector<1x8x8x128xf32>, vector<1x8x8x128xf32>, vector<1x8x8x128xf32>, vector<1x8x8x128xf32>, vector<1x8x8x128xf32>, vector<1x8x8x128xf32>, vector<1x8x8x128xf32> -> vector<1x8x8x1152xf32>
    %10 = vector.shape_cast %9 : vector<1x8x8x1152xf32> to vector<64x1152xf32>
    %11 = arith.truncf %10 : vector<64x1152xf32> to vector<64x1152xbf16>
    %c0_33 = arith.constant 0 : index
    %c0_34 = arith.constant 0 : index
    %12 = vector.load %arg2[%c0_33, %c0_34] : memref<1152x128xbf16, #tpu.memory_space<vmem>>, vector<1152x128xbf16>
    %cst = arith.constant dense<0.000000e+00> : vector<64x128xf32>
    %13 = tpu.matmul %11, %12, %cst {dimension_numbers = #tpu.dot_dimension_numbers<[1], [0], [0], [1], [0, 0, 1, 1], [], []>} : vector<64x1152xbf16>, vector<1152x128xbf16>, vector<64x128xf32> -> vector<64x128xf32>
    %c0_35 = arith.constant 0 : index
    %c0_36 = arith.constant 0 : index
    %14 = vector.load %arg3[%c0_35, %c0_36] : memref<1x128xf32, #tpu.memory_space<vmem>>, vector<1x128xf32>
    %15 = vector.broadcast %14 : vector<1x128xf32> to vector<64x128xf32>
    %16 = arith.addf %13, %15 : vector<64x128xf32>
    %17 = vector.shape_cast %16 : vector<64x128xf32> to vector<1x8x8x128xf32>
    %c0_37 = arith.constant 0 : index
    %c0_38 = arith.constant 0 : index
    %c0_39 = arith.constant 0 : index
    %c0_40 = arith.constant 0 : index
    %18 = vector.load %arg4[%c0_37, %c0_38, %c0_39, %c0_40] : memref<1x8x8x128xf32, #tpu.memory_space<vmem>>, vector<1x8x8x128xf32>
    tpu.vector_store %arg4[%c0_37, %c0_38, %c0_39, %c0_40], %17 {strides = array<i32>} : memref<1x8x8x128xf32, #tpu.memory_space<vmem>>, vector<1x8x8x128xf32>,
    return
  }
  func.func @transform_0(%arg0: i32) -> (i32, i32, i32, i32) {
    %c0_i32 = arith.constant 0 : i32
    %c0_i32_0 = arith.constant 0 : i32
    %c0_i32_1 = arith.constant 0 : i32
    %c0_i32_2 = arith.constant 0 : i32
    return %arg0, %c0_i32, %c0_i32_0, %c0_i32_1 : i32, i32, i32, i32
  }
  func.func @transform_1(%arg0: i32) -> (i32, i32) {
    %c0_i32 = arith.constant 0 : i32
    %c0_i32_0 = arith.constant 0 : i32
    %c0_i32_1 = arith.constant 0 : i32
    return %c0_i32, %c0_i32_0 : i32, i32
  }
  func.func @transform_2(%arg0: i32) -> (i32, i32) {
    %c0_i32 = arith.constant 0 : i32
    %c0_i32_0 = arith.constant 0 : i32
    %c0_i32_1 = arith.constant 0 : i32
    return %c0_i32, %c0_i32_0 : i32, i32
  }
  func.func @transform_3(%arg0: i32) -> (i32, i32, i32, i32) {
    %c0_i32 = arith.constant 0 : i32
    %c0_i32_0 = arith.constant 0 : i32
    %c0_i32_1 = arith.constant 0 : i32
    %c0_i32_2 = arith.constant 0 : i32
    return %arg0, %c0_i32, %c0_i32_0, %c0_i32_1 : i32, i32, i32, i32
  }
}

module attributes {stable_mosaic.version = 11 : i64} {
  func.func @_conv3x3_kernel(%arg0: i32, %arg1: memref<1x6x6x128xf32, #tpu.memory_space<vmem>>, %arg2: memref<1152x128xbf16, #tpu.memory_space<vmem>>, %arg3: memref<1x128xf32, #tpu.memory_space<vmem>>, %arg4: memref<1x4x4x128xf32, #tpu.memory_space<vmem>>) attributes {dimension_semantics = [#tpu.dimension_semantics<parallel>], iteration_bounds = array<i64: 2>, scalar_prefetch = 0 : i64, scratch_operands = 0 : i64, tpu.core_type = #tpu.core_type<tc>, window_params = [{transform_indices = @transform_0, window_bounds = array<i64: 1, 6, 6, 128>}, {pipeline_mode = #tpu.pipeline_mode<synchronous>, transform_indices = @transform_1, window_bounds = array<i64: 1152, 128>}, {pipeline_mode = #tpu.pipeline_mode<synchronous>, transform_indices = @transform_2, window_bounds = array<i64: 1, 128>}, {transform_indices = @transform_3, window_bounds = array<i64: 1, 4, 4, 128>}]} {
    %c0 = arith.constant 0 : index
    %c0_0 = arith.constant 0 : index
    %c0_1 = arith.constant 0 : index
    %c0_2 = arith.constant 0 : index
    %0 = vector.load %arg1[%c0, %c0_0, %c0_1, %c0_2] : memref<1x6x6x128xf32, #tpu.memory_space<vmem>>, vector<1x4x4x128xf32>
    %c0_3 = arith.constant 0 : index
    %c0_4 = arith.constant 0 : index
    %c1 = arith.constant 1 : index
    %c0_5 = arith.constant 0 : index
    %1 = vector.load %arg1[%c0_3, %c0_4, %c1, %c0_5] : memref<1x6x6x128xf32, #tpu.memory_space<vmem>>, vector<1x4x4x128xf32>
    %c0_6 = arith.constant 0 : index
    %c0_7 = arith.constant 0 : index
    %c2 = arith.constant 2 : index
    %c0_8 = arith.constant 0 : index
    %2 = vector.load %arg1[%c0_6, %c0_7, %c2, %c0_8] : memref<1x6x6x128xf32, #tpu.memory_space<vmem>>, vector<1x4x4x128xf32>
    %c0_9 = arith.constant 0 : index
    %c1_10 = arith.constant 1 : index
    %c0_11 = arith.constant 0 : index
    %c0_12 = arith.constant 0 : index
    %3 = vector.load %arg1[%c0_9, %c1_10, %c0_11, %c0_12] : memref<1x6x6x128xf32, #tpu.memory_space<vmem>>, vector<1x4x4x128xf32>
    %c0_13 = arith.constant 0 : index
    %c1_14 = arith.constant 1 : index
    %c1_15 = arith.constant 1 : index
    %c0_16 = arith.constant 0 : index
    %4 = vector.load %arg1[%c0_13, %c1_14, %c1_15, %c0_16] : memref<1x6x6x128xf32, #tpu.memory_space<vmem>>, vector<1x4x4x128xf32>
    %c0_17 = arith.constant 0 : index
    %c1_18 = arith.constant 1 : index
    %c2_19 = arith.constant 2 : index
    %c0_20 = arith.constant 0 : index
    %5 = vector.load %arg1[%c0_17, %c1_18, %c2_19, %c0_20] : memref<1x6x6x128xf32, #tpu.memory_space<vmem>>, vector<1x4x4x128xf32>
    %c0_21 = arith.constant 0 : index
    %c2_22 = arith.constant 2 : index
    %c0_23 = arith.constant 0 : index
    %c0_24 = arith.constant 0 : index
    %6 = vector.load %arg1[%c0_21, %c2_22, %c0_23, %c0_24] : memref<1x6x6x128xf32, #tpu.memory_space<vmem>>, vector<1x4x4x128xf32>
    %c0_25 = arith.constant 0 : index
    %c2_26 = arith.constant 2 : index
    %c1_27 = arith.constant 1 : index
    %c0_28 = arith.constant 0 : index
    %7 = vector.load %arg1[%c0_25, %c2_26, %c1_27, %c0_28] : memref<1x6x6x128xf32, #tpu.memory_space<vmem>>, vector<1x4x4x128xf32>
    %c0_29 = arith.constant 0 : index
    %c2_30 = arith.constant 2 : index
    %c2_31 = arith.constant 2 : index
    %c0_32 = arith.constant 0 : index
    %8 = vector.load %arg1[%c0_29, %c2_30, %c2_31, %c0_32] : memref<1x6x6x128xf32, #tpu.memory_space<vmem>>, vector<1x4x4x128xf32>
    %9 = tpu.concatenate %0, %1, %2, %3, %4, %5, %6, %7, %8 in 3 : vector<1x4x4x128xf32>, vector<1x4x4x128xf32>, vector<1x4x4x128xf32>, vector<1x4x4x128xf32>, vector<1x4x4x128xf32>, vector<1x4x4x128xf32>, vector<1x4x4x128xf32>, vector<1x4x4x128xf32>, vector<1x4x4x128xf32> -> vector<1x4x4x1152xf32>
    %10 = vector.shape_cast %9 : vector<1x4x4x1152xf32> to vector<16x1152xf32>
    %11 = arith.truncf %10 : vector<16x1152xf32> to vector<16x1152xbf16>
    %c0_33 = arith.constant 0 : index
    %c0_34 = arith.constant 0 : index
    %12 = vector.load %arg2[%c0_33, %c0_34] : memref<1152x128xbf16, #tpu.memory_space<vmem>>, vector<1152x128xbf16>
    %cst = arith.constant dense<0.000000e+00> : vector<16x128xf32>
    %13 = tpu.matmul %11, %12, %cst {dimension_numbers = #tpu.dot_dimension_numbers<[1], [0], [0], [1], [0, 0, 1, 1], [], []>} : vector<16x1152xbf16>, vector<1152x128xbf16>, vector<16x128xf32> -> vector<16x128xf32>
    %c0_35 = arith.constant 0 : index
    %c0_36 = arith.constant 0 : index
    %14 = vector.load %arg3[%c0_35, %c0_36] : memref<1x128xf32, #tpu.memory_space<vmem>>, vector<1x128xf32>
    %15 = vector.broadcast %14 : vector<1x128xf32> to vector<16x128xf32>
    %16 = arith.addf %13, %15 : vector<16x128xf32>
    %17 = vector.shape_cast %16 : vector<16x128xf32> to vector<1x4x4x128xf32>
    %c0_37 = arith.constant 0 : index
    %c0_38 = arith.constant 0 : index
    %c0_39 = arith.constant 0 : index
    %c0_40 = arith.constant 0 : index
    %18 = vector.load %arg4[%c0_37, %c0_38, %c0_39, %c0_40] : memref<1x4x4x128xf32, #tpu.memory_space<vmem>>, vector<1x4x4x128xf32>
    tpu.vector_store %arg4[%c0_37, %c0_38, %c0_39, %c0_40], %17 {strides = array<i32>} : memref<1x4x4x128xf32, #tpu.memory_space<vmem>>, vector<1x4x4x128xf32>,
    return
  }
  func.func @transform_0(%arg0: i32) -> (i32, i32, i32, i32) {
    %c0_i32 = arith.constant 0 : i32
    %c0_i32_0 = arith.constant 0 : i32
    %c0_i32_1 = arith.constant 0 : i32
    %c0_i32_2 = arith.constant 0 : i32
    return %arg0, %c0_i32, %c0_i32_0, %c0_i32_1 : i32, i32, i32, i32
  }
  func.func @transform_1(%arg0: i32) -> (i32, i32) {
    %c0_i32 = arith.constant 0 : i32
    %c0_i32_0 = arith.constant 0 : i32
    %c0_i32_1 = arith.constant 0 : i32
    return %c0_i32, %c0_i32_0 : i32, i32
  }
  func.func @transform_2(%arg0: i32) -> (i32, i32) {
    %c0_i32 = arith.constant 0 : i32
    %c0_i32_0 = arith.constant 0 : i32
    %c0_i32_1 = arith.constant 0 : i32
    return %c0_i32, %c0_i32_0 : i32, i32
  }
  func.func @transform_3(%arg0: i32) -> (i32, i32, i32, i32) {
    %c0_i32 = arith.constant 0 : i32
    %c0_i32_0 = arith.constant 0 : i32
    %c0_i32_1 = arith.constant 0 : i32
    %c0_i32_2 = arith.constant 0 : i32
    return %arg0, %c0_i32, %c0_i32_0, %c0_i32_1 : i32, i32, i32, i32
  }
}

module attributes {stable_mosaic.version = 11 : i64} {
  func.func @_conv3x3_kernel(%arg0: i32, %arg1: memref<1x4x4x128xf32, #tpu.memory_space<vmem>>, %arg2: memref<1152x128xbf16, #tpu.memory_space<vmem>>, %arg3: memref<1x128xf32, #tpu.memory_space<vmem>>, %arg4: memref<1x2x2x128xf32, #tpu.memory_space<vmem>>) attributes {dimension_semantics = [#tpu.dimension_semantics<parallel>], iteration_bounds = array<i64: 2>, scalar_prefetch = 0 : i64, scratch_operands = 0 : i64, tpu.core_type = #tpu.core_type<tc>, window_params = [{transform_indices = @transform_0, window_bounds = array<i64: 1, 4, 4, 128>}, {pipeline_mode = #tpu.pipeline_mode<synchronous>, transform_indices = @transform_1, window_bounds = array<i64: 1152, 128>}, {pipeline_mode = #tpu.pipeline_mode<synchronous>, transform_indices = @transform_2, window_bounds = array<i64: 1, 128>}, {transform_indices = @transform_3, window_bounds = array<i64: 1, 2, 2, 128>}]} {
    %c0 = arith.constant 0 : index
    %c0_0 = arith.constant 0 : index
    %c0_1 = arith.constant 0 : index
    %c0_2 = arith.constant 0 : index
    %0 = vector.load %arg1[%c0, %c0_0, %c0_1, %c0_2] : memref<1x4x4x128xf32, #tpu.memory_space<vmem>>, vector<1x2x2x128xf32>
    %c0_3 = arith.constant 0 : index
    %c0_4 = arith.constant 0 : index
    %c1 = arith.constant 1 : index
    %c0_5 = arith.constant 0 : index
    %1 = vector.load %arg1[%c0_3, %c0_4, %c1, %c0_5] : memref<1x4x4x128xf32, #tpu.memory_space<vmem>>, vector<1x2x2x128xf32>
    %c0_6 = arith.constant 0 : index
    %c0_7 = arith.constant 0 : index
    %c2 = arith.constant 2 : index
    %c0_8 = arith.constant 0 : index
    %2 = vector.load %arg1[%c0_6, %c0_7, %c2, %c0_8] : memref<1x4x4x128xf32, #tpu.memory_space<vmem>>, vector<1x2x2x128xf32>
    %c0_9 = arith.constant 0 : index
    %c1_10 = arith.constant 1 : index
    %c0_11 = arith.constant 0 : index
    %c0_12 = arith.constant 0 : index
    %3 = vector.load %arg1[%c0_9, %c1_10, %c0_11, %c0_12] : memref<1x4x4x128xf32, #tpu.memory_space<vmem>>, vector<1x2x2x128xf32>
    %c0_13 = arith.constant 0 : index
    %c1_14 = arith.constant 1 : index
    %c1_15 = arith.constant 1 : index
    %c0_16 = arith.constant 0 : index
    %4 = vector.load %arg1[%c0_13, %c1_14, %c1_15, %c0_16] : memref<1x4x4x128xf32, #tpu.memory_space<vmem>>, vector<1x2x2x128xf32>
    %c0_17 = arith.constant 0 : index
    %c1_18 = arith.constant 1 : index
    %c2_19 = arith.constant 2 : index
    %c0_20 = arith.constant 0 : index
    %5 = vector.load %arg1[%c0_17, %c1_18, %c2_19, %c0_20] : memref<1x4x4x128xf32, #tpu.memory_space<vmem>>, vector<1x2x2x128xf32>
    %c0_21 = arith.constant 0 : index
    %c2_22 = arith.constant 2 : index
    %c0_23 = arith.constant 0 : index
    %c0_24 = arith.constant 0 : index
    %6 = vector.load %arg1[%c0_21, %c2_22, %c0_23, %c0_24] : memref<1x4x4x128xf32, #tpu.memory_space<vmem>>, vector<1x2x2x128xf32>
    %c0_25 = arith.constant 0 : index
    %c2_26 = arith.constant 2 : index
    %c1_27 = arith.constant 1 : index
    %c0_28 = arith.constant 0 : index
    %7 = vector.load %arg1[%c0_25, %c2_26, %c1_27, %c0_28] : memref<1x4x4x128xf32, #tpu.memory_space<vmem>>, vector<1x2x2x128xf32>
    %c0_29 = arith.constant 0 : index
    %c2_30 = arith.constant 2 : index
    %c2_31 = arith.constant 2 : index
    %c0_32 = arith.constant 0 : index
    %8 = vector.load %arg1[%c0_29, %c2_30, %c2_31, %c0_32] : memref<1x4x4x128xf32, #tpu.memory_space<vmem>>, vector<1x2x2x128xf32>
    %9 = tpu.concatenate %0, %1, %2, %3, %4, %5, %6, %7, %8 in 3 : vector<1x2x2x128xf32>, vector<1x2x2x128xf32>, vector<1x2x2x128xf32>, vector<1x2x2x128xf32>, vector<1x2x2x128xf32>, vector<1x2x2x128xf32>, vector<1x2x2x128xf32>, vector<1x2x2x128xf32>, vector<1x2x2x128xf32> -> vector<1x2x2x1152xf32>
    %10 = vector.shape_cast %9 : vector<1x2x2x1152xf32> to vector<4x1152xf32>
    %11 = arith.truncf %10 : vector<4x1152xf32> to vector<4x1152xbf16>
    %c0_33 = arith.constant 0 : index
    %c0_34 = arith.constant 0 : index
    %12 = vector.load %arg2[%c0_33, %c0_34] : memref<1152x128xbf16, #tpu.memory_space<vmem>>, vector<1152x128xbf16>
    %cst = arith.constant dense<0.000000e+00> : vector<4x128xf32>
    %13 = tpu.matmul %11, %12, %cst {dimension_numbers = #tpu.dot_dimension_numbers<[1], [0], [0], [1], [0, 0, 1, 1], [], []>} : vector<4x1152xbf16>, vector<1152x128xbf16>, vector<4x128xf32> -> vector<4x128xf32>
    %c0_35 = arith.constant 0 : index
    %c0_36 = arith.constant 0 : index
    %14 = vector.load %arg3[%c0_35, %c0_36] : memref<1x128xf32, #tpu.memory_space<vmem>>, vector<1x128xf32>
    %15 = vector.broadcast %14 : vector<1x128xf32> to vector<4x128xf32>
    %16 = arith.addf %13, %15 : vector<4x128xf32>
    %17 = vector.shape_cast %16 : vector<4x128xf32> to vector<1x2x2x128xf32>
    %c0_37 = arith.constant 0 : index
    %c0_38 = arith.constant 0 : index
    %c0_39 = arith.constant 0 : index
    %c0_40 = arith.constant 0 : index
    %18 = vector.load %arg4[%c0_37, %c0_38, %c0_39, %c0_40] : memref<1x2x2x128xf32, #tpu.memory_space<vmem>>, vector<1x2x2x128xf32>
    tpu.vector_store %arg4[%c0_37, %c0_38, %c0_39, %c0_40], %17 {strides = array<i32>} : memref<1x2x2x128xf32, #tpu.memory_space<vmem>>, vector<1x2x2x128xf32>,
    return
  }
  func.func @transform_0(%arg0: i32) -> (i32, i32, i32, i32) {
    %c0_i32 = arith.constant 0 : i32
    %c0_i32_0 = arith.constant 0 : i32
    %c0_i32_1 = arith.constant 0 : i32
    %c0_i32_2 = arith.constant 0 : i32
    return %arg0, %c0_i32, %c0_i32_0, %c0_i32_1 : i32, i32, i32, i32
  }
  func.func @transform_1(%arg0: i32) -> (i32, i32) {
    %c0_i32 = arith.constant 0 : i32
    %c0_i32_0 = arith.constant 0 : i32
    %c0_i32_1 = arith.constant 0 : i32
    return %c0_i32, %c0_i32_0 : i32, i32
  }
  func.func @transform_2(%arg0: i32) -> (i32, i32) {
    %c0_i32 = arith.constant 0 : i32
    %c0_i32_0 = arith.constant 0 : i32
    %c0_i32_1 = arith.constant 0 : i32
    return %c0_i32, %c0_i32_0 : i32, i32
  }
  func.func @transform_3(%arg0: i32) -> (i32, i32, i32, i32) {
    %c0_i32 = arith.constant 0 : i32
    %c0_i32_0 = arith.constant 0 : i32
    %c0_i32_1 = arith.constant 0 : i32
    %c0_i32_2 = arith.constant 0 : i32
    return %arg0, %c0_i32, %c0_i32_0, %c0_i32_1 : i32, i32, i32, i32
  }
}

</mosaic_0001>

<llo_original>
// kernel: detector_backbone_with_fpn.9
$region0: #{detector_backbone_with_fpn.9}
  #allocation0 [shape = 'u32[]', space=smem, size = 0x4, offset = 0x4, fixed_abs, tag = 'smem constant byte address 0x4 - core index']
  #allocation1 [shape = 'u32[144,128]{1,0:T(1,128)}', space=vmem, size = 0x12000, scoped, tag = 'internal scratch']
  %s0 = inlined_call_operand.vmem [shape: f32[128,256], index: 0, kind: input, shape index: {}]
  %s1 = inlined_call_operand.vmem [shape: bf16[256,128], index: 1, kind: input, shape index: {}]
  %s2 = inlined_call_operand.vmem [shape: f32[1,128], index: 2, kind: input, shape index: {}]
  %s3 = inlined_call_operand.vmem [shape: f32[128,128], index: 3, kind: output, shape index: {}]
  %s4 = sld [smem:[#allocation0]]
  $region22: #{detector_backbone_with_fpn.9} parent=0
    _
  %s6 = ssub.s32 1, %s4
  %s7 = scalar_select 0, %s6, %s4
  // Predicated region
  $region2: #{detector_backbone_with_fpn.9} parent=0 // pred_check
    _
  $region3: #{detector_backbone_with_fpn.9} parent=0 // pred_check_branch
    %9 = sbr.rel (0) target = $region5
  $region4: #{detector_backbone_with_fpn.9} parent=0 // pred_region
    _
  $region5: #{detector_backbone_with_fpn.9} parent=0 // pred_fallthru
    _
  // Predicated region
  $region6: #{detector_backbone_with_fpn.9} parent=0 // pred_check
    _
  $region7: #{detector_backbone_with_fpn.9} parent=0 // pred_check_branch
    %11 = sbr.rel (0) target = $region9
  $region8: #{detector_backbone_with_fpn.9} parent=0 // pred_region
    _
  $region9: #{detector_backbone_with_fpn.9} parent=0 // pred_fallthru
    _
  // Predicated region
  $region10: #{detector_backbone_with_fpn.9} parent=0 // pred_check
    _
  $region11: #{detector_backbone_with_fpn.9} parent=0 // pred_check_branch
    %13 = sbr.rel (0) target = $region13
  $region12: #{detector_backbone_with_fpn.9} parent=0 // pred_region
    _
  $region13: #{detector_backbone_with_fpn.9} parent=0 // pred_fallthru
    _
  %v15 = vld [vmem:[%s0] sm:$0xff]
  %v16 = vld [vmem:[%s0 + $0x8] sm:$0xff]
  %v17 = vld [vmem:[%s0 + $0x10] sm:$0xff]
  %v18 = vld [vmem:[%s0 + $0x18] sm:$0xff]
  %v19 = vld [vmem:[%s0 + $0x20] sm:$0xff]
  %v20 = vld [vmem:[%s0 + $0x28] sm:$0xff]
  %v21 = vld [vmem:[%s0 + $0x30] sm:$0xff]
  %v22 = vld [vmem:[%s0 + $0x38] sm:$0xff]
  %v23 = vld [vmem:[%s0 + $0x40] sm:$0xff]
  %v24 = vld [vmem:[%s0 + $0x48] sm:$0xff]
  %v25 = vld [vmem:[%s0 + $0x50] sm:$0xff]
  %v26 = vld [vmem:[%s0 + $0x58] sm:$0xff]
  %v27 = vld [vmem:[%s0 + $0x60] sm:$0xff]
  %v28 = vld [vmem:[%s0 + $0x68] sm:$0xff]
  %v29 = vld [vmem:[%s0 + $0x70] sm:$0xff]
  %v30 = vld [vmem:[%s0 + $0x78] sm:$0xff]
  %v31 = vld [vmem:[%s0 + $0x80] sm:$0xff]
  %v32 = vld [vmem:[%s0 + $0x88] sm:$0xff]
  %v33 = vld [vmem:[%s0 + $0x90] sm:$0xff]
  %v34 = vld [vmem:[%s0 + $0x98] sm:$0xff]
  %v35 = vld [vmem:[%s0 + $0xa0] sm:$0xff]
  %v36 = vld [vmem:[%s0 + $0xa8] sm:$0xff]
  %v37 = vld [vmem:[%s0 + $0xb0] sm:$0xff]
  %v38 = vld [vmem:[%s0 + $0xb8] sm:$0xff]
  %v39 = vld [vmem:[%s0 + $0xc0] sm:$0xff]
  %v40 = vld [vmem:[%s0 + $0xc8] sm:$0xff]
  %v41 = vld [vmem:[%s0 + $0xd0] sm:$0xff]
  %v42 = vld [vmem:[%s0 + $0xd8] sm:$0xff]
  %v43 = vld [vmem:[%s0 + $0xe0] sm:$0xff]
  %v44 = vld [vmem:[%s0 + $0xe8] sm:$0xff]
  %v45 = vld [vmem:[%s0 + $0xf0] sm:$0xff]
  %v46 = vld [vmem:[%s0 + $0xf8] sm:$0xff]
  %v47 = vpack.c.bf16 %v17, %v15
  %v48 = vpack.c.bf16 %v18, %v16
  %v49 = vpack.c.bf16 %v21, %v19
  %v50 = vpack.c.bf16 %v22, %v20
  %v51 = vpack.c.bf16 %v25, %v23
  %v52 = vpack.c.bf16 %v26, %v24
  %v53 = vpack.c.bf16 %v29, %v27
  %v54 = vpack.c.bf16 %v30, %v28
  %v55 = vpack.c.bf16 %v33, %v31
  %v56 = vpack.c.bf16 %v34, %v32
  %v57 = vpack.c.bf16 %v37, %v35
  %v58 = vpack.c.bf16 %v38, %v36
  %v59 = vpack.c.bf16 %v41, %v39
  %v60 = vpack.c.bf16 %v42, %v40
  %v61 = vpack.c.bf16 %v45, %v43
  %v62 = vpack.c.bf16 %v46, %v44
  %v63 = vld [vmem:[%s1] sm:$0xf]
  %v64 = vld [vmem:[%s1 + $0x4] sm:$0xf]
  %v65 = vld [vmem:[%s1 + $0x8] sm:$0xf]
  %v66 = vld [vmem:[%s1 + $0xc] sm:$0xf]
  %v67 = vld [vmem:[%s1 + $0x10] sm:$0xf]
  %v68 = vld [vmem:[%s1 + $0x14] sm:$0xf]
  %v69 = vld [vmem:[%s1 + $0x18] sm:$0xf]
  %v70 = vld [vmem:[%s1 + $0x1c] sm:$0xf]
  %v71 = vld [vmem:[%s1 + $0x20] sm:$0xf]
  %v72 = vld [vmem:[%s1 + $0x24] sm:$0xf]
  %v73 = vld [vmem:[%s1 + $0x28] sm:$0xf]
  %v74 = vld [vmem:[%s1 + $0x2c] sm:$0xf]
  %v75 = vld [vmem:[%s1 + $0x30] sm:$0xf]
  %v76 = vld [vmem:[%s1 + $0x34] sm:$0xf]
  %v77 = vld [vmem:[%s1 + $0x38] sm:$0xf]
  %v78 = vld [vmem:[%s1 + $0x3c] sm:$0xf]
  %v79 = vld [vmem:[%s1 + $0x40] sm:$0xf]
  %v80 = vld [vmem:[%s1 + $0x44] sm:$0xf]
  %v81 = vld [vmem:[%s1 + $0x48] sm:$0xf]
  %v82 = vld [vmem:[%s1 + $0x4c] sm:$0xf]
  %v83 = vld [vmem:[%s1 + $0x50] sm:$0xf]
  %v84 = vld [vmem:[%s1 + $0x54] sm:$0xf]
  %v85 = vld [vmem:[%s1 + $0x58] sm:$0xf]
  %v86 = vld [vmem:[%s1 + $0x5c] sm:$0xf]
  %v87 = vld [vmem:[%s1 + $0x60] sm:$0xf]
  %v88 = vld [vmem:[%s1 + $0x64] sm:$0xf]
  %v89 = vld [vmem:[%s1 + $0x68] sm:$0xf]
  %v90 = vld [vmem:[%s1 + $0x6c] sm:$0xf]
  %v91 = vld [vmem:[%s1 + $0x70] sm:$0xf]
  %v92 = vld [vmem:[%s1 + $0x74] sm:$0xf]
  %v93 = vld [vmem:[%s1 + $0x78] sm:$0xf]
  %v94 = vld [vmem:[%s1 + $0x7c] sm:$0xf]
  %v95 = vld [vmem:[%s2] sm:$0x1]
  %v97 = vlaneseq
  %v98 = vshrl.u32 %v97, 7
  %v99 = vsub.s32 0, %v98
  %v100 = vrot.slane %v95, %v99
  %v134 = vunpack.c.l.b16 %v63
  %v135 = vunpack.c.l.b16 %v64
  %v136 = vunpack.c.l.b16 %v65
  %v137 = vunpack.c.l.b16 %v66
  %v138 = vunpack.c.l.b16 %v67
  %v139 = vunpack.c.l.b16 %v68
  %v140 = vunpack.c.l.b16 %v69
  %v141 = vunpack.c.l.b16 %v70
  %v142 = vunpack.c.l.b16 %v71
  %v143 = vunpack.c.l.b16 %v72
  %v144 = vunpack.c.l.b16 %v73
  %v145 = vunpack.c.l.b16 %v74
  %v146 = vunpack.c.l.b16 %v75
  %v147 = vunpack.c.l.b16 %v76
  %v148 = vunpack.c.l.b16 %v77
  %v149 = vunpack.c.l.b16 %v78
  %v150 = vunpack.c.l.b16 %v79
  %v151 = vunpack.c.l.b16 %v80
  %v152 = vunpack.c.l.b16 %v81
  %v153 = vunpack.c.l.b16 %v82
  %v154 = vunpack.c.l.b16 %v83
  %v155 = vunpack.c.l.b16 %v84
  %v156 = vunpack.c.l.b16 %v85
  %v157 = vunpack.c.l.b16 %v86
  %v158 = vunpack.c.l.b16 %v87
  %v159 = vunpack.c.l.b16 %v88
  %v160 = vunpack.c.l.b16 %v89
  %v161 = vunpack.c.l.b16 %v90
  %v162 = vunpack.c.l.b16 %v91
  %v163 = vunpack.c.l.b16 %v92
  %v164 = vunpack.c.l.b16 %v93
  %v165 = vunpack.c.l.b16 %v94
  %v166 = vpack.c.b16 %v135, %v134
  %v167 = vpack.c.b16 %v137, %v136
  %v168 = vpack.c.b16 %v139, %v138
  %v169 = vpack.c.b16 %v141, %v140
  %v170 = vpack.c.b16 %v143, %v142
  %v171 = vpack.c.b16 %v145, %v144
  %v172 = vpack.c.b16 %v147, %v146
  %v173 = vpack.c.b16 %v149, %v148
  %v174 = vpack.c.b16 %v151, %v150
  %v175 = vpack.c.b16 %v153, %v152
  %v176 = vpack.c.b16 %v155, %v154
  %v177 = vpack.c.b16 %v157, %v156
  %v178 = vpack.c.b16 %v159, %v158
  %v179 = vpack.c.b16 %v161, %v160
  %v180 = vpack.c.b16 %v163, %v162
  %v181 = vpack.c.b16 %v165, %v164
  %198 = vmatprep.subr.bf16.mxu0 0
  %199 = vmatpush1.bf16.msra.mxu0 %v166
  %200 = vmatprep.subr.bf16.mxu0 0
  %201 = vmatpush1.bf16.msra.mxu0 %v167
  %202 = vmatprep.subr.bf16.mxu0 0
  %203 = vmatpush1.bf16.msra.mxu0 %v168
  %204 = vmatprep.subr.bf16.mxu0 0
  %205 = vmatpush1.bf16.msra.mxu0 %v169
  %206 = vmatprep.subr.bf16.mxu0 0
  %207 = vmatpush1.bf16.msra.mxu0 %v170
  %208 = vmatprep.subr.bf16.mxu0 0
  %209 = vmatpush1.bf16.msra.mxu0 %v171
  %210 = vmatprep.subr.bf16.mxu0 0
  %211 = vmatpush1.bf16.msra.mxu0 %v172
  %212 = vmatprep.subr.bf16.mxu0 0
  %213 = vmatpush1.bf16.msra.mxu0 %v173
  %214 = vmatprep.subr.bf16.mxu0 0
  %215 = vmatpush1.bf16.msra.mxu0 %v174
  %216 = vmatprep.subr.bf16.mxu0 0
  %217 = vmatpush1.bf16.msra.mxu0 %v175
  %218 = vmatprep.subr.bf16.mxu0 0
  %219 = vmatpush1.bf16.msra.mxu0 %v176
  %220 = vmatprep.subr.bf16.mxu0 0
  %221 = vmatpush1.bf16.msra.mxu0 %v177
  %222 = vmatprep.subr.bf16.mxu0 0
  %223 = vmatpush1.bf16.msra.mxu0 %v178
  %224 = vmatprep.subr.bf16.mxu0 0
  %225 = vmatpush1.bf16.msra.mxu0 %v179
  %226 = vmatprep.subr.bf16.mxu0 0
  %227 = vmatpush1.bf16.msra.mxu0 %v180
  %228 = vmatprep.subr.bf16.mxu0 0
  %229 = vmatpush1.bf16.msra.mxu0 %v181
  %230 = vmatprep.mubr.bf16.mxu0 %v48
  %231 = vmatmul.mubr.bf16.gmra.mrb[0].mxu0 %v47
  %v232 = vpop.f32.mrb[0].mxu0
  %v233 = vadd.f32 %v100, %v232
  %v234 = vpop.f32.mrb[0].mxu0
  %v235 = vpop.f32.mrb[0].mxu0
  %v236 = vadd.f32 %v100, %v235
  %v237 = vpop.f32.mrb[0].mxu0
  %238 = vmatprep.mubr.bf16.mxu0 %v50
  %239 = vmatmul.mubr.bf16.gmra.mrb[0].mxu0 %v49
  %v240 = vpop.f32.mrb[0].mxu0
  %v241 = vadd.f32 %v100, %v240
  %v242 = vpop.f32.mrb[0].mxu0
  %v243 = vpop.f32.mrb[0].mxu0
  %v244 = vadd.f32 %v100, %v243
  %v245 = vpop.f32.mrb[0].mxu0
  %246 = vmatprep.mubr.bf16.mxu0 %v52
  %247 = vmatmul.mubr.bf16.gmra.mrb[0].mxu0 %v51
  %v248 = vpop.f32.mrb[0].mxu0
  %v249 = vadd.f32 %v100, %v248
  %v250 = vpop.f32.mrb[0].mxu0
  %v251 = vpop.f32.mrb[0].mxu0
  %v252 = vadd.f32 %v100, %v251
  %v253 = vpop.f32.mrb[0].mxu0
  %254 = vmatprep.mubr.bf16.mxu0 %v54
  %255 = vmatmul.mubr.bf16.gmra.mrb[0].mxu0 %v53
  %v256 = vpop.f32.mrb[0].mxu0
  %v257 = vadd.f32 %v100, %v256
  %v258 = vpop.f32.mrb[0].mxu0
  %v259 = vpop.f32.mrb[0].mxu0
  %v260 = vadd.f32 %v100, %v259
  %v261 = vpop.f32.mrb[0].mxu0
  %262 = vmatprep.mubr.bf16.mxu0 %v56
  %263 = vmatmul.mubr.bf16.gmra.mrb[0].mxu0 %v55
  %v264 = vpop.f32.mrb[0].mxu0
  %v265 = vadd.f32 %v100, %v264
  %v266 = vpop.f32.mrb[0].mxu0
  %v267 = vpop.f32.mrb[0].mxu0
  %v268 = vadd.f32 %v100, %v267
  %v269 = vpop.f32.mrb[0].mxu0
  %270 = vmatprep.mubr.bf16.mxu0 %v58
  %271 = vmatmul.mubr.bf16.gmra.mrb[0].mxu0 %v57
  %v272 = vpop.f32.mrb[0].mxu0
  %v273 = vadd.f32 %v100, %v272
  %v274 = vpop.f32.mrb[0].mxu0
  %v275 = vpop.f32.mrb[0].mxu0
  %v276 = vadd.f32 %v100, %v275
  %v277 = vpop.f32.mrb[0].mxu0
  %278 = vmatprep.mubr.bf16.mxu0 %v60
  %279 = vmatmul.mubr.bf16.gmra.mrb[0].mxu0 %v59
  %v280 = vpop.f32.mrb[0].mxu0
  %v281 = vadd.f32 %v100, %v280
  %v282 = vpop.f32.mrb[0].mxu0
  %v283 = vpop.f32.mrb[0].mxu0
  %v284 = vadd.f32 %v100, %v283
  %v285 = vpop.f32.mrb[0].mxu0
  %286 = vmatprep.mubr.bf16.mxu0 %v62
  %287 = vmatmul.mubr.bf16.gmra.mrb[0].mxu0 %v61
  %v288 = vpop.f32.mrb[0].mxu0
  %v289 = vadd.f32 %v100, %v288
  %v290 = vpop.f32.mrb[0].mxu0
  %v291 = vpop.f32.mrb[0].mxu0
  %v292 = vadd.f32 %v100, %v291
  %v293 = vpop.f32.mrb[0].mxu0
  %294 = vdwg.mxu0
  %v295 = vmax.f32 %v233, 0.0
  %v296 = vmax.f32 %v236, 0.0
  %v297 = vmax.f32 %v241, 0.0
  %v298 = vmax.f32 %v244, 0.0
  %v299 = vmax.f32 %v249, 0.0
  %v300 = vmax.f32 %v252, 0.0
  %v301 = vmax.f32 %v257, 0.0
  %v302 = vmax.f32 %v260, 0.0
  %v303 = vmax.f32 %v265, 0.0
  %v304 = vmax.f32 %v268, 0.0
  %v305 = vmax.f32 %v273, 0.0
  %v306 = vmax.f32 %v276, 0.0
  %v307 = vmax.f32 %v281, 0.0
  %v308 = vmax.f32 %v284, 0.0
  %v309 = vmax.f32 %v289, 0.0
  %v310 = vmax.f32 %v292, 0.0
  %311 = vst [vmem:[%s3] sm:$0xff] %v295
  %312 = vst [vmem:[%s3 + $0x8] sm:$0xff] %v296
  %313 = vst [vmem:[%s3 + $0x10] sm:$0xff] %v297
  %314 = vst [vmem:[%s3 + $0x18] sm:$0xff] %v298
  %315 = vst [vmem:[%s3 + $0x20] sm:$0xff] %v299
  %316 = vst [vmem:[%s3 + $0x28] sm:$0xff] %v300
  %317 = vst [vmem:[%s3 + $0x30] sm:$0xff] %v301
  %318 = vst [vmem:[%s3 + $0x38] sm:$0xff] %v302
  %319 = vst [vmem:[%s3 + $0x40] sm:$0xff] %v303
  %320 = vst [vmem:[%s3 + $0x48] sm:$0xff] %v304
  %321 = vst [vmem:[%s3 + $0x50] sm:$0xff] %v305
  %322 = vst [vmem:[%s3 + $0x58] sm:$0xff] %v306
  %323 = vst [vmem:[%s3 + $0x60] sm:$0xff] %v307
  %324 = vst [vmem:[%s3 + $0x68] sm:$0xff] %v308
  %325 = vst [vmem:[%s3 + $0x70] sm:$0xff] %v309
  %326 = vst [vmem:[%s3 + $0x78] sm:$0xff] %v310
  // Predicated region
  $region14: #{detector_backbone_with_fpn.9} parent=0 // pred_check
    _
  $region15: #{detector_backbone_with_fpn.9} parent=0 // pred_check_branch
    %328 = sbr.rel (0) target = $region17
  $region16: #{detector_backbone_with_fpn.9} parent=0 // pred_region
    _
  $region17: #{detector_backbone_with_fpn.9} parent=0 // pred_fallthru
    _
  // Predicated region
  $region18: #{detector_backbone_with_fpn.9} parent=0 // pred_check
    _
  $region19: #{detector_backbone_with_fpn.9} parent=0 // pred_check_branch
    %330 = sbr.rel (0) target = $region21
  $region20: #{detector_backbone_with_fpn.9} parent=0 // pred_region
    _
  $region21: #{detector_backbone_with_fpn.9} parent=0 // pred_fallthru
    _

// kernel: detector_backbone_with_fpn.10
$region0: #{detector_backbone_with_fpn.10}
  #allocation0 [shape = 'u32[]', space=smem, size = 0x4, offset = 0x4, fixed_abs, tag = 'smem constant byte address 0x4 - core index']
  #allocation1 [shape = 'u32[144,128]{1,0:T(1,128)}', space=vmem, size = 0x12000, scoped, tag = 'internal scratch']
  %s0 = inlined_call_operand.vmem [shape: f32[32,512], index: 0, kind: input, shape index: {}]
  %s1 = inlined_call_operand.vmem [shape: bf16[512,256], index: 1, kind: input, shape index: {}]
  %s2 = inlined_call_operand.vmem [shape: f32[1,256], index: 2, kind: input, shape index: {}]
  %s3 = inlined_call_operand.vmem [shape: f32[32,256], index: 3, kind: output, shape index: {}]
  %s4 = sld [smem:[#allocation0]]
  $region22: #{detector_backbone_with_fpn.10} parent=0
    _
  %s6 = ssub.s32 1, %s4
  %s7 = scalar_select 0, %s6, %s4
  // Predicated region
  $region2: #{detector_backbone_with_fpn.10} parent=0 // pred_check
    _
  $region3: #{detector_backbone_with_fpn.10} parent=0 // pred_check_branch
    %9 = sbr.rel (0) target = $region5
  $region4: #{detector_backbone_with_fpn.10} parent=0 // pred_region
    _
  $region5: #{detector_backbone_with_fpn.10} parent=0 // pred_fallthru
    _
  // Predicated region
  $region6: #{detector_backbone_with_fpn.10} parent=0 // pred_check
    _
  $region7: #{detector_backbone_with_fpn.10} parent=0 // pred_check_branch
    %11 = sbr.rel (0) target = $region9
  $region8: #{detector_backbone_with_fpn.10} parent=0 // pred_region
    _
  $region9: #{detector_backbone_with_fpn.10} parent=0 // pred_fallthru
    _
  // Predicated region
  $region10: #{detector_backbone_with_fpn.10} parent=0 // pred_check
    _
  $region11: #{detector_backbone_with_fpn.10} parent=0 // pred_check_branch
    %13 = sbr.rel (0) target = $region13
  $region12: #{detector_backbone_with_fpn.10} parent=0 // pred_region
    _
  $region13: #{detector_backbone_with_fpn.10} parent=0 // pred_fallthru
    _
  %v14 = vld [vmem:[%s0] sm:$0xff]
  %v15 = vld [vmem:[%s0 + $0x8] sm:$0xff]
  %v16 = vld [vmem:[%s0 + $0x10] sm:$0xff]
  %v17 = vld [vmem:[%s0 + $0x18] sm:$0xff]
  %v18 = vld [vmem:[%s0 + $0x20] sm:$0xff]
  %v19 = vld [vmem:[%s0 + $0x28] sm:$0xff]
  %v20 = vld [vmem:[%s0 + $0x30] sm:$0xff]
  %v21 = vld [vmem:[%s0 + $0x38] sm:$0xff]
  %v22 = vld [vmem:[%s0 + $0x40] sm:$0xff]
  %v23 = vld [vmem:[%s0 + $0x48] sm:$0xff]
  %v24 = vld [vmem:[%s0 + $0x50] sm:$0xff]
  %v25 = vld [vmem:[%s0 + $0x58] sm:$0xff]
  %v26 = vld [vmem:[%s0 + $0x60] sm:$0xff]
  %v27 = vld [vmem:[%s0 + $0x68] sm:$0xff]
  %v28 = vld [vmem:[%s0 + $0x70] sm:$0xff]
  %v29 = vld [vmem:[%s0 + $0x78] sm:$0xff]
  %v30 = vpack.c.bf16 %v18, %v14
  %v31 = vpack.c.bf16 %v19, %v15
  %v32 = vpack.c.bf16 %v20, %v16
  %v33 = vpack.c.bf16 %v21, %v17
  %v34 = vpack.c.bf16 %v26, %v22
  %v35 = vpack.c.bf16 %v27, %v23
  %v36 = vpack.c.bf16 %v28, %v24
  %v37 = vpack.c.bf16 %v29, %v25
  %v38 = vld [vmem:[%s1] sm:$0xff]
  %v39 = vld [vmem:[%s1 + $0x8] sm:$0xff]
  %v40 = vld [vmem:[%s1 + $0x10] sm:$0xff]
  %v41 = vld [vmem:[%s1 + $0x18] sm:$0xff]
  %v42 = vld [vmem:[%s1 + $0x20] sm:$0xff]
  %v43 = vld [vmem:[%s1 + $0x28] sm:$0xff]
  %v44 = vld [vmem:[%s1 + $0x30] sm:$0xff]
  %v45 = vld [vmem:[%s1 + $0x38] sm:$0xff]
  %v46 = vld [vmem:[%s1 + $0x40] sm:$0xff]
  %v47 = vld [vmem:[%s1 + $0x48] sm:$0xff]
  %v48 = vld [vmem:[%s1 + $0x50] sm:$0xff]
  %v49 = vld [vmem:[%s1 + $0x58] sm:$0xff]
  %v50 = vld [vmem:[%s1 + $0x60] sm:$0xff]
  %v51 = vld [vmem:[%s1 + $0x68] sm:$0xff]
  %v52 = vld [vmem:[%s1 + $0x70] sm:$0xff]
  %v53 = vld [vmem:[%s1 + $0x78] sm:$0xff]
  %v54 = vld [vmem:[%s1 + $0x80] sm:$0xff]
  %v55 = vld [vmem:[%s1 + $0x88] sm:$0xff]
  %v56 = vld [vmem:[%s1 + $0x90] sm:$0xff]
  %v57 = vld [vmem:[%s1 + $0x98] sm:$0xff]
  %v58 = vld [vmem:[%s1 + $0xa0] sm:$0xff]
  %v59 = vld [vmem:[%s1 + $0xa8] sm:$0xff]
  %v60 = vld [vmem:[%s1 + $0xb0] sm:$0xff]
  %v61 = vld [vmem:[%s1 + $0xb8] sm:$0xff]
  %v62 = vld [vmem:[%s1 + $0xc0] sm:$0xff]
  %v63 = vld [vmem:[%s1 + $0xc8] sm:$0xff]
  %v64 = vld [vmem:[%s1 + $0xd0] sm:$0xff]
  %v65 = vld [vmem:[%s1 + $0xd8] sm:$0xff]
  %v66 = vld [vmem:[%s1 + $0xe0] sm:$0xff]
  %v67 = vld [vmem:[%s1 + $0xe8] sm:$0xff]
  %v68 = vld [vmem:[%s1 + $0xf0] sm:$0xff]
  %v69 = vld [vmem:[%s1 + $0xf8] sm:$0xff]
  %v70 = vld [vmem:[%s1 + $0x100] sm:$0xff]
  %v71 = vld [vmem:[%s1 + $0x108] sm:$0xff]
  %v72 = vld [vmem:[%s1 + $0x110] sm:$0xff]
  %v73 = vld [vmem:[%s1 + $0x118] sm:$0xff]
  %v74 = vld [vmem:[%s1 + $0x120] sm:$0xff]
  %v75 = vld [vmem:[%s1 + $0x128] sm:$0xff]
  %v76 = vld [vmem:[%s1 + $0x130] sm:$0xff]
  %v77 = vld [vmem:[%s1 + $0x138] sm:$0xff]
  %v78 = vld [vmem:[%s1 + $0x140] sm:$0xff]
  %v79 = vld [vmem:[%s1 + $0x148] sm:$0xff]
  %v80 = vld [vmem:[%s1 + $0x150] sm:$0xff]
  %v81 = vld [vmem:[%s1 + $0x158] sm:$0xff]
  %v82 = vld [vmem:[%s1 + $0x160] sm:$0xff]
  %v83 = vld [vmem:[%s1 + $0x168] sm:$0xff]
  %v84 = vld [vmem:[%s1 + $0x170] sm:$0xff]
  %v85 = vld [vmem:[%s1 + $0x178] sm:$0xff]
  %v86 = vld [vmem:[%s1 + $0x180] sm:$0xff]
  %v87 = vld [vmem:[%s1 + $0x188] sm:$0xff]
  %v88 = vld [vmem:[%s1 + $0x190] sm:$0xff]
  %v89 = vld [vmem:[%s1 + $0x198] sm:$0xff]
  %v90 = vld [vmem:[%s1 + $0x1a0] sm:$0xff]
  %v91 = vld [vmem:[%s1 + $0x1a8] sm:$0xff]
  %v92 = vld [vmem:[%s1 + $0x1b0] sm:$0xff]
  %v93 = vld [vmem:[%s1 + $0x1b8] sm:$0xff]
  %v94 = vld [vmem:[%s1 + $0x1c0] sm:$0xff]
  %v95 = vld [vmem:[%s1 + $0x1c8] sm:$0xff]
  %v96 = vld [vmem:[%s1 + $0x1d0] sm:$0xff]
  %v97 = vld [vmem:[%s1 + $0x1d8] sm:$0xff]
  %v98 = vld [vmem:[%s1 + $0x1e0] sm:$0xff]
  %v99 = vld [vmem:[%s1 + $0x1e8] sm:$0xff]
  %v100 = vld [vmem:[%s1 + $0x1f0] sm:$0xff]
  %v101 = vld [vmem:[%s1 + $0x1f8] sm:$0xff]
  %v102 = vld [vmem:[%s2] sm:$0x3]
  %v104 = vlaneseq
  %v105 = vshrl.u32 %v104, 7
  %v106 = vsub.s32 0, %v105
  %v107 = vrot.slane %v102, %v106
  %v108 = vlaneseq
  %v109 = vshrl.u32 %v108, 7
  %v110 = vsub.s32 1, %v109
  %v111 = vrot.slane %v102, %v110
  %v178 = vunpack.c.l.b16 %v38
  %v179 = vunpack.c.h.b16 %v38
  %v180 = vunpack.c.l.b16 %v39
  %v181 = vunpack.c.h.b16 %v39
  %v182 = vunpack.c.l.b16 %v40
  %v183 = vunpack.c.h.b16 %v40
  %v184 = vunpack.c.l.b16 %v41
  %v185 = vunpack.c.h.b16 %v41
  %v186 = vunpack.c.l.b16 %v42
  %v187 = vunpack.c.h.b16 %v42
  %v188 = vunpack.c.l.b16 %v43
  %v189 = vunpack.c.h.b16 %v43
  %v190 = vunpack.c.l.b16 %v44
  %v191 = vunpack.c.h.b16 %v44
  %v192 = vunpack.c.l.b16 %v45
  %v193 = vunpack.c.h.b16 %v45
  %v194 = vunpack.c.l.b16 %v46
  %v195 = vunpack.c.h.b16 %v46
  %v196 = vunpack.c.l.b16 %v47
  %v197 = vunpack.c.h.b16 %v47
  %v198 = vunpack.c.l.b16 %v48
  %v199 = vunpack.c.h.b16 %v48
  %v200 = vunpack.c.l.b16 %v49
  %v201 = vunpack.c.h.b16 %v49
  %v202 = vunpack.c.l.b16 %v50
  %v203 = vunpack.c.h.b16 %v50
  %v204 = vunpack.c.l.b16 %v51
  %v205 = vunpack.c.h.b16 %v51
  %v206 = vunpack.c.l.b16 %v52
  %v207 = vunpack.c.h.b16 %v52
  %v208 = vunpack.c.l.b16 %v53
  %v209 = vunpack.c.h.b16 %v53
  %v210 = vunpack.c.l.b16 %v54
  %v211 = vunpack.c.h.b16 %v54
  %v212 = vunpack.c.l.b16 %v55
  %v213 = vunpack.c.h.b16 %v55
  %v214 = vunpack.c.l.b16 %v56
  %v215 = vunpack.c.h.b16 %v56
  %v216 = vunpack.c.l.b16 %v57
  %v217 = vunpack.c.h.b16 %v57
  %v218 = vunpack.c.l.b16 %v58
  %v219 = vunpack.c.h.b16 %v58
  %v220 = vunpack.c.l.b16 %v59
  %v221 = vunpack.c.h.b16 %v59
  %v222 = vunpack.c.l.b16 %v60
  %v223 = vunpack.c.h.b16 %v60
  %v224 = vunpack.c.l.b16 %v61
  %v225 = vunpack.c.h.b16 %v61
  %v226 = vunpack.c.l.b16 %v62
  %v227 = vunpack.c.h.b16 %v62
  %v228 = vunpack.c.l.b16 %v63
  %v229 = vunpack.c.h.b16 %v63
  %v230 = vunpack.c.l.b16 %v64
  %v231 = vunpack.c.h.b16 %v64
  %v232 = vunpack.c.l.b16 %v65
  %v233 = vunpack.c.h.b16 %v65
  %v234 = vunpack.c.l.b16 %v66
  %v235 = vunpack.c.h.b16 %v66
  %v236 = vunpack.c.l.b16 %v67
  %v237 = vunpack.c.h.b16 %v67
  %v238 = vunpack.c.l.b16 %v68
  %v239 = vunpack.c.h.b16 %v68
  %v240 = vunpack.c.l.b16 %v69
  %v241 = vunpack.c.h.b16 %v69
  %v242 = vunpack.c.l.b16 %v70
  %v243 = vunpack.c.h.b16 %v70
  %v244 = vunpack.c.l.b16 %v71
  %v245 = vunpack.c.h.b16 %v71
  %v246 = vunpack.c.l.b16 %v72
  %v247 = vunpack.c.h.b16 %v72
  %v248 = vunpack.c.l.b16 %v73
  %v249 = vunpack.c.h.b16 %v73
  %v250 = vunpack.c.l.b16 %v74
  %v251 = vunpack.c.h.b16 %v74
  %v252 = vunpack.c.l.b16 %v75
  %v253 = vunpack.c.h.b16 %v75
  %v254 = vunpack.c.l.b16 %v76
  %v255 = vunpack.c.h.b16 %v76
  %v256 = vunpack.c.l.b16 %v77
  %v257 = vunpack.c.h.b16 %v77
  %v258 = vunpack.c.l.b16 %v78
  %v259 = vunpack.c.h.b16 %v78
  %v260 = vunpack.c.l.b16 %v79
  %v261 = vunpack.c.h.b16 %v79
  %v262 = vunpack.c.l.b16 %v80
  %v263 = vunpack.c.h.b16 %v80
  %v264 = vunpack.c.l.b16 %v81
  %v265 = vunpack.c.h.b16 %v81
  %v266 = vunpack.c.l.b16 %v82
  %v267 = vunpack.c.h.b16 %v82
  %v268 = vunpack.c.l.b16 %v83
  %v269 = vunpack.c.h.b16 %v83
  %v270 = vunpack.c.l.b16 %v84
  %v271 = vunpack.c.h.b16 %v84
  %v272 = vunpack.c.l.b16 %v85
  %v273 = vunpack.c.h.b16 %v85
  %v274 = vunpack.c.l.b16 %v86
  %v275 = vunpack.c.h.b16 %v86
  %v276 = vunpack.c.l.b16 %v87
  %v277 = vunpack.c.h.b16 %v87
  %v278 = vunpack.c.l.b16 %v88
  %v279 = vunpack.c.h.b16 %v88
  %v280 = vunpack.c.l.b16 %v89
  %v281 = vunpack.c.h.b16 %v89
  %v282 = vunpack.c.l.b16 %v90
  %v283 = vunpack.c.h.b16 %v90
  %v284 = vunpack.c.l.b16 %v91
  %v285 = vunpack.c.h.b16 %v91
  %v286 = vunpack.c.l.b16 %v92
  %v287 = vunpack.c.h.b16 %v92
  %v288 = vunpack.c.l.b16 %v93
  %v289 = vunpack.c.h.b16 %v93
  %v290 = vunpack.c.l.b16 %v94
  %v291 = vunpack.c.h.b16 %v94
  %v292 = vunpack.c.l.b16 %v95
  %v293 = vunpack.c.h.b16 %v95
  %v294 = vunpack.c.l.b16 %v96
  %v295 = vunpack.c.h.b16 %v96
  %v296 = vunpack.c.l.b16 %v97
  %v297 = vunpack.c.h.b16 %v97
  %v298 = vunpack.c.l.b16 %v98
  %v299 = vunpack.c.h.b16 %v98
  %v300 = vunpack.c.l.b16 %v99
  %v301 = vunpack.c.h.b16 %v99
  %v302 = vunpack.c.l.b16 %v100
  %v303 = vunpack.c.h.b16 %v100
  %v304 = vunpack.c.l.b16 %v101
  %v305 = vunpack.c.h.b16 %v101
  %v306 = vpack.c.b16 %v180, %v178
  %v307 = vpack.c.b16 %v181, %v179
  %v308 = vpack.c.b16 %v184, %v182
  %v309 = vpack.c.b16 %v185, %v183
  %v310 = vpack.c.b16 %v188, %v186
  %v311 = vpack.c.b16 %v189, %v187
  %v312 = vpack.c.b16 %v192, %v190
  %v313 = vpack.c.b16 %v193, %v191
  %v314 = vpack.c.b16 %v196, %v194
  %v315 = vpack.c.b16 %v197, %v195
  %v316 = vpack.c.b16 %v200, %v198
  %v317 = vpack.c.b16 %v201, %v199
  %v318 = vpack.c.b16 %v204, %v202
  %v319 = vpack.c.b16 %v205, %v203
  %v320 = vpack.c.b16 %v208, %v206
  %v321 = vpack.c.b16 %v209, %v207
  %v322 = vpack.c.b16 %v212, %v210
  %v323 = vpack.c.b16 %v213, %v211
  %v324 = vpack.c.b16 %v216, %v214
  %v325 = vpack.c.b16 %v217, %v215
  %v326 = vpack.c.b16 %v220, %v218
  %v327 = vpack.c.b16 %v221, %v219
  %v328 = vpack.c.b16 %v224, %v222
  %v329 = vpack.c.b16 %v225, %v223
  %v330 = vpack.c.b16 %v228, %v226
  %v331 = vpack.c.b16 %v229, %v227
  %v332 = vpack.c.b16 %v232, %v230
  %v333 = vpack.c.b16 %v233, %v231
  %v334 = vpack.c.b16 %v236, %v234
  %v335 = vpack.c.b16 %v237, %v235
  %v336 = vpack.c.b16 %v240, %v238
  %v337 = vpack.c.b16 %v241, %v239
  %v338 = vpack.c.b16 %v244, %v242
  %v339 = vpack.c.b16 %v245, %v243
  %v340 = vpack.c.b16 %v248, %v246
  %v341 = vpack.c.b16 %v249, %v247
  %v342 = vpack.c.b16 %v252, %v250
  %v343 = vpack.c.b16 %v253, %v251
  %v344 = vpack.c.b16 %v256, %v254
  %v345 = vpack.c.b16 %v257, %v255
  %v346 = vpack.c.b16 %v260, %v258
  %v347 = vpack.c.b16 %v261, %v259
  %v348 = vpack.c.b16 %v264, %v262
  %v349 = vpack.c.b16 %v265, %v263
  %v350 = vpack.c.b16 %v268, %v266
  %v351 = vpack.c.b16 %v269, %v267
  %v352 = vpack.c.b16 %v272, %v270
  %v353 = vpack.c.b16 %v273, %v271
  %v354 = vpack.c.b16 %v276, %v274
  %v355 = vpack.c.b16 %v277, %v275
  %v356 = vpack.c.b16 %v280, %v278
  %v357 = vpack.c.b16 %v281, %v279
  %v358 = vpack.c.b16 %v284, %v282
  %v359 = vpack.c.b16 %v285, %v283
  %v360 = vpack.c.b16 %v288, %v286
  %v361 = vpack.c.b16 %v289, %v287
  %v362 = vpack.c.b16 %v292, %v290
  %v363 = vpack.c.b16 %v293, %v291
  %v364 = vpack.c.b16 %v296, %v294
  %v365 = vpack.c.b16 %v297, %v295
  %v366 = vpack.c.b16 %v300, %v298
  %v367 = vpack.c.b16 %v301, %v299
  %v368 = vpack.c.b16 %v304, %v302
  %v369 = vpack.c.b16 %v305, %v303
  %434 = vmatprep.subr.bf16.mxu0 %v307
  %435 = vmatpush1.bf16.msra.mxu0 %v306
  %436 = vmatprep.subr.bf16.mxu0 %v309
  %437 = vmatpush1.bf16.msra.mxu0 %v308
  %438 = vmatprep.subr.bf16.mxu0 %v311
  %439 = vmatpush1.bf16.msra.mxu0 %v310
  %440 = vmatprep.subr.bf16.mxu0 %v313
  %441 = vmatpush1.bf16.msra.mxu0 %v312
  %442 = vmatprep.subr.bf16.mxu0 %v315
  %443 = vmatpush1.bf16.msra.mxu0 %v314
  %444 = vmatprep.subr.bf16.mxu0 %v317
  %445 = vmatpush1.bf16.msra.mxu0 %v316
  %446 = vmatprep.subr.bf16.mxu0 %v319
  %447 = vmatpush1.bf16.msra.mxu0 %v318
  %448 = vmatprep.subr.bf16.mxu0 %v321
  %449 = vmatpush1.bf16.msra.mxu0 %v320
  %450 = vmatprep.subr.bf16.mxu0 %v323
  %451 = vmatpush1.bf16.msra.mxu0 %v322
  %452 = vmatprep.subr.bf16.mxu0 %v325
  %453 = vmatpush1.bf16.msra.mxu0 %v324
  %454 = vmatprep.subr.bf16.mxu0 %v327
  %455 = vmatpush1.bf16.msra.mxu0 %v326
  %456 = vmatprep.subr.bf16.mxu0 %v329
  %457 = vmatpush1.bf16.msra.mxu0 %v328
  %458 = vmatprep.subr.bf16.mxu0 %v331
  %459 = vmatpush1.bf16.msra.mxu0 %v330
  %460 = vmatprep.subr.bf16.mxu0 %v333
  %461 = vmatpush1.bf16.msra.mxu0 %v332
  %462 = vmatprep.subr.bf16.mxu0 %v335
  %463 = vmatpush1.bf16.msra.mxu0 %v334
  %464 = vmatprep.subr.bf16.mxu0 %v337
  %465 = vmatpush1.bf16.msra.mxu0 %v336
  %466 = vmatprep.mubr.bf16.mxu0 %v31
  %467 = vmatmul.mubr.bf16.gmra.mrb[0].mxu0 %v30
  %v468 = vpop.f32.mrb[0].mxu0
  %v469 = vadd.f32 %v107, %v468
  %v470 = vpop.f32.mrb[0].mxu0
  %v471 = vadd.f32 %v111, %v470
  %v472 = vpop.f32.mrb[0].mxu0
  %v473 = vadd.f32 %v107, %v472
  %v474 = vpop.f32.mrb[0].mxu0
  %v475 = vadd.f32 %v111, %v474
  %476 = vmatprep.mubr.bf16.mxu0 %v35
  %477 = vmatmul.mubr.bf16.gmra.mrb[0].mxu0 %v34
  %v478 = vpop.f32.mrb[0].mxu0
  %v479 = vadd.f32 %v107, %v478
  %v480 = vpop.f32.mrb[0].mxu0
  %v481 = vadd.f32 %v111, %v480
  %v482 = vpop.f32.mrb[0].mxu0
  %v483 = vadd.f32 %v107, %v482
  %v484 = vpop.f32.mrb[0].mxu0
  %v485 = vadd.f32 %v111, %v484
  %486 = vdwg.mxu0
  %487 = vmatprep.subr.bf16.mxu0 %v339
  %488 = vmatpush1.bf16.msra.mxu0 %v338
  %489 = vmatprep.subr.bf16.mxu0 %v341
  %490 = vmatpush1.bf16.msra.mxu0 %v340
  %491 = vmatprep.subr.bf16.mxu0 %v343
  %492 = vmatpush1.bf16.msra.mxu0 %v342
  %493 = vmatprep.subr.bf16.mxu0 %v345
  %494 = vmatpush1.bf16.msra.mxu0 %v344
  %495 = vmatprep.subr.bf16.mxu0 %v347
  %496 = vmatpush1.bf16.msra.mxu0 %v346
  %497 = vmatprep.subr.bf16.mxu0 %v349
  %498 = vmatpush1.bf16.msra.mxu0 %v348
  %499 = vmatprep.subr.bf16.mxu0 %v351
  %500 = vmatpush1.bf16.msra.mxu0 %v350
  %501 = vmatprep.subr.bf16.mxu0 %v353
  %502 = vmatpush1.bf16.msra.mxu0 %v352
  %503 = vmatprep.subr.bf16.mxu0 %v355
  %504 = vmatpush1.bf16.msra.mxu0 %v354
  %505 = vmatprep.subr.bf16.mxu0 %v357
  %506 = vmatpush1.bf16.msra.mxu0 %v356
  %507 = vmatprep.subr.bf16.mxu0 %v359
  %508 = vmatpush1.bf16.msra.mxu0 %v358
  %509 = vmatprep.subr.bf16.mxu0 %v361
  %510 = vmatpush1.bf16.msra.mxu0 %v360
  %511 = vmatprep.subr.bf16.mxu0 %v363
  %512 = vmatpush1.bf16.msra.mxu0 %v362
  %513 = vmatprep.subr.bf16.mxu0 %v365
  %514 = vmatpush1.bf16.msra.mxu0 %v364
  %515 = vmatprep.subr.bf16.mxu0 %v367
  %516 = vmatpush1.bf16.msra.mxu0 %v366
  %517 = vmatprep.subr.bf16.mxu0 %v369
  %518 = vmatpush1.bf16.msra.mxu0 %v368
  %519 = vmatprep.mubr.bf16.mxu0 %v33
  %520 = vmatmul.mubr.bf16.gmra.mrb[0].mxu0 %v32
  %v521 = vpop.f32.mrb[0].mxu0
  %v522 = vadd.f32 %v469, %v521
  %v523 = vpop.f32.mrb[0].mxu0
  %v524 = vadd.f32 %v471, %v523
  %v525 = vpop.f32.mrb[0].mxu0
  %v526 = vadd.f32 %v473, %v525
  %v527 = vpop.f32.mrb[0].mxu0
  %v528 = vadd.f32 %v475, %v527
  %529 = vmatprep.mubr.bf16.mxu0 %v37
  %530 = vmatmul.mubr.bf16.gmra.mrb[0].mxu0 %v36
  %v531 = vpop.f32.mrb[0].mxu0
  %v532 = vadd.f32 %v479, %v531
  %v533 = vpop.f32.mrb[0].mxu0
  %v534 = vadd.f32 %v481, %v533
  %v535 = vpop.f32.mrb[0].mxu0
  %v536 = vadd.f32 %v483, %v535
  %v537 = vpop.f32.mrb[0].mxu0
  %v538 = vadd.f32 %v485, %v537
  %539 = vdwg.mxu0
  %v540 = vmax.f32 %v522, 0.0
  %v541 = vmax.f32 %v524, 0.0
  %v542 = vmax.f32 %v526, 0.0
  %v543 = vmax.f32 %v528, 0.0
  %v544 = vmax.f32 %v532, 0.0
  %v545 = vmax.f32 %v534, 0.0
  %v546 = vmax.f32 %v536, 0.0
  %v547 = vmax.f32 %v538, 0.0
  %548 = vst [vmem:[%s3] sm:$0xff] %v540
  %549 = vst [vmem:[%s3 + $0x8] sm:$0xff] %v541
  %550 = vst [vmem:[%s3 + $0x10] sm:$0xff] %v542
  %551 = vst [vmem:[%s3 + $0x18] sm:$0xff] %v543
  %552 = vst [vmem:[%s3 + $0x20] sm:$0xff] %v544
  %553 = vst [vmem:[%s3 + $0x28] sm:$0xff] %v545
  %554 = vst [vmem:[%s3 + $0x30] sm:$0xff] %v546
  %555 = vst [vmem:[%s3 + $0x38] sm:$0xff] %v547
  // Predicated region
  $region14: #{detector_backbone_with_fpn.10} parent=0 // pred_check
    _
  $region15: #{detector_backbone_with_fpn.10} parent=0 // pred_check_branch
    %557 = sbr.rel (0) target = $region17
  $region16: #{detector_backbone_with_fpn.10} parent=0 // pred_region
    _
  $region17: #{detector_backbone_with_fpn.10} parent=0 // pred_fallthru
    _
  // Predicated region
  $region18: #{detector_backbone_with_fpn.10} parent=0 // pred_check
    _
  $region19: #{detector_backbone_with_fpn.10} parent=0 // pred_check_branch
    %559 = sbr.rel (0) target = $region21
  $region20: #{detector_backbone_with_fpn.10} parent=0 // pred_region
    _
  $region21: #{detector_backbone_with_fpn.10} parent=0 // pred_fallthru
    _

// kernel: detector_backbone_with_fpn.12
$region0: #{detector_backbone_with_fpn.12}
  #allocation0 [shape = 'u32[]', space=smem, size = 0x4, offset = 0x4, fixed_abs, tag = 'smem constant byte address 0x4 - core index']
  #allocation1 [shape = 'u32[144,128]{1,0:T(1,128)}', space=vmem, size = 0x12000, scoped, tag = 'internal scratch']
  %s0 = inlined_call_operand.vmem [shape: f32[8,512], index: 0, kind: input, shape index: {}]
  %s1 = inlined_call_operand.vmem [shape: bf16[512,128], index: 1, kind: input, shape index: {}]
  %s2 = inlined_call_operand.vmem [shape: f32[1,128], index: 2, kind: input, shape index: {}]
  %s3 = inlined_call_operand.vmem [shape: f32[8,128], index: 3, kind: output, shape index: {}]
  %s4 = sld [smem:[#allocation0]]
  $region22: #{detector_backbone_with_fpn.12} parent=0
    _
  %s6 = ssub.s32 1, %s4
  %s7 = scalar_select 0, %s6, %s4
  // Predicated region
  $region2: #{detector_backbone_with_fpn.12} parent=0 // pred_check
    _
  $region3: #{detector_backbone_with_fpn.12} parent=0 // pred_check_branch
    %9 = sbr.rel (0) target = $region5
  $region4: #{detector_backbone_with_fpn.12} parent=0 // pred_region
    _
  $region5: #{detector_backbone_with_fpn.12} parent=0 // pred_fallthru
    _
  // Predicated region
  $region6: #{detector_backbone_with_fpn.12} parent=0 // pred_check
    _
  $region7: #{detector_backbone_with_fpn.12} parent=0 // pred_check_branch
    %11 = sbr.rel (0) target = $region9
  $region8: #{detector_backbone_with_fpn.12} parent=0 // pred_region
    _
  $region9: #{detector_backbone_with_fpn.12} parent=0 // pred_fallthru
    _
  // Predicated region
  $region10: #{detector_backbone_with_fpn.12} parent=0 // pred_check
    _
  $region11: #{detector_backbone_with_fpn.12} parent=0 // pred_check_branch
    %13 = sbr.rel (0) target = $region13
  $region12: #{detector_backbone_with_fpn.12} parent=0 // pred_region
    _
  $region13: #{detector_backbone_with_fpn.12} parent=0 // pred_fallthru
    _
  %v15 = vld [vmem:[%s0] sm:$0xff]
  %v16 = vld [vmem:[%s0 + $0x8] sm:$0xff]
  %v17 = vld [vmem:[%s0 + $0x10] sm:$0xff]
  %v18 = vld [vmem:[%s0 + $0x18] sm:$0xff]
  %v19 = vpack.c.bf16 %v15, %v15
  %v20 = vpack.c.bf16 %v16, %v16
  %v21 = vpack.c.bf16 %v17, %v17
  %v22 = vpack.c.bf16 %v18, %v18
  %v23 = vld [vmem:[%s1] sm:$0xf]
  %v24 = vld [vmem:[%s1 + $0x4] sm:$0xf]
  %v25 = vld [vmem:[%s1 + $0x8] sm:$0xf]
  %v26 = vld [vmem:[%s1 + $0xc] sm:$0xf]
  %v27 = vld [vmem:[%s1 + $0x10] sm:$0xf]
  %v28 = vld [vmem:[%s1 + $0x14] sm:$0xf]
  %v29 = vld [vmem:[%s1 + $0x18] sm:$0xf]
  %v30 = vld [vmem:[%s1 + $0x1c] sm:$0xf]
  %v31 = vld [vmem:[%s1 + $0x20] sm:$0xf]
  %v32 = vld [vmem:[%s1 + $0x24] sm:$0xf]
  %v33 = vld [vmem:[%s1 + $0x28] sm:$0xf]
  %v34 = vld [vmem:[%s1 + $0x2c] sm:$0xf]
  %v35 = vld [vmem:[%s1 + $0x30] sm:$0xf]
  %v36 = vld [vmem:[%s1 + $0x34] sm:$0xf]
  %v37 = vld [vmem:[%s1 + $0x38] sm:$0xf]
  %v38 = vld [vmem:[%s1 + $0x3c] sm:$0xf]
  %v39 = vld [vmem:[%s1 + $0x40] sm:$0xf]
  %v40 = vld [vmem:[%s1 + $0x44] sm:$0xf]
  %v41 = vld [vmem:[%s1 + $0x48] sm:$0xf]
  %v42 = vld [vmem:[%s1 + $0x4c] sm:$0xf]
  %v43 = vld [vmem:[%s1 + $0x50] sm:$0xf]
  %v44 = vld [vmem:[%s1 + $0x54] sm:$0xf]
  %v45 = vld [vmem:[%s1 + $0x58] sm:$0xf]
  %v46 = vld [vmem:[%s1 + $0x5c] sm:$0xf]
  %v47 = vld [vmem:[%s1 + $0x60] sm:$0xf]
  %v48 = vld [vmem:[%s1 + $0x64] sm:$0xf]
  %v49 = vld [vmem:[%s1 + $0x68] sm:$0xf]
  %v50 = vld [vmem:[%s1 + $0x6c] sm:$0xf]
  %v51 = vld [vmem:[%s1 + $0x70] sm:$0xf]
  %v52 = vld [vmem:[%s1 + $0x74] sm:$0xf]
  %v53 = vld [vmem:[%s1 + $0x78] sm:$0xf]
  %v54 = vld [vmem:[%s1 + $0x7c] sm:$0xf]
  %v55 = vld [vmem:[%s1 + $0x80] sm:$0xf]
  %v56 = vld [vmem:[%s1 + $0x84] sm:$0xf]
  %v57 = vld [vmem:[%s1 + $0x88] sm:$0xf]
  %v58 = vld [vmem:[%s1 + $0x8c] sm:$0xf]
  %v59 = vld [vmem:[%s1 + $0x90] sm:$0xf]
  %v60 = vld [vmem:[%s1 + $0x94] sm:$0xf]
  %v61 = vld [vmem:[%s1 + $0x98] sm:$0xf]
  %v62 = vld [vmem:[%s1 + $0x9c] sm:$0xf]
  %v63 = vld [vmem:[%s1 + $0xa0] sm:$0xf]
  %v64 = vld [vmem:[%s1 + $0xa4] sm:$0xf]
  %v65 = vld [vmem:[%s1 + $0xa8] sm:$0xf]
  %v66 = vld [vmem:[%s1 + $0xac] sm:$0xf]
  %v67 = vld [vmem:[%s1 + $0xb0] sm:$0xf]
  %v68 = vld [vmem:[%s1 + $0xb4] sm:$0xf]
  %v69 = vld [vmem:[%s1 + $0xb8] sm:$0xf]
  %v70 = vld [vmem:[%s1 + $0xbc] sm:$0xf]
  %v71 = vld [vmem:[%s1 + $0xc0] sm:$0xf]
  %v72 = vld [vmem:[%s1 + $0xc4] sm:$0xf]
  %v73 = vld [vmem:[%s1 + $0xc8] sm:$0xf]
  %v74 = vld [vmem:[%s1 + $0xcc] sm:$0xf]
  %v75 = vld [vmem:[%s1 + $0xd0] sm:$0xf]
  %v76 = vld [vmem:[%s1 + $0xd4] sm:$0xf]
  %v77 = vld [vmem:[%s1 + $0xd8] sm:$0xf]
  %v78 = vld [vmem:[%s1 + $0xdc] sm:$0xf]
  %v79 = vld [vmem:[%s1 + $0xe0] sm:$0xf]
  %v80 = vld [vmem:[%s1 + $0xe4] sm:$0xf]
  %v81 = vld [vmem:[%s1 + $0xe8] sm:$0xf]
  %v82 = vld [vmem:[%s1 + $0xec] sm:$0xf]
  %v83 = vld [vmem:[%s1 + $0xf0] sm:$0xf]
  %v84 = vld [vmem:[%s1 + $0xf4] sm:$0xf]
  %v85 = vld [vmem:[%s1 + $0xf8] sm:$0xf]
  %v86 = vld [vmem:[%s1 + $0xfc] sm:$0xf]
  %v87 = vld [vmem:[%s2] sm:$0x1]
  %v89 = vlaneseq
  %v90 = vshrl.u32 %v89, 7
  %v91 = vsub.s32 0, %v90
  %v92 = vrot.slane %v87, %v91
  %v158 = vunpack.c.l.b16 %v23
  %v159 = vunpack.c.l.b16 %v24
  %v160 = vunpack.c.l.b16 %v25
  %v161 = vunpack.c.l.b16 %v26
  %v162 = vunpack.c.l.b16 %v27
  %v163 = vunpack.c.l.b16 %v28
  %v164 = vunpack.c.l.b16 %v29
  %v165 = vunpack.c.l.b16 %v30
  %v166 = vunpack.c.l.b16 %v31
  %v167 = vunpack.c.l.b16 %v32
  %v168 = vunpack.c.l.b16 %v33
  %v169 = vunpack.c.l.b16 %v34
  %v170 = vunpack.c.l.b16 %v35
  %v171 = vunpack.c.l.b16 %v36
  %v172 = vunpack.c.l.b16 %v37
  %v173 = vunpack.c.l.b16 %v38
  %v174 = vunpack.c.l.b16 %v39
  %v175 = vunpack.c.l.b16 %v40
  %v176 = vunpack.c.l.b16 %v41
  %v177 = vunpack.c.l.b16 %v42
  %v178 = vunpack.c.l.b16 %v43
  %v179 = vunpack.c.l.b16 %v44
  %v180 = vunpack.c.l.b16 %v45
  %v181 = vunpack.c.l.b16 %v46
  %v182 = vunpack.c.l.b16 %v47
  %v183 = vunpack.c.l.b16 %v48
  %v184 = vunpack.c.l.b16 %v49
  %v185 = vunpack.c.l.b16 %v50
  %v186 = vunpack.c.l.b16 %v51
  %v187 = vunpack.c.l.b16 %v52
  %v188 = vunpack.c.l.b16 %v53
  %v189 = vunpack.c.l.b16 %v54
  %v190 = vunpack.c.l.b16 %v55
  %v191 = vunpack.c.l.b16 %v56
  %v192 = vunpack.c.l.b16 %v57
  %v193 = vunpack.c.l.b16 %v58
  %v194 = vunpack.c.l.b16 %v59
  %v195 = vunpack.c.l.b16 %v60
  %v196 = vunpack.c.l.b16 %v61
  %v197 = vunpack.c.l.b16 %v62
  %v198 = vunpack.c.l.b16 %v63
  %v199 = vunpack.c.l.b16 %v64
  %v200 = vunpack.c.l.b16 %v65
  %v201 = vunpack.c.l.b16 %v66
  %v202 = vunpack.c.l.b16 %v67
  %v203 = vunpack.c.l.b16 %v68
  %v204 = vunpack.c.l.b16 %v69
  %v205 = vunpack.c.l.b16 %v70
  %v206 = vunpack.c.l.b16 %v71
  %v207 = vunpack.c.l.b16 %v72
  %v208 = vunpack.c.l.b16 %v73
  %v209 = vunpack.c.l.b16 %v74
  %v210 = vunpack.c.l.b16 %v75
  %v211 = vunpack.c.l.b16 %v76
  %v212 = vunpack.c.l.b16 %v77
  %v213 = vunpack.c.l.b16 %v78
  %v214 = vunpack.c.l.b16 %v79
  %v215 = vunpack.c.l.b16 %v80
  %v216 = vunpack.c.l.b16 %v81
  %v217 = vunpack.c.l.b16 %v82
  %v218 = vunpack.c.l.b16 %v83
  %v219 = vunpack.c.l.b16 %v84
  %v220 = vunpack.c.l.b16 %v85
  %v221 = vunpack.c.l.b16 %v86
  %v222 = vpack.c.b16 %v159, %v158
  %v223 = vpack.c.b16 %v161, %v160
  %v224 = vpack.c.b16 %v163, %v162
  %v225 = vpack.c.b16 %v165, %v164
  %v226 = vpack.c.b16 %v167, %v166
  %v227 = vpack.c.b16 %v169, %v168
  %v228 = vpack.c.b16 %v171, %v170
  %v229 = vpack.c.b16 %v173, %v172
  %v230 = vpack.c.b16 %v175, %v174
  %v231 = vpack.c.b16 %v177, %v176
  %v232 = vpack.c.b16 %v179, %v178
  %v233 = vpack.c.b16 %v181, %v180
  %v234 = vpack.c.b16 %v183, %v182
  %v235 = vpack.c.b16 %v185, %v184
  %v236 = vpack.c.b16 %v187, %v186
  %v237 = vpack.c.b16 %v189, %v188
  %v238 = vpack.c.b16 %v191, %v190
  %v239 = vpack.c.b16 %v193, %v192
  %v240 = vpack.c.b16 %v195, %v194
  %v241 = vpack.c.b16 %v197, %v196
  %v242 = vpack.c.b16 %v199, %v198
  %v243 = vpack.c.b16 %v201, %v200
  %v244 = vpack.c.b16 %v203, %v202
  %v245 = vpack.c.b16 %v205, %v204
  %v246 = vpack.c.b16 %v207, %v206
  %v247 = vpack.c.b16 %v209, %v208
  %v248 = vpack.c.b16 %v211, %v210
  %v249 = vpack.c.b16 %v213, %v212
  %v250 = vpack.c.b16 %v215, %v214
  %v251 = vpack.c.b16 %v217, %v216
  %v252 = vpack.c.b16 %v219, %v218
  %v253 = vpack.c.b16 %v221, %v220
  %286 = vmatprep.subr.bf16.mxu0 0
  %287 = vmatpush1.bf16.msra.mxu0 %v222
  %288 = vmatprep.subr.bf16.mxu0 0
  %289 = vmatpush1.bf16.msra.mxu0 %v223
  %290 = vmatprep.subr.bf16.mxu0 0
  %291 = vmatpush1.bf16.msra.mxu0 %v224
  %292 = vmatprep.subr.bf16.mxu0 0
  %293 = vmatpush1.bf16.msra.mxu0 %v225
  %294 = vmatprep.subr.bf16.mxu0 0
  %295 = vmatpush1.bf16.msra.mxu0 %v226
  %296 = vmatprep.subr.bf16.mxu0 0
  %297 = vmatpush1.bf16.msra.mxu0 %v227
  %298 = vmatprep.subr.bf16.mxu0 0
  %299 = vmatpush1.bf16.msra.mxu0 %v228
  %300 = vmatprep.subr.bf16.mxu0 0
  %301 = vmatpush1.bf16.msra.mxu0 %v229
  %302 = vmatprep.subr.bf16.mxu0 0
  %303 = vmatpush1.bf16.msra.mxu0 %v230
  %304 = vmatprep.subr.bf16.mxu0 0
  %305 = vmatpush1.bf16.msra.mxu0 %v231
  %306 = vmatprep.subr.bf16.mxu0 0
  %307 = vmatpush1.bf16.msra.mxu0 %v232
  %308 = vmatprep.subr.bf16.mxu0 0
  %309 = vmatpush1.bf16.msra.mxu0 %v233
  %310 = vmatprep.subr.bf16.mxu0 0
  %311 = vmatpush1.bf16.msra.mxu0 %v234
  %312 = vmatprep.subr.bf16.mxu0 0
  %313 = vmatpush1.bf16.msra.mxu0 %v235
  %314 = vmatprep.subr.bf16.mxu0 0
  %315 = vmatpush1.bf16.msra.mxu0 %v236
  %316 = vmatprep.subr.bf16.mxu0 0
  %317 = vmatpush1.bf16.msra.mxu0 %v237
  %318 = vmatprep.mubr.bf16.mxu0 %v20
  %319 = vmatmul.mubr.bf16.gmra.mrb[0].mxu0 %v19
  %v320 = vpop.f32.mrb[0].mxu0
  %v321 = vadd.f32 %v92, %v320
  %v322 = vpop.f32.mrb[0].mxu0
  %v323 = vpop.f32.mrb[0].mxu0
  %v324 = vpop.f32.mrb[0].mxu0
  %325 = vdwg.mxu0
  %326 = vmatprep.subr.bf16.mxu0 0
  %327 = vmatpush1.bf16.msra.mxu0 %v238
  %328 = vmatprep.subr.bf16.mxu0 0
  %329 = vmatpush1.bf16.msra.mxu0 %v239
  %330 = vmatprep.subr.bf16.mxu0 0
  %331 = vmatpush1.bf16.msra.mxu0 %v240
  %332 = vmatprep.subr.bf16.mxu0 0
  %333 = vmatpush1.bf16.msra.mxu0 %v241
  %334 = vmatprep.subr.bf16.mxu0 0
  %335 = vmatpush1.bf16.msra.mxu0 %v242
  %336 = vmatprep.subr.bf16.mxu0 0
  %337 = vmatpush1.bf16.msra.mxu0 %v243
  %338 = vmatprep.subr.bf16.mxu0 0
  %339 = vmatpush1.bf16.msra.mxu0 %v244
  %340 = vmatprep.subr.bf16.mxu0 0
  %341 = vmatpush1.bf16.msra.mxu0 %v245
  %342 = vmatprep.subr.bf16.mxu0 0
  %343 = vmatpush1.bf16.msra.mxu0 %v246
  %344 = vmatprep.subr.bf16.mxu0 0
  %345 = vmatpush1.bf16.msra.mxu0 %v247
  %346 = vmatprep.subr.bf16.mxu0 0
  %347 = vmatpush1.bf16.msra.mxu0 %v248
  %348 = vmatprep.subr.bf16.mxu0 0
  %349 = vmatpush1.bf16.msra.mxu0 %v249
  %350 = vmatprep.subr.bf16.mxu0 0
  %351 = vmatpush1.bf16.msra.mxu0 %v250
  %352 = vmatprep.subr.bf16.mxu0 0
  %353 = vmatpush1.bf16.msra.mxu0 %v251
  %354 = vmatprep.subr.bf16.mxu0 0
  %355 = vmatpush1.bf16.msra.mxu0 %v252
  %356 = vmatprep.subr.bf16.mxu0 0
  %357 = vmatpush1.bf16.msra.mxu0 %v253
  %358 = vmatprep.mubr.bf16.mxu0 %v22
  %359 = vmatmul.mubr.bf16.gmra.mrb[0].mxu0 %v21
  %v360 = vpop.f32.mrb[0].mxu0
  %v361 = vadd.f32 %v321, %v360
  %v362 = vpop.f32.mrb[0].mxu0
  %v363 = vpop.f32.mrb[0].mxu0
  %v364 = vpop.f32.mrb[0].mxu0
  %365 = vdwg.mxu0
  %366 = vst [vmem:[%s3] sm:$0xff] %v361
  // Predicated region
  $region14: #{detector_backbone_with_fpn.12} parent=0 // pred_check
    _
  $region15: #{detector_backbone_with_fpn.12} parent=0 // pred_check_branch
    %368 = sbr.rel (0) target = $region17
  $region16: #{detector_backbone_with_fpn.12} parent=0 // pred_region
    _
  $region17: #{detector_backbone_with_fpn.12} parent=0 // pred_fallthru
    _
  // Predicated region
  $region18: #{detector_backbone_with_fpn.12} parent=0 // pred_check
    _
  $region19: #{detector_backbone_with_fpn.12} parent=0 // pred_check_branch
    %370 = sbr.rel (0) target = $region21
  $region20: #{detector_backbone_with_fpn.12} parent=0 // pred_region
    _
  $region21: #{detector_backbone_with_fpn.12} parent=0 // pred_fallthru
    _

// kernel: detector_backbone_with_fpn.11
$region0: #{detector_backbone_with_fpn.11}
  #allocation0 [shape = 'u32[]', space=smem, size = 0x4, offset = 0x4, fixed_abs, tag = 'smem constant byte address 0x4 - core index']
  #allocation1 [shape = 'u32[144,128]{1,0:T(1,128)}', space=vmem, size = 0x12000, scoped, tag = 'internal scratch']
  %s0 = inlined_call_operand.vmem [shape: f32[8,1024], index: 0, kind: input, shape index: {}]
  %s1 = inlined_call_operand.vmem [shape: bf16[1024,512], index: 1, kind: input, shape index: {}]
  %s2 = inlined_call_operand.vmem [shape: f32[1,512], index: 2, kind: input, shape index: {}]
  %s3 = inlined_call_operand.vmem [shape: f32[8,512], index: 3, kind: output, shape index: {}]
  %s4 = sld [smem:[#allocation0]]
  $region22: #{detector_backbone_with_fpn.11} parent=0
    _
  %s6 = ssub.s32 1, %s4
  %s7 = scalar_select 0, %s6, %s4
  // Predicated region
  $region2: #{detector_backbone_with_fpn.11} parent=0 // pred_check
    _
  $region3: #{detector_backbone_with_fpn.11} parent=0 // pred_check_branch
    %9 = sbr.rel (0) target = $region5
  $region4: #{detector_backbone_with_fpn.11} parent=0 // pred_region
    _
  $region5: #{detector_backbone_with_fpn.11} parent=0 // pred_fallthru
    _
  // Predicated region
  $region6: #{detector_backbone_with_fpn.11} parent=0 // pred_check
    _
  $region7: #{detector_backbone_with_fpn.11} parent=0 // pred_check_branch
    %11 = sbr.rel (0) target = $region9
  $region8: #{detector_backbone_with_fpn.11} parent=0 // pred_region
    _
  $region9: #{detector_backbone_with_fpn.11} parent=0 // pred_fallthru
    _
  // Predicated region
  $region10: #{detector_backbone_with_fpn.11} parent=0 // pred_check
    _
  $region11: #{detector_backbone_with_fpn.11} parent=0 // pred_check_branch
    %13 = sbr.rel (0) target = $region13
  $region12: #{detector_backbone_with_fpn.11} parent=0 // pred_region
    _
  $region13: #{detector_backbone_with_fpn.11} parent=0 // pred_fallthru
    _
  %v14 = vld [vmem:[%s0] sm:$0xff]
  %v15 = vld [vmem:[%s0 + $0x8] sm:$0xff]
  %v16 = vld [vmem:[%s0 + $0x10] sm:$0xff]
  %v17 = vld [vmem:[%s0 + $0x18] sm:$0xff]
  %v18 = vld [vmem:[%s0 + $0x20] sm:$0xff]
  %v19 = vld [vmem:[%s0 + $0x28] sm:$0xff]
  %v20 = vld [vmem:[%s0 + $0x30] sm:$0xff]
  %v21 = vld [vmem:[%s0 + $0x38] sm:$0xff]
  %v22 = vpack.c.bf16 %v14, %v14
  %v23 = vpack.c.bf16 %v15, %v15
  %v24 = vpack.c.bf16 %v16, %v16
  %v25 = vpack.c.bf16 %v17, %v17
  %v26 = vpack.c.bf16 %v18, %v18
  %v27 = vpack.c.bf16 %v19, %v19
  %v28 = vpack.c.bf16 %v20, %v20
  %v29 = vpack.c.bf16 %v21, %v21
  %v30 = vld [vmem:[%s1] sm:$0xff]
  %v31 = vld [vmem:[%s1 + $0x8] sm:$0xff]
  %v32 = vld [vmem:[%s1 + $0x10] sm:$0xff]
  %v33 = vld [vmem:[%s1 + $0x18] sm:$0xff]
  %v34 = vld [vmem:[%s1 + $0x20] sm:$0xff]
  %v35 = vld [vmem:[%s1 + $0x28] sm:$0xff]
  %v36 = vld [vmem:[%s1 + $0x30] sm:$0xff]
  %v37 = vld [vmem:[%s1 + $0x38] sm:$0xff]
  %v38 = vld [vmem:[%s1 + $0x40] sm:$0xff]
  %v39 = vld [vmem:[%s1 + $0x48] sm:$0xff]
  %v40 = vld [vmem:[%s1 + $0x50] sm:$0xff]
  %v41 = vld [vmem:[%s1 + $0x58] sm:$0xff]
  %v42 = vld [vmem:[%s1 + $0x60] sm:$0xff]
  %v43 = vld [vmem:[%s1 + $0x68] sm:$0xff]
  %v44 = vld [vmem:[%s1 + $0x70] sm:$0xff]
  %v45 = vld [vmem:[%s1 + $0x78] sm:$0xff]
  %v46 = vld [vmem:[%s1 + $0x80] sm:$0xff]
  %v47 = vld [vmem:[%s1 + $0x88] sm:$0xff]
  %v48 = vld [vmem:[%s1 + $0x90] sm:$0xff]
  %v49 = vld [vmem:[%s1 + $0x98] sm:$0xff]
  %v50 = vld [vmem:[%s1 + $0xa0] sm:$0xff]
  %v51 = vld [vmem:[%s1 + $0xa8] sm:$0xff]
  %v52 = vld [vmem:[%s1 + $0xb0] sm:$0xff]
  %v53 = vld [vmem:[%s1 + $0xb8] sm:$0xff]
  %v54 = vld [vmem:[%s1 + $0xc0] sm:$0xff]
  %v55 = vld [vmem:[%s1 + $0xc8] sm:$0xff]
  %v56 = vld [vmem:[%s1 + $0xd0] sm:$0xff]
  %v57 = vld [vmem:[%s1 + $0xd8] sm:$0xff]
  %v58 = vld [vmem:[%s1 + $0xe0] sm:$0xff]
  %v59 = vld [vmem:[%s1 + $0xe8] sm:$0xff]
  %v60 = vld [vmem:[%s1 + $0xf0] sm:$0xff]
  %v61 = vld [vmem:[%s1 + $0xf8] sm:$0xff]
  %v62 = vld [vmem:[%s1 + $0x100] sm:$0xff]
  %v63 = vld [vmem:[%s1 + $0x108] sm:$0xff]
  %v64 = vld [vmem:[%s1 + $0x110] sm:$0xff]
  %v65 = vld [vmem:[%s1 + $0x118] sm:$0xff]
  %v66 = vld [vmem:[%s1 + $0x120] sm:$0xff]
  %v67 = vld [vmem:[%s1 + $0x128] sm:$0xff]
  %v68 = vld [vmem:[%s1 + $0x130] sm:$0xff]
  %v69 = vld [vmem:[%s1 + $0x138] sm:$0xff]
  %v70 = vld [vmem:[%s1 + $0x140] sm:$0xff]
  %v71 = vld [vmem:[%s1 + $0x148] sm:$0xff]
  %v72 = vld [vmem:[%s1 + $0x150] sm:$0xff]
  %v73 = vld [vmem:[%s1 + $0x158] sm:$0xff]
  %v74 = vld [vmem:[%s1 + $0x160] sm:$0xff]
  %v75 = vld [vmem:[%s1 + $0x168] sm:$0xff]
  %v76 = vld [vmem:[%s1 + $0x170] sm:$0xff]
  %v77 = vld [vmem:[%s1 + $0x178] sm:$0xff]
  %v78 = vld [vmem:[%s1 + $0x180] sm:$0xff]
  %v79 = vld [vmem:[%s1 + $0x188] sm:$0xff]
  %v80 = vld [vmem:[%s1 + $0x190] sm:$0xff]
  %v81 = vld [vmem:[%s1 + $0x198] sm:$0xff]
  %v82 = vld [vmem:[%s1 + $0x1a0] sm:$0xff]
  %v83 = vld [vmem:[%s1 + $0x1a8] sm:$0xff]
  %v84 = vld [vmem:[%s1 + $0x1b0] sm:$0xff]
  %v85 = vld [vmem:[%s1 + $0x1b8] sm:$0xff]
  %v86 = vld [vmem:[%s1 + $0x1c0] sm:$0xff]
  %v87 = vld [vmem:[%s1 + $0x1c8] sm:$0xff]
  %v88 = vld [vmem:[%s1 + $0x1d0] sm:$0xff]
  %v89 = vld [vmem:[%s1 + $0x1d8] sm:$0xff]
  %v90 = vld [vmem:[%s1 + $0x1e0] sm:$0xff]
  %v91 = vld [vmem:[%s1 + $0x1e8] sm:$0xff]
  %v92 = vld [vmem:[%s1 + $0x1f0] sm:$0xff]
  %v93 = vld [vmem:[%s1 + $0x1f8] sm:$0xff]
  %v94 = vld [vmem:[%s1 + $0x200] sm:$0xff]
  %v95 = vld [vmem:[%s1 + $0x208] sm:$0xff]
  %v96 = vld [vmem:[%s1 + $0x210] sm:$0xff]
  %v97 = vld [vmem:[%s1 + $0x218] sm:$0xff]
  %v98 = vld [vmem:[%s1 + $0x220] sm:$0xff]
  %v99 = vld [vmem:[%s1 + $0x228] sm:$0xff]
  %v100 = vld [vmem:[%s1 + $0x230] sm:$0xff]
  %v101 = vld [vmem:[%s1 + $0x238] sm:$0xff]
  %v102 = vld [vmem:[%s1 + $0x240] sm:$0xff]
  %v103 = vld [vmem:[%s1 + $0x248] sm:$0xff]
  %v104 = vld [vmem:[%s1 + $0x250] sm:$0xff]
  %v105 = vld [vmem:[%s1 + $0x258] sm:$0xff]
  %v106 = vld [vmem:[%s1 + $0x260] sm:$0xff]
  %v107 = vld [vmem:[%s1 + $0x268] sm:$0xff]
  %v108 = vld [vmem:[%s1 + $0x270] sm:$0xff]
  %v109 = vld [vmem:[%s1 + $0x278] sm:$0xff]
  %v110 = vld [vmem:[%s1 + $0x280] sm:$0xff]
  %v111 = vld [vmem:[%s1 + $0x288] sm:$0xff]
  %v112 = vld [vmem:[%s1 + $0x290] sm:$0xff]
  %v113 = vld [vmem:[%s1 + $0x298] sm:$0xff]
  %v114 = vld [vmem:[%s1 + $0x2a0] sm:$0xff]
  %v115 = vld [vmem:[%s1 + $0x2a8] sm:$0xff]
  %v116 = vld [vmem:[%s1 + $0x2b0] sm:$0xff]
  %v117 = vld [vmem:[%s1 + $0x2b8] sm:$0xff]
  %v118 = vld [vmem:[%s1 + $0x2c0] sm:$0xff]
  %v119 = vld [vmem:[%s1 + $0x2c8] sm:$0xff]
  %v120 = vld [vmem:[%s1 + $0x2d0] sm:$0xff]
  %v121 = vld [vmem:[%s1 + $0x2d8] sm:$0xff]
  %v122 = vld [vmem:[%s1 + $0x2e0] sm:$0xff]
  %v123 = vld [vmem:[%s1 + $0x2e8] sm:$0xff]
  %v124 = vld [vmem:[%s1 + $0x2f0] sm:$0xff]
  %v125 = vld [vmem:[%s1 + $0x2f8] sm:$0xff]
  %v126 = vld [vmem:[%s1 + $0x300] sm:$0xff]
  %v127 = vld [vmem:[%s1 + $0x308] sm:$0xff]
  %v128 = vld [vmem:[%s1 + $0x310] sm:$0xff]
  %v129 = vld [vmem:[%s1 + $0x318] sm:$0xff]
  %v130 = vld [vmem:[%s1 + $0x320] sm:$0xff]
  %v131 = vld [vmem:[%s1 + $0x328] sm:$0xff]
  %v132 = vld [vmem:[%s1 + $0x330] sm:$0xff]
  %v133 = vld [vmem:[%s1 + $0x338] sm:$0xff]
  %v134 = vld [vmem:[%s1 + $0x340] sm:$0xff]
  %v135 = vld [vmem:[%s1 + $0x348] sm:$0xff]
  %v136 = vld [vmem:[%s1 + $0x350] sm:$0xff]
  %v137 = vld [vmem:[%s1 + $0x358] sm:$0xff]
  %v138 = vld [vmem:[%s1 + $0x360] sm:$0xff]
  %v139 = vld [vmem:[%s1 + $0x368] sm:$0xff]
  %v140 = vld [vmem:[%s1 + $0x370] sm:$0xff]
  %v141 = vld [vmem:[%s1 + $0x378] sm:$0xff]
  %v142 = vld [vmem:[%s1 + $0x380] sm:$0xff]
  %v143 = vld [vmem:[%s1 + $0x388] sm:$0xff]
  %v144 = vld [vmem:[%s1 + $0x390] sm:$0xff]
  %v145 = vld [vmem:[%s1 + $0x398] sm:$0xff]
  %v146 = vld [vmem:[%s1 + $0x3a0] sm:$0xff]
  %v147 = vld [vmem:[%s1 + $0x3a8] sm:$0xff]
  %v148 = vld [vmem:[%s1 + $0x3b0] sm:$0xff]
  %v149 = vld [vmem:[%s1 + $0x3b8] sm:$0xff]
  %v150 = vld [vmem:[%s1 + $0x3c0] sm:$0xff]
  %v151 = vld [vmem:[%s1 + $0x3c8] sm:$0xff]
  %v152 = vld [vmem:[%s1 + $0x3d0] sm:$0xff]
  %v153 = vld [vmem:[%s1 + $0x3d8] sm:$0xff]
  %v154 = vld [vmem:[%s1 + $0x3e0] sm:$0xff]
  %v155 = vld [vmem:[%s1 + $0x3e8] sm:$0xff]
  %v156 = vld [vmem:[%s1 + $0x3f0] sm:$0xff]
  %v157 = vld [vmem:[%s1 + $0x3f8] sm:$0xff]
  %v158 = vld [vmem:[%s1 + $0x400] sm:$0xff]
  %v159 = vld [vmem:[%s1 + $0x408] sm:$0xff]
  %v160 = vld [vmem:[%s1 + $0x410] sm:$0xff]
  %v161 = vld [vmem:[%s1 + $0x418] sm:$0xff]
  %v162 = vld [vmem:[%s1 + $0x420] sm:$0xff]
  %v163 = vld [vmem:[%s1 + $0x428] sm:$0xff]
  %v164 = vld [vmem:[%s1 + $0x430] sm:$0xff]
  %v165 = vld [vmem:[%s1 + $0x438] sm:$0xff]
  %v166 = vld [vmem:[%s1 + $0x440] sm:$0xff]
  %v167 = vld [vmem:[%s1 + $0x448] sm:$0xff]
  %v168 = vld [vmem:[%s1 + $0x450] sm:$0xff]
  %v169 = vld [vmem:[%s1 + $0x458] sm:$0xff]
  %v170 = vld [vmem:[%s1 + $0x460] sm:$0xff]
  %v171 = vld [vmem:[%s1 + $0x468] sm:$0xff]
  %v172 = vld [vmem:[%s1 + $0x470] sm:$0xff]
  %v173 = vld [vmem:[%s1 + $0x478] sm:$0xff]
  %v174 = vld [vmem:[%s1 + $0x480] sm:$0xff]
  %v175 = vld [vmem:[%s1 + $0x488] sm:$0xff]
  %v176 = vld [vmem:[%s1 + $0x490] sm:$0xff]
  %v177 = vld [vmem:[%s1 + $0x498] sm:$0xff]
  %v178 = vld [vmem:[%s1 + $0x4a0] sm:$0xff]
  %v179 = vld [vmem:[%s1 + $0x4a8] sm:$0xff]
  %v180 = vld [vmem:[%s1 + $0x4b0] sm:$0xff]
  %v181 = vld [vmem:[%s1 + $0x4b8] sm:$0xff]
  %v182 = vld [vmem:[%s1 + $0x4c0] sm:$0xff]
  %v183 = vld [vmem:[%s1 + $0x4c8] sm:$0xff]
  %v184 = vld [vmem:[%s1 + $0x4d0] sm:$0xff]
  %v185 = vld [vmem:[%s1 + $0x4d8] sm:$0xff]
  %v186 = vld [vmem:[%s1 + $0x4e0] sm:$0xff]
  %v187 = vld [vmem:[%s1 + $0x4e8] sm:$0xff]
  %v188 = vld [vmem:[%s1 + $0x4f0] sm:$0xff]
  %v189 = vld [vmem:[%s1 + $0x4f8] sm:$0xff]
  %v190 = vld [vmem:[%s1 + $0x500] sm:$0xff]
  %v191 = vld [vmem:[%s1 + $0x508] sm:$0xff]
  %v192 = vld [vmem:[%s1 + $0x510] sm:$0xff]
  %v193 = vld [vmem:[%s1 + $0x518] sm:$0xff]
  %v194 = vld [vmem:[%s1 + $0x520] sm:$0xff]
  %v195 = vld [vmem:[%s1 + $0x528] sm:$0xff]
  %v196 = vld [vmem:[%s1 + $0x530] sm:$0xff]
  %v197 = vld [vmem:[%s1 + $0x538] sm:$0xff]
  %v198 = vld [vmem:[%s1 + $0x540] sm:$0xff]
  %v199 = vld [vmem:[%s1 + $0x548] sm:$0xff]
  %v200 = vld [vmem:[%s1 + $0x550] sm:$0xff]
  %v201 = vld [vmem:[%s1 + $0x558] sm:$0xff]
  %v202 = vld [vmem:[%s1 + $0x560] sm:$0xff]
  %v203 = vld [vmem:[%s1 + $0x568] sm:$0xff]
  %v204 = vld [vmem:[%s1 + $0x570] sm:$0xff]
  %v205 = vld [vmem:[%s1 + $0x578] sm:$0xff]
  %v206 = vld [vmem:[%s1 + $0x580] sm:$0xff]
  %v207 = vld [vmem:[%s1 + $0x588] sm:$0xff]
  %v208 = vld [vmem:[%s1 + $0x590] sm:$0xff]
  %v209 = vld [vmem:[%s1 + $0x598] sm:$0xff]
  %v210 = vld [vmem:[%s1 + $0x5a0] sm:$0xff]
  %v211 = vld [vmem:[%s1 + $0x5a8] sm:$0xff]
  %v212 = vld [vmem:[%s1 + $0x5b0] sm:$0xff]
  %v213 = vld [vmem:[%s1 + $0x5b8] sm:$0xff]
  %v214 = vld [vmem:[%s1 + $0x5c0] sm:$0xff]
  %v215 = vld [vmem:[%s1 + $0x5c8] sm:$0xff]
  %v216 = vld [vmem:[%s1 + $0x5d0] sm:$0xff]
  %v217 = vld [vmem:[%s1 + $0x5d8] sm:$0xff]
  %v218 = vld [vmem:[%s1 + $0x5e0] sm:$0xff]
  %v219 = vld [vmem:[%s1 + $0x5e8] sm:$0xff]
  %v220 = vld [vmem:[%s1 + $0x5f0] sm:$0xff]
  %v221 = vld [vmem:[%s1 + $0x5f8] sm:$0xff]
  %v222 = vld [vmem:[%s1 + $0x600] sm:$0xff]
  %v223 = vld [vmem:[%s1 + $0x608] sm:$0xff]
  %v224 = vld [vmem:[%s1 + $0x610] sm:$0xff]
  %v225 = vld [vmem:[%s1 + $0x618] sm:$0xff]
  %v226 = vld [vmem:[%s1 + $0x620] sm:$0xff]
  %v227 = vld [vmem:[%s1 + $0x628] sm:$0xff]
  %v228 = vld [vmem:[%s1 + $0x630] sm:$0xff]
  %v229 = vld [vmem:[%s1 + $0x638] sm:$0xff]
  %v230 = vld [vmem:[%s1 + $0x640] sm:$0xff]
  %v231 = vld [vmem:[%s1 + $0x648] sm:$0xff]
  %v232 = vld [vmem:[%s1 + $0x650] sm:$0xff]
  %v233 = vld [vmem:[%s1 + $0x658] sm:$0xff]
  %v234 = vld [vmem:[%s1 + $0x660] sm:$0xff]
  %v235 = vld [vmem:[%s1 + $0x668] sm:$0xff]
  %v236 = vld [vmem:[%s1 + $0x670] sm:$0xff]
  %v237 = vld [vmem:[%s1 + $0x678] sm:$0xff]
  %v238 = vld [vmem:[%s1 + $0x680] sm:$0xff]
  %v239 = vld [vmem:[%s1 + $0x688] sm:$0xff]
  %v240 = vld [vmem:[%s1 + $0x690] sm:$0xff]
  %v241 = vld [vmem:[%s1 + $0x698] sm:$0xff]
  %v242 = vld [vmem:[%s1 + $0x6a0] sm:$0xff]
  %v243 = vld [vmem:[%s1 + $0x6a8] sm:$0xff]
  %v244 = vld [vmem:[%s1 + $0x6b0] sm:$0xff]
  %v245 = vld [vmem:[%s1 + $0x6b8] sm:$0xff]
  %v246 = vld [vmem:[%s1 + $0x6c0] sm:$0xff]
  %v247 = vld [vmem:[%s1 + $0x6c8] sm:$0xff]
  %v248 = vld [vmem:[%s1 + $0x6d0] sm:$0xff]
  %v249 = vld [vmem:[%s1 + $0x6d8] sm:$0xff]
  %v250 = vld [vmem:[%s1 + $0x6e0] sm:$0xff]
  %v251 = vld [vmem:[%s1 + $0x6e8] sm:$0xff]
  %v252 = vld [vmem:[%s1 + $0x6f0] sm:$0xff]
  %v253 = vld [vmem:[%s1 + $0x6f8] sm:$0xff]
  %v254 = vld [vmem:[%s1 + $0x700] sm:$0xff]
  %v255 = vld [vmem:[%s1 + $0x708] sm:$0xff]
  %v256 = vld [vmem:[%s1 + $0x710] sm:$0xff]
  %v257 = vld [vmem:[%s1 + $0x718] sm:$0xff]
  %v258 = vld [vmem:[%s1 + $0x720] sm:$0xff]
  %v259 = vld [vmem:[%s1 + $0x728] sm:$0xff]
  %v260 = vld [vmem:[%s1 + $0x730] sm:$0xff]
  %v261 = vld [vmem:[%s1 + $0x738] sm:$0xff]
  %v262 = vld [vmem:[%s1 + $0x740] sm:$0xff]
  %v263 = vld [vmem:[%s1 + $0x748] sm:$0xff]
  %v264 = vld [vmem:[%s1 + $0x750] sm:$0xff]
  %v265 = vld [vmem:[%s1 + $0x758] sm:$0xff]
  %v266 = vld [vmem:[%s1 + $0x760] sm:$0xff]
  %v267 = vld [vmem:[%s1 + $0x768] sm:$0xff]
  %v268 = vld [vmem:[%s1 + $0x770] sm:$0xff]
  %v269 = vld [vmem:[%s1 + $0x778] sm:$0xff]
  %v270 = vld [vmem:[%s1 + $0x780] sm:$0xff]
  %v271 = vld [vmem:[%s1 + $0x788] sm:$0xff]
  %v272 = vld [vmem:[%s1 + $0x790] sm:$0xff]
  %v273 = vld [vmem:[%s1 + $0x798] sm:$0xff]
  %v274 = vld [vmem:[%s1 + $0x7a0] sm:$0xff]
  %v275 = vld [vmem:[%s1 + $0x7a8] sm:$0xff]
  %v276 = vld [vmem:[%s1 + $0x7b0] sm:$0xff]
  %v277 = vld [vmem:[%s1 + $0x7b8] sm:$0xff]
  %v278 = vld [vmem:[%s1 + $0x7c0] sm:$0xff]
  %v279 = vld [vmem:[%s1 + $0x7c8] sm:$0xff]
  %v280 = vld [vmem:[%s1 + $0x7d0] sm:$0xff]
  %v281 = vld [vmem:[%s1 + $0x7d8] sm:$0xff]
  %v282 = vld [vmem:[%s1 + $0x7e0] sm:$0xff]
  %v283 = vld [vmem:[%s1 + $0x7e8] sm:$0xff]
  %v284 = vld [vmem:[%s1 + $0x7f0] sm:$0xff]
  %v285 = vld [vmem:[%s1 + $0x7f8] sm:$0xff]
  %v286 = vld [vmem:[%s2] sm:$0xf]
  %v288 = vlaneseq
  %v289 = vshrl.u32 %v288, 7
  %v290 = vsub.s32 0, %v289
  %v291 = vrot.slane %v286, %v290
  %v292 = vlaneseq
  %v293 = vshrl.u32 %v292, 7
  %v294 = vsub.s32 1, %v293
  %v295 = vrot.slane %v286, %v294
  %v296 = vlaneseq
  %v297 = vshrl.u32 %v296, 7
  %v298 = vsub.s32 2, %v297
  %v299 = vrot.slane %v286, %v298
  %v300 = vlaneseq
  %v301 = vshrl.u32 %v300, 7
  %v302 = vsub.s32 3, %v301
  %v303 = vrot.slane %v286, %v302
  %v564 = vunpack.c.l.b16 %v30
  %v565 = vunpack.c.h.b16 %v30
  %v566 = vunpack.c.l.b16 %v31
  %v567 = vunpack.c.h.b16 %v31
  %v568 = vunpack.c.l.b16 %v32
  %v569 = vunpack.c.h.b16 %v32
  %v570 = vunpack.c.l.b16 %v33
  %v571 = vunpack.c.h.b16 %v33
  %v572 = vunpack.c.l.b16 %v34
  %v573 = vunpack.c.h.b16 %v34
  %v574 = vunpack.c.l.b16 %v35
  %v575 = vunpack.c.h.b16 %v35
  %v576 = vunpack.c.l.b16 %v36
  %v577 = vunpack.c.h.b16 %v36
  %v578 = vunpack.c.l.b16 %v37
  %v579 = vunpack.c.h.b16 %v37
  %v580 = vunpack.c.l.b16 %v38
  %v581 = vunpack.c.h.b16 %v38
  %v582 = vunpack.c.l.b16 %v39
  %v583 = vunpack.c.h.b16 %v39
  %v584 = vunpack.c.l.b16 %v40
  %v585 = vunpack.c.h.b16 %v40
  %v586 = vunpack.c.l.b16 %v41
  %v587 = vunpack.c.h.b16 %v41
  %v588 = vunpack.c.l.b16 %v42
  %v589 = vunpack.c.h.b16 %v42
  %v590 = vunpack.c.l.b16 %v43
  %v591 = vunpack.c.h.b16 %v43
  %v592 = vunpack.c.l.b16 %v44
  %v593 = vunpack.c.h.b16 %v44
  %v594 = vunpack.c.l.b16 %v45
  %v595 = vunpack.c.h.b16 %v45
  %v596 = vunpack.c.l.b16 %v46
  %v597 = vunpack.c.h.b16 %v46
  %v598 = vunpack.c.l.b16 %v47
  %v599 = vunpack.c.h.b16 %v47
  %v600 = vunpack.c.l.b16 %v48
  %v601 = vunpack.c.h.b16 %v48
  %v602 = vunpack.c.l.b16 %v49
  %v603 = vunpack.c.h.b16 %v49
  %v604 = vunpack.c.l.b16 %v50
  %v605 = vunpack.c.h.b16 %v50
  %v606 = vunpack.c.l.b16 %v51
  %v607 = vunpack.c.h.b16 %v51
  %v608 = vunpack.c.l.b16 %v52
  %v609 = vunpack.c.h.b16 %v52
  %v610 = vunpack.c.l.b16 %v53
  %v611 = vunpack.c.h.b16 %v53
  %v612 = vunpack.c.l.b16 %v54
  %v613 = vunpack.c.h.b16 %v54
  %v614 = vunpack.c.l.b16 %v55
  %v615 = vunpack.c.h.b16 %v55
  %v616 = vunpack.c.l.b16 %v56
  %v617 = vunpack.c.h.b16 %v56
  %v618 = vunpack.c.l.b16 %v57
  %v619 = vunpack.c.h.b16 %v57
  %v620 = vunpack.c.l.b16 %v58
  %v621 = vunpack.c.h.b16 %v58
  %v622 = vunpack.c.l.b16 %v59
  %v623 = vunpack.c.h.b16 %v59
  %v624 = vunpack.c.l.b16 %v60
  %v625 = vunpack.c.h.b16 %v60
  %v626 = vunpack.c.l.b16 %v61
  %v627 = vunpack.c.h.b16 %v61
  %v628 = vunpack.c.l.b16 %v62
  %v629 = vunpack.c.h.b16 %v62
  %v630 = vunpack.c.l.b16 %v63
  %v631 = vunpack.c.h.b16 %v63
  %v632 = vunpack.c.l.b16 %v64
  %v633 = vunpack.c.h.b16 %v64
  %v634 = vunpack.c.l.b16 %v65
  %v635 = vunpack.c.h.b16 %v65
  %v636 = vunpack.c.l.b16 %v66
  %v637 = vunpack.c.h.b16 %v66
  %v638 = vunpack.c.l.b16 %v67
  %v639 = vunpack.c.h.b16 %v67
  %v640 = vunpack.c.l.b16 %v68
  %v641 = vunpack.c.h.b16 %v68
  %v642 = vunpack.c.l.b16 %v69
  %v643 = vunpack.c.h.b16 %v69
  %v644 = vunpack.c.l.b16 %v70
  %v645 = vunpack.c.h.b16 %v70
  %v646 = vunpack.c.l.b16 %v71
  %v647 = vunpack.c.h.b16 %v71
  %v648 = vunpack.c.l.b16 %v72
  %v649 = vunpack.c.h.b16 %v72
  %v650 = vunpack.c.l.b16 %v73
  %v651 = vunpack.c.h.b16 %v73
  %v652 = vunpack.c.l.b16 %v74
  %v653 = vunpack.c.h.b16 %v74
  %v654 = vunpack.c.l.b16 %v75
  %v655 = vunpack.c.h.b16 %v75
  %v656 = vunpack.c.l.b16 %v76
  %v657 = vunpack.c.h.b16 %v76
  %v658 = vunpack.c.l.b16 %v77
  %v659 = vunpack.c.h.b16 %v77
  %v660 = vunpack.c.l.b16 %v78
  %v661 = vunpack.c.h.b16 %v78
  %v662 = vunpack.c.l.b16 %v79
  %v663 = vunpack.c.h.b16 %v79
  %v664 = vunpack.c.l.b16 %v80
  %v665 = vunpack.c.h.b16 %v80
  %v666 = vunpack.c.l.b16 %v81
  %v667 = vunpack.c.h.b16 %v81
  %v668 = vunpack.c.l.b16 %v82
  %v669 = vunpack.c.h.b16 %v82
  %v670 = vunpack.c.l.b16 %v83
  %v671 = vunpack.c.h.b16 %v83
  %v672 = vunpack.c.l.b16 %v84
  %v673 = vunpack.c.h.b16 %v84
  %v674 = vunpack.c.l.b16 %v85
  %v675 = vunpack.c.h.b16 %v85
  %v676 = vunpack.c.l.b16 %v86
  %v677 = vunpack.c.h.b16 %v86
  %v678 = vunpack.c.l.b16 %v87
  %v679 = vunpack.c.h.b16 %v87
  %v680 = vunpack.c.l.b16 %v88
  %v681 = vunpack.c.h.b16 %v88
  %v682 = vunpack.c.l.b16 %v89
  %v683 = vunpack.c.h.b16 %v89
  %v684 = vunpack.c.l.b16 %v90
  %v685 = vunpack.c.h.b16 %v90
  %v686 = vunpack.c.l.b16 %v91
  %v687 = vunpack.c.h.b16 %v91
  %v688 = vunpack.c.l.b16 %v92
  %v689 = vunpack.c.h.b16 %v92
  %v690 = vunpack.c.l.b16 %v93
  %v691 = vunpack.c.h.b16 %v93
  %v692 = vunpack.c.l.b16 %v94
  %v693 = vunpack.c.h.b16 %v94
  %v694 = vunpack.c.l.b16 %v95
  %v695 = vunpack.c.h.b16 %v95
  %v696 = vunpack.c.l.b16 %v96
  %v697 = vunpack.c.h.b16 %v96
  %v698 = vunpack.c.l.b16 %v97
  %v699 = vunpack.c.h.b16 %v97
  %v700 = vunpack.c.l.b16 %v98
  %v701 = vunpack.c.h.b16 %v98
  %v702 = vunpack.c.l.b16 %v99
  %v703 = vunpack.c.h.b16 %v99
  %v704 = vunpack.c.l.b16 %v100
  %v705 = vunpack.c.h.b16 %v100
  %v706 = vunpack.c.l.b16 %v101
  %v707 = vunpack.c.h.b16 %v101
  %v708 = vunpack.c.l.b16 %v102
  %v709 = vunpack.c.h.b16 %v102
  %v710 = vunpack.c.l.b16 %v103
  %v711 = vunpack.c.h.b16 %v103
  %v712 = vunpack.c.l.b16 %v104
  %v713 = vunpack.c.h.b16 %v104
  %v714 = vunpack.c.l.b16 %v105
  %v715 = vunpack.c.h.b16 %v105
  %v716 = vunpack.c.l.b16 %v106
  %v717 = vunpack.c.h.b16 %v106
  %v718 = vunpack.c.l.b16 %v107
  %v719 = vunpack.c.h.b16 %v107
  %v720 = vunpack.c.l.b16 %v108
  %v721 = vunpack.c.h.b16 %v108
  %v722 = vunpack.c.l.b16 %v109
  %v723 = vunpack.c.h.b16 %v109
  %v724 = vunpack.c.l.b16 %v110
  %v725 = vunpack.c.h.b16 %v110
  %v726 = vunpack.c.l.b16 %v111
  %v727 = vunpack.c.h.b16 %v111
  %v728 = vunpack.c.l.b16 %v112
  %v729 = vunpack.c.h.b16 %v112
  %v730 = vunpack.c.l.b16 %v113
  %v731 = vunpack.c.h.b16 %v113
  %v732 = vunpack.c.l.b16 %v114
  %v733 = vunpack.c.h.b16 %v114
  %v734 = vunpack.c.l.b16 %v115
  %v735 = vunpack.c.h.b16 %v115
  %v736 = vunpack.c.l.b16 %v116
  %v737 = vunpack.c.h.b16 %v116
  %v738 = vunpack.c.l.b16 %v117
  %v739 = vunpack.c.h.b16 %v117
  %v740 = vunpack.c.l.b16 %v118
  %v741 = vunpack.c.h.b16 %v118
  %v742 = vunpack.c.l.b16 %v119
  %v743 = vunpack.c.h.b16 %v119
  %v744 = vunpack.c.l.b16 %v120
  %v745 = vunpack.c.h.b16 %v120
  %v746 = vunpack.c.l.b16 %v121
  %v747 = vunpack.c.h.b16 %v121
  %v748 = vunpack.c.l.b16 %v122
  %v749 = vunpack.c.h.b16 %v122
  %v750 = vunpack.c.l.b16 %v123
  %v751 = vunpack.c.h.b16 %v123
  %v752 = vunpack.c.l.b16 %v124
  %v753 = vunpack.c.h.b16 %v124
  %v754 = vunpack.c.l.b16 %v125
  %v755 = vunpack.c.h.b16 %v125
  %v756 = vunpack.c.l.b16 %v126
  %v757 = vunpack.c.h.b16 %v126
  %v758 = vunpack.c.l.b16 %v127
  %v759 = vunpack.c.h.b16 %v127
  %v760 = vunpack.c.l.b16 %v128
  %v761 = vunpack.c.h.b16 %v128
  %v762 = vunpack.c.l.b16 %v129
  %v763 = vunpack.c.h.b16 %v129
  %v764 = vunpack.c.l.b16 %v130
  %v765 = vunpack.c.h.b16 %v130
  %v766 = vunpack.c.l.b16 %v131
  %v767 = vunpack.c.h.b16 %v131
  %v768 = vunpack.c.l.b16 %v132
  %v769 = vunpack.c.h.b16 %v132
  %v770 = vunpack.c.l.b16 %v133
  %v771 = vunpack.c.h.b16 %v133
  %v772 = vunpack.c.l.b16 %v134
  %v773 = vunpack.c.h.b16 %v134
  %v774 = vunpack.c.l.b16 %v135
  %v775 = vunpack.c.h.b16 %v135
  %v776 = vunpack.c.l.b16 %v136
  %v777 = vunpack.c.h.b16 %v136
  %v778 = vunpack.c.l.b16 %v137
  %v779 = vunpack.c.h.b16 %v137
  %v780 = vunpack.c.l.b16 %v138
  %v781 = vunpack.c.h.b16 %v138
  %v782 = vunpack.c.l.b16 %v139
  %v783 = vunpack.c.h.b16 %v139
  %v784 = vunpack.c.l.b16 %v140
  %v785 = vunpack.c.h.b16 %v140
  %v786 = vunpack.c.l.b16 %v141
  %v787 = vunpack.c.h.b16 %v141
  %v788 = vunpack.c.l.b16 %v142
  %v789 = vunpack.c.h.b16 %v142
  %v790 = vunpack.c.l.b16 %v143
  %v791 = vunpack.c.h.b16 %v143
  %v792 = vunpack.c.l.b16 %v144
  %v793 = vunpack.c.h.b16 %v144
  %v794 = vunpack.c.l.b16 %v145
  %v795 = vunpack.c.h.b16 %v145
  %v796 = vunpack.c.l.b16 %v146
  %v797 = vunpack.c.h.b16 %v146
  %v798 = vunpack.c.l.b16 %v147
  %v799 = vunpack.c.h.b16 %v147
  %v800 = vunpack.c.l.b16 %v148
  %v801 = vunpack.c.h.b16 %v148
  %v802 = vunpack.c.l.b16 %v149
  %v803 = vunpack.c.h.b16 %v149
  %v804 = vunpack.c.l.b16 %v150
  %v805 = vunpack.c.h.b16 %v150
  %v806 = vunpack.c.l.b16 %v151
  %v807 = vunpack.c.h.b16 %v151
  %v808 = vunpack.c.l.b16 %v152
  %v809 = vunpack.c.h.b16 %v152
  %v810 = vunpack.c.l.b16 %v153
  %v811 = vunpack.c.h.b16 %v153
  %v812 = vunpack.c.l.b16 %v154
  %v813 = vunpack.c.h.b16 %v154
  %v814 = vunpack.c.l.b16 %v155
  %v815 = vunpack.c.h.b16 %v155
  %v816 = vunpack.c.l.b16 %v156
  %v817 = vunpack.c.h.b16 %v156
  %v818 = vunpack.c.l.b16 %v157
  %v819 = vunpack.c.h.b16 %v157
  %v820 = vunpack.c.l.b16 %v158
  %v821 = vunpack.c.h.b16 %v158
  %v822 = vunpack.c.l.b16 %v159
  %v823 = vunpack.c.h.b16 %v159
  %v824 = vunpack.c.l.b16 %v160
  %v825 = vunpack.c.h.b16 %v160
  %v826 = vunpack.c.l.b16 %v161
  %v827 = vunpack.c.h.b16 %v161
  %v828 = vunpack.c.l.b16 %v162
  %v829 = vunpack.c.h.b16 %v162
  %v830 = vunpack.c.l.b16 %v163
  %v831 = vunpack.c.h.b16 %v163
  %v832 = vunpack.c.l.b16 %v164
  %v833 = vunpack.c.h.b16 %v164
  %v834 = vunpack.c.l.b16 %v165
  %v835 = vunpack.c.h.b16 %v165
  %v836 = vunpack.c.l.b16 %v166
  %v837 = vunpack.c.h.b16 %v166
  %v838 = vunpack.c.l.b16 %v167
  %v839 = vunpack.c.h.b16 %v167
  %v840 = vunpack.c.l.b16 %v168
  %v841 = vunpack.c.h.b16 %v168
  %v842 = vunpack.c.l.b16 %v169
  %v843 = vunpack.c.h.b16 %v169
  %v844 = vunpack.c.l.b16 %v170
  %v845 = vunpack.c.h.b16 %v170
  %v846 = vunpack.c.l.b16 %v171
  %v847 = vunpack.c.h.b16 %v171
  %v848 = vunpack.c.l.b16 %v172
  %v849 = vunpack.c.h.b16 %v172
  %v850 = vunpack.c.l.b16 %v173
  %v851 = vunpack.c.h.b16 %v173
  %v852 = vunpack.c.l.b16 %v174
  %v853 = vunpack.c.h.b16 %v174
  %v854 = vunpack.c.l.b16 %v175
  %v855 = vunpack.c.h.b16 %v175
  %v856 = vunpack.c.l.b16 %v176
  %v857 = vunpack.c.h.b16 %v176
  %v858 = vunpack.c.l.b16 %v177
  %v859 = vunpack.c.h.b16 %v177
  %v860 = vunpack.c.l.b16 %v178
  %v861 = vunpack.c.h.b16 %v178
  %v862 = vunpack.c.l.b16 %v179
  %v863 = vunpack.c.h.b16 %v179
  %v864 = vunpack.c.l.b16 %v180
  %v865 = vunpack.c.h.b16 %v180
  %v866 = vunpack.c.l.b16 %v181
  %v867 = vunpack.c.h.b16 %v181
  %v868 = vunpack.c.l.b16 %v182
  %v869 = vunpack.c.h.b16 %v182
  %v870 = vunpack.c.l.b16 %v183
  %v871 = vunpack.c.h.b16 %v183
  %v872 = vunpack.c.l.b16 %v184
  %v873 = vunpack.c.h.b16 %v184
  %v874 = vunpack.c.l.b16 %v185
  %v875 = vunpack.c.h.b16 %v185
  %v876 = vunpack.c.l.b16 %v186
  %v877 = vunpack.c.h.b16 %v186
  %v878 = vunpack.c.l.b16 %v187
  %v879 = vunpack.c.h.b16 %v187
  %v880 = vunpack.c.l.b16 %v188
  %v881 = vunpack.c.h.b16 %v188
  %v882 = vunpack.c.l.b16 %v189
  %v883 = vunpack.c.h.b16 %v189
  %v884 = vunpack.c.l.b16 %v190
  %v885 = vunpack.c.h.b16 %v190
  %v886 = vunpack.c.l.b16 %v191
  %v887 = vunpack.c.h.b16 %v191
  %v888 = vunpack.c.l.b16 %v192
  %v889 = vunpack.c.h.b16 %v192
  %v890 = vunpack.c.l.b16 %v193
  %v891 = vunpack.c.h.b16 %v193
  %v892 = vunpack.c.l.b16 %v194
  %v893 = vunpack.c.h.b16 %v194
  %v894 = vunpack.c.l.b16 %v195
  %v895 = vunpack.c.h.b16 %v195
  %v896 = vunpack.c.l.b16 %v196
  %v897 = vunpack.c.h.b16 %v196
  %v898 = vunpack.c.l.b16 %v197
  %v899 = vunpack.c.h.b16 %v197
  %v900 = vunpack.c.l.b16 %v198
  %v901 = vunpack.c.h.b16 %v198
  %v902 = vunpack.c.l.b16 %v199
  %v903 = vunpack.c.h.b16 %v199
  %v904 = vunpack.c.l.b16 %v200
  %v905 = vunpack.c.h.b16 %v200
  %v906 = vunpack.c.l.b16 %v201
  %v907 = vunpack.c.h.b16 %v201
  %v908 = vunpack.c.l.b16 %v202
  %v909 = vunpack.c.h.b16 %v202
  %v910 = vunpack.c.l.b16 %v203
  %v911 = vunpack.c.h.b16 %v203
  %v912 = vunpack.c.l.b16 %v204
  %v913 = vunpack.c.h.b16 %v204
  %v914 = vunpack.c.l.b16 %v205
  %v915 = vunpack.c.h.b16 %v205
  %v916 = vunpack.c.l.b16 %v206
  %v917 = vunpack.c.h.b16 %v206
  %v918 = vunpack.c.l.b16 %v207
  %v919 = vunpack.c.h.b16 %v207
  %v920 = vunpack.c.l.b16 %v208
  %v921 = vunpack.c.h.b16 %v208
  %v922 = vunpack.c.l.b16 %v209
  %v923 = vunpack.c.h.b16 %v209
  %v924 = vunpack.c.l.b16 %v210
  %v925 = vunpack.c.h.b16 %v210
  %v926 = vunpack.c.l.b16 %v211
  %v927 = vunpack.c.h.b16 %v211
  %v928 = vunpack.c.l.b16 %v212
  %v929 = vunpack.c.h.b16 %v212
  %v930 = vunpack.c.l.b16 %v213
  %v931 = vunpack.c.h.b16 %v213
  %v932 = vunpack.c.l.b16 %v214
  %v933 = vunpack.c.h.b16 %v214
  %v934 = vunpack.c.l.b16 %v215
  %v935 = vunpack.c.h.b16 %v215
  %v936 = vunpack.c.l.b16 %v216
  %v937 = vunpack.c.h.b16 %v216
  %v938 = vunpack.c.l.b16 %v217
  %v939 = vunpack.c.h.b16 %v217
  %v940 = vunpack.c.l.b16 %v218
  %v941 = vunpack.c.h.b16 %v218
  %v942 = vunpack.c.l.b16 %v219
  %v943 = vunpack.c.h.b16 %v219
  %v944 = vunpack.c.l.b16 %v220
  %v945 = vunpack.c.h.b16 %v220
  %v946 = vunpack.c.l.b16 %v221
  %v947 = vunpack.c.h.b16 %v221
  %v948 = vunpack.c.l.b16 %v222
  %v949 = vunpack.c.h.b16 %v222
  %v950 = vunpack.c.l.b16 %v223
  %v951 = vunpack.c.h.b16 %v223
  %v952 = vunpack.c.l.b16 %v224
  %v953 = vunpack.c.h.b16 %v224
  %v954 = vunpack.c.l.b16 %v225
  %v955 = vunpack.c.h.b16 %v225
  %v956 = vunpack.c.l.b16 %v226
  %v957 = vunpack.c.h.b16 %v226
  %v958 = vunpack.c.l.b16 %v227
  %v959 = vunpack.c.h.b16 %v227
  %v960 = vunpack.c.l.b16 %v228
  %v961 = vunpack.c.h.b16 %v228
  %v962 = vunpack.c.l.b16 %v229
  %v963 = vunpack.c.h.b16 %v229
  %v964 = vunpack.c.l.b16 %v230
  %v965 = vunpack.c.h.b16 %v230
  %v966 = vunpack.c.l.b16 %v231
  %v967 = vunpack.c.h.b16 %v231
  %v968 = vunpack.c.l.b16 %v232
  %v969 = vunpack.c.h.b16 %v232
  %v970 = vunpack.c.l.b16 %v233
  %v971 = vunpack.c.h.b16 %v233
  %v972 = vunpack.c.l.b16 %v234
  %v973 = vunpack.c.h.b16 %v234
  %v974 = vunpack.c.l.b16 %v235
  %v975 = vunpack.c.h.b16 %v235
  %v976 = vunpack.c.l.b16 %v236
  %v977 = vunpack.c.h.b16 %v236
  %v978 = vunpack.c.l.b16 %v237
  %v979 = vunpack.c.h.b16 %v237
  %v980 = vunpack.c.l.b16 %v238
  %v981 = vunpack.c.h.b16 %v238
  %v982 = vunpack.c.l.b16 %v239
  %v983 = vunpack.c.h.b16 %v239
  %v984 = vunpack.c.l.b16 %v240
  %v985 = vunpack.c.h.b16 %v240
  %v986 = vunpack.c.l.b16 %v241
  %v987 = vunpack.c.h.b16 %v241
  %v988 = vunpack.c.l.b16 %v242
  %v989 = vunpack.c.h.b16 %v242
  %v990 = vunpack.c.l.b16 %v243
  %v991 = vunpack.c.h.b16 %v243
  %v992 = vunpack.c.l.b16 %v244
  %v993 = vunpack.c.h.b16 %v244
  %v994 = vunpack.c.l.b16 %v245
  %v995 = vunpack.c.h.b16 %v245
  %v996 = vunpack.c.l.b16 %v246
  %v997 = vunpack.c.h.b16 %v246
  %v998 = vunpack.c.l.b16 %v247
  %v999 = vunpack.c.h.b16 %v247
  %v1000 = vunpack.c.l.b16 %v248
  %v1001 = vunpack.c.h.b16 %v248
  %v1002 = vunpack.c.l.b16 %v249
  %v1003 = vunpack.c.h.b16 %v249
  %v1004 = vunpack.c.l.b16 %v250
  %v1005 = vunpack.c.h.b16 %v250
  %v1006 = vunpack.c.l.b16 %v251
  %v1007 = vunpack.c.h.b16 %v251
  %v1008 = vunpack.c.l.b16 %v252
  %v1009 = vunpack.c.h.b16 %v252
  %v1010 = vunpack.c.l.b16 %v253
  %v1011 = vunpack.c.h.b16 %v253
  %v1012 = vunpack.c.l.b16 %v254
  %v1013 = vunpack.c.h.b16 %v254
  %v1014 = vunpack.c.l.b16 %v255
  %v1015 = vunpack.c.h.b16 %v255
  %v1016 = vunpack.c.l.b16 %v256
  %v1017 = vunpack.c.h.b16 %v256
  %v1018 = vunpack.c.l.b16 %v257
  %v1019 = vunpack.c.h.b16 %v257
  %v1020 = vunpack.c.l.b16 %v258
  %v1021 = vunpack.c.h.b16 %v258
  %v1022 = vunpack.c.l.b16 %v259
  %v1023 = vunpack.c.h.b16 %v259
  %v1024 = vunpack.c.l.b16 %v260
  %v1025 = vunpack.c.h.b16 %v260
  %v1026 = vunpack.c.l.b16 %v261
  %v1027 = vunpack.c.h.b16 %v261
  %v1028 = vunpack.c.l.b16 %v262
  %v1029 = vunpack.c.h.b16 %v262
  %v1030 = vunpack.c.l.b16 %v263
  %v1031 = vunpack.c.h.b16 %v263
  %v1032 = vunpack.c.l.b16 %v264
  %v1033 = vunpack.c.h.b16 %v264
  %v1034 = vunpack.c.l.b16 %v265
  %v1035 = vunpack.c.h.b16 %v265
  %v1036 = vunpack.c.l.b16 %v266
  %v1037 = vunpack.c.h.b16 %v266
  %v1038 = vunpack.c.l.b16 %v267
  %v1039 = vunpack.c.h.b16 %v267
  %v1040 = vunpack.c.l.b16 %v268
  %v1041 = vunpack.c.h.b16 %v268
  %v1042 = vunpack.c.l.b16 %v269
  %v1043 = vunpack.c.h.b16 %v269
  %v1044 = vunpack.c.l.b16 %v270
  %v1045 = vunpack.c.h.b16 %v270
  %v1046 = vunpack.c.l.b16 %v271
  %v1047 = vunpack.c.h.b16 %v271
  %v1048 = vunpack.c.l.b16 %v272
  %v1049 = vunpack.c.h.b16 %v272
  %v1050 = vunpack.c.l.b16 %v273
  %v1051 = vunpack.c.h.b16 %v273
  %v1052 = vunpack.c.l.b16 %v274
  %v1053 = vunpack.c.h.b16 %v274
  %v1054 = vunpack.c.l.b16 %v275
  %v1055 = vunpack.c.h.b16 %v275
  %v1056 = vunpack.c.l.b16 %v276
  %v1057 = vunpack.c.h.b16 %v276
  %v1058 = vunpack.c.l.b16 %v277
  %v1059 = vunpack.c.h.b16 %v277
  %v1060 = vunpack.c.l.b16 %v278
  %v1061 = vunpack.c.h.b16 %v278
  %v1062 = vunpack.c.l.b16 %v279
  %v1063 = vunpack.c.h.b16 %v279
  %v1064 = vunpack.c.l.b16 %v280
  %v1065 = vunpack.c.h.b16 %v280
  %v1066 = vunpack.c.l.b16 %v281
  %v1067 = vunpack.c.h.b16 %v281
  %v1068 = vunpack.c.l.b16 %v282
  %v1069 = vunpack.c.h.b16 %v282
  %v1070 = vunpack.c.l.b16 %v283
  %v1071 = vunpack.c.h.b16 %v283
  %v1072 = vunpack.c.l.b16 %v284
  %v1073 = vunpack.c.h.b16 %v284
  %v1074 = vunpack.c.l.b16 %v285
  %v1075 = vunpack.c.h.b16 %v285
  %v1076 = vpack.c.b16 %v568, %v564
  %v1077 = vpack.c.b16 %v569, %v565
  %v1078 = vpack.c.b16 %v570, %v566
  %v1079 = vpack.c.b16 %v571, %v567
  %v1080 = vpack.c.b16 %v576, %v572
  %v1081 = vpack.c.b16 %v577, %v573
  %v1082 = vpack.c.b16 %v578, %v574
  %v1083 = vpack.c.b16 %v579, %v575
  %v1084 = vpack.c.b16 %v584, %v580
  %v1085 = vpack.c.b16 %v585, %v581
  %v1086 = vpack.c.b16 %v586, %v582
  %v1087 = vpack.c.b16 %v587, %v583
  %v1088 = vpack.c.b16 %v592, %v588
  %v1089 = vpack.c.b16 %v593, %v589
  %v1090 = vpack.c.b16 %v594, %v590
  %v1091 = vpack.c.b16 %v595, %v591
  %v1092 = vpack.c.b16 %v600, %v596
  %v1093 = vpack.c.b16 %v601, %v597
  %v1094 = vpack.c.b16 %v602, %v598
  %v1095 = vpack.c.b16 %v603, %v599
  %v1096 = vpack.c.b16 %v608, %v604
  %v1097 = vpack.c.b16 %v609, %v605
  %v1098 = vpack.c.b16 %v610, %v606
  %v1099 = vpack.c.b16 %v611, %v607
  %v1100 = vpack.c.b16 %v616, %v612
  %v1101 = vpack.c.b16 %v617, %v613
  %v1102 = vpack.c.b16 %v618, %v614
  %v1103 = vpack.c.b16 %v619, %v615
  %v1104 = vpack.c.b16 %v624, %v620
  %v1105 = vpack.c.b16 %v625, %v621
  %v1106 = vpack.c.b16 %v626, %v622
  %v1107 = vpack.c.b16 %v627, %v623
  %v1108 = vpack.c.b16 %v632, %v628
  %v1109 = vpack.c.b16 %v633, %v629
  %v1110 = vpack.c.b16 %v634, %v630
  %v1111 = vpack.c.b16 %v635, %v631
  %v1112 = vpack.c.b16 %v640, %v636
  %v1113 = vpack.c.b16 %v641, %v637
  %v1114 = vpack.c.b16 %v642, %v638
  %v1115 = vpack.c.b16 %v643, %v639
  %v1116 = vpack.c.b16 %v648, %v644
  %v1117 = vpack.c.b16 %v649, %v645
  %v1118 = vpack.c.b16 %v650, %v646
  %v1119 = vpack.c.b16 %v651, %v647
  %v1120 = vpack.c.b16 %v656, %v652
  %v1121 = vpack.c.b16 %v657, %v653
  %v1122 = vpack.c.b16 %v658, %v654
  %v1123 = vpack.c.b16 %v659, %v655
  %v1124 = vpack.c.b16 %v664, %v660
  %v1125 = vpack.c.b16 %v665, %v661
  %v1126 = vpack.c.b16 %v666, %v662
  %v1127 = vpack.c.b16 %v667, %v663
  %v1128 = vpack.c.b16 %v672, %v668
  %v1129 = vpack.c.b16 %v673, %v669
  %v1130 = vpack.c.b16 %v674, %v670
  %v1131 = vpack.c.b16 %v675, %v671
  %v1132 = vpack.c.b16 %v680, %v676
  %v1133 = vpack.c.b16 %v681, %v677
  %v1134 = vpack.c.b16 %v682, %v678
  %v1135 = vpack.c.b16 %v683, %v679
  %v1136 = vpack.c.b16 %v688, %v684
  %v1137 = vpack.c.b16 %v689, %v685
  %v1138 = vpack.c.b16 %v690, %v686
  %v1139 = vpack.c.b16 %v691, %v687
  %v1140 = vpack.c.b16 %v696, %v692
  %v1141 = vpack.c.b16 %v697, %v693
  %v1142 = vpack.c.b16 %v698, %v694
  %v1143 = vpack.c.b16 %v699, %v695
  %v1144 = vpack.c.b16 %v704, %v700
  %v1145 = vpack.c.b16 %v705, %v701
  %v1146 = vpack.c.b16 %v706, %v702
  %v1147 = vpack.c.b16 %v707, %v703
  %v1148 = vpack.c.b16 %v712, %v708
  %v1149 = vpack.c.b16 %v713, %v709
  %v1150 = vpack.c.b16 %v714, %v710
  %v1151 = vpack.c.b16 %v715, %v711
  %v1152 = vpack.c.b16 %v720, %v716
  %v1153 = vpack.c.b16 %v721, %v717
  %v1154 = vpack.c.b16 %v722, %v718
  %v1155 = vpack.c.b16 %v723, %v719
  %v1156 = vpack.c.b16 %v728, %v724
  %v1157 = vpack.c.b16 %v729, %v725
  %v1158 = vpack.c.b16 %v730, %v726
  %v1159 = vpack.c.b16 %v731, %v727
  %v1160 = vpack.c.b16 %v736, %v732
  %v1161 = vpack.c.b16 %v737, %v733
  %v1162 = vpack.c.b16 %v738, %v734
  %v1163 = vpack.c.b16 %v739, %v735
  %v1164 = vpack.c.b16 %v744, %v740
  %v1165 = vpack.c.b16 %v745, %v741
  %v1166 = vpack.c.b16 %v746, %v742
  %v1167 = vpack.c.b16 %v747, %v743
  %v1168 = vpack.c.b16 %v752, %v748
  %v1169 = vpack.c.b16 %v753, %v749
  %v1170 = vpack.c.b16 %v754, %v750
  %v1171 = vpack.c.b16 %v755, %v751
  %v1172 = vpack.c.b16 %v760, %v756
  %v1173 = vpack.c.b16 %v761, %v757
  %v1174 = vpack.c.b16 %v762, %v758
  %v1175 = vpack.c.b16 %v763, %v759
  %v1176 = vpack.c.b16 %v768, %v764
  %v1177 = vpack.c.b16 %v769, %v765
  %v1178 = vpack.c.b16 %v770, %v766
  %v1179 = vpack.c.b16 %v771, %v767
  %v1180 = vpack.c.b16 %v776, %v772
  %v1181 = vpack.c.b16 %v777, %v773
  %v1182 = vpack.c.b16 %v778, %v774
  %v1183 = vpack.c.b16 %v779, %v775
  %v1184 = vpack.c.b16 %v784, %v780
  %v1185 = vpack.c.b16 %v785, %v781
  %v1186 = vpack.c.b16 %v786, %v782
  %v1187 = vpack.c.b16 %v787, %v783
  %v1188 = vpack.c.b16 %v792, %v788
  %v1189 = vpack.c.b16 %v793, %v789
  %v1190 = vpack.c.b16 %v794, %v790
  %v1191 = vpack.c.b16 %v795, %v791
  %v1192 = vpack.c.b16 %v800, %v796
  %v1193 = vpack.c.b16 %v801, %v797
  %v1194 = vpack.c.b16 %v802, %v798
  %v1195 = vpack.c.b16 %v803, %v799
  %v1196 = vpack.c.b16 %v808, %v804
  %v1197 = vpack.c.b16 %v809, %v805
  %v1198 = vpack.c.b16 %v810, %v806
  %v1199 = vpack.c.b16 %v811, %v807
  %v1200 = vpack.c.b16 %v816, %v812
  %v1201 = vpack.c.b16 %v817, %v813
  %v1202 = vpack.c.b16 %v818, %v814
  %v1203 = vpack.c.b16 %v819, %v815
  %v1204 = vpack.c.b16 %v824, %v820
  %v1205 = vpack.c.b16 %v825, %v821
  %v1206 = vpack.c.b16 %v826, %v822
  %v1207 = vpack.c.b16 %v827, %v823
  %v1208 = vpack.c.b16 %v832, %v828
  %v1209 = vpack.c.b16 %v833, %v829
  %v1210 = vpack.c.b16 %v834, %v830
  %v1211 = vpack.c.b16 %v835, %v831
  %v1212 = vpack.c.b16 %v840, %v836
  %v1213 = vpack.c.b16 %v841, %v837
  %v1214 = vpack.c.b16 %v842, %v838
  %v1215 = vpack.c.b16 %v843, %v839
  %v1216 = vpack.c.b16 %v848, %v844
  %v1217 = vpack.c.b16 %v849, %v845
  %v1218 = vpack.c.b16 %v850, %v846
  %v1219 = vpack.c.b16 %v851, %v847
  %v1220 = vpack.c.b16 %v856, %v852
  %v1221 = vpack.c.b16 %v857, %v853
  %v1222 = vpack.c.b16 %v858, %v854
  %v1223 = vpack.c.b16 %v859, %v855
  %v1224 = vpack.c.b16 %v864, %v860
  %v1225 = vpack.c.b16 %v865, %v861
  %v1226 = vpack.c.b16 %v866, %v862
  %v1227 = vpack.c.b16 %v867, %v863
  %v1228 = vpack.c.b16 %v872, %v868
  %v1229 = vpack.c.b16 %v873, %v869
  %v1230 = vpack.c.b16 %v874, %v870
  %v1231 = vpack.c.b16 %v875, %v871
  %v1232 = vpack.c.b16 %v880, %v876
  %v1233 = vpack.c.b16 %v881, %v877
  %v1234 = vpack.c.b16 %v882, %v878
  %v1235 = vpack.c.b16 %v883, %v879
  %v1236 = vpack.c.b16 %v888, %v884
  %v1237 = vpack.c.b16 %v889, %v885
  %v1238 = vpack.c.b16 %v890, %v886
  %v1239 = vpack.c.b16 %v891, %v887
  %v1240 = vpack.c.b16 %v896, %v892
  %v1241 = vpack.c.b16 %v897, %v893
  %v1242 = vpack.c.b16 %v898, %v894
  %v1243 = vpack.c.b16 %v899, %v895
  %v1244 = vpack.c.b16 %v904, %v900
  %v1245 = vpack.c.b16 %v905, %v901
  %v1246 = vpack.c.b16 %v906, %v902
  %v1247 = vpack.c.b16 %v907, %v903
  %v1248 = vpack.c.b16 %v912, %v908
  %v1249 = vpack.c.b16 %v913, %v909
  %v1250 = vpack.c.b16 %v914, %v910
  %v1251 = vpack.c.b16 %v915, %v911
  %v1252 = vpack.c.b16 %v920, %v916
  %v1253 = vpack.c.b16 %v921, %v917
  %v1254 = vpack.c.b16 %v922, %v918
  %v1255 = vpack.c.b16 %v923, %v919
  %v1256 = vpack.c.b16 %v928, %v924
  %v1257 = vpack.c.b16 %v929, %v925
  %v1258 = vpack.c.b16 %v930, %v926
  %v1259 = vpack.c.b16 %v931, %v927
  %v1260 = vpack.c.b16 %v936, %v932
  %v1261 = vpack.c.b16 %v937, %v933
  %v1262 = vpack.c.b16 %v938, %v934
  %v1263 = vpack.c.b16 %v939, %v935
  %v1264 = vpack.c.b16 %v944, %v940
  %v1265 = vpack.c.b16 %v945, %v941
  %v1266 = vpack.c.b16 %v946, %v942
  %v1267 = vpack.c.b16 %v947, %v943
  %v1268 = vpack.c.b16 %v952, %v948
  %v1269 = vpack.c.b16 %v953, %v949
  %v1270 = vpack.c.b16 %v954, %v950
  %v1271 = vpack.c.b16 %v955, %v951
  %v1272 = vpack.c.b16 %v960, %v956
  %v1273 = vpack.c.b16 %v961, %v957
  %v1274 = vpack.c.b16 %v962, %v958
  %v1275 = vpack.c.b16 %v963, %v959
  %v1276 = vpack.c.b16 %v968, %v964
  %v1277 = vpack.c.b16 %v969, %v965
  %v1278 = vpack.c.b16 %v970, %v966
  %v1279 = vpack.c.b16 %v971, %v967
  %v1280 = vpack.c.b16 %v976, %v972
  %v1281 = vpack.c.b16 %v977, %v973
  %v1282 = vpack.c.b16 %v978, %v974
  %v1283 = vpack.c.b16 %v979, %v975
  %v1284 = vpack.c.b16 %v984, %v980
  %v1285 = vpack.c.b16 %v985, %v981
  %v1286 = vpack.c.b16 %v986, %v982
  %v1287 = vpack.c.b16 %v987, %v983
  %v1288 = vpack.c.b16 %v992, %v988
  %v1289 = vpack.c.b16 %v993, %v989
  %v1290 = vpack.c.b16 %v994, %v990
  %v1291 = vpack.c.b16 %v995, %v991
  %v1292 = vpack.c.b16 %v1000, %v996
  %v1293 = vpack.c.b16 %v1001, %v997
  %v1294 = vpack.c.b16 %v1002, %v998
  %v1295 = vpack.c.b16 %v1003, %v999
  %v1296 = vpack.c.b16 %v1008, %v1004
  %v1297 = vpack.c.b16 %v1009, %v1005
  %v1298 = vpack.c.b16 %v1010, %v1006
  %v1299 = vpack.c.b16 %v1011, %v1007
  %v1300 = vpack.c.b16 %v1016, %v1012
  %v1301 = vpack.c.b16 %v1017, %v1013
  %v1302 = vpack.c.b16 %v1018, %v1014
  %v1303 = vpack.c.b16 %v1019, %v1015
  %v1304 = vpack.c.b16 %v1024, %v1020
  %v1305 = vpack.c.b16 %v1025, %v1021
  %v1306 = vpack.c.b16 %v1026, %v1022
  %v1307 = vpack.c.b16 %v1027, %v1023
  %v1308 = vpack.c.b16 %v1032, %v1028
  %v1309 = vpack.c.b16 %v1033, %v1029
  %v1310 = vpack.c.b16 %v1034, %v1030
  %v1311 = vpack.c.b16 %v1035, %v1031
  %v1312 = vpack.c.b16 %v1040, %v1036
  %v1313 = vpack.c.b16 %v1041, %v1037
  %v1314 = vpack.c.b16 %v1042, %v1038
  %v1315 = vpack.c.b16 %v1043, %v1039
  %v1316 = vpack.c.b16 %v1048, %v1044
  %v1317 = vpack.c.b16 %v1049, %v1045
  %v1318 = vpack.c.b16 %v1050, %v1046
  %v1319 = vpack.c.b16 %v1051, %v1047
  %v1320 = vpack.c.b16 %v1056, %v1052
  %v1321 = vpack.c.b16 %v1057, %v1053
  %v1322 = vpack.c.b16 %v1058, %v1054
  %v1323 = vpack.c.b16 %v1059, %v1055
  %v1324 = vpack.c.b16 %v1064, %v1060
  %v1325 = vpack.c.b16 %v1065, %v1061
  %v1326 = vpack.c.b16 %v1066, %v1062
  %v1327 = vpack.c.b16 %v1067, %v1063
  %v1328 = vpack.c.b16 %v1072, %v1068
  %v1329 = vpack.c.b16 %v1073, %v1069
  %v1330 = vpack.c.b16 %v1074, %v1070
  %v1331 = vpack.c.b16 %v1075, %v1071
  %1588 = vmatprep.subr.bf16.mxu0 %v1077
  %1589 = vmatpush1.bf16.msra.mxu0 %v1076
  %1590 = vmatprep.subr.bf16.mxu0 %v1081
  %1591 = vmatpush1.bf16.msra.mxu0 %v1080
  %1592 = vmatprep.subr.bf16.mxu0 %v1085
  %1593 = vmatpush1.bf16.msra.mxu0 %v1084
  %1594 = vmatprep.subr.bf16.mxu0 %v1089
  %1595 = vmatpush1.bf16.msra.mxu0 %v1088
  %1596 = vmatprep.subr.bf16.mxu0 %v1093
  %1597 = vmatpush1.bf16.msra.mxu0 %v1092
  %1598 = vmatprep.subr.bf16.mxu0 %v1097
  %1599 = vmatpush1.bf16.msra.mxu0 %v1096
  %1600 = vmatprep.subr.bf16.mxu0 %v1101
  %1601 = vmatpush1.bf16.msra.mxu0 %v1100
  %1602 = vmatprep.subr.bf16.mxu0 %v1105
  %1603 = vmatpush1.bf16.msra.mxu0 %v1104
  %1604 = vmatprep.subr.bf16.mxu0 %v1109
  %1605 = vmatpush1.bf16.msra.mxu0 %v1108
  %1606 = vmatprep.subr.bf16.mxu0 %v1113
  %1607 = vmatpush1.bf16.msra.mxu0 %v1112
  %1608 = vmatprep.subr.bf16.mxu0 %v1117
  %1609 = vmatpush1.bf16.msra.mxu0 %v1116
  %1610 = vmatprep.subr.bf16.mxu0 %v1121
  %1611 = vmatpush1.bf16.msra.mxu0 %v1120
  %1612 = vmatprep.subr.bf16.mxu0 %v1125
  %1613 = vmatpush1.bf16.msra.mxu0 %v1124
  %1614 = vmatprep.subr.bf16.mxu0 %v1129
  %1615 = vmatpush1.bf16.msra.mxu0 %v1128
  %1616 = vmatprep.subr.bf16.mxu0 %v1133
  %1617 = vmatpush1.bf16.msra.mxu0 %v1132
  %1618 = vmatprep.subr.bf16.mxu0 %v1137
  %1619 = vmatpush1.bf16.msra.mxu0 %v1136
  %1620 = vmatprep.mubr.bf16.mxu0 %v23
  %1621 = vmatmul.mubr.bf16.gmra.mrb[0].mxu0 %v22
  %v1622 = vpop.f32.mrb[0].mxu0
  %v1623 = vadd.f32 %v291, %v1622
  %v1624 = vpop.f32.mrb[0].mxu0
  %v1625 = vadd.f32 %v295, %v1624
  %v1626 = vpop.f32.mrb[0].mxu0
  %v1627 = vpop.f32.mrb[0].mxu0
  %1628 = vdwg.mxu0
  %1629 = vmatprep.subr.bf16.mxu0 %v1141
  %1630 = vmatpush1.bf16.msra.mxu0 %v1140
  %1631 = vmatprep.subr.bf16.mxu0 %v1145
  %1632 = vmatpush1.bf16.msra.mxu0 %v1144
  %1633 = vmatprep.subr.bf16.mxu0 %v1149
  %1634 = vmatpush1.bf16.msra.mxu0 %v1148
  %1635 = vmatprep.subr.bf16.mxu0 %v1153
  %1636 = vmatpush1.bf16.msra.mxu0 %v1152
  %1637 = vmatprep.subr.bf16.mxu0 %v1157
  %1638 = vmatpush1.bf16.msra.mxu0 %v1156
  %1639 = vmatprep.subr.bf16.mxu0 %v1161
  %1640 = vmatpush1.bf16.msra.mxu0 %v1160
  %1641 = vmatprep.subr.bf16.mxu0 %v1165
  %1642 = vmatpush1.bf16.msra.mxu0 %v1164
  %1643 = vmatprep.subr.bf16.mxu0 %v1169
  %1644 = vmatpush1.bf16.msra.mxu0 %v1168
  %1645 = vmatprep.subr.bf16.mxu0 %v1173
  %1646 = vmatpush1.bf16.msra.mxu0 %v1172
  %1647 = vmatprep.subr.bf16.mxu0 %v1177
  %1648 = vmatpush1.bf16.msra.mxu0 %v1176
  %1649 = vmatprep.subr.bf16.mxu0 %v1181
  %1650 = vmatpush1.bf16.msra.mxu0 %v1180
  %1651 = vmatprep.subr.bf16.mxu0 %v1185
  %1652 = vmatpush1.bf16.msra.mxu0 %v1184
  %1653 = vmatprep.subr.bf16.mxu0 %v1189
  %1654 = vmatpush1.bf16.msra.mxu0 %v1188
  %1655 = vmatprep.subr.bf16.mxu0 %v1193
  %1656 = vmatpush1.bf16.msra.mxu0 %v1192
  %1657 = vmatprep.subr.bf16.mxu0 %v1197
  %1658 = vmatpush1.bf16.msra.mxu0 %v1196
  %1659 = vmatprep.subr.bf16.mxu0 %v1201
  %1660 = vmatpush1.bf16.msra.mxu0 %v1200
  %1661 = vmatprep.mubr.bf16.mxu0 %v25
  %1662 = vmatmul.mubr.bf16.gmra.mrb[0].mxu0 %v24
  %v1663 = vpop.f32.mrb[0].mxu0
  %v1664 = vadd.f32 %v1623, %v1663
  %v1665 = vpop.f32.mrb[0].mxu0
  %v1666 = vadd.f32 %v1625, %v1665
  %v1667 = vpop.f32.mrb[0].mxu0
  %v1668 = vpop.f32.mrb[0].mxu0
  %1669 = vdwg.mxu0
  %1670 = vmatprep.subr.bf16.mxu0 %v1205
  %1671 = vmatpush1.bf16.msra.mxu0 %v1204
  %1672 = vmatprep.subr.bf16.mxu0 %v1209
  %1673 = vmatpush1.bf16.msra.mxu0 %v1208
  %1674 = vmatprep.subr.bf16.mxu0 %v1213
  %1675 = vmatpush1.bf16.msra.mxu0 %v1212
  %1676 = vmatprep.subr.bf16.mxu0 %v1217
  %1677 = vmatpush1.bf16.msra.mxu0 %v1216
  %1678 = vmatprep.subr.bf16.mxu0 %v1221
  %1679 = vmatpush1.bf16.msra.mxu0 %v1220
  %1680 = vmatprep.subr.bf16.mxu0 %v1225
  %1681 = vmatpush1.bf16.msra.mxu0 %v1224
  %1682 = vmatprep.subr.bf16.mxu0 %v1229
  %1683 = vmatpush1.bf16.msra.mxu0 %v1228
  %1684 = vmatprep.subr.bf16.mxu0 %v1233
  %1685 = vmatpush1.bf16.msra.mxu0 %v1232
  %1686 = vmatprep.subr.bf16.mxu0 %v1237
  %1687 = vmatpush1.bf16.msra.mxu0 %v1236
  %1688 = vmatprep.subr.bf16.mxu0 %v1241
  %1689 = vmatpush1.bf16.msra.mxu0 %v1240
  %1690 = vmatprep.subr.bf16.mxu0 %v1245
  %1691 = vmatpush1.bf16.msra.mxu0 %v1244
  %1692 = vmatprep.subr.bf16.mxu0 %v1249
  %1693 = vmatpush1.bf16.msra.mxu0 %v1248
  %1694 = vmatprep.subr.bf16.mxu0 %v1253
  %1695 = vmatpush1.bf16.msra.mxu0 %v1252
  %1696 = vmatprep.subr.bf16.mxu0 %v1257
  %1697 = vmatpush1.bf16.msra.mxu0 %v1256
  %1698 = vmatprep.subr.bf16.mxu0 %v1261
  %1699 = vmatpush1.bf16.msra.mxu0 %v1260
  %1700 = vmatprep.subr.bf16.mxu0 %v1265
  %1701 = vmatpush1.bf16.msra.mxu0 %v1264
  %1702 = vmatprep.mubr.bf16.mxu0 %v27
  %1703 = vmatmul.mubr.bf16.gmra.mrb[0].mxu0 %v26
  %v1704 = vpop.f32.mrb[0].mxu0
  %v1705 = vadd.f32 %v1664, %v1704
  %v1706 = vpop.f32.mrb[0].mxu0
  %v1707 = vadd.f32 %v1666, %v1706
  %v1708 = vpop.f32.mrb[0].mxu0
  %v1709 = vpop.f32.mrb[0].mxu0
  %1710 = vdwg.mxu0
  %1711 = vmatprep.subr.bf16.mxu0 %v1269
  %1712 = vmatpush1.bf16.msra.mxu0 %v1268
  %1713 = vmatprep.subr.bf16.mxu0 %v1273
  %1714 = vmatpush1.bf16.msra.mxu0 %v1272
  %1715 = vmatprep.subr.bf16.mxu0 %v1277
  %1716 = vmatpush1.bf16.msra.mxu0 %v1276
  %1717 = vmatprep.subr.bf16.mxu0 %v1281
  %1718 = vmatpush1.bf16.msra.mxu0 %v1280
  %1719 = vmatprep.subr.bf16.mxu0 %v1285
  %1720 = vmatpush1.bf16.msra.mxu0 %v1284
  %1721 = vmatprep.subr.bf16.mxu0 %v1289
  %1722 = vmatpush1.bf16.msra.mxu0 %v1288
  %1723 = vmatprep.subr.bf16.mxu0 %v1293
  %1724 = vmatpush1.bf16.msra.mxu0 %v1292
  %1725 = vmatprep.subr.bf16.mxu0 %v1297
  %1726 = vmatpush1.bf16.msra.mxu0 %v1296
  %1727 = vmatprep.subr.bf16.mxu0 %v1301
  %1728 = vmatpush1.bf16.msra.mxu0 %v1300
  %1729 = vmatprep.subr.bf16.mxu0 %v1305
  %1730 = vmatpush1.bf16.msra.mxu0 %v1304
  %1731 = vmatprep.subr.bf16.mxu0 %v1309
  %1732 = vmatpush1.bf16.msra.mxu0 %v1308
  %1733 = vmatprep.subr.bf16.mxu0 %v1313
  %1734 = vmatpush1.bf16.msra.mxu0 %v1312
  %1735 = vmatprep.subr.bf16.mxu0 %v1317
  %1736 = vmatpush1.bf16.msra.mxu0 %v1316
  %1737 = vmatprep.subr.bf16.mxu0 %v1321
  %1738 = vmatpush1.bf16.msra.mxu0 %v1320
  %1739 = vmatprep.subr.bf16.mxu0 %v1325
  %1740 = vmatpush1.bf16.msra.mxu0 %v1324
  %1741 = vmatprep.subr.bf16.mxu0 %v1329
  %1742 = vmatpush1.bf16.msra.mxu0 %v1328
  %1743 = vmatprep.mubr.bf16.mxu0 %v29
  %1744 = vmatmul.mubr.bf16.gmra.mrb[0].mxu0 %v28
  %v1745 = vpop.f32.mrb[0].mxu0
  %v1746 = vadd.f32 %v1705, %v1745
  %v1747 = vpop.f32.mrb[0].mxu0
  %v1748 = vadd.f32 %v1707, %v1747
  %v1749 = vpop.f32.mrb[0].mxu0
  %v1750 = vpop.f32.mrb[0].mxu0
  %1751 = vdwg.mxu0
  %1752 = vmatprep.subr.bf16.mxu0 %v1079
  %1753 = vmatpush1.bf16.msra.mxu0 %v1078
  %1754 = vmatprep.subr.bf16.mxu0 %v1083
  %1755 = vmatpush1.bf16.msra.mxu0 %v1082
  %1756 = vmatprep.subr.bf16.mxu0 %v1087
  %1757 = vmatpush1.bf16.msra.mxu0 %v1086
  %1758 = vmatprep.subr.bf16.mxu0 %v1091
  %1759 = vmatpush1.bf16.msra.mxu0 %v1090
  %1760 = vmatprep.subr.bf16.mxu0 %v1095
  %1761 = vmatpush1.bf16.msra.mxu0 %v1094
  %1762 = vmatprep.subr.bf16.mxu0 %v1099
  %1763 = vmatpush1.bf16.msra.mxu0 %v1098
  %1764 = vmatprep.subr.bf16.mxu0 %v1103
  %1765 = vmatpush1.bf16.msra.mxu0 %v1102
  %1766 = vmatprep.subr.bf16.mxu0 %v1107
  %1767 = vmatpush1.bf16.msra.mxu0 %v1106
  %1768 = vmatprep.subr.bf16.mxu0 %v1111
  %1769 = vmatpush1.bf16.msra.mxu0 %v1110
  %1770 = vmatprep.subr.bf16.mxu0 %v1115
  %1771 = vmatpush1.bf16.msra.mxu0 %v1114
  %1772 = vmatprep.subr.bf16.mxu0 %v1119
  %1773 = vmatpush1.bf16.msra.mxu0 %v1118
  %1774 = vmatprep.subr.bf16.mxu0 %v1123
  %1775 = vmatpush1.bf16.msra.mxu0 %v1122
  %1776 = vmatprep.subr.bf16.mxu0 %v1127
  %1777 = vmatpush1.bf16.msra.mxu0 %v1126
  %1778 = vmatprep.subr.bf16.mxu0 %v1131
  %1779 = vmatpush1.bf16.msra.mxu0 %v1130
  %1780 = vmatprep.subr.bf16.mxu0 %v1135
  %1781 = vmatpush1.bf16.msra.mxu0 %v1134
  %1782 = vmatprep.subr.bf16.mxu0 %v1139
  %1783 = vmatpush1.bf16.msra.mxu0 %v1138
  %1784 = vmatprep.mubr.bf16.mxu0 %v23
  %1785 = vmatmul.mubr.bf16.gmra.mrb[0].mxu0 %v22
  %v1786 = vpop.f32.mrb[0].mxu0
  %v1787 = vadd.f32 %v299, %v1786
  %v1788 = vpop.f32.mrb[0].mxu0
  %v1789 = vadd.f32 %v303, %v1788
  %v1790 = vpop.f32.mrb[0].mxu0
  %v1791 = vpop.f32.mrb[0].mxu0
  %1792 = vdwg.mxu0
  %1793 = vmatprep.subr.bf16.mxu0 %v1143
  %1794 = vmatpush1.bf16.msra.mxu0 %v1142
  %1795 = vmatprep.subr.bf16.mxu0 %v1147
  %1796 = vmatpush1.bf16.msra.mxu0 %v1146
  %1797 = vmatprep.subr.bf16.mxu0 %v1151
  %1798 = vmatpush1.bf16.msra.mxu0 %v1150
  %1799 = vmatprep.subr.bf16.mxu0 %v1155
  %1800 = vmatpush1.bf16.msra.mxu0 %v1154
  %1801 = vmatprep.subr.bf16.mxu0 %v1159
  %1802 = vmatpush1.bf16.msra.mxu0 %v1158
  %1803 = vmatprep.subr.bf16.mxu0 %v1163
  %1804 = vmatpush1.bf16.msra.mxu0 %v1162
  %1805 = vmatprep.subr.bf16.mxu0 %v1167
  %1806 = vmatpush1.bf16.msra.mxu0 %v1166
  %1807 = vmatprep.subr.bf16.mxu0 %v1171
  %1808 = vmatpush1.bf16.msra.mxu0 %v1170
  %1809 = vmatprep.subr.bf16.mxu0 %v1175
  %1810 = vmatpush1.bf16.msra.mxu0 %v1174
  %1811 = vmatprep.subr.bf16.mxu0 %v1179
  %1812 = vmatpush1.bf16.msra.mxu0 %v1178
  %1813 = vmatprep.subr.bf16.mxu0 %v1183
  %1814 = vmatpush1.bf16.msra.mxu0 %v1182
  %1815 = vmatprep.subr.bf16.mxu0 %v1187
  %1816 = vmatpush1.bf16.msra.mxu0 %v1186
  %1817 = vmatprep.subr.bf16.mxu0 %v1191
  %1818 = vmatpush1.bf16.msra.mxu0 %v1190
  %1819 = vmatprep.subr.bf16.mxu0 %v1195
  %1820 = vmatpush1.bf16.msra.mxu0 %v1194
  %1821 = vmatprep.subr.bf16.mxu0 %v1199
  %1822 = vmatpush1.bf16.msra.mxu0 %v1198
  %1823 = vmatprep.subr.bf16.mxu0 %v1203
  %1824 = vmatpush1.bf16.msra.mxu0 %v1202
  %1825 = vmatprep.mubr.bf16.mxu0 %v25
  %1826 = vmatmul.mubr.bf16.gmra.mrb[0].mxu0 %v24
  %v1827 = vpop.f32.mrb[0].mxu0
  %v1828 = vadd.f32 %v1787, %v1827
  %v1829 = vpop.f32.mrb[0].mxu0
  %v1830 = vadd.f32 %v1789, %v1829
  %v1831 = vpop.f32.mrb[0].mxu0
  %v1832 = vpop.f32.mrb[0].mxu0
  %1833 = vdwg.mxu0
  %1834 = vmatprep.subr.bf16.mxu0 %v1207
  %1835 = vmatpush1.bf16.msra.mxu0 %v1206
  %1836 = vmatprep.subr.bf16.mxu0 %v1211
  %1837 = vmatpush1.bf16.msra.mxu0 %v1210
  %1838 = vmatprep.subr.bf16.mxu0 %v1215
  %1839 = vmatpush1.bf16.msra.mxu0 %v1214
  %1840 = vmatprep.subr.bf16.mxu0 %v1219
  %1841 = vmatpush1.bf16.msra.mxu0 %v1218
  %1842 = vmatprep.subr.bf16.mxu0 %v1223
  %1843 = vmatpush1.bf16.msra.mxu0 %v1222
  %1844 = vmatprep.subr.bf16.mxu0 %v1227
  %1845 = vmatpush1.bf16.msra.mxu0 %v1226
  %1846 = vmatprep.subr.bf16.mxu0 %v1231
  %1847 = vmatpush1.bf16.msra.mxu0 %v1230
  %1848 = vmatprep.subr.bf16.mxu0 %v1235
  %1849 = vmatpush1.bf16.msra.mxu0 %v1234
  %1850 = vmatprep.subr.bf16.mxu0 %v1239
  %1851 = vmatpush1.bf16.msra.mxu0 %v1238
  %1852 = vmatprep.subr.bf16.mxu0 %v1243
  %1853 = vmatpush1.bf16.msra.mxu0 %v1242
  %1854 = vmatprep.subr.bf16.mxu0 %v1247
  %1855 = vmatpush1.bf16.msra.mxu0 %v1246
  %1856 = vmatprep.subr.bf16.mxu0 %v1251
  %1857 = vmatpush1.bf16.msra.mxu0 %v1250
  %1858 = vmatprep.subr.bf16.mxu0 %v1255
  %1859 = vmatpush1.bf16.msra.mxu0 %v1254
  %1860 = vmatprep.subr.bf16.mxu0 %v1259
  %1861 = vmatpush1.bf16.msra.mxu0 %v1258
  %1862 = vmatprep.subr.bf16.mxu0 %v1263
  %1863 = vmatpush1.bf16.msra.mxu0 %v1262
  %1864 = vmatprep.subr.bf16.mxu0 %v1267
  %1865 = vmatpush1.bf16.msra.mxu0 %v1266
  %1866 = vmatprep.mubr.bf16.mxu0 %v27
  %1867 = vmatmul.mubr.bf16.gmra.mrb[0].mxu0 %v26
  %v1868 = vpop.f32.mrb[0].mxu0
  %v1869 = vadd.f32 %v1828, %v1868
  %v1870 = vpop.f32.mrb[0].mxu0
  %v1871 = vadd.f32 %v1830, %v1870
  %v1872 = vpop.f32.mrb[0].mxu0
  %v1873 = vpop.f32.mrb[0].mxu0
  %1874 = vdwg.mxu0
  %1875 = vmatprep.subr.bf16.mxu0 %v1271
  %1876 = vmatpush1.bf16.msra.mxu0 %v1270
  %1877 = vmatprep.subr.bf16.mxu0 %v1275
  %1878 = vmatpush1.bf16.msra.mxu0 %v1274
  %1879 = vmatprep.subr.bf16.mxu0 %v1279
  %1880 = vmatpush1.bf16.msra.mxu0 %v1278
  %1881 = vmatprep.subr.bf16.mxu0 %v1283
  %1882 = vmatpush1.bf16.msra.mxu0 %v1282
  %1883 = vmatprep.subr.bf16.mxu0 %v1287
  %1884 = vmatpush1.bf16.msra.mxu0 %v1286
  %1885 = vmatprep.subr.bf16.mxu0 %v1291
  %1886 = vmatpush1.bf16.msra.mxu0 %v1290
  %1887 = vmatprep.subr.bf16.mxu0 %v1295
  %1888 = vmatpush1.bf16.msra.mxu0 %v1294
  %1889 = vmatprep.subr.bf16.mxu0 %v1299
  %1890 = vmatpush1.bf16.msra.mxu0 %v1298
  %1891 = vmatprep.subr.bf16.mxu0 %v1303
  %1892 = vmatpush1.bf16.msra.mxu0 %v1302
  %1893 = vmatprep.subr.bf16.mxu0 %v1307
  %1894 = vmatpush1.bf16.msra.mxu0 %v1306
  %1895 = vmatprep.subr.bf16.mxu0 %v1311
  %1896 = vmatpush1.bf16.msra.mxu0 %v1310
  %1897 = vmatprep.subr.bf16.mxu0 %v1315
  %1898 = vmatpush1.bf16.msra.mxu0 %v1314
  %1899 = vmatprep.subr.bf16.mxu0 %v1319
  %1900 = vmatpush1.bf16.msra.mxu0 %v1318
  %1901 = vmatprep.subr.bf16.mxu0 %v1323
  %1902 = vmatpush1.bf16.msra.mxu0 %v1322
  %1903 = vmatprep.subr.bf16.mxu0 %v1327
  %1904 = vmatpush1.bf16.msra.mxu0 %v1326
  %1905 = vmatprep.subr.bf16.mxu0 %v1331
  %1906 = vmatpush1.bf16.msra.mxu0 %v1330
  %1907 = vmatprep.mubr.bf16.mxu0 %v29
  %1908 = vmatmul.mubr.bf16.gmra.mrb[0].mxu0 %v28
  %v1909 = vpop.f32.mrb[0].mxu0
  %v1910 = vadd.f32 %v1869, %v1909
  %v1911 = vpop.f32.mrb[0].mxu0
  %v1912 = vadd.f32 %v1871, %v1911
  %v1913 = vpop.f32.mrb[0].mxu0
  %v1914 = vpop.f32.mrb[0].mxu0
  %1915 = vdwg.mxu0
  %v1916 = vmax.f32 %v1746, 0.0
  %v1917 = vmax.f32 %v1748, 0.0
  %v1918 = vmax.f32 %v1910, 0.0
  %v1919 = vmax.f32 %v1912, 0.0
  %1920 = vst [vmem:[%s3] sm:$0xff] %v1916
  %1921 = vst [vmem:[%s3 + $0x8] sm:$0xff] %v1917
  %1922 = vst [vmem:[%s3 + $0x10] sm:$0xff] %v1918
  %1923 = vst [vmem:[%s3 + $0x18] sm:$0xff] %v1919
  // Predicated region
  $region14: #{detector_backbone_with_fpn.11} parent=0 // pred_check
    _
  $region15: #{detector_backbone_with_fpn.11} parent=0 // pred_check_branch
    %1925 = sbr.rel (0) target = $region17
  $region16: #{detector_backbone_with_fpn.11} parent=0 // pred_region
    _
  $region17: #{detector_backbone_with_fpn.11} parent=0 // pred_fallthru
    _
  // Predicated region
  $region18: #{detector_backbone_with_fpn.11} parent=0 // pred_check
    _
  $region19: #{detector_backbone_with_fpn.11} parent=0 // pred_check_branch
    %1927 = sbr.rel (0) target = $region21
  $region20: #{detector_backbone_with_fpn.11} parent=0 // pred_region
    _
  $region21: #{detector_backbone_with_fpn.11} parent=0 // pred_fallthru
    _

// kernel: detector_backbone_with_fpn.14
$region0: #{detector_backbone_with_fpn.14}
  #allocation0 [shape = 'u32[]', space=smem, size = 0x4, offset = 0x4, fixed_abs, tag = 'smem constant byte address 0x4 - core index']
  #allocation1 [shape = 'u32[144,128]{1,0:T(1,128)}', space=vmem, size = 0x12000, scoped, tag = 'internal scratch']
  %s0 = inlined_call_operand.vmem [shape: f32[32,256], index: 0, kind: input, shape index: {}]
  %s1 = inlined_call_operand.vmem [shape: bf16[256,128], index: 1, kind: input, shape index: {}]
  %s2 = inlined_call_operand.vmem [shape: f32[1,128], index: 2, kind: input, shape index: {}]
  %s3 = inlined_call_operand.vmem [shape: f32[32,128], index: 3, kind: input, shape index: {}]
  %s4 = inlined_call_operand.vmem [shape: f32[32,128], index: 4, kind: output, shape index: {}]
  %s5 = sld [smem:[#allocation0]]
  $region26: #{detector_backbone_with_fpn.14} parent=0
    _
  %s7 = ssub.s32 1, %s5
  %s8 = scalar_select 0, %s7, %s5
  // Predicated region
  $region2: #{detector_backbone_with_fpn.14} parent=0 // pred_check
    _
  $region3: #{detector_backbone_with_fpn.14} parent=0 // pred_check_branch
    %10 = sbr.rel (0) target = $region5
  $region4: #{detector_backbone_with_fpn.14} parent=0 // pred_region
    _
  $region5: #{detector_backbone_with_fpn.14} parent=0 // pred_fallthru
    _
  // Predicated region
  $region6: #{detector_backbone_with_fpn.14} parent=0 // pred_check
    _
  $region7: #{detector_backbone_with_fpn.14} parent=0 // pred_check_branch
    %12 = sbr.rel (0) target = $region9
  $region8: #{detector_backbone_with_fpn.14} parent=0 // pred_region
    _
  $region9: #{detector_backbone_with_fpn.14} parent=0 // pred_fallthru
    _
  // Predicated region
  $region10: #{detector_backbone_with_fpn.14} parent=0 // pred_check
    _
  $region11: #{detector_backbone_with_fpn.14} parent=0 // pred_check_branch
    %14 = sbr.rel (0) target = $region13
  $region12: #{detector_backbone_with_fpn.14} parent=0 // pred_region
    _
  $region13: #{detector_backbone_with_fpn.14} parent=0 // pred_fallthru
    _
  // Predicated region
  $region14: #{detector_backbone_with_fpn.14} parent=0 // pred_check
    _
  $region15: #{detector_backbone_with_fpn.14} parent=0 // pred_check_branch
    %16 = sbr.rel (0) target = $region17
  $region16: #{detector_backbone_with_fpn.14} parent=0 // pred_region
    _
  $region17: #{detector_backbone_with_fpn.14} parent=0 // pred_fallthru
    _
  %v18 = vld [vmem:[%s0] sm:$0xff]
  %v19 = vld [vmem:[%s0 + $0x8] sm:$0xff]
  %v20 = vld [vmem:[%s0 + $0x10] sm:$0xff]
  %v21 = vld [vmem:[%s0 + $0x18] sm:$0xff]
  %v22 = vld [vmem:[%s0 + $0x20] sm:$0xff]
  %v23 = vld [vmem:[%s0 + $0x28] sm:$0xff]
  %v24 = vld [vmem:[%s0 + $0x30] sm:$0xff]
  %v25 = vld [vmem:[%s0 + $0x38] sm:$0xff]
  %v26 = vpack.c.bf16 %v20, %v18
  %v27 = vpack.c.bf16 %v21, %v19
  %v28 = vpack.c.bf16 %v24, %v22
  %v29 = vpack.c.bf16 %v25, %v23
  %v30 = vld [vmem:[%s1] sm:$0xf]
  %v31 = vld [vmem:[%s1 + $0x4] sm:$0xf]
  %v32 = vld [vmem:[%s1 + $0x8] sm:$0xf]
  %v33 = vld [vmem:[%s1 + $0xc] sm:$0xf]
  %v34 = vld [vmem:[%s1 + $0x10] sm:$0xf]
  %v35 = vld [vmem:[%s1 + $0x14] sm:$0xf]
  %v36 = vld [vmem:[%s1 + $0x18] sm:$0xf]
  %v37 = vld [vmem:[%s1 + $0x1c] sm:$0xf]
  %v38 = vld [vmem:[%s1 + $0x20] sm:$0xf]
  %v39 = vld [vmem:[%s1 + $0x24] sm:$0xf]
  %v40 = vld [vmem:[%s1 + $0x28] sm:$0xf]
  %v41 = vld [vmem:[%s1 + $0x2c] sm:$0xf]
  %v42 = vld [vmem:[%s1 + $0x30] sm:$0xf]
  %v43 = vld [vmem:[%s1 + $0x34] sm:$0xf]
  %v44 = vld [vmem:[%s1 + $0x38] sm:$0xf]
  %v45 = vld [vmem:[%s1 + $0x3c] sm:$0xf]
  %v46 = vld [vmem:[%s1 + $0x40] sm:$0xf]
  %v47 = vld [vmem:[%s1 + $0x44] sm:$0xf]
  %v48 = vld [vmem:[%s1 + $0x48] sm:$0xf]
  %v49 = vld [vmem:[%s1 + $0x4c] sm:$0xf]
  %v50 = vld [vmem:[%s1 + $0x50] sm:$0xf]
  %v51 = vld [vmem:[%s1 + $0x54] sm:$0xf]
  %v52 = vld [vmem:[%s1 + $0x58] sm:$0xf]
  %v53 = vld [vmem:[%s1 + $0x5c] sm:$0xf]
  %v54 = vld [vmem:[%s1 + $0x60] sm:$0xf]
  %v55 = vld [vmem:[%s1 + $0x64] sm:$0xf]
  %v56 = vld [vmem:[%s1 + $0x68] sm:$0xf]
  %v57 = vld [vmem:[%s1 + $0x6c] sm:$0xf]
  %v58 = vld [vmem:[%s1 + $0x70] sm:$0xf]
  %v59 = vld [vmem:[%s1 + $0x74] sm:$0xf]
  %v60 = vld [vmem:[%s1 + $0x78] sm:$0xf]
  %v61 = vld [vmem:[%s1 + $0x7c] sm:$0xf]
  %v62 = vld [vmem:[%s2] sm:$0x1]
  %v64 = vlaneseq
  %v65 = vshrl.u32 %v64, 7
  %v66 = vsub.s32 0, %v65
  %v67 = vrot.slane %v62, %v66
  %v101 = vunpack.c.l.b16 %v30
  %v102 = vunpack.c.l.b16 %v31
  %v103 = vunpack.c.l.b16 %v32
  %v104 = vunpack.c.l.b16 %v33
  %v105 = vunpack.c.l.b16 %v34
  %v106 = vunpack.c.l.b16 %v35
  %v107 = vunpack.c.l.b16 %v36
  %v108 = vunpack.c.l.b16 %v37
  %v109 = vunpack.c.l.b16 %v38
  %v110 = vunpack.c.l.b16 %v39
  %v111 = vunpack.c.l.b16 %v40
  %v112 = vunpack.c.l.b16 %v41
  %v113 = vunpack.c.l.b16 %v42
  %v114 = vunpack.c.l.b16 %v43
  %v115 = vunpack.c.l.b16 %v44
  %v116 = vunpack.c.l.b16 %v45
  %v117 = vunpack.c.l.b16 %v46
  %v118 = vunpack.c.l.b16 %v47
  %v119 = vunpack.c.l.b16 %v48
  %v120 = vunpack.c.l.b16 %v49
  %v121 = vunpack.c.l.b16 %v50
  %v122 = vunpack.c.l.b16 %v51
  %v123 = vunpack.c.l.b16 %v52
  %v124 = vunpack.c.l.b16 %v53
  %v125 = vunpack.c.l.b16 %v54
  %v126 = vunpack.c.l.b16 %v55
  %v127 = vunpack.c.l.b16 %v56
  %v128 = vunpack.c.l.b16 %v57
  %v129 = vunpack.c.l.b16 %v58
  %v130 = vunpack.c.l.b16 %v59
  %v131 = vunpack.c.l.b16 %v60
  %v132 = vunpack.c.l.b16 %v61
  %v133 = vpack.c.b16 %v102, %v101
  %v134 = vpack.c.b16 %v104, %v103
  %v135 = vpack.c.b16 %v106, %v105
  %v136 = vpack.c.b16 %v108, %v107
  %v137 = vpack.c.b16 %v110, %v109
  %v138 = vpack.c.b16 %v112, %v111
  %v139 = vpack.c.b16 %v114, %v113
  %v140 = vpack.c.b16 %v116, %v115
  %v141 = vpack.c.b16 %v118, %v117
  %v142 = vpack.c.b16 %v120, %v119
  %v143 = vpack.c.b16 %v122, %v121
  %v144 = vpack.c.b16 %v124, %v123
  %v145 = vpack.c.b16 %v126, %v125
  %v146 = vpack.c.b16 %v128, %v127
  %v147 = vpack.c.b16 %v130, %v129
  %v148 = vpack.c.b16 %v132, %v131
  %165 = vmatprep.subr.bf16.mxu0 0
  %166 = vmatpush1.bf16.msra.mxu0 %v133
  %167 = vmatprep.subr.bf16.mxu0 0
  %168 = vmatpush1.bf16.msra.mxu0 %v134
  %169 = vmatprep.subr.bf16.mxu0 0
  %170 = vmatpush1.bf16.msra.mxu0 %v135
  %171 = vmatprep.subr.bf16.mxu0 0
  %172 = vmatpush1.bf16.msra.mxu0 %v136
  %173 = vmatprep.subr.bf16.mxu0 0
  %174 = vmatpush1.bf16.msra.mxu0 %v137
  %175 = vmatprep.subr.bf16.mxu0 0
  %176 = vmatpush1.bf16.msra.mxu0 %v138
  %177 = vmatprep.subr.bf16.mxu0 0
  %178 = vmatpush1.bf16.msra.mxu0 %v139
  %179 = vmatprep.subr.bf16.mxu0 0
  %180 = vmatpush1.bf16.msra.mxu0 %v140
  %181 = vmatprep.subr.bf16.mxu0 0
  %182 = vmatpush1.bf16.msra.mxu0 %v141
  %183 = vmatprep.subr.bf16.mxu0 0
  %184 = vmatpush1.bf16.msra.mxu0 %v142
  %185 = vmatprep.subr.bf16.mxu0 0
  %186 = vmatpush1.bf16.msra.mxu0 %v143
  %187 = vmatprep.subr.bf16.mxu0 0
  %188 = vmatpush1.bf16.msra.mxu0 %v144
  %189 = vmatprep.subr.bf16.mxu0 0
  %190 = vmatpush1.bf16.msra.mxu0 %v145
  %191 = vmatprep.subr.bf16.mxu0 0
  %192 = vmatpush1.bf16.msra.mxu0 %v146
  %193 = vmatprep.subr.bf16.mxu0 0
  %194 = vmatpush1.bf16.msra.mxu0 %v147
  %195 = vmatprep.subr.bf16.mxu0 0
  %196 = vmatpush1.bf16.msra.mxu0 %v148
  %197 = vmatprep.mubr.bf16.mxu0 %v27
  %198 = vmatmul.mubr.bf16.gmra.mrb[0].mxu0 %v26
  %v199 = vpop.f32.mrb[0].mxu0
  %v200 = vadd.f32 %v67, %v199
  %v201 = vpop.f32.mrb[0].mxu0
  %v202 = vpop.f32.mrb[0].mxu0
  %v203 = vadd.f32 %v67, %v202
  %v204 = vpop.f32.mrb[0].mxu0
  %205 = vmatprep.mubr.bf16.mxu0 %v29
  %206 = vmatmul.mubr.bf16.gmra.mrb[0].mxu0 %v28
  %v207 = vpop.f32.mrb[0].mxu0
  %v208 = vadd.f32 %v67, %v207
  %v209 = vpop.f32.mrb[0].mxu0
  %v210 = vpop.f32.mrb[0].mxu0
  %v211 = vadd.f32 %v67, %v210
  %v212 = vpop.f32.mrb[0].mxu0
  %213 = vdwg.mxu0
  %v214 = vld [vmem:[%s3] sm:$0xff]
  %v215 = vld [vmem:[%s3 + $0x8] sm:$0xff]
  %v216 = vld [vmem:[%s3 + $0x10] sm:$0xff]
  %v217 = vld [vmem:[%s3 + $0x18] sm:$0xff]
  %v218 = vadd.f32 %v200, %v214
  %v219 = vadd.f32 %v203, %v215
  %v220 = vadd.f32 %v208, %v216
  %v221 = vadd.f32 %v211, %v217
  %222 = vst [vmem:[%s4] sm:$0xff] %v218
  %223 = vst [vmem:[%s4 + $0x8] sm:$0xff] %v219
  %224 = vst [vmem:[%s4 + $0x10] sm:$0xff] %v220
  %225 = vst [vmem:[%s4 + $0x18] sm:$0xff] %v221
  // Predicated region
  $region18: #{detector_backbone_with_fpn.14} parent=0 // pred_check
    _
  $region19: #{detector_backbone_with_fpn.14} parent=0 // pred_check_branch
    %227 = sbr.rel (0) target = $region21
  $region20: #{detector_backbone_with_fpn.14} parent=0 // pred_region
    _
  $region21: #{detector_backbone_with_fpn.14} parent=0 // pred_fallthru
    _
  // Predicated region
  $region22: #{detector_backbone_with_fpn.14} parent=0 // pred_check
    _
  $region23: #{detector_backbone_with_fpn.14} parent=0 // pred_check_branch
    %229 = sbr.rel (0) target = $region25
  $region24: #{detector_backbone_with_fpn.14} parent=0 // pred_region
    _
  $region25: #{detector_backbone_with_fpn.14} parent=0 // pred_fallthru
    _

// kernel: detector_backbone_with_fpn.16
$region0: #{detector_backbone_with_fpn.16}
  #allocation0 [shape = 'u32[]', space=smem, size = 0x4, offset = 0x4, fixed_abs, tag = 'smem constant byte address 0x4 - core index']
  #allocation1 [shape = 'u32[144,128]{1,0:T(1,128)}', space=vmem, size = 0x12000, scoped, tag = 'internal scratch']
  %s0 = inlined_call_operand.vmem [shape: f32[128,128], index: 0, kind: input, shape index: {}]
  %s1 = inlined_call_operand.vmem [shape: bf16[128,128], index: 1, kind: input, shape index: {}]
  %s2 = inlined_call_operand.vmem [shape: f32[1,128], index: 2, kind: input, shape index: {}]
  %s3 = inlined_call_operand.vmem [shape: f32[128,128], index: 3, kind: input, shape index: {}]
  %s4 = inlined_call_operand.vmem [shape: f32[128,128], index: 4, kind: output, shape index: {}]
  %s5 = sld [smem:[#allocation0]]
  $region26: #{detector_backbone_with_fpn.16} parent=0
    _
  %s7 = ssub.s32 1, %s5
  %s8 = scalar_select 0, %s7, %s5
  // Predicated region
  $region2: #{detector_backbone_with_fpn.16} parent=0 // pred_check
    _
  $region3: #{detector_backbone_with_fpn.16} parent=0 // pred_check_branch
    %10 = sbr.rel (0) target = $region5
  $region4: #{detector_backbone_with_fpn.16} parent=0 // pred_region
    _
  $region5: #{detector_backbone_with_fpn.16} parent=0 // pred_fallthru
    _
  // Predicated region
  $region6: #{detector_backbone_with_fpn.16} parent=0 // pred_check
    _
  $region7: #{detector_backbone_with_fpn.16} parent=0 // pred_check_branch
    %12 = sbr.rel (0) target = $region9
  $region8: #{detector_backbone_with_fpn.16} parent=0 // pred_region
    _
  $region9: #{detector_backbone_with_fpn.16} parent=0 // pred_fallthru
    _
  // Predicated region
  $region10: #{detector_backbone_with_fpn.16} parent=0 // pred_check
    _
  $region11: #{detector_backbone_with_fpn.16} parent=0 // pred_check_branch
    %14 = sbr.rel (0) target = $region13
  $region12: #{detector_backbone_with_fpn.16} parent=0 // pred_region
    _
  $region13: #{detector_backbone_with_fpn.16} parent=0 // pred_fallthru
    _
  // Predicated region
  $region14: #{detector_backbone_with_fpn.16} parent=0 // pred_check
    _
  $region15: #{detector_backbone_with_fpn.16} parent=0 // pred_check_branch
    %16 = sbr.rel (0) target = $region17
  $region16: #{detector_backbone_with_fpn.16} parent=0 // pred_region
    _
  $region17: #{detector_backbone_with_fpn.16} parent=0 // pred_fallthru
    _
  %v18 = vld [vmem:[%s0] sm:$0xff]
  %v19 = vld [vmem:[%s0 + $0x8] sm:$0xff]
  %v20 = vld [vmem:[%s0 + $0x10] sm:$0xff]
  %v21 = vld [vmem:[%s0 + $0x18] sm:$0xff]
  %v22 = vld [vmem:[%s0 + $0x20] sm:$0xff]
  %v23 = vld [vmem:[%s0 + $0x28] sm:$0xff]
  %v24 = vld [vmem:[%s0 + $0x30] sm:$0xff]
  %v25 = vld [vmem:[%s0 + $0x38] sm:$0xff]
  %v26 = vld [vmem:[%s0 + $0x40] sm:$0xff]
  %v27 = vld [vmem:[%s0 + $0x48] sm:$0xff]
  %v28 = vld [vmem:[%s0 + $0x50] sm:$0xff]
  %v29 = vld [vmem:[%s0 + $0x58] sm:$0xff]
  %v30 = vld [vmem:[%s0 + $0x60] sm:$0xff]
  %v31 = vld [vmem:[%s0 + $0x68] sm:$0xff]
  %v32 = vld [vmem:[%s0 + $0x70] sm:$0xff]
  %v33 = vld [vmem:[%s0 + $0x78] sm:$0xff]
  %v34 = vpack.c.bf16 %v19, %v18
  %v35 = vpack.c.bf16 %v21, %v20
  %v36 = vpack.c.bf16 %v23, %v22
  %v37 = vpack.c.bf16 %v25, %v24
  %v38 = vpack.c.bf16 %v27, %v26
  %v39 = vpack.c.bf16 %v29, %v28
  %v40 = vpack.c.bf16 %v31, %v30
  %v41 = vpack.c.bf16 %v33, %v32
  %v42 = vld [vmem:[%s1] sm:$0xf]
  %v43 = vld [vmem:[%s1 + $0x4] sm:$0xf]
  %v44 = vld [vmem:[%s1 + $0x8] sm:$0xf]
  %v45 = vld [vmem:[%s1 + $0xc] sm:$0xf]
  %v46 = vld [vmem:[%s1 + $0x10] sm:$0xf]
  %v47 = vld [vmem:[%s1 + $0x14] sm:$0xf]
  %v48 = vld [vmem:[%s1 + $0x18] sm:$0xf]
  %v49 = vld [vmem:[%s1 + $0x1c] sm:$0xf]
  %v50 = vld [vmem:[%s1 + $0x20] sm:$0xf]
  %v51 = vld [vmem:[%s1 + $0x24] sm:$0xf]
  %v52 = vld [vmem:[%s1 + $0x28] sm:$0xf]
  %v53 = vld [vmem:[%s1 + $0x2c] sm:$0xf]
  %v54 = vld [vmem:[%s1 + $0x30] sm:$0xf]
  %v55 = vld [vmem:[%s1 + $0x34] sm:$0xf]
  %v56 = vld [vmem:[%s1 + $0x38] sm:$0xf]
  %v57 = vld [vmem:[%s1 + $0x3c] sm:$0xf]
  %v58 = vld [vmem:[%s2] sm:$0x1]
  %v60 = vlaneseq
  %v61 = vshrl.u32 %v60, 7
  %v62 = vsub.s32 0, %v61
  %v63 = vrot.slane %v58, %v62
  %v81 = vunpack.c.l.b16 %v42
  %v82 = vunpack.c.l.b16 %v43
  %v83 = vunpack.c.l.b16 %v44
  %v84 = vunpack.c.l.b16 %v45
  %v85 = vunpack.c.l.b16 %v46
  %v86 = vunpack.c.l.b16 %v47
  %v87 = vunpack.c.l.b16 %v48
  %v88 = vunpack.c.l.b16 %v49
  %v89 = vunpack.c.l.b16 %v50
  %v90 = vunpack.c.l.b16 %v51
  %v91 = vunpack.c.l.b16 %v52
  %v92 = vunpack.c.l.b16 %v53
  %v93 = vunpack.c.l.b16 %v54
  %v94 = vunpack.c.l.b16 %v55
  %v95 = vunpack.c.l.b16 %v56
  %v96 = vunpack.c.l.b16 %v57
  %v97 = vpack.c.b16 %v82, %v81
  %v98 = vpack.c.b16 %v84, %v83
  %v99 = vpack.c.b16 %v86, %v85
  %v100 = vpack.c.b16 %v88, %v87
  %v101 = vpack.c.b16 %v90, %v89
  %v102 = vpack.c.b16 %v92, %v91
  %v103 = vpack.c.b16 %v94, %v93
  %v104 = vpack.c.b16 %v96, %v95
  %113 = vmatprep.subr.bf16.mxu0 0
  %114 = vmatpush1.bf16.msra.mxu0 %v97
  %115 = vmatprep.subr.bf16.mxu0 0
  %116 = vmatpush1.bf16.msra.mxu0 %v98
  %117 = vmatprep.subr.bf16.mxu0 0
  %118 = vmatpush1.bf16.msra.mxu0 %v99
  %119 = vmatprep.subr.bf16.mxu0 0
  %120 = vmatpush1.bf16.msra.mxu0 %v100
  %121 = vmatprep.subr.bf16.mxu0 0
  %122 = vmatpush1.bf16.msra.mxu0 %v101
  %123 = vmatprep.subr.bf16.mxu0 0
  %124 = vmatpush1.bf16.msra.mxu0 %v102
  %125 = vmatprep.subr.bf16.mxu0 0
  %126 = vmatpush1.bf16.msra.mxu0 %v103
  %127 = vmatprep.subr.bf16.mxu0 0
  %128 = vmatpush1.bf16.msra.mxu0 %v104
  %129 = vmatprep.subr.bf16.mxu0 0
  %130 = vmatpush1.bf16.msra.mxu0 0
  %131 = vmatprep.subr.bf16.mxu0 0
  %132 = vmatpush1.bf16.msra.mxu0 0
  %133 = vmatprep.subr.bf16.mxu0 0
  %134 = vmatpush1.bf16.msra.mxu0 0
  %135 = vmatprep.subr.bf16.mxu0 0
  %136 = vmatpush1.bf16.msra.mxu0 0
  %137 = vmatprep.subr.bf16.mxu0 0
  %138 = vmatpush1.bf16.msra.mxu0 0
  %139 = vmatprep.subr.bf16.mxu0 0
  %140 = vmatpush1.bf16.msra.mxu0 0
  %141 = vmatprep.subr.bf16.mxu0 0
  %142 = vmatpush1.bf16.msra.mxu0 0
  %143 = vmatprep.subr.bf16.mxu0 0
  %144 = vmatpush1.bf16.msra.mxu0 0
  %145 = vmatprep.mubr.bf16.mxu0 0
  %146 = vmatmul.mubr.bf16.gmra.mrb[0].mxu0 %v34
  %v147 = vpop.f32.mrb[0].mxu0
  %v148 = vadd.f32 %v63, %v147
  %v149 = vpop.f32.mrb[0].mxu0
  %v150 = vpop.f32.mrb[0].mxu0
  %v151 = vadd.f32 %v63, %v150
  %v152 = vpop.f32.mrb[0].mxu0
  %153 = vmatprep.mubr.bf16.mxu0 0
  %154 = vmatmul.mubr.bf16.gmra.mrb[0].mxu0 %v35
  %v155 = vpop.f32.mrb[0].mxu0
  %v156 = vadd.f32 %v63, %v155
  %v157 = vpop.f32.mrb[0].mxu0
  %v158 = vpop.f32.mrb[0].mxu0
  %v159 = vadd.f32 %v63, %v158
  %v160 = vpop.f32.mrb[0].mxu0
  %161 = vmatprep.mubr.bf16.mxu0 0
  %162 = vmatmul.mubr.bf16.gmra.mrb[0].mxu0 %v36
  %v163 = vpop.f32.mrb[0].mxu0
  %v164 = vadd.f32 %v63, %v163
  %v165 = vpop.f32.mrb[0].mxu0
  %v166 = vpop.f32.mrb[0].mxu0
  %v167 = vadd.f32 %v63, %v166
  %v168 = vpop.f32.mrb[0].mxu0
  %169 = vmatprep.mubr.bf16.mxu0 0
  %170 = vmatmul.mubr.bf16.gmra.mrb[0].mxu0 %v37
  %v171 = vpop.f32.mrb[0].mxu0
  %v172 = vadd.f32 %v63, %v171
  %v173 = vpop.f32.mrb[0].mxu0
  %v174 = vpop.f32.mrb[0].mxu0
  %v175 = vadd.f32 %v63, %v174
  %v176 = vpop.f32.mrb[0].mxu0
  %177 = vmatprep.mubr.bf16.mxu0 0
  %178 = vmatmul.mubr.bf16.gmra.mrb[0].mxu0 %v38
  %v179 = vpop.f32.mrb[0].mxu0
  %v180 = vadd.f32 %v63, %v179
  %v181 = vpop.f32.mrb[0].mxu0
  %v182 = vpop.f32.mrb[0].mxu0
  %v183 = vadd.f32 %v63, %v182
  %v184 = vpop.f32.mrb[0].mxu0
  %185 = vmatprep.mubr.bf16.mxu0 0
  %186 = vmatmul.mubr.bf16.gmra.mrb[0].mxu0 %v39
  %v187 = vpop.f32.mrb[0].mxu0
  %v188 = vadd.f32 %v63, %v187
  %v189 = vpop.f32.mrb[0].mxu0
  %v190 = vpop.f32.mrb[0].mxu0
  %v191 = vadd.f32 %v63, %v190
  %v192 = vpop.f32.mrb[0].mxu0
  %193 = vmatprep.mubr.bf16.mxu0 0
  %194 = vmatmul.mubr.bf16.gmra.mrb[0].mxu0 %v40
  %v195 = vpop.f32.mrb[0].mxu0
  %v196 = vadd.f32 %v63, %v195
  %v197 = vpop.f32.mrb[0].mxu0
  %v198 = vpop.f32.mrb[0].mxu0
  %v199 = vadd.f32 %v63, %v198
  %v200 = vpop.f32.mrb[0].mxu0
  %201 = vmatprep.mubr.bf16.mxu0 0
  %202 = vmatmul.mubr.bf16.gmra.mrb[0].mxu0 %v41
  %v203 = vpop.f32.mrb[0].mxu0
  %v204 = vadd.f32 %v63, %v203
  %v205 = vpop.f32.mrb[0].mxu0
  %v206 = vpop.f32.mrb[0].mxu0
  %v207 = vadd.f32 %v63, %v206
  %v208 = vpop.f32.mrb[0].mxu0
  %209 = vdwg.mxu0
  %v210 = vld [vmem:[%s3] sm:$0xff]
  %v211 = vld [vmem:[%s3 + $0x8] sm:$0xff]
  %v212 = vld [vmem:[%s3 + $0x10] sm:$0xff]
  %v213 = vld [vmem:[%s3 + $0x18] sm:$0xff]
  %v214 = vld [vmem:[%s3 + $0x20] sm:$0xff]
  %v215 = vld [vmem:[%s3 + $0x28] sm:$0xff]
  %v216 = vld [vmem:[%s3 + $0x30] sm:$0xff]
  %v217 = vld [vmem:[%s3 + $0x38] sm:$0xff]
  %v218 = vld [vmem:[%s3 + $0x40] sm:$0xff]
  %v219 = vld [vmem:[%s3 + $0x48] sm:$0xff]
  %v220 = vld [vmem:[%s3 + $0x50] sm:$0xff]
  %v221 = vld [vmem:[%s3 + $0x58] sm:$0xff]
  %v222 = vld [vmem:[%s3 + $0x60] sm:$0xff]
  %v223 = vld [vmem:[%s3 + $0x68] sm:$0xff]
  %v224 = vld [vmem:[%s3 + $0x70] sm:$0xff]
  %v225 = vld [vmem:[%s3 + $0x78] sm:$0xff]
  %v226 = vadd.f32 %v148, %v210
  %v227 = vadd.f32 %v151, %v211
  %v228 = vadd.f32 %v156, %v212
  %v229 = vadd.f32 %v159, %v213
  %v230 = vadd.f32 %v164, %v214
  %v231 = vadd.f32 %v167, %v215
  %v232 = vadd.f32 %v172, %v216
  %v233 = vadd.f32 %v175, %v217
  %v234 = vadd.f32 %v180, %v218
  %v235 = vadd.f32 %v183, %v219
  %v236 = vadd.f32 %v188, %v220
  %v237 = vadd.f32 %v191, %v221
  %v238 = vadd.f32 %v196, %v222
  %v239 = vadd.f32 %v199, %v223
  %v240 = vadd.f32 %v204, %v224
  %v241 = vadd.f32 %v207, %v225
  %242 = vst [vmem:[%s4] sm:$0xff] %v226
  %243 = vst [vmem:[%s4 + $0x8] sm:$0xff] %v227
  %244 = vst [vmem:[%s4 + $0x10] sm:$0xff] %v228
  %245 = vst [vmem:[%s4 + $0x18] sm:$0xff] %v229
  %246 = vst [vmem:[%s4 + $0x20] sm:$0xff] %v230
  %247 = vst [vmem:[%s4 + $0x28] sm:$0xff] %v231
  %248 = vst [vmem:[%s4 + $0x30] sm:$0xff] %v232
  %249 = vst [vmem:[%s4 + $0x38] sm:$0xff] %v233
  %250 = vst [vmem:[%s4 + $0x40] sm:$0xff] %v234
  %251 = vst [vmem:[%s4 + $0x48] sm:$0xff] %v235
  %252 = vst [vmem:[%s4 + $0x50] sm:$0xff] %v236
  %253 = vst [vmem:[%s4 + $0x58] sm:$0xff] %v237
  %254 = vst [vmem:[%s4 + $0x60] sm:$0xff] %v238
  %255 = vst [vmem:[%s4 + $0x68] sm:$0xff] %v239
  %256 = vst [vmem:[%s4 + $0x70] sm:$0xff] %v240
  %257 = vst [vmem:[%s4 + $0x78] sm:$0xff] %v241
  // Predicated region
  $region18: #{detector_backbone_with_fpn.16} parent=0 // pred_check
    _
  $region19: #{detector_backbone_with_fpn.16} parent=0 // pred_check_branch
    %259 = sbr.rel (0) target = $region21
  $region20: #{detector_backbone_with_fpn.16} parent=0 // pred_region
    _
  $region21: #{detector_backbone_with_fpn.16} parent=0 // pred_fallthru
    _
  // Predicated region
  $region22: #{detector_backbone_with_fpn.16} parent=0 // pred_check
    _
  $region23: #{detector_backbone_with_fpn.16} parent=0 // pred_check_branch
    %261 = sbr.rel (0) target = $region25
  $region24: #{detector_backbone_with_fpn.16} parent=0 // pred_region
    _
  $region25: #{detector_backbone_with_fpn.16} parent=0 // pred_fallthru
    _

// kernel: detector_backbone_with_fpn.17
$region0: #{detector_backbone_with_fpn.17}
  #allocation0 [shape = 'u32[]', space=smem, size = 0x4, offset = 0x4, fixed_abs, tag = 'smem constant byte address 0x4 - core index']
  #allocation1 [shape = 'u32[144,128]{1,0:T(1,128)}', space=vmem, size = 0x12000, scoped, tag = 'internal scratch']
  %s0 = inlined_call_operand.vmem [shape: f32[2,10,10,128], index: 0, kind: input, shape index: {}]
  %s1 = inlined_call_operand.vmem [shape: bf16[1152,128], index: 1, kind: input, shape index: {}]
  %s2 = inlined_call_operand.vmem [shape: f32[1,128], index: 2, kind: input, shape index: {}]
  %s3 = inlined_call_operand.vmem [shape: f32[2,8,8,128], index: 3, kind: output, shape index: {}]
  %s4 = sld [smem:[#allocation0]]
  $region45: #{detector_backbone_with_fpn.17} parent=0
    _
  %s6 = ssub.s32 1, %s4
  %s7 = scalar_select 0, %s6, %s4
  loop: start=0, step=1, limit=4
  $region2: #{detector_backbone_with_fpn.17} parent=0 // loop_pre_header
    _
  $region3: #{detector_backbone_with_fpn.17} parent=0 // loop_header
    %s9 = sphi 0, %s13
    %p10 = scmp.ge.s32.totalorder %s9, 4
    %s19 = sphi 0, %s21
    %s22 = sphi 0, %s19
    %s23 = sphi 0, %s22
    %s39 = sphi 0, %s23
    %s43 = sphi 0, %s43
    %s45 = sphi 0, %s43
    %s46 = sphi 0, %s45
    %s60 = sphi 0, %s46
    %s64 = sphi 0, %s64
    %s66 = sphi 0, %s64
    %s67 = sphi 0, %s66
    %s81 = sphi 0, %s67
    %s87 = sphi 0, %s89
    %s90 = sphi 0, %s87
    %s91 = sphi 0, %s90
    %s107 = sphi 0, %s91
  $region4: #{detector_backbone_with_fpn.17} parent=0 // loop_header_branch
    %12 = sbr.rel (%p10) target = $region8
  $region5: #{detector_backbone_with_fpn.17} parent=0 // loop_body
    %s14 = ssub.s32 %s9, 1
    %s15 = ssub.s32 %s9, 2
    %s16 = sadd.s32 %s9, 1
    %s17 = ssub.s32 %s9, %s16
    %p18 = scmp.eq.s32.totalorder %s17, 0
    %s20 = sadd.s32 %s19, 1
    %s21 = scalar_select %p18, %s19, %s20
    %p24 = pneg %p18
    %p25 = scmp.eq.s32.totalorder %s9, 1
    %p26 = por %p24, %p25
    %p27 = scmp.ne.s32.totalorder %s19, %s22
    %p28 = scmp.eq.s32.totalorder %s9, 0
    %p29 = por %p27, %p28
    %p30 = scmp.ne.s32.totalorder %s19, %s22
    %p31 = scmp.eq.s32.totalorder %s14, 1
    %p32 = por %p30, %p31
    %p33 = scmp.ne.s32.totalorder %s22, %s23
    %p34 = scmp.eq.s32.totalorder %s14, 0
    %p35 = por %p33, %p34
    %p36 = scmp.ne.s32.totalorder %s22, %s23
    %p37 = scmp.eq.s32.totalorder %s15, 1
    %p38 = por %p36, %p37
    %p40 = scmp.ne.s32.totalorder %s23, %s39
    %p41 = scmp.eq.s32.totalorder %s15, 0
    %p42 = por %p40, %p41
    %s44 = sadd.s32 %s43, 1
    %p47 = scmp.eq.s32.totalorder %s9, 1
    %p48 = scmp.ne.s32.totalorder %s43, %s45
    %p49 = scmp.eq.s32.totalorder %s9, 0
    %p50 = por %p48, %p49
    %p51 = scmp.ne.s32.totalorder %s43, %s45
    %p52 = scmp.eq.s32.totalorder %s14, 1
    %p53 = por %p51, %p52
    %p54 = scmp.ne.s32.totalorder %s45, %s46
    %p55 = scmp.eq.s32.totalorder %s14, 0
    %p56 = por %p54, %p55
    %p57 = scmp.ne.s32.totalorder %s45, %s46
    %p58 = scmp.eq.s32.totalorder %s15, 1
    %p59 = por %p57, %p58
    %p61 = scmp.ne.s32.totalorder %s46, %s60
    %p62 = scmp.eq.s32.totalorder %s15, 0
    %p63 = por %p61, %p62
    %s65 = sadd.s32 %s64, 1
    %p68 = scmp.eq.s32.totalorder %s9, 1
    %p69 = scmp.ne.s32.totalorder %s64, %s66
    %p70 = scmp.eq.s32.totalorder %s9, 0
    %p71 = por %p69, %p70
    %p72 = scmp.ne.s32.totalorder %s64, %s66
    %p73 = scmp.eq.s32.totalorder %s14, 1
    %p74 = por %p72, %p73
    %p75 = scmp.ne.s32.totalorder %s66, %s67
    %p76 = scmp.eq.s32.totalorder %s14, 0
    %p77 = por %p75, %p76
    %p78 = scmp.ne.s32.totalorder %s66, %s67
    %p79 = scmp.eq.s32.totalorder %s15, 1
    %p80 = por %p78, %p79
    %p82 = scmp.ne.s32.totalorder %s67, %s81
    %p83 = scmp.eq.s32.totalorder %s15, 0
    %p84 = por %p82, %p83
    %s85 = ssub.s32 %s9, %s16
    %p86 = scmp.eq.s32.totalorder %s85, 0
    %s88 = sadd.s32 %s87, 1
    %s89 = scalar_select %p86, %s87, %s88
    %p92 = pneg %p86
    %p93 = scmp.eq.s32.totalorder %s9, 1
    %p94 = por %p92, %p93
    %p95 = scmp.ne.s32.totalorder %s87, %s90
    %p96 = scmp.eq.s32.totalorder %s9, 0
    %p97 = por %p95, %p96
    %p98 = scmp.ne.s32.totalorder %s87, %s90
    %p99 = scmp.eq.s32.totalorder %s14, 1
    %p100 = por %p98, %p99
    %p101 = scmp.ne.s32.totalorder %s90, %s91
    %p102 = scmp.eq.s32.totalorder %s14, 0
    %p103 = por %p101, %p102
    %p104 = scmp.ne.s32.totalorder %s90, %s91
    %p105 = scmp.eq.s32.totalorder %s15, 1
    %p106 = por %p104, %p105
    %p108 = scmp.ne.s32.totalorder %s91, %s107
    %p109 = scmp.eq.s32.totalorder %s15, 0
    %p110 = por %p108, %p109
    %p111 = scmp.le.s32.totalorder 1, %s9
    %p112 = scmp.lt.s32.totalorder %s9, 3
    %p113 = pnand %p111, %p112
    %p114 = pneg %p113
    // Predicated region
    $region9: #{detector_backbone_with_fpn.17} parent=5 // pred_check
      _
    $region10: #{detector_backbone_with_fpn.17} parent=5 // pred_check_branch
      %116 = sbr.rel (%p113) target = $region12
    $region11: #{detector_backbone_with_fpn.17} parent=5 // pred_region
      %s117 = ssub.s32 %s9, 1
      // Predicated region
      $region13: #{detector_backbone_with_fpn.17} parent=11 // pred_check
        %p118 = pneg %p56
      $region14: #{detector_backbone_with_fpn.17} parent=11 // pred_check_branch
        %120 = sbr.rel (%p118) target = $region16
      $region15: #{detector_backbone_with_fpn.17} parent=11 // pred_region
        _
      $region16: #{detector_backbone_with_fpn.17} parent=11 // pred_fallthru
        _
      // Predicated region
      $region17: #{detector_backbone_with_fpn.17} parent=11 // pred_check
        %p121 = pneg %p77
      $region18: #{detector_backbone_with_fpn.17} parent=11 // pred_check_branch
        %123 = sbr.rel (%p121) target = $region20
      $region19: #{detector_backbone_with_fpn.17} parent=11 // pred_region
        _
      $region20: #{detector_backbone_with_fpn.17} parent=11 // pred_fallthru
        _
    $region12: #{detector_backbone_with_fpn.17} parent=5 // pred_fallthru
      _
    %p124 = scmp.lt.s32.totalorder %s9, 2
    // Predicated region
    $region21: #{detector_backbone_with_fpn.17} parent=5 // pred_check
      %p125 = pneg %p124
    $region22: #{detector_backbone_with_fpn.17} parent=5 // pred_check_branch
      %127 = sbr.rel (%p125) target = $region24
    $region23: #{detector_backbone_with_fpn.17} parent=5 // pred_region
      // Predicated region
      $region25: #{detector_backbone_with_fpn.17} parent=23 // pred_check
        %p128 = pneg %p29
      $region26: #{detector_backbone_with_fpn.17} parent=23 // pred_check_branch
        %130 = sbr.rel (%p128) target = $region28
      $region27: #{detector_backbone_with_fpn.17} parent=23 // pred_region
        %p131 = scmp.lt.s32.totalorder %s9, 1
        %s132 = scalar_select %p131, %s9, 1
        %s133 = smul.addr %s132, 20
        %s134 = smul.addr %s133, 8
        %s135 = scalar_lea.vmem %s0, %s134
      $region28: #{detector_backbone_with_fpn.17} parent=23 // pred_fallthru
        _
    $region24: #{detector_backbone_with_fpn.17} parent=5 // pred_fallthru
      _
    %p136 = scmp.le.s32.totalorder 1, %s9
    %p137 = scmp.lt.s32.totalorder %s9, 3
    %p138 = pnand %p136, %p137
    %p139 = pneg %p138
    // Predicated region
    $region29: #{detector_backbone_with_fpn.17} parent=5 // pred_check
      _
    $region30: #{detector_backbone_with_fpn.17} parent=5 // pred_check_branch
      %141 = sbr.rel (%p138) target = $region32
    $region31: #{detector_backbone_with_fpn.17} parent=5 // pred_region
      %s142 = ssub.s32 %s9, 1
      %p143 = scmp.lt.s32.totalorder %s14, 1
      %s144 = scalar_select %p143, %s14, 1
      %s145 = smul.addr %s144, 20
      %s146 = smul.addr %s145, 8
      %s147 = scalar_lea.vmem %s0, %s146
      %p148 = pneg %p35
      %p149 = pneg %p32
      %p150 = pneg %p56
      %p151 = pneg %p53
      %p152 = pneg %p77
      %p153 = pneg %p74
      %p154 = pneg %p103
      %p155 = pneg %p100
      %p156 = scmp.lt.s32.totalorder %s14, 1
      %s157 = scalar_select %p156, %s14, 1
      %s158 = smul.addr %s157, 8
      %s159 = smul.addr %s158, 8
      %s160 = scalar_lea.vmem %s3, %s159
      %p161 = scmp.lt.s32.totalorder %s14, 1
      %s162 = scalar_select %p161, %s14, 1
      %s163 = smul.addr %s162, 20
      %s164 = smul.addr %s163, 8
      %s165 = scalar_lea.vmem %s0, %s164
      %p166 = scmp.lt.s32.totalorder %s14, 1
      %s167 = scalar_select %p166, %s14, 1
      %s168 = smul.addr %s167, 8
      %s169 = smul.addr %s168, 8
      %s170 = scalar_lea.vmem %s3, %s169
      %v172 = vld [vmem:[%s165] sm:$0xff]
      %v173 = vld [vmem:[%s165 + $0x10] sm:$0xff]
      %v174 = vld [vmem:[%s165 + $0x20] sm:$0xff]
      %v175 = vld [vmem:[%s165 + $0x30] sm:$0xff]
      %v176 = vld [vmem:[%s165 + $0x40] sm:$0xff]
      %v177 = vld [vmem:[%s165 + $0x50] sm:$0xff]
      %v178 = vld [vmem:[%s165 + $0x60] sm:$0xff]
      %v179 = vld [vmem:[%s165 + $0x70] sm:$0xff]
      %v180 = vld [vmem:[%s165 + $0x1] sm:$0xff]
      %v181 = vld [vmem:[%s165 + $0x11] sm:$0xff]
      %v182 = vld [vmem:[%s165 + $0x21] sm:$0xff]
      %v183 = vld [vmem:[%s165 + $0x31] sm:$0xff]
      %v184 = vld [vmem:[%s165 + $0x41] sm:$0xff]
      %v185 = vld [vmem:[%s165 + $0x51] sm:$0xff]
      %v186 = vld [vmem:[%s165 + $0x61] sm:$0xff]
      %v187 = vld [vmem:[%s165 + $0x71] sm:$0xff]
      %v188 = vld [vmem:[%s165 + $0x2] sm:$0xff]
      %v189 = vld [vmem:[%s165 + $0x12] sm:$0xff]
      %v190 = vld [vmem:[%s165 + $0x22] sm:$0xff]
      %v191 = vld [vmem:[%s165 + $0x32] sm:$0xff]
      %v192 = vld [vmem:[%s165 + $0x42] sm:$0xff]
      %v193 = vld [vmem:[%s165 + $0x52] sm:$0xff]
      %v194 = vld [vmem:[%s165 + $0x62] sm:$0xff]
      %v195 = vld [vmem:[%s165 + $0x72] sm:$0xff]
      %s196 = scalar_lea.vmem %s165, 16
      %v197 = vld [vmem:[%s196] sm:$0xff]
      %v198 = vld [vmem:[%s196 + $0x10] sm:$0xff]
      %v199 = vld [vmem:[%s196 + $0x20] sm:$0xff]
      %v200 = vld [vmem:[%s196 + $0x30] sm:$0xff]
      %v201 = vld [vmem:[%s196 + $0x40] sm:$0xff]
      %v202 = vld [vmem:[%s196 + $0x50] sm:$0xff]
      %v203 = vld [vmem:[%s196 + $0x60] sm:$0xff]
      %v204 = vld [vmem:[%s196 + $0x70] sm:$0xff]
      %v205 = vld [vmem:[%s196 + $0x1] sm:$0xff]
      %v206 = vld [vmem:[%s196 + $0x11] sm:$0xff]
      %v207 = vld [vmem:[%s196 + $0x21] sm:$0xff]
      %v208 = vld [vmem:[%s196 + $0x31] sm:$0xff]
      %v209 = vld [vmem:[%s196 + $0x41] sm:$0xff]
      %v210 = vld [vmem:[%s196 + $0x51] sm:$0xff]
      %v211 = vld [vmem:[%s196 + $0x61] sm:$0xff]
      %v212 = vld [vmem:[%s196 + $0x71] sm:$0xff]
      %v213 = vld [vmem:[%s196 + $0x2] sm:$0xff]
      %v214 = vld [vmem:[%s196 + $0x12] sm:$0xff]
      %v215 = vld [vmem:[%s196 + $0x22] sm:$0xff]
      %v216 = vld [vmem:[%s196 + $0x32] sm:$0xff]
      %v217 = vld [vmem:[%s196 + $0x42] sm:$0xff]
      %v218 = vld [vmem:[%s196 + $0x52] sm:$0xff]
      %v219 = vld [vmem:[%s196 + $0x62] sm:$0xff]
      %v220 = vld [vmem:[%s196 + $0x72] sm:$0xff]
      %s221 = scalar_lea.vmem %s165, 32
      %v222 = vld [vmem:[%s221] sm:$0xff]
      %v223 = vld [vmem:[%s221 + $0x10] sm:$0xff]
      %v224 = vld [vmem:[%s221 + $0x20] sm:$0xff]
      %v225 = vld [vmem:[%s221 + $0x30] sm:$0xff]
      %v226 = vld [vmem:[%s221 + $0x40] sm:$0xff]
      %v227 = vld [vmem:[%s221 + $0x50] sm:$0xff]
      %v228 = vld [vmem:[%s221 + $0x60] sm:$0xff]
      %v229 = vld [vmem:[%s221 + $0x70] sm:$0xff]
      %v230 = vld [vmem:[%s221 + $0x1] sm:$0xff]
      %v231 = vld [vmem:[%s221 + $0x11] sm:$0xff]
      %v232 = vld [vmem:[%s221 + $0x21] sm:$0xff]
      %v233 = vld [vmem:[%s221 + $0x31] sm:$0xff]
      %v234 = vld [vmem:[%s221 + $0x41] sm:$0xff]
      %v235 = vld [vmem:[%s221 + $0x51] sm:$0xff]
      %v236 = vld [vmem:[%s221 + $0x61] sm:$0xff]
      %v237 = vld [vmem:[%s221 + $0x71] sm:$0xff]
      %v238 = vld [vmem:[%s221 + $0x2] sm:$0xff]
      %v239 = vld [vmem:[%s221 + $0x12] sm:$0xff]
      %v240 = vld [vmem:[%s221 + $0x22] sm:$0xff]
      %v241 = vld [vmem:[%s221 + $0x32] sm:$0xff]
      %v242 = vld [vmem:[%s221 + $0x42] sm:$0xff]
      %v243 = vld [vmem:[%s221 + $0x52] sm:$0xff]
      %v244 = vld [vmem:[%s221 + $0x62] sm:$0xff]
      %v245 = vld [vmem:[%s221 + $0x72] sm:$0xff]
      %v246 = vpack.c.bf16 %v173, %v172
      %v247 = vpack.c.bf16 %v181, %v180
      %v248 = vpack.c.bf16 %v189, %v188
      %v249 = vpack.c.bf16 %v198, %v197
      %v250 = vpack.c.bf16 %v206, %v205
      %v251 = vpack.c.bf16 %v214, %v213
      %v252 = vpack.c.bf16 %v223, %v222
      %v253 = vpack.c.bf16 %v231, %v230
      %v254 = vpack.c.bf16 %v239, %v238
      %v255 = vpack.c.bf16 %v175, %v174
      %v256 = vpack.c.bf16 %v183, %v182
      %v257 = vpack.c.bf16 %v191, %v190
      %v258 = vpack.c.bf16 %v200, %v199
      %v259 = vpack.c.bf16 %v208, %v207
      %v260 = vpack.c.bf16 %v216, %v215
      %v261 = vpack.c.bf16 %v225, %v224
      %v262 = vpack.c.bf16 %v233, %v232
      %v263 = vpack.c.bf16 %v241, %v240
      %v264 = vpack.c.bf16 %v177, %v176
      %v265 = vpack.c.bf16 %v185, %v184
      %v266 = vpack.c.bf16 %v193, %v192
      %v267 = vpack.c.bf16 %v202, %v201
      %v268 = vpack.c.bf16 %v210, %v209
      %v269 = vpack.c.bf16 %v218, %v217
      %v270 = vpack.c.bf16 %v227, %v226
      %v271 = vpack.c.bf16 %v235, %v234
      %v272 = vpack.c.bf16 %v243, %v242
      %v273 = vpack.c.bf16 %v179, %v178
      %v274 = vpack.c.bf16 %v187, %v186
      %v275 = vpack.c.bf16 %v195, %v194
      %v276 = vpack.c.bf16 %v204, %v203
      %v277 = vpack.c.bf16 %v212, %v211
      %v278 = vpack.c.bf16 %v220, %v219
      %v279 = vpack.c.bf16 %v229, %v228
      %v280 = vpack.c.bf16 %v237, %v236
      %v281 = vpack.c.bf16 %v245, %v244
      %v282 = vld [vmem:[%s1] sm:$0xf]
      %v283 = vld [vmem:[%s1 + $0x4] sm:$0xf]
      %v284 = vld [vmem:[%s1 + $0x8] sm:$0xf]
      %v285 = vld [vmem:[%s1 + $0xc] sm:$0xf]
      %v286 = vld [vmem:[%s1 + $0x10] sm:$0xf]
      %v287 = vld [vmem:[%s1 + $0x14] sm:$0xf]
      %v288 = vld [vmem:[%s1 + $0x18] sm:$0xf]
      %v289 = vld [vmem:[%s1 + $0x1c] sm:$0xf]
      %v290 = vld [vmem:[%s1 + $0x20] sm:$0xf]
      %v291 = vld [vmem:[%s1 + $0x24] sm:$0xf]
      %v292 = vld [vmem:[%s1 + $0x28] sm:$0xf]
      %v293 = vld [vmem:[%s1 + $0x2c] sm:$0xf]
      %v294 = vld [vmem:[%s1 + $0x30] sm:$0xf]
      %v295 = vld [vmem:[%s1 + $0x34] sm:$0xf]
      %v296 = vld [vmem:[%s1 + $0x38] sm:$0xf]
      %v297 = vld [vmem:[%s1 + $0x3c] sm:$0xf]
      %v298 = vld [vmem:[%s1 + $0x40] sm:$0xf]
      %v299 = vld [vmem:[%s1 + $0x44] sm:$0xf]
      %v300 = vld [vmem:[%s1 + $0x48] sm:$0xf]
      %v301 = vld [vmem:[%s1 + $0x4c] sm:$0xf]
      %v302 = vld [vmem:[%s1 + $0x50] sm:$0xf]
      %v303 = vld [vmem:[%s1 + $0x54] sm:$0xf]
      %v304 = vld [vmem:[%s1 + $0x58] sm:$0xf]
      %v305 = vld [vmem:[%s1 + $0x5c] sm:$0xf]
      %v306 = vld [vmem:[%s1 + $0x60] sm:$0xf]
      %v307 = vld [vmem:[%s1 + $0x64] sm:$0xf]
      %v308 = vld [vmem:[%s1 + $0x68] sm:$0xf]
      %v309 = vld [vmem:[%s1 + $0x6c] sm:$0xf]
      %v310 = vld [vmem:[%s1 + $0x70] sm:$0xf]
      %v311 = vld [vmem:[%s1 + $0x74] sm:$0xf]
      %v312 = vld [vmem:[%s1 + $0x78] sm:$0xf]
      %v313 = vld [vmem:[%s1 + $0x7c] sm:$0xf]
      %v314 = vld [vmem:[%s1 + $0x80] sm:$0xf]
      %v315 = vld [vmem:[%s1 + $0x84] sm:$0xf]
      %v316 = vld [vmem:[%s1 + $0x88] sm:$0xf]
      %v317 = vld [vmem:[%s1 + $0x8c] sm:$0xf]
      %v318 = vld [vmem:[%s1 + $0x90] sm:$0xf]
      %v319 = vld [vmem:[%s1 + $0x94] sm:$0xf]
      %v320 = vld [vmem:[%s1 + $0x98] sm:$0xf]
      %v321 = vld [vmem:[%s1 + $0x9c] sm:$0xf]
      %v322 = vld [vmem:[%s1 + $0xa0] sm:$0xf]
      %v323 = vld [vmem:[%s1 + $0xa4] sm:$0xf]
      %v324 = vld [vmem:[%s1 + $0xa8] sm:$0xf]
      %v325 = vld [vmem:[%s1 + $0xac] sm:$0xf]
      %v326 = vld [vmem:[%s1 + $0xb0] sm:$0xf]
      %v327 = vld [vmem:[%s1 + $0xb4] sm:$0xf]
      %v328 = vld [vmem:[%s1 + $0xb8] sm:$0xf]
      %v329 = vld [vmem:[%s1 + $0xbc] sm:$0xf]
      %v330 = vld [vmem:[%s1 + $0xc0] sm:$0xf]
      %v331 = vld [vmem:[%s1 + $0xc4] sm:$0xf]
      %v332 = vld [vmem:[%s1 + $0xc8] sm:$0xf]
      %v333 = vld [vmem:[%s1 + $0xcc] sm:$0xf]
      %v334 = vld [vmem:[%s1 + $0xd0] sm:$0xf]
      %v335 = vld [vmem:[%s1 + $0xd4] sm:$0xf]
      %v336 = vld [vmem:[%s1 + $0xd8] sm:$0xf]
      %v337 = vld [vmem:[%s1 + $0xdc] sm:$0xf]
      %v338 = vld [vmem:[%s1 + $0xe0] sm:$0xf]
      %v339 = vld [vmem:[%s1 + $0xe4] sm:$0xf]
      %v340 = vld [vmem:[%s1 + $0xe8] sm:$0xf]
      %v341 = vld [vmem:[%s1 + $0xec] sm:$0xf]
      %v342 = vld [vmem:[%s1 + $0xf0] sm:$0xf]
      %v343 = vld [vmem:[%s1 + $0xf4] sm:$0xf]
      %v344 = vld [vmem:[%s1 + $0xf8] sm:$0xf]
      %v345 = vld [vmem:[%s1 + $0xfc] sm:$0xf]
      %v346 = vld [vmem:[%s1 + $0x100] sm:$0xf]
      %v347 = vld [vmem:[%s1 + $0x104] sm:$0xf]
      %v348 = vld [vmem:[%s1 + $0x108] sm:$0xf]
      %v349 = vld [vmem:[%s1 + $0x10c] sm:$0xf]
      %v350 = vld [vmem:[%s1 + $0x110] sm:$0xf]
      %v351 = vld [vmem:[%s1 + $0x114] sm:$0xf]
      %v352 = vld [vmem:[%s1 + $0x118] sm:$0xf]
      %v353 = vld [vmem:[%s1 + $0x11c] sm:$0xf]
      %v354 = vld [vmem:[%s1 + $0x120] sm:$0xf]
      %v355 = vld [vmem:[%s1 + $0x124] sm:$0xf]
      %v356 = vld [vmem:[%s1 + $0x128] sm:$0xf]
      %v357 = vld [vmem:[%s1 + $0x12c] sm:$0xf]
      %v358 = vld [vmem:[%s1 + $0x130] sm:$0xf]
      %v359 = vld [vmem:[%s1 + $0x134] sm:$0xf]
      %v360 = vld [vmem:[%s1 + $0x138] sm:$0xf]
      %v361 = vld [vmem:[%s1 + $0x13c] sm:$0xf]
      %v362 = vld [vmem:[%s1 + $0x140] sm:$0xf]
      %v363 = vld [vmem:[%s1 + $0x144] sm:$0xf]
      %v364 = vld [vmem:[%s1 + $0x148] sm:$0xf]
      %v365 = vld [vmem:[%s1 + $0x14c] sm:$0xf]
      %v366 = vld [vmem:[%s1 + $0x150] sm:$0xf]
      %v367 = vld [vmem:[%s1 + $0x154] sm:$0xf]
      %v368 = vld [vmem:[%s1 + $0x158] sm:$0xf]
      %v369 = vld [vmem:[%s1 + $0x15c] sm:$0xf]
      %v370 = vld [vmem:[%s1 + $0x160] sm:$0xf]
      %v371 = vld [vmem:[%s1 + $0x164] sm:$0xf]
      %v372 = vld [vmem:[%s1 + $0x168] sm:$0xf]
      %v373 = vld [vmem:[%s1 + $0x16c] sm:$0xf]
      %v374 = vld [vmem:[%s1 + $0x170] sm:$0xf]
      %v375 = vld [vmem:[%s1 + $0x174] sm:$0xf]
      %v376 = vld [vmem:[%s1 + $0x178] sm:$0xf]
      %v377 = vld [vmem:[%s1 + $0x17c] sm:$0xf]
      %v378 = vld [vmem:[%s1 + $0x180] sm:$0xf]
      %v379 = vld [vmem:[%s1 + $0x184] sm:$0xf]
      %v380 = vld [vmem:[%s1 + $0x188] sm:$0xf]
      %v381 = vld [vmem:[%s1 + $0x18c] sm:$0xf]
      %v382 = vld [vmem:[%s1 + $0x190] sm:$0xf]
      %v383 = vld [vmem:[%s1 + $0x194] sm:$0xf]
      %v384 = vld [vmem:[%s1 + $0x198] sm:$0xf]
      %v385 = vld [vmem:[%s1 + $0x19c] sm:$0xf]
      %v386 = vld [vmem:[%s1 + $0x1a0] sm:$0xf]
      %v387 = vld [vmem:[%s1 + $0x1a4] sm:$0xf]
      %v388 = vld [vmem:[%s1 + $0x1a8] sm:$0xf]
      %v389 = vld [vmem:[%s1 + $0x1ac] sm:$0xf]
      %v390 = vld [vmem:[%s1 + $0x1b0] sm:$0xf]
      %v391 = vld [vmem:[%s1 + $0x1b4] sm:$0xf]
      %v392 = vld [vmem:[%s1 + $0x1b8] sm:$0xf]
      %v393 = vld [vmem:[%s1 + $0x1bc] sm:$0xf]
      %v394 = vld [vmem:[%s1 + $0x1c0] sm:$0xf]
      %v395 = vld [vmem:[%s1 + $0x1c4] sm:$0xf]
      %v396 = vld [vmem:[%s1 + $0x1c8] sm:$0xf]
      %v397 = vld [vmem:[%s1 + $0x1cc] sm:$0xf]
      %v398 = vld [vmem:[%s1 + $0x1d0] sm:$0xf]
      %v399 = vld [vmem:[%s1 + $0x1d4] sm:$0xf]
      %v400 = vld [vmem:[%s1 + $0x1d8] sm:$0xf]
      %v401 = vld [vmem:[%s1 + $0x1dc] sm:$0xf]
      %v402 = vld [vmem:[%s1 + $0x1e0] sm:$0xf]
      %v403 = vld [vmem:[%s1 + $0x1e4] sm:$0xf]
      %v404 = vld [vmem:[%s1 + $0x1e8] sm:$0xf]
      %v405 = vld [vmem:[%s1 + $0x1ec] sm:$0xf]
      %v406 = vld [vmem:[%s1 + $0x1f0] sm:$0xf]
      %v407 = vld [vmem:[%s1 + $0x1f4] sm:$0xf]
      %v408 = vld [vmem:[%s1 + $0x1f8] sm:$0xf]
      %v409 = vld [vmem:[%s1 + $0x1fc] sm:$0xf]
      %v410 = vld [vmem:[%s1 + $0x200] sm:$0xf]
      %v411 = vld [vmem:[%s1 + $0x204] sm:$0xf]
      %v412 = vld [vmem:[%s1 + $0x208] sm:$0xf]
      %v413 = vld [vmem:[%s1 + $0x20c] sm:$0xf]
      %v414 = vld [vmem:[%s1 + $0x210] sm:$0xf]
      %v415 = vld [vmem:[%s1 + $0x214] sm:$0xf]
      %v416 = vld [vmem:[%s1 + $0x218] sm:$0xf]
      %v417 = vld [vmem:[%s1 + $0x21c] sm:$0xf]
      %v418 = vld [vmem:[%s1 + $0x220] sm:$0xf]
      %v419 = vld [vmem:[%s1 + $0x224] sm:$0xf]
      %v420 = vld [vmem:[%s1 + $0x228] sm:$0xf]
      %v421 = vld [vmem:[%s1 + $0x22c] sm:$0xf]
      %v422 = vld [vmem:[%s1 + $0x230] sm:$0xf]
      %v423 = vld [vmem:[%s1 + $0x234] sm:$0xf]
      %v424 = vld [vmem:[%s1 + $0x238] sm:$0xf]
      %v425 = vld [vmem:[%s1 + $0x23c] sm:$0xf]
      %v426 = vld [vmem:[%s2] sm:$0x1]
      %v428 = vlaneseq
      %v429 = vshrl.u32 %v428, 7
      %v430 = vsub.s32 0, %v429
      %v431 = vrot.slane %v426, %v430
      %v577 = vunpack.c.l.b16 %v282
      %v578 = vunpack.c.l.b16 %v283
      %v579 = vunpack.c.l.b16 %v284
      %v580 = vunpack.c.l.b16 %v285
      %v581 = vunpack.c.l.b16 %v286
      %v582 = vunpack.c.l.b16 %v287
      %v583 = vunpack.c.l.b16 %v288
      %v584 = vunpack.c.l.b16 %v289
      %v585 = vunpack.c.l.b16 %v290
      %v586 = vunpack.c.l.b16 %v291
      %v587 = vunpack.c.l.b16 %v292
      %v588 = vunpack.c.l.b16 %v293
      %v589 = vunpack.c.l.b16 %v294
      %v590 = vunpack.c.l.b16 %v295
      %v591 = vunpack.c.l.b16 %v296
      %v592 = vunpack.c.l.b16 %v297
      %v593 = vunpack.c.l.b16 %v298
      %v594 = vunpack.c.l.b16 %v299
      %v595 = vunpack.c.l.b16 %v300
      %v596 = vunpack.c.l.b16 %v301
      %v597 = vunpack.c.l.b16 %v302
      %v598 = vunpack.c.l.b16 %v303
      %v599 = vunpack.c.l.b16 %v304
      %v600 = vunpack.c.l.b16 %v305
      %v601 = vunpack.c.l.b16 %v306
      %v602 = vunpack.c.l.b16 %v307
      %v603 = vunpack.c.l.b16 %v308
      %v604 = vunpack.c.l.b16 %v309
      %v605 = vunpack.c.l.b16 %v310
      %v606 = vunpack.c.l.b16 %v311
      %v607 = vunpack.c.l.b16 %v312
      %v608 = vunpack.c.l.b16 %v313
      %v609 = vunpack.c.l.b16 %v314
      %v610 = vunpack.c.l.b16 %v315
      %v611 = vunpack.c.l.b16 %v316
      %v612 = vunpack.c.l.b16 %v317
      %v613 = vunpack.c.l.b16 %v318
      %v614 = vunpack.c.l.b16 %v319
      %v615 = vunpack.c.l.b16 %v320
      %v616 = vunpack.c.l.b16 %v321
      %v617 = vunpack.c.l.b16 %v322
      %v618 = vunpack.c.l.b16 %v323
      %v619 = vunpack.c.l.b16 %v324
      %v620 = vunpack.c.l.b16 %v325
      %v621 = vunpack.c.l.b16 %v326
      %v622 = vunpack.c.l.b16 %v327
      %v623 = vunpack.c.l.b16 %v328
      %v624 = vunpack.c.l.b16 %v329
      %v625 = vunpack.c.l.b16 %v330
      %v626 = vunpack.c.l.b16 %v331
      %v627 = vunpack.c.l.b16 %v332
      %v628 = vunpack.c.l.b16 %v333
      %v629 = vunpack.c.l.b16 %v334
      %v630 = vunpack.c.l.b16 %v335
      %v631 = vunpack.c.l.b16 %v336
      %v632 = vunpack.c.l.b16 %v337
      %v633 = vunpack.c.l.b16 %v338
      %v634 = vunpack.c.l.b16 %v339
      %v635 = vunpack.c.l.b16 %v340
      %v636 = vunpack.c.l.b16 %v341
      %v637 = vunpack.c.l.b16 %v342
      %v638 = vunpack.c.l.b16 %v343
      %v639 = vunpack.c.l.b16 %v344
      %v640 = vunpack.c.l.b16 %v345
      %v641 = vunpack.c.l.b16 %v346
      %v642 = vunpack.c.l.b16 %v347
      %v643 = vunpack.c.l.b16 %v348
      %v644 = vunpack.c.l.b16 %v349
      %v645 = vunpack.c.l.b16 %v350
      %v646 = vunpack.c.l.b16 %v351
      %v647 = vunpack.c.l.b16 %v352
      %v648 = vunpack.c.l.b16 %v353
      %v649 = vunpack.c.l.b16 %v354
      %v650 = vunpack.c.l.b16 %v355
      %v651 = vunpack.c.l.b16 %v356
      %v652 = vunpack.c.l.b16 %v357
      %v653 = vunpack.c.l.b16 %v358
      %v654 = vunpack.c.l.b16 %v359
      %v655 = vunpack.c.l.b16 %v360
      %v656 = vunpack.c.l.b16 %v361
      %v657 = vunpack.c.l.b16 %v362
      %v658 = vunpack.c.l.b16 %v363
      %v659 = vunpack.c.l.b16 %v364
      %v660 = vunpack.c.l.b16 %v365
      %v661 = vunpack.c.l.b16 %v366
      %v662 = vunpack.c.l.b16 %v367
      %v663 = vunpack.c.l.b16 %v368
      %v664 = vunpack.c.l.b16 %v369
      %v665 = vunpack.c.l.b16 %v370
      %v666 = vunpack.c.l.b16 %v371
      %v667 = vunpack.c.l.b16 %v372
      %v668 = vunpack.c.l.b16 %v373
      %v669 = vunpack.c.l.b16 %v374
      %v670 = vunpack.c.l.b16 %v375
      %v671 = vunpack.c.l.b16 %v376
      %v672 = vunpack.c.l.b16 %v377
      %v673 = vunpack.c.l.b16 %v378
      %v674 = vunpack.c.l.b16 %v379
      %v675 = vunpack.c.l.b16 %v380
      %v676 = vunpack.c.l.b16 %v381
      %v677 = vunpack.c.l.b16 %v382
      %v678 = vunpack.c.l.b16 %v383
      %v679 = vunpack.c.l.b16 %v384
      %v680 = vunpack.c.l.b16 %v385
      %v681 = vunpack.c.l.b16 %v386
      %v682 = vunpack.c.l.b16 %v387
      %v683 = vunpack.c.l.b16 %v388
      %v684 = vunpack.c.l.b16 %v389
      %v685 = vunpack.c.l.b16 %v390
      %v686 = vunpack.c.l.b16 %v391
      %v687 = vunpack.c.l.b16 %v392
      %v688 = vunpack.c.l.b16 %v393
      %v689 = vunpack.c.l.b16 %v394
      %v690 = vunpack.c.l.b16 %v395
      %v691 = vunpack.c.l.b16 %v396
      %v692 = vunpack.c.l.b16 %v397
      %v693 = vunpack.c.l.b16 %v398
      %v694 = vunpack.c.l.b16 %v399
      %v695 = vunpack.c.l.b16 %v400
      %v696 = vunpack.c.l.b16 %v401
      %v697 = vunpack.c.l.b16 %v402
      %v698 = vunpack.c.l.b16 %v403
      %v699 = vunpack.c.l.b16 %v404
      %v700 = vunpack.c.l.b16 %v405
      %v701 = vunpack.c.l.b16 %v406
      %v702 = vunpack.c.l.b16 %v407
      %v703 = vunpack.c.l.b16 %v408
      %v704 = vunpack.c.l.b16 %v409
      %v705 = vunpack.c.l.b16 %v410
      %v706 = vunpack.c.l.b16 %v411
      %v707 = vunpack.c.l.b16 %v412
      %v708 = vunpack.c.l.b16 %v413
      %v709 = vunpack.c.l.b16 %v414
      %v710 = vunpack.c.l.b16 %v415
      %v711 = vunpack.c.l.b16 %v416
      %v712 = vunpack.c.l.b16 %v417
      %v713 = vunpack.c.l.b16 %v418
      %v714 = vunpack.c.l.b16 %v419
      %v715 = vunpack.c.l.b16 %v420
      %v716 = vunpack.c.l.b16 %v421
      %v717 = vunpack.c.l.b16 %v422
      %v718 = vunpack.c.l.b16 %v423
      %v719 = vunpack.c.l.b16 %v424
      %v720 = vunpack.c.l.b16 %v425
      %v721 = vpack.c.b16 %v578, %v577
      %v722 = vpack.c.b16 %v580, %v579
      %v723 = vpack.c.b16 %v582, %v581
      %v724 = vpack.c.b16 %v584, %v583
      %v725 = vpack.c.b16 %v586, %v585
      %v726 = vpack.c.b16 %v588, %v587
      %v727 = vpack.c.b16 %v590, %v589
      %v728 = vpack.c.b16 %v592, %v591
      %v729 = vpack.c.b16 %v594, %v593
      %v730 = vpack.c.b16 %v596, %v595
      %v731 = vpack.c.b16 %v598, %v597
      %v732 = vpack.c.b16 %v600, %v599
      %v733 = vpack.c.b16 %v602, %v601
      %v734 = vpack.c.b16 %v604, %v603
      %v735 = vpack.c.b16 %v606, %v605
      %v736 = vpack.c.b16 %v608, %v607
      %v737 = vpack.c.b16 %v610, %v609
      %v738 = vpack.c.b16 %v612, %v611
      %v739 = vpack.c.b16 %v614, %v613
      %v740 = vpack.c.b16 %v616, %v615
      %v741 = vpack.c.b16 %v618, %v617
      %v742 = vpack.c.b16 %v620, %v619
      %v743 = vpack.c.b16 %v622, %v621
      %v744 = vpack.c.b16 %v624, %v623
      %v745 = vpack.c.b16 %v626, %v625
      %v746 = vpack.c.b16 %v628, %v627
      %v747 = vpack.c.b16 %v630, %v629
      %v748 = vpack.c.b16 %v632, %v631
      %v749 = vpack.c.b16 %v634, %v633
      %v750 = vpack.c.b16 %v636, %v635
      %v751 = vpack.c.b16 %v638, %v637
      %v752 = vpack.c.b16 %v640, %v639
      %v753 = vpack.c.b16 %v642, %v641
      %v754 = vpack.c.b16 %v644, %v643
      %v755 = vpack.c.b16 %v646, %v645
      %v756 = vpack.c.b16 %v648, %v647
      %v757 = vpack.c.b16 %v650, %v649
      %v758 = vpack.c.b16 %v652, %v651
      %v759 = vpack.c.b16 %v654, %v653
      %v760 = vpack.c.b16 %v656, %v655
      %v761 = vpack.c.b16 %v658, %v657
      %v762 = vpack.c.b16 %v660, %v659
      %v763 = vpack.c.b16 %v662, %v661
      %v764 = vpack.c.b16 %v664, %v663
      %v765 = vpack.c.b16 %v666, %v665
      %v766 = vpack.c.b16 %v668, %v667
      %v767 = vpack.c.b16 %v670, %v669
      %v768 = vpack.c.b16 %v672, %v671
      %v769 = vpack.c.b16 %v674, %v673
      %v770 = vpack.c.b16 %v676, %v675
      %v771 = vpack.c.b16 %v678, %v677
      %v772 = vpack.c.b16 %v680, %v679
      %v773 = vpack.c.b16 %v682, %v681
      %v774 = vpack.c.b16 %v684, %v683
      %v775 = vpack.c.b16 %v686, %v685
      %v776 = vpack.c.b16 %v688, %v687
      %v777 = vpack.c.b16 %v690, %v689
      %v778 = vpack.c.b16 %v692, %v691
      %v779 = vpack.c.b16 %v694, %v693
      %v780 = vpack.c.b16 %v696, %v695
      %v781 = vpack.c.b16 %v698, %v697
      %v782 = vpack.c.b16 %v700, %v699
      %v783 = vpack.c.b16 %v702, %v701
      %v784 = vpack.c.b16 %v704, %v703
      %v785 = vpack.c.b16 %v706, %v705
      %v786 = vpack.c.b16 %v708, %v707
      %v787 = vpack.c.b16 %v710, %v709
      %v788 = vpack.c.b16 %v712, %v711
      %v789 = vpack.c.b16 %v714, %v713
      %v790 = vpack.c.b16 %v716, %v715
      %v791 = vpack.c.b16 %v718, %v717
      %v792 = vpack.c.b16 %v720, %v719
      %865 = vmatprep.subr.bf16.mxu0 0
      %866 = vmatpush1.bf16.msra.mxu0 %v721
      %867 = vmatprep.subr.bf16.mxu0 0
      %868 = vmatpush1.bf16.msra.mxu0 %v722
      %869 = vmatprep.subr.bf16.mxu0 0
      %870 = vmatpush1.bf16.msra.mxu0 %v723
      %871 = vmatprep.subr.bf16.mxu0 0
      %872 = vmatpush1.bf16.msra.mxu0 %v724
      %873 = vmatprep.subr.bf16.mxu0 0
      %874 = vmatpush1.bf16.msra.mxu0 %v725
      %875 = vmatprep.subr.bf16.mxu0 0
      %876 = vmatpush1.bf16.msra.mxu0 %v726
      %877 = vmatprep.subr.bf16.mxu0 0
      %878 = vmatpush1.bf16.msra.mxu0 %v727
      %879 = vmatprep.subr.bf16.mxu0 0
      %880 = vmatpush1.bf16.msra.mxu0 %v728
      %881 = vmatprep.subr.bf16.mxu0 0
      %882 = vmatpush1.bf16.msra.mxu0 %v729
      %883 = vmatprep.subr.bf16.mxu0 0
      %884 = vmatpush1.bf16.msra.mxu0 %v730
      %885 = vmatprep.subr.bf16.mxu0 0
      %886 = vmatpush1.bf16.msra.mxu0 %v731
      %887 = vmatprep.subr.bf16.mxu0 0
      %888 = vmatpush1.bf16.msra.mxu0 %v732
      %889 = vmatprep.subr.bf16.mxu0 0
      %890 = vmatpush1.bf16.msra.mxu0 %v733
      %891 = vmatprep.subr.bf16.mxu0 0
      %892 = vmatpush1.bf16.msra.mxu0 %v734
      %893 = vmatprep.subr.bf16.mxu0 0
      %894 = vmatpush1.bf16.msra.mxu0 %v735
      %895 = vmatprep.subr.bf16.mxu0 0
      %896 = vmatpush1.bf16.msra.mxu0 %v736
      %897 = vmatprep.mubr.bf16.mxu0 %v247
      %898 = vmatmul.mubr.bf16.gmra.mrb[0].mxu0 %v246
      %v899 = vpop.f32.mrb[0].mxu0
      %v900 = vadd.f32 %v431, %v899
      %v901 = vpop.f32.mrb[0].mxu0
      %v902 = vpop.f32.mrb[0].mxu0
      %v903 = vadd.f32 %v431, %v902
      %v904 = vpop.f32.mrb[0].mxu0
      %905 = vmatprep.mubr.bf16.mxu0 %v256
      %906 = vmatmul.mubr.bf16.gmra.mrb[0].mxu0 %v255
      %v907 = vpop.f32.mrb[0].mxu0
      %v908 = vadd.f32 %v431, %v907
      %v909 = vpop.f32.mrb[0].mxu0
      %v910 = vpop.f32.mrb[0].mxu0
      %v911 = vadd.f32 %v431, %v910
      %v912 = vpop.f32.mrb[0].mxu0
      %913 = vmatprep.mubr.bf16.mxu0 %v265
      %914 = vmatmul.mubr.bf16.gmra.mrb[0].mxu0 %v264
      %v915 = vpop.f32.mrb[0].mxu0
      %v916 = vadd.f32 %v431, %v915
      %v917 = vpop.f32.mrb[0].mxu0
      %v918 = vpop.f32.mrb[0].mxu0
      %v919 = vadd.f32 %v431, %v918
      %v920 = vpop.f32.mrb[0].mxu0
      %921 = vmatprep.mubr.bf16.mxu0 %v274
      %922 = vmatmul.mubr.bf16.gmra.mrb[0].mxu0 %v273
      %v923 = vpop.f32.mrb[0].mxu0
      %v924 = vadd.f32 %v431, %v923
      %v925 = vpop.f32.mrb[0].mxu0
      %v926 = vpop.f32.mrb[0].mxu0
      %v927 = vadd.f32 %v431, %v926
      %v928 = vpop.f32.mrb[0].mxu0
      %929 = vdwg.mxu0
      %930 = vmatprep.subr.bf16.mxu0 0
      %931 = vmatpush1.bf16.msra.mxu0 %v737
      %932 = vmatprep.subr.bf16.mxu0 0
      %933 = vmatpush1.bf16.msra.mxu0 %v738
      %934 = vmatprep.subr.bf16.mxu0 0
      %935 = vmatpush1.bf16.msra.mxu0 %v739
      %936 = vmatprep.subr.bf16.mxu0 0
      %937 = vmatpush1.bf16.msra.mxu0 %v740
      %938 = vmatprep.subr.bf16.mxu0 0
      %939 = vmatpush1.bf16.msra.mxu0 %v741
      %940 = vmatprep.subr.bf16.mxu0 0
      %941 = vmatpush1.bf16.msra.mxu0 %v742
      %942 = vmatprep.subr.bf16.mxu0 0
      %943 = vmatpush1.bf16.msra.mxu0 %v743
      %944 = vmatprep.subr.bf16.mxu0 0
      %945 = vmatpush1.bf16.msra.mxu0 %v744
      %946 = vmatprep.subr.bf16.mxu0 0
      %947 = vmatpush1.bf16.msra.mxu0 %v745
      %948 = vmatprep.subr.bf16.mxu0 0
      %949 = vmatpush1.bf16.msra.mxu0 %v746
      %950 = vmatprep.subr.bf16.mxu0 0
      %951 = vmatpush1.bf16.msra.mxu0 %v747
      %952 = vmatprep.subr.bf16.mxu0 0
      %953 = vmatpush1.bf16.msra.mxu0 %v748
      %954 = vmatprep.subr.bf16.mxu0 0
      %955 = vmatpush1.bf16.msra.mxu0 %v749
      %956 = vmatprep.subr.bf16.mxu0 0
      %957 = vmatpush1.bf16.msra.mxu0 %v750
      %958 = vmatprep.subr.bf16.mxu0 0
      %959 = vmatpush1.bf16.msra.mxu0 %v751
      %960 = vmatprep.subr.bf16.mxu0 0
      %961 = vmatpush1.bf16.msra.mxu0 %v752
      %962 = vmatprep.mubr.bf16.mxu0 %v249
      %963 = vmatmul.mubr.bf16.gmra.mrb[0].mxu0 %v248
      %v964 = vpop.f32.mrb[0].mxu0
      %v965 = vadd.f32 %v900, %v964
      %v966 = vpop.f32.mrb[0].mxu0
      %v967 = vpop.f32.mrb[0].mxu0
      %v968 = vadd.f32 %v903, %v967
      %v969 = vpop.f32.mrb[0].mxu0
      %970 = vmatprep.mubr.bf16.mxu0 %v258
      %971 = vmatmul.mubr.bf16.gmra.mrb[0].mxu0 %v257
      %v972 = vpop.f32.mrb[0].mxu0
      %v973 = vadd.f32 %v908, %v972
      %v974 = vpop.f32.mrb[0].mxu0
      %v975 = vpop.f32.mrb[0].mxu0
      %v976 = vadd.f32 %v911, %v975
      %v977 = vpop.f32.mrb[0].mxu0
      %978 = vmatprep.mubr.bf16.mxu0 %v267
      %979 = vmatmul.mubr.bf16.gmra.mrb[0].mxu0 %v266
      %v980 = vpop.f32.mrb[0].mxu0
      %v981 = vadd.f32 %v916, %v980
      %v982 = vpop.f32.mrb[0].mxu0
      %v983 = vpop.f32.mrb[0].mxu0
      %v984 = vadd.f32 %v919, %v983
      %v985 = vpop.f32.mrb[0].mxu0
      %986 = vmatprep.mubr.bf16.mxu0 %v276
      %987 = vmatmul.mubr.bf16.gmra.mrb[0].mxu0 %v275
      %v988 = vpop.f32.mrb[0].mxu0
      %v989 = vadd.f32 %v924, %v988
      %v990 = vpop.f32.mrb[0].mxu0
      %v991 = vpop.f32.mrb[0].mxu0
      %v992 = vadd.f32 %v927, %v991
      %v993 = vpop.f32.mrb[0].mxu0
      %994 = vdwg.mxu0
      %995 = vmatprep.subr.bf16.mxu0 0
      %996 = vmatpush1.bf16.msra.mxu0 %v753
      %997 = vmatprep.subr.bf16.mxu0 0
      %998 = vmatpush1.bf16.msra.mxu0 %v754
      %999 = vmatprep.subr.bf16.mxu0 0
      %1000 = vmatpush1.bf16.msra.mxu0 %v755
      %1001 = vmatprep.subr.bf16.mxu0 0
      %1002 = vmatpush1.bf16.msra.mxu0 %v756
      %1003 = vmatprep.subr.bf16.mxu0 0
      %1004 = vmatpush1.bf16.msra.mxu0 %v757
      %1005 = vmatprep.subr.bf16.mxu0 0
      %1006 = vmatpush1.bf16.msra.mxu0 %v758
      %1007 = vmatprep.subr.bf16.mxu0 0
      %1008 = vmatpush1.bf16.msra.mxu0 %v759
      %1009 = vmatprep.subr.bf16.mxu0 0
      %1010 = vmatpush1.bf16.msra.mxu0 %v760
      %1011 = vmatprep.subr.bf16.mxu0 0
      %1012 = vmatpush1.bf16.msra.mxu0 %v761
      %1013 = vmatprep.subr.bf16.mxu0 0
      %1014 = vmatpush1.bf16.msra.mxu0 %v762
      %1015 = vmatprep.subr.bf16.mxu0 0
      %1016 = vmatpush1.bf16.msra.mxu0 %v763
      %1017 = vmatprep.subr.bf16.mxu0 0
      %1018 = vmatpush1.bf16.msra.mxu0 %v764
      %1019 = vmatprep.subr.bf16.mxu0 0
      %1020 = vmatpush1.bf16.msra.mxu0 %v765
      %1021 = vmatprep.subr.bf16.mxu0 0
      %1022 = vmatpush1.bf16.msra.mxu0 %v766
      %1023 = vmatprep.subr.bf16.mxu0 0
      %1024 = vmatpush1.bf16.msra.mxu0 %v767
      %1025 = vmatprep.subr.bf16.mxu0 0
      %1026 = vmatpush1.bf16.msra.mxu0 %v768
      %1027 = vmatprep.mubr.bf16.mxu0 %v251
      %1028 = vmatmul.mubr.bf16.gmra.mrb[0].mxu0 %v250
      %v1029 = vpop.f32.mrb[0].mxu0
      %v1030 = vadd.f32 %v965, %v1029
      %v1031 = vpop.f32.mrb[0].mxu0
      %v1032 = vpop.f32.mrb[0].mxu0
      %v1033 = vadd.f32 %v968, %v1032
      %v1034 = vpop.f32.mrb[0].mxu0
      %1035 = vmatprep.mubr.bf16.mxu0 %v260
      %1036 = vmatmul.mubr.bf16.gmra.mrb[0].mxu0 %v259
      %v1037 = vpop.f32.mrb[0].mxu0
      %v1038 = vadd.f32 %v973, %v1037
      %v1039 = vpop.f32.mrb[0].mxu0
      %v1040 = vpop.f32.mrb[0].mxu0
      %v1041 = vadd.f32 %v976, %v1040
      %v1042 = vpop.f32.mrb[0].mxu0
      %1043 = vmatprep.mubr.bf16.mxu0 %v269
      %1044 = vmatmul.mubr.bf16.gmra.mrb[0].mxu0 %v268
      %v1045 = vpop.f32.mrb[0].mxu0
      %v1046 = vadd.f32 %v981, %v1045
      %v1047 = vpop.f32.mrb[0].mxu0
      %v1048 = vpop.f32.mrb[0].mxu0
      %v1049 = vadd.f32 %v984, %v1048
      %v1050 = vpop.f32.mrb[0].mxu0
      %1051 = vmatprep.mubr.bf16.mxu0 %v278
      %1052 = vmatmul.mubr.bf16.gmra.mrb[0].mxu0 %v277
      %v1053 = vpop.f32.mrb[0].mxu0
      %v1054 = vadd.f32 %v989, %v1053
      %v1055 = vpop.f32.mrb[0].mxu0
      %v1056 = vpop.f32.mrb[0].mxu0
      %v1057 = vadd.f32 %v992, %v1056
      %v1058 = vpop.f32.mrb[0].mxu0
      %1059 = vdwg.mxu0
      %1060 = vmatprep.subr.bf16.mxu0 0
      %1061 = vmatpush1.bf16.msra.mxu0 %v769
      %1062 = vmatprep.subr.bf16.mxu0 0
      %1063 = vmatpush1.bf16.msra.mxu0 %v770
      %1064 = vmatprep.subr.bf16.mxu0 0
      %1065 = vmatpush1.bf16.msra.mxu0 %v771
      %1066 = vmatprep.subr.bf16.mxu0 0
      %1067 = vmatpush1.bf16.msra.mxu0 %v772
      %1068 = vmatprep.subr.bf16.mxu0 0
      %1069 = vmatpush1.bf16.msra.mxu0 %v773
      %1070 = vmatprep.subr.bf16.mxu0 0
      %1071 = vmatpush1.bf16.msra.mxu0 %v774
      %1072 = vmatprep.subr.bf16.mxu0 0
      %1073 = vmatpush1.bf16.msra.mxu0 %v775
      %1074 = vmatprep.subr.bf16.mxu0 0
      %1075 = vmatpush1.bf16.msra.mxu0 %v776
      %1076 = vmatprep.subr.bf16.mxu0 0
      %1077 = vmatpush1.bf16.msra.mxu0 %v777
      %1078 = vmatprep.subr.bf16.mxu0 0
      %1079 = vmatpush1.bf16.msra.mxu0 %v778
      %1080 = vmatprep.subr.bf16.mxu0 0
      %1081 = vmatpush1.bf16.msra.mxu0 %v779
      %1082 = vmatprep.subr.bf16.mxu0 0
      %1083 = vmatpush1.bf16.msra.mxu0 %v780
      %1084 = vmatprep.subr.bf16.mxu0 0
      %1085 = vmatpush1.bf16.msra.mxu0 %v781
      %1086 = vmatprep.subr.bf16.mxu0 0
      %1087 = vmatpush1.bf16.msra.mxu0 %v782
      %1088 = vmatprep.subr.bf16.mxu0 0
      %1089 = vmatpush1.bf16.msra.mxu0 %v783
      %1090 = vmatprep.subr.bf16.mxu0 0
      %1091 = vmatpush1.bf16.msra.mxu0 %v784
      %1092 = vmatprep.mubr.bf16.mxu0 %v253
      %1093 = vmatmul.mubr.bf16.gmra.mrb[0].mxu0 %v252
      %v1094 = vpop.f32.mrb[0].mxu0
      %v1095 = vadd.f32 %v1030, %v1094
      %v1096 = vpop.f32.mrb[0].mxu0
      %v1097 = vpop.f32.mrb[0].mxu0
      %v1098 = vadd.f32 %v1033, %v1097
      %v1099 = vpop.f32.mrb[0].mxu0
      %1100 = vmatprep.mubr.bf16.mxu0 %v262
      %1101 = vmatmul.mubr.bf16.gmra.mrb[0].mxu0 %v261
      %v1102 = vpop.f32.mrb[0].mxu0
      %v1103 = vadd.f32 %v1038, %v1102
      %v1104 = vpop.f32.mrb[0].mxu0
      %v1105 = vpop.f32.mrb[0].mxu0
      %v1106 = vadd.f32 %v1041, %v1105
      %v1107 = vpop.f32.mrb[0].mxu0
      %1108 = vmatprep.mubr.bf16.mxu0 %v271
      %1109 = vmatmul.mubr.bf16.gmra.mrb[0].mxu0 %v270
      %v1110 = vpop.f32.mrb[0].mxu0
      %v1111 = vadd.f32 %v1046, %v1110
      %v1112 = vpop.f32.mrb[0].mxu0
      %v1113 = vpop.f32.mrb[0].mxu0
      %v1114 = vadd.f32 %v1049, %v1113
      %v1115 = vpop.f32.mrb[0].mxu0
      %1116 = vmatprep.mubr.bf16.mxu0 %v280
      %1117 = vmatmul.mubr.bf16.gmra.mrb[0].mxu0 %v279
      %v1118 = vpop.f32.mrb[0].mxu0
      %v1119 = vadd.f32 %v1054, %v1118
      %v1120 = vpop.f32.mrb[0].mxu0
      %v1121 = vpop.f32.mrb[0].mxu0
      %v1122 = vadd.f32 %v1057, %v1121
      %v1123 = vpop.f32.mrb[0].mxu0
      %1124 = vdwg.mxu0
      %1125 = vmatprep.subr.bf16.mxu0 0
      %1126 = vmatpush1.bf16.msra.mxu0 %v785
      %1127 = vmatprep.subr.bf16.mxu0 0
      %1128 = vmatpush1.bf16.msra.mxu0 %v786
      %1129 = vmatprep.subr.bf16.mxu0 0
      %1130 = vmatpush1.bf16.msra.mxu0 %v787
      %1131 = vmatprep.subr.bf16.mxu0 0
      %1132 = vmatpush1.bf16.msra.mxu0 %v788
      %1133 = vmatprep.subr.bf16.mxu0 0
      %1134 = vmatpush1.bf16.msra.mxu0 %v789
      %1135 = vmatprep.subr.bf16.mxu0 0
      %1136 = vmatpush1.bf16.msra.mxu0 %v790
      %1137 = vmatprep.subr.bf16.mxu0 0
      %1138 = vmatpush1.bf16.msra.mxu0 %v791
      %1139 = vmatprep.subr.bf16.mxu0 0
      %1140 = vmatpush1.bf16.msra.mxu0 %v792
      %1141 = vmatprep.subr.bf16.mxu0 0
      %1142 = vmatpush1.bf16.msra.mxu0 0
      %1143 = vmatprep.subr.bf16.mxu0 0
      %1144 = vmatpush1.bf16.msra.mxu0 0
      %1145 = vmatprep.subr.bf16.mxu0 0
      %1146 = vmatpush1.bf16.msra.mxu0 0
      %1147 = vmatprep.subr.bf16.mxu0 0
      %1148 = vmatpush1.bf16.msra.mxu0 0
      %1149 = vmatprep.subr.bf16.mxu0 0
      %1150 = vmatpush1.bf16.msra.mxu0 0
      %1151 = vmatprep.subr.bf16.mxu0 0
      %1152 = vmatpush1.bf16.msra.mxu0 0
      %1153 = vmatprep.subr.bf16.mxu0 0
      %1154 = vmatpush1.bf16.msra.mxu0 0
      %1155 = vmatprep.subr.bf16.mxu0 0
      %1156 = vmatpush1.bf16.msra.mxu0 0
      %1157 = vmatprep.mubr.bf16.mxu0 0
      %1158 = vmatmul.mubr.bf16.gmra.mrb[0].mxu0 %v254
      %v1159 = vpop.f32.mrb[0].mxu0
      %v1160 = vadd.f32 %v1095, %v1159
      %v1161 = vpop.f32.mrb[0].mxu0
      %v1162 = vpop.f32.mrb[0].mxu0
      %v1163 = vadd.f32 %v1098, %v1162
      %v1164 = vpop.f32.mrb[0].mxu0
      %1165 = vmatprep.mubr.bf16.mxu0 0
      %1166 = vmatmul.mubr.bf16.gmra.mrb[0].mxu0 %v263
      %v1167 = vpop.f32.mrb[0].mxu0
      %v1168 = vadd.f32 %v1103, %v1167
      %v1169 = vpop.f32.mrb[0].mxu0
      %v1170 = vpop.f32.mrb[0].mxu0
      %v1171 = vadd.f32 %v1106, %v1170
      %v1172 = vpop.f32.mrb[0].mxu0
      %1173 = vmatprep.mubr.bf16.mxu0 0
      %1174 = vmatmul.mubr.bf16.gmra.mrb[0].mxu0 %v272
      %v1175 = vpop.f32.mrb[0].mxu0
      %v1176 = vadd.f32 %v1111, %v1175
      %v1177 = vpop.f32.mrb[0].mxu0
      %v1178 = vpop.f32.mrb[0].mxu0
      %v1179 = vadd.f32 %v1114, %v1178
      %v1180 = vpop.f32.mrb[0].mxu0
      %1181 = vmatprep.mubr.bf16.mxu0 0
      %1182 = vmatmul.mubr.bf16.gmra.mrb[0].mxu0 %v281
      %v1183 = vpop.f32.mrb[0].mxu0
      %v1184 = vadd.f32 %v1119, %v1183
      %v1185 = vpop.f32.mrb[0].mxu0
      %v1186 = vpop.f32.mrb[0].mxu0
      %v1187 = vadd.f32 %v1122, %v1186
      %v1188 = vpop.f32.mrb[0].mxu0
      %1189 = vdwg.mxu0
      %1190 = vst [vmem:[%s170] sm:$0xff] %v1160
      %1191 = vst [vmem:[%s170 + $0x8] sm:$0xff] %v1163
      %1192 = vst [vmem:[%s170 + $0x10] sm:$0xff] %v1168
      %1193 = vst [vmem:[%s170 + $0x18] sm:$0xff] %v1171
      %1194 = vst [vmem:[%s170 + $0x20] sm:$0xff] %v1176
      %1195 = vst [vmem:[%s170 + $0x28] sm:$0xff] %v1179
      %1196 = vst [vmem:[%s170 + $0x30] sm:$0xff] %v1184
      %1197 = vst [vmem:[%s170 + $0x38] sm:$0xff] %v1187
      %p1198 = scmp.lt.s32.totalorder %s14, 1
      %s1199 = scalar_select %p1198, %s14, 1
      %s1200 = smul.addr %s1199, 8
      %s1201 = smul.addr %s1200, 8
      %s1202 = scalar_lea.vmem %s3, %s1201
      // Predicated region
      $region33: #{detector_backbone_with_fpn.17} parent=31 // pred_check
        %p1203 = pneg %p100
      $region34: #{detector_backbone_with_fpn.17} parent=31 // pred_check_branch
        %1205 = sbr.rel (%p1203) target = $region36
      $region35: #{detector_backbone_with_fpn.17} parent=31 // pred_region
        _
      $region36: #{detector_backbone_with_fpn.17} parent=31 // pred_fallthru
        _
    $region32: #{detector_backbone_with_fpn.17} parent=5 // pred_fallthru
      _
    %p1206 = scmp.le.s32.totalorder 2, %s9
    // Predicated region
    $region37: #{detector_backbone_with_fpn.17} parent=5 // pred_check
      %p1207 = pneg %p1206
    $region38: #{detector_backbone_with_fpn.17} parent=5 // pred_check_branch
      %1209 = sbr.rel (%p1207) target = $region40
    $region39: #{detector_backbone_with_fpn.17} parent=5 // pred_region
      %s1210 = ssub.s32 %s9, 2
      // Predicated region
      $region41: #{detector_backbone_with_fpn.17} parent=39 // pred_check
        %p1211 = pneg %p106
      $region42: #{detector_backbone_with_fpn.17} parent=39 // pred_check_branch
        %1213 = sbr.rel (%p1211) target = $region44
      $region43: #{detector_backbone_with_fpn.17} parent=39 // pred_region
        %p1214 = scmp.lt.s32.totalorder %s15, 1
        %s1215 = scalar_select %p1214, %s15, 1
        %s1216 = smul.addr %s1215, 8
        %s1217 = smul.addr %s1216, 8
        %s1218 = scalar_lea.vmem %s3, %s1217
      $region44: #{detector_backbone_with_fpn.17} parent=39 // pred_fallthru
        _
    $region40: #{detector_backbone_with_fpn.17} parent=5 // pred_fallthru
      _
  $region6: #{detector_backbone_with_fpn.17} parent=0 // loop_footer
    %s13 = sadd.s32 1, %s9
  $region7: #{detector_backbone_with_fpn.17} parent=0 // loop_footer_branch
    %8 = sbr.rel target = $region3
  $region8: #{detector_backbone_with_fpn.17} parent=0 // loop_exit
    _

// kernel: detector_backbone_with_fpn.15
$region0: #{detector_backbone_with_fpn.15}
  #allocation0 [shape = 'u32[]', space=smem, size = 0x4, offset = 0x4, fixed_abs, tag = 'smem constant byte address 0x4 - core index']
  #allocation1 [shape = 'u32[144,128]{1,0:T(1,128)}', space=vmem, size = 0x12000, scoped, tag = 'internal scratch']
  %s0 = inlined_call_operand.vmem [shape: f32[2,6,6,128], index: 0, kind: input, shape index: {}]
  %s1 = inlined_call_operand.vmem [shape: bf16[1152,128], index: 1, kind: input, shape index: {}]
  %s2 = inlined_call_operand.vmem [shape: f32[1,128], index: 2, kind: input, shape index: {}]
  %s3 = inlined_call_operand.vmem [shape: f32[2,4,4,128], index: 3, kind: output, shape index: {}]
  %s4 = sld [smem:[#allocation0]]
  $region45: #{detector_backbone_with_fpn.15} parent=0
    _
  %s6 = ssub.s32 1, %s4
  %s7 = scalar_select 0, %s6, %s4
  loop: start=0, step=1, limit=4
  $region2: #{detector_backbone_with_fpn.15} parent=0 // loop_pre_header
    _
  $region3: #{detector_backbone_with_fpn.15} parent=0 // loop_header
    %s9 = sphi 0, %s13
    %p10 = scmp.ge.s32.totalorder %s9, 4
    %s19 = sphi 0, %s21
    %s22 = sphi 0, %s19
    %s23 = sphi 0, %s22
    %s39 = sphi 0, %s23
    %s43 = sphi 0, %s43
    %s45 = sphi 0, %s43
    %s46 = sphi 0, %s45
    %s60 = sphi 0, %s46
    %s64 = sphi 0, %s64
    %s66 = sphi 0, %s64
    %s67 = sphi 0, %s66
    %s81 = sphi 0, %s67
    %s87 = sphi 0, %s89
    %s90 = sphi 0, %s87
    %s91 = sphi 0, %s90
    %s107 = sphi 0, %s91
  $region4: #{detector_backbone_with_fpn.15} parent=0 // loop_header_branch
    %12 = sbr.rel (%p10) target = $region8
  $region5: #{detector_backbone_with_fpn.15} parent=0 // loop_body
    %s14 = ssub.s32 %s9, 1
    %s15 = ssub.s32 %s9, 2
    %s16 = sadd.s32 %s9, 1
    %s17 = ssub.s32 %s9, %s16
    %p18 = scmp.eq.s32.totalorder %s17, 0
    %s20 = sadd.s32 %s19, 1
    %s21 = scalar_select %p18, %s19, %s20
    %p24 = pneg %p18
    %p25 = scmp.eq.s32.totalorder %s9, 1
    %p26 = por %p24, %p25
    %p27 = scmp.ne.s32.totalorder %s19, %s22
    %p28 = scmp.eq.s32.totalorder %s9, 0
    %p29 = por %p27, %p28
    %p30 = scmp.ne.s32.totalorder %s19, %s22
    %p31 = scmp.eq.s32.totalorder %s14, 1
    %p32 = por %p30, %p31
    %p33 = scmp.ne.s32.totalorder %s22, %s23
    %p34 = scmp.eq.s32.totalorder %s14, 0
    %p35 = por %p33, %p34
    %p36 = scmp.ne.s32.totalorder %s22, %s23
    %p37 = scmp.eq.s32.totalorder %s15, 1
    %p38 = por %p36, %p37
    %p40 = scmp.ne.s32.totalorder %s23, %s39
    %p41 = scmp.eq.s32.totalorder %s15, 0
    %p42 = por %p40, %p41
    %s44 = sadd.s32 %s43, 1
    %p47 = scmp.eq.s32.totalorder %s9, 1
    %p48 = scmp.ne.s32.totalorder %s43, %s45
    %p49 = scmp.eq.s32.totalorder %s9, 0
    %p50 = por %p48, %p49
    %p51 = scmp.ne.s32.totalorder %s43, %s45
    %p52 = scmp.eq.s32.totalorder %s14, 1
    %p53 = por %p51, %p52
    %p54 = scmp.ne.s32.totalorder %s45, %s46
    %p55 = scmp.eq.s32.totalorder %s14, 0
    %p56 = por %p54, %p55
    %p57 = scmp.ne.s32.totalorder %s45, %s46
    %p58 = scmp.eq.s32.totalorder %s15, 1
    %p59 = por %p57, %p58
    %p61 = scmp.ne.s32.totalorder %s46, %s60
    %p62 = scmp.eq.s32.totalorder %s15, 0
    %p63 = por %p61, %p62
    %s65 = sadd.s32 %s64, 1
    %p68 = scmp.eq.s32.totalorder %s9, 1
    %p69 = scmp.ne.s32.totalorder %s64, %s66
    %p70 = scmp.eq.s32.totalorder %s9, 0
    %p71 = por %p69, %p70
    %p72 = scmp.ne.s32.totalorder %s64, %s66
    %p73 = scmp.eq.s32.totalorder %s14, 1
    %p74 = por %p72, %p73
    %p75 = scmp.ne.s32.totalorder %s66, %s67
    %p76 = scmp.eq.s32.totalorder %s14, 0
    %p77 = por %p75, %p76
    %p78 = scmp.ne.s32.totalorder %s66, %s67
    %p79 = scmp.eq.s32.totalorder %s15, 1
    %p80 = por %p78, %p79
    %p82 = scmp.ne.s32.totalorder %s67, %s81
    %p83 = scmp.eq.s32.totalorder %s15, 0
    %p84 = por %p82, %p83
    %s85 = ssub.s32 %s9, %s16
    %p86 = scmp.eq.s32.totalorder %s85, 0
    %s88 = sadd.s32 %s87, 1
    %s89 = scalar_select %p86, %s87, %s88
    %p92 = pneg %p86
    %p93 = scmp.eq.s32.totalorder %s9, 1
    %p94 = por %p92, %p93
    %p95 = scmp.ne.s32.totalorder %s87, %s90
    %p96 = scmp.eq.s32.totalorder %s9, 0
    %p97 = por %p95, %p96
    %p98 = scmp.ne.s32.totalorder %s87, %s90
    %p99 = scmp.eq.s32.totalorder %s14, 1
    %p100 = por %p98, %p99
    %p101 = scmp.ne.s32.totalorder %s90, %s91
    %p102 = scmp.eq.s32.totalorder %s14, 0
    %p103 = por %p101, %p102
    %p104 = scmp.ne.s32.totalorder %s90, %s91
    %p105 = scmp.eq.s32.totalorder %s15, 1
    %p106 = por %p104, %p105
    %p108 = scmp.ne.s32.totalorder %s91, %s107
    %p109 = scmp.eq.s32.totalorder %s15, 0
    %p110 = por %p108, %p109
    %p111 = scmp.le.s32.totalorder 1, %s9
    %p112 = scmp.lt.s32.totalorder %s9, 3
    %p113 = pnand %p111, %p112
    %p114 = pneg %p113
    // Predicated region
    $region9: #{detector_backbone_with_fpn.15} parent=5 // pred_check
      _
    $region10: #{detector_backbone_with_fpn.15} parent=5 // pred_check_branch
      %116 = sbr.rel (%p113) target = $region12
    $region11: #{detector_backbone_with_fpn.15} parent=5 // pred_region
      %s117 = ssub.s32 %s9, 1
      // Predicated region
      $region13: #{detector_backbone_with_fpn.15} parent=11 // pred_check
        %p118 = pneg %p56
      $region14: #{detector_backbone_with_fpn.15} parent=11 // pred_check_branch
        %120 = sbr.rel (%p118) target = $region16
      $region15: #{detector_backbone_with_fpn.15} parent=11 // pred_region
        _
      $region16: #{detector_backbone_with_fpn.15} parent=11 // pred_fallthru
        _
      // Predicated region
      $region17: #{detector_backbone_with_fpn.15} parent=11 // pred_check
        %p121 = pneg %p77
      $region18: #{detector_backbone_with_fpn.15} parent=11 // pred_check_branch
        %123 = sbr.rel (%p121) target = $region20
      $region19: #{detector_backbone_with_fpn.15} parent=11 // pred_region
        _
      $region20: #{detector_backbone_with_fpn.15} parent=11 // pred_fallthru
        _
    $region12: #{detector_backbone_with_fpn.15} parent=5 // pred_fallthru
      _
    %p124 = scmp.lt.s32.totalorder %s9, 2
    // Predicated region
    $region21: #{detector_backbone_with_fpn.15} parent=5 // pred_check
      %p125 = pneg %p124
    $region22: #{detector_backbone_with_fpn.15} parent=5 // pred_check_branch
      %127 = sbr.rel (%p125) target = $region24
    $region23: #{detector_backbone_with_fpn.15} parent=5 // pred_region
      // Predicated region
      $region25: #{detector_backbone_with_fpn.15} parent=23 // pred_check
        %p128 = pneg %p29
      $region26: #{detector_backbone_with_fpn.15} parent=23 // pred_check_branch
        %130 = sbr.rel (%p128) target = $region28
      $region27: #{detector_backbone_with_fpn.15} parent=23 // pred_region
        %p131 = scmp.lt.s32.totalorder %s9, 1
        %s132 = scalar_select %p131, %s9, 1
        %s133 = smul.addr %s132, 6
        %s134 = smul.addr %s133, 8
        %s135 = scalar_lea.vmem %s0, %s134
      $region28: #{detector_backbone_with_fpn.15} parent=23 // pred_fallthru
        _
    $region24: #{detector_backbone_with_fpn.15} parent=5 // pred_fallthru
      _
    %p136 = scmp.le.s32.totalorder 1, %s9
    %p137 = scmp.lt.s32.totalorder %s9, 3
    %p138 = pnand %p136, %p137
    %p139 = pneg %p138
    // Predicated region
    $region29: #{detector_backbone_with_fpn.15} parent=5 // pred_check
      _
    $region30: #{detector_backbone_with_fpn.15} parent=5 // pred_check_branch
      %141 = sbr.rel (%p138) target = $region32
    $region31: #{detector_backbone_with_fpn.15} parent=5 // pred_region
      %s142 = ssub.s32 %s9, 1
      %p143 = scmp.lt.s32.totalorder %s14, 1
      %s144 = scalar_select %p143, %s14, 1
      %s145 = smul.addr %s144, 6
      %s146 = smul.addr %s145, 8
      %s147 = scalar_lea.vmem %s0, %s146
      %p148 = pneg %p35
      %p149 = pneg %p32
      %p150 = pneg %p56
      %p151 = pneg %p53
      %p152 = pneg %p77
      %p153 = pneg %p74
      %p154 = pneg %p103
      %p155 = pneg %p100
      %p156 = scmp.lt.s32.totalorder %s14, 1
      %s157 = scalar_select %p156, %s14, 1
      %s158 = smul.addr %s157, 4
      %s159 = smul.addr %s158, 4
      %s160 = scalar_lea.vmem %s3, %s159
      %p161 = scmp.lt.s32.totalorder %s14, 1
      %s162 = scalar_select %p161, %s14, 1
      %s163 = smul.addr %s162, 6
      %s164 = smul.addr %s163, 8
      %s165 = scalar_lea.vmem %s0, %s164
      %p166 = scmp.lt.s32.totalorder %s14, 1
      %s167 = scalar_select %p166, %s14, 1
      %s168 = smul.addr %s167, 4
      %s169 = smul.addr %s168, 4
      %s170 = scalar_lea.vmem %s3, %s169
      %v172 = vld [vmem:[%s165] sm:$0xf]
      %v173 = vld [vmem:[%s165 + $0x8] sm:$0xf]
      %v174 = vld [vmem:[%s165 + $0x10] sm:$0xf]
      %v175 = vld [vmem:[%s165 + $0x18] sm:$0xf]
      %v176 = vld [vmem:[%s165 + $0x1] sm:$0xf]
      %v177 = vld [vmem:[%s165 + $0x9] sm:$0xf]
      %v178 = vld [vmem:[%s165 + $0x11] sm:$0xf]
      %v179 = vld [vmem:[%s165 + $0x19] sm:$0xf]
      %v180 = vld [vmem:[%s165 + $0x2] sm:$0xf]
      %v181 = vld [vmem:[%s165 + $0xa] sm:$0xf]
      %v182 = vld [vmem:[%s165 + $0x12] sm:$0xf]
      %v183 = vld [vmem:[%s165 + $0x1a] sm:$0xf]
      %s184 = scalar_lea.vmem %s165, 8
      %v185 = vld [vmem:[%s184] sm:$0xf]
      %v186 = vld [vmem:[%s184 + $0x8] sm:$0xf]
      %v187 = vld [vmem:[%s184 + $0x10] sm:$0xf]
      %v188 = vld [vmem:[%s184 + $0x18] sm:$0xf]
      %v189 = vld [vmem:[%s184 + $0x1] sm:$0xf]
      %v190 = vld [vmem:[%s184 + $0x9] sm:$0xf]
      %v191 = vld [vmem:[%s184 + $0x11] sm:$0xf]
      %v192 = vld [vmem:[%s184 + $0x19] sm:$0xf]
      %v193 = vld [vmem:[%s184 + $0x2] sm:$0xf]
      %v194 = vld [vmem:[%s184 + $0xa] sm:$0xf]
      %v195 = vld [vmem:[%s184 + $0x12] sm:$0xf]
      %v196 = vld [vmem:[%s184 + $0x1a] sm:$0xf]
      %s197 = scalar_lea.vmem %s165, 16
      %v198 = vld [vmem:[%s197] sm:$0xf]
      %v199 = vld [vmem:[%s197 + $0x8] sm:$0xf]
      %v200 = vld [vmem:[%s197 + $0x10] sm:$0xf]
      %v201 = vld [vmem:[%s197 + $0x18] sm:$0xf]
      %v202 = vld [vmem:[%s197 + $0x1] sm:$0xf]
      %v203 = vld [vmem:[%s197 + $0x9] sm:$0xf]
      %v204 = vld [vmem:[%s197 + $0x11] sm:$0xf]
      %v205 = vld [vmem:[%s197 + $0x19] sm:$0xf]
      %v206 = vld [vmem:[%s197 + $0x2] sm:$0xf]
      %v207 = vld [vmem:[%s197 + $0xa] sm:$0xf]
      %v208 = vld [vmem:[%s197 + $0x12] sm:$0xf]
      %v209 = vld [vmem:[%s197 + $0x1a] sm:$0xf]
      %v246 = vcombine.low %v172, %v176
      %v247 = vcombine.low %v180, %v185
      %v248 = vcombine.low %v189, %v193
      %v249 = vcombine.low %v198, %v202
      %v250 = vcombine.low %v173, %v177
      %v251 = vcombine.low %v181, %v186
      %v252 = vcombine.low %v190, %v194
      %v253 = vcombine.low %v199, %v203
      %v254 = vcombine.low %v174, %v178
      %v255 = vcombine.low %v182, %v187
      %v256 = vcombine.low %v191, %v195
      %v257 = vcombine.low %v200, %v204
      %v258 = vcombine.low %v175, %v179
      %v259 = vcombine.low %v183, %v188
      %v260 = vcombine.low %v192, %v196
      %v261 = vcombine.low %v201, %v205
      %v262 = vcombine.low %v246, %v250
      %v263 = vcombine.high %v246, %v250
      %v264 = vcombine.low %v247, %v251
      %v265 = vcombine.high %v247, %v251
      %v266 = vcombine.low %v248, %v252
      %v267 = vcombine.high %v248, %v252
      %v268 = vcombine.low %v249, %v253
      %v269 = vcombine.high %v249, %v253
      %v270 = vcombine.low %v206, %v207
      %v271 = vcombine.low %v254, %v258
      %v272 = vcombine.high %v254, %v258
      %v273 = vcombine.low %v255, %v259
      %v274 = vcombine.high %v255, %v259
      %v275 = vcombine.low %v256, %v260
      %v276 = vcombine.high %v256, %v260
      %v277 = vcombine.low %v257, %v261
      %v278 = vcombine.high %v257, %v261
      %v279 = vcombine.low %v208, %v209
      %v298 = vpack.c.bf16 %v271, %v262
      %v299 = vpack.c.bf16 %v272, %v263
      %v300 = vpack.c.bf16 %v273, %v264
      %v301 = vpack.c.bf16 %v274, %v265
      %v302 = vpack.c.bf16 %v275, %v266
      %v303 = vpack.c.bf16 %v276, %v267
      %v304 = vpack.c.bf16 %v277, %v268
      %v305 = vpack.c.bf16 %v278, %v269
      %v306 = vpack.c.bf16 %v279, %v270
      %v307 = vld [vmem:[%s1] sm:$0xf]
      %v308 = vld [vmem:[%s1 + $0x4] sm:$0xf]
      %v309 = vld [vmem:[%s1 + $0x8] sm:$0xf]
      %v310 = vld [vmem:[%s1 + $0xc] sm:$0xf]
      %v311 = vld [vmem:[%s1 + $0x10] sm:$0xf]
      %v312 = vld [vmem:[%s1 + $0x14] sm:$0xf]
      %v313 = vld [vmem:[%s1 + $0x18] sm:$0xf]
      %v314 = vld [vmem:[%s1 + $0x1c] sm:$0xf]
      %v315 = vld [vmem:[%s1 + $0x20] sm:$0xf]
      %v316 = vld [vmem:[%s1 + $0x24] sm:$0xf]
      %v317 = vld [vmem:[%s1 + $0x28] sm:$0xf]
      %v318 = vld [vmem:[%s1 + $0x2c] sm:$0xf]
      %v319 = vld [vmem:[%s1 + $0x30] sm:$0xf]
      %v320 = vld [vmem:[%s1 + $0x34] sm:$0xf]
      %v321 = vld [vmem:[%s1 + $0x38] sm:$0xf]
      %v322 = vld [vmem:[%s1 + $0x3c] sm:$0xf]
      %v323 = vld [vmem:[%s1 + $0x40] sm:$0xf]
      %v324 = vld [vmem:[%s1 + $0x44] sm:$0xf]
      %v325 = vld [vmem:[%s1 + $0x48] sm:$0xf]
      %v326 = vld [vmem:[%s1 + $0x4c] sm:$0xf]
      %v327 = vld [vmem:[%s1 + $0x50] sm:$0xf]
      %v328 = vld [vmem:[%s1 + $0x54] sm:$0xf]
      %v329 = vld [vmem:[%s1 + $0x58] sm:$0xf]
      %v330 = vld [vmem:[%s1 + $0x5c] sm:$0xf]
      %v331 = vld [vmem:[%s1 + $0x60] sm:$0xf]
      %v332 = vld [vmem:[%s1 + $0x64] sm:$0xf]
      %v333 = vld [vmem:[%s1 + $0x68] sm:$0xf]
      %v334 = vld [vmem:[%s1 + $0x6c] sm:$0xf]
      %v335 = vld [vmem:[%s1 + $0x70] sm:$0xf]
      %v336 = vld [vmem:[%s1 + $0x74] sm:$0xf]
      %v337 = vld [vmem:[%s1 + $0x78] sm:$0xf]
      %v338 = vld [vmem:[%s1 + $0x7c] sm:$0xf]
      %v339 = vld [vmem:[%s1 + $0x80] sm:$0xf]
      %v340 = vld [vmem:[%s1 + $0x84] sm:$0xf]
      %v341 = vld [vmem:[%s1 + $0x88] sm:$0xf]
      %v342 = vld [vmem:[%s1 + $0x8c] sm:$0xf]
      %v343 = vld [vmem:[%s1 + $0x90] sm:$0xf]
      %v344 = vld [vmem:[%s1 + $0x94] sm:$0xf]
      %v345 = vld [vmem:[%s1 + $0x98] sm:$0xf]
      %v346 = vld [vmem:[%s1 + $0x9c] sm:$0xf]
      %v347 = vld [vmem:[%s1 + $0xa0] sm:$0xf]
      %v348 = vld [vmem:[%s1 + $0xa4] sm:$0xf]
      %v349 = vld [vmem:[%s1 + $0xa8] sm:$0xf]
      %v350 = vld [vmem:[%s1 + $0xac] sm:$0xf]
      %v351 = vld [vmem:[%s1 + $0xb0] sm:$0xf]
      %v352 = vld [vmem:[%s1 + $0xb4] sm:$0xf]
      %v353 = vld [vmem:[%s1 + $0xb8] sm:$0xf]
      %v354 = vld [vmem:[%s1 + $0xbc] sm:$0xf]
      %v355 = vld [vmem:[%s1 + $0xc0] sm:$0xf]
      %v356 = vld [vmem:[%s1 + $0xc4] sm:$0xf]
      %v357 = vld [vmem:[%s1 + $0xc8] sm:$0xf]
      %v358 = vld [vmem:[%s1 + $0xcc] sm:$0xf]
      %v359 = vld [vmem:[%s1 + $0xd0] sm:$0xf]
      %v360 = vld [vmem:[%s1 + $0xd4] sm:$0xf]
      %v361 = vld [vmem:[%s1 + $0xd8] sm:$0xf]
      %v362 = vld [vmem:[%s1 + $0xdc] sm:$0xf]
      %v363 = vld [vmem:[%s1 + $0xe0] sm:$0xf]
      %v364 = vld [vmem:[%s1 + $0xe4] sm:$0xf]
      %v365 = vld [vmem:[%s1 + $0xe8] sm:$0xf]
      %v366 = vld [vmem:[%s1 + $0xec] sm:$0xf]
      %v367 = vld [vmem:[%s1 + $0xf0] sm:$0xf]
      %v368 = vld [vmem:[%s1 + $0xf4] sm:$0xf]
      %v369 = vld [vmem:[%s1 + $0xf8] sm:$0xf]
      %v370 = vld [vmem:[%s1 + $0xfc] sm:$0xf]
      %v371 = vld [vmem:[%s1 + $0x100] sm:$0xf]
      %v372 = vld [vmem:[%s1 + $0x104] sm:$0xf]
      %v373 = vld [vmem:[%s1 + $0x108] sm:$0xf]
      %v374 = vld [vmem:[%s1 + $0x10c] sm:$0xf]
      %v375 = vld [vmem:[%s1 + $0x110] sm:$0xf]
      %v376 = vld [vmem:[%s1 + $0x114] sm:$0xf]
      %v377 = vld [vmem:[%s1 + $0x118] sm:$0xf]
      %v378 = vld [vmem:[%s1 + $0x11c] sm:$0xf]
      %v379 = vld [vmem:[%s1 + $0x120] sm:$0xf]
      %v380 = vld [vmem:[%s1 + $0x124] sm:$0xf]
      %v381 = vld [vmem:[%s1 + $0x128] sm:$0xf]
      %v382 = vld [vmem:[%s1 + $0x12c] sm:$0xf]
      %v383 = vld [vmem:[%s1 + $0x130] sm:$0xf]
      %v384 = vld [vmem:[%s1 + $0x134] sm:$0xf]
      %v385 = vld [vmem:[%s1 + $0x138] sm:$0xf]
      %v386 = vld [vmem:[%s1 + $0x13c] sm:$0xf]
      %v387 = vld [vmem:[%s1 + $0x140] sm:$0xf]
      %v388 = vld [vmem:[%s1 + $0x144] sm:$0xf]
      %v389 = vld [vmem:[%s1 + $0x148] sm:$0xf]
      %v390 = vld [vmem:[%s1 + $0x14c] sm:$0xf]
      %v391 = vld [vmem:[%s1 + $0x150] sm:$0xf]
      %v392 = vld [vmem:[%s1 + $0x154] sm:$0xf]
      %v393 = vld [vmem:[%s1 + $0x158] sm:$0xf]
      %v394 = vld [vmem:[%s1 + $0x15c] sm:$0xf]
      %v395 = vld [vmem:[%s1 + $0x160] sm:$0xf]
      %v396 = vld [vmem:[%s1 + $0x164] sm:$0xf]
      %v397 = vld [vmem:[%s1 + $0x168] sm:$0xf]
      %v398 = vld [vmem:[%s1 + $0x16c] sm:$0xf]
      %v399 = vld [vmem:[%s1 + $0x170] sm:$0xf]
      %v400 = vld [vmem:[%s1 + $0x174] sm:$0xf]
      %v401 = vld [vmem:[%s1 + $0x178] sm:$0xf]
      %v402 = vld [vmem:[%s1 + $0x17c] sm:$0xf]
      %v403 = vld [vmem:[%s1 + $0x180] sm:$0xf]
      %v404 = vld [vmem:[%s1 + $0x184] sm:$0xf]
      %v405 = vld [vmem:[%s1 + $0x188] sm:$0xf]
      %v406 = vld [vmem:[%s1 + $0x18c] sm:$0xf]
      %v407 = vld [vmem:[%s1 + $0x190] sm:$0xf]
      %v408 = vld [vmem:[%s1 + $0x194] sm:$0xf]
      %v409 = vld [vmem:[%s1 + $0x198] sm:$0xf]
      %v410 = vld [vmem:[%s1 + $0x19c] sm:$0xf]
      %v411 = vld [vmem:[%s1 + $0x1a0] sm:$0xf]
      %v412 = vld [vmem:[%s1 + $0x1a4] sm:$0xf]
      %v413 = vld [vmem:[%s1 + $0x1a8] sm:$0xf]
      %v414 = vld [vmem:[%s1 + $0x1ac] sm:$0xf]
      %v415 = vld [vmem:[%s1 + $0x1b0] sm:$0xf]
      %v416 = vld [vmem:[%s1 + $0x1b4] sm:$0xf]
      %v417 = vld [vmem:[%s1 + $0x1b8] sm:$0xf]
      %v418 = vld [vmem:[%s1 + $0x1bc] sm:$0xf]
      %v419 = vld [vmem:[%s1 + $0x1c0] sm:$0xf]
      %v420 = vld [vmem:[%s1 + $0x1c4] sm:$0xf]
      %v421 = vld [vmem:[%s1 + $0x1c8] sm:$0xf]
      %v422 = vld [vmem:[%s1 + $0x1cc] sm:$0xf]
      %v423 = vld [vmem:[%s1 + $0x1d0] sm:$0xf]
      %v424 = vld [vmem:[%s1 + $0x1d4] sm:$0xf]
      %v425 = vld [vmem:[%s1 + $0x1d8] sm:$0xf]
      %v426 = vld [vmem:[%s1 + $0x1dc] sm:$0xf]
      %v427 = vld [vmem:[%s1 + $0x1e0] sm:$0xf]
      %v428 = vld [vmem:[%s1 + $0x1e4] sm:$0xf]
      %v429 = vld [vmem:[%s1 + $0x1e8] sm:$0xf]
      %v430 = vld [vmem:[%s1 + $0x1ec] sm:$0xf]
      %v431 = vld [vmem:[%s1 + $0x1f0] sm:$0xf]
      %v432 = vld [vmem:[%s1 + $0x1f4] sm:$0xf]
      %v433 = vld [vmem:[%s1 + $0x1f8] sm:$0xf]
      %v434 = vld [vmem:[%s1 + $0x1fc] sm:$0xf]
      %v435 = vld [vmem:[%s1 + $0x200] sm:$0xf]
      %v436 = vld [vmem:[%s1 + $0x204] sm:$0xf]
      %v437 = vld [vmem:[%s1 + $0x208] sm:$0xf]
      %v438 = vld [vmem:[%s1 + $0x20c] sm:$0xf]
      %v439 = vld [vmem:[%s1 + $0x210] sm:$0xf]
      %v440 = vld [vmem:[%s1 + $0x214] sm:$0xf]
      %v441 = vld [vmem:[%s1 + $0x218] sm:$0xf]
      %v442 = vld [vmem:[%s1 + $0x21c] sm:$0xf]
      %v443 = vld [vmem:[%s1 + $0x220] sm:$0xf]
      %v444 = vld [vmem:[%s1 + $0x224] sm:$0xf]
      %v445 = vld [vmem:[%s1 + $0x228] sm:$0xf]
      %v446 = vld [vmem:[%s1 + $0x22c] sm:$0xf]
      %v447 = vld [vmem:[%s1 + $0x230] sm:$0xf]
      %v448 = vld [vmem:[%s1 + $0x234] sm:$0xf]
      %v449 = vld [vmem:[%s1 + $0x238] sm:$0xf]
      %v450 = vld [vmem:[%s1 + $0x23c] sm:$0xf]
      %v451 = vld [vmem:[%s2] sm:$0x1]
      %v453 = vlaneseq
      %v454 = vshrl.u32 %v453, 7
      %v455 = vsub.s32 0, %v454
      %v456 = vrot.slane %v451, %v455
      %v602 = vunpack.c.l.b16 %v307
      %v603 = vunpack.c.l.b16 %v308
      %v604 = vunpack.c.l.b16 %v309
      %v605 = vunpack.c.l.b16 %v310
      %v606 = vunpack.c.l.b16 %v311
      %v607 = vunpack.c.l.b16 %v312
      %v608 = vunpack.c.l.b16 %v313
      %v609 = vunpack.c.l.b16 %v314
      %v610 = vunpack.c.l.b16 %v315
      %v611 = vunpack.c.l.b16 %v316
      %v612 = vunpack.c.l.b16 %v317
      %v613 = vunpack.c.l.b16 %v318
      %v614 = vunpack.c.l.b16 %v319
      %v615 = vunpack.c.l.b16 %v320
      %v616 = vunpack.c.l.b16 %v321
      %v617 = vunpack.c.l.b16 %v322
      %v618 = vunpack.c.l.b16 %v323
      %v619 = vunpack.c.l.b16 %v324
      %v620 = vunpack.c.l.b16 %v325
      %v621 = vunpack.c.l.b16 %v326
      %v622 = vunpack.c.l.b16 %v327
      %v623 = vunpack.c.l.b16 %v328
      %v624 = vunpack.c.l.b16 %v329
      %v625 = vunpack.c.l.b16 %v330
      %v626 = vunpack.c.l.b16 %v331
      %v627 = vunpack.c.l.b16 %v332
      %v628 = vunpack.c.l.b16 %v333
      %v629 = vunpack.c.l.b16 %v334
      %v630 = vunpack.c.l.b16 %v335
      %v631 = vunpack.c.l.b16 %v336
      %v632 = vunpack.c.l.b16 %v337
      %v633 = vunpack.c.l.b16 %v338
      %v634 = vunpack.c.l.b16 %v339
      %v635 = vunpack.c.l.b16 %v340
      %v636 = vunpack.c.l.b16 %v341
      %v637 = vunpack.c.l.b16 %v342
      %v638 = vunpack.c.l.b16 %v343
      %v639 = vunpack.c.l.b16 %v344
      %v640 = vunpack.c.l.b16 %v345
      %v641 = vunpack.c.l.b16 %v346
      %v642 = vunpack.c.l.b16 %v347
      %v643 = vunpack.c.l.b16 %v348
      %v644 = vunpack.c.l.b16 %v349
      %v645 = vunpack.c.l.b16 %v350
      %v646 = vunpack.c.l.b16 %v351
      %v647 = vunpack.c.l.b16 %v352
      %v648 = vunpack.c.l.b16 %v353
      %v649 = vunpack.c.l.b16 %v354
      %v650 = vunpack.c.l.b16 %v355
      %v651 = vunpack.c.l.b16 %v356
      %v652 = vunpack.c.l.b16 %v357
      %v653 = vunpack.c.l.b16 %v358
      %v654 = vunpack.c.l.b16 %v359
      %v655 = vunpack.c.l.b16 %v360
      %v656 = vunpack.c.l.b16 %v361
      %v657 = vunpack.c.l.b16 %v362
      %v658 = vunpack.c.l.b16 %v363
      %v659 = vunpack.c.l.b16 %v364
      %v660 = vunpack.c.l.b16 %v365
      %v661 = vunpack.c.l.b16 %v366
      %v662 = vunpack.c.l.b16 %v367
      %v663 = vunpack.c.l.b16 %v368
      %v664 = vunpack.c.l.b16 %v369
      %v665 = vunpack.c.l.b16 %v370
      %v666 = vunpack.c.l.b16 %v371
      %v667 = vunpack.c.l.b16 %v372
      %v668 = vunpack.c.l.b16 %v373
      %v669 = vunpack.c.l.b16 %v374
      %v670 = vunpack.c.l.b16 %v375
      %v671 = vunpack.c.l.b16 %v376
      %v672 = vunpack.c.l.b16 %v377
      %v673 = vunpack.c.l.b16 %v378
      %v674 = vunpack.c.l.b16 %v379
      %v675 = vunpack.c.l.b16 %v380
      %v676 = vunpack.c.l.b16 %v381
      %v677 = vunpack.c.l.b16 %v382
      %v678 = vunpack.c.l.b16 %v383
      %v679 = vunpack.c.l.b16 %v384
      %v680 = vunpack.c.l.b16 %v385
      %v681 = vunpack.c.l.b16 %v386
      %v682 = vunpack.c.l.b16 %v387
      %v683 = vunpack.c.l.b16 %v388
      %v684 = vunpack.c.l.b16 %v389
      %v685 = vunpack.c.l.b16 %v390
      %v686 = vunpack.c.l.b16 %v391
      %v687 = vunpack.c.l.b16 %v392
      %v688 = vunpack.c.l.b16 %v393
      %v689 = vunpack.c.l.b16 %v394
      %v690 = vunpack.c.l.b16 %v395
      %v691 = vunpack.c.l.b16 %v396
      %v692 = vunpack.c.l.b16 %v397
      %v693 = vunpack.c.l.b16 %v398
      %v694 = vunpack.c.l.b16 %v399
      %v695 = vunpack.c.l.b16 %v400
      %v696 = vunpack.c.l.b16 %v401
      %v697 = vunpack.c.l.b16 %v402
      %v698 = vunpack.c.l.b16 %v403
      %v699 = vunpack.c.l.b16 %v404
      %v700 = vunpack.c.l.b16 %v405
      %v701 = vunpack.c.l.b16 %v406
      %v702 = vunpack.c.l.b16 %v407
      %v703 = vunpack.c.l.b16 %v408
      %v704 = vunpack.c.l.b16 %v409
      %v705 = vunpack.c.l.b16 %v410
      %v706 = vunpack.c.l.b16 %v411
      %v707 = vunpack.c.l.b16 %v412
      %v708 = vunpack.c.l.b16 %v413
      %v709 = vunpack.c.l.b16 %v414
      %v710 = vunpack.c.l.b16 %v415
      %v711 = vunpack.c.l.b16 %v416
      %v712 = vunpack.c.l.b16 %v417
      %v713 = vunpack.c.l.b16 %v418
      %v714 = vunpack.c.l.b16 %v419
      %v715 = vunpack.c.l.b16 %v420
      %v716 = vunpack.c.l.b16 %v421
      %v717 = vunpack.c.l.b16 %v422
      %v718 = vunpack.c.l.b16 %v423
      %v719 = vunpack.c.l.b16 %v424
      %v720 = vunpack.c.l.b16 %v425
      %v721 = vunpack.c.l.b16 %v426
      %v722 = vunpack.c.l.b16 %v427
      %v723 = vunpack.c.l.b16 %v428
      %v724 = vunpack.c.l.b16 %v429
      %v725 = vunpack.c.l.b16 %v430
      %v726 = vunpack.c.l.b16 %v431
      %v727 = vunpack.c.l.b16 %v432
      %v728 = vunpack.c.l.b16 %v433
      %v729 = vunpack.c.l.b16 %v434
      %v730 = vunpack.c.l.b16 %v435
      %v731 = vunpack.c.l.b16 %v436
      %v732 = vunpack.c.l.b16 %v437
      %v733 = vunpack.c.l.b16 %v438
      %v734 = vunpack.c.l.b16 %v439
      %v735 = vunpack.c.l.b16 %v440
      %v736 = vunpack.c.l.b16 %v441
      %v737 = vunpack.c.l.b16 %v442
      %v738 = vunpack.c.l.b16 %v443
      %v739 = vunpack.c.l.b16 %v444
      %v740 = vunpack.c.l.b16 %v445
      %v741 = vunpack.c.l.b16 %v446
      %v742 = vunpack.c.l.b16 %v447
      %v743 = vunpack.c.l.b16 %v448
      %v744 = vunpack.c.l.b16 %v449
      %v745 = vunpack.c.l.b16 %v450
      %v746 = vpack.c.b16 %v603, %v602
      %v747 = vpack.c.b16 %v605, %v604
      %v748 = vpack.c.b16 %v607, %v606
      %v749 = vpack.c.b16 %v609, %v608
      %v750 = vpack.c.b16 %v611, %v610
      %v751 = vpack.c.b16 %v613, %v612
      %v752 = vpack.c.b16 %v615, %v614
      %v753 = vpack.c.b16 %v617, %v616
      %v754 = vpack.c.b16 %v619, %v618
      %v755 = vpack.c.b16 %v621, %v620
      %v756 = vpack.c.b16 %v623, %v622
      %v757 = vpack.c.b16 %v625, %v624
      %v758 = vpack.c.b16 %v627, %v626
      %v759 = vpack.c.b16 %v629, %v628
      %v760 = vpack.c.b16 %v631, %v630
      %v761 = vpack.c.b16 %v633, %v632
      %v762 = vpack.c.b16 %v635, %v634
      %v763 = vpack.c.b16 %v637, %v636
      %v764 = vpack.c.b16 %v639, %v638
      %v765 = vpack.c.b16 %v641, %v640
      %v766 = vpack.c.b16 %v643, %v642
      %v767 = vpack.c.b16 %v645, %v644
      %v768 = vpack.c.b16 %v647, %v646
      %v769 = vpack.c.b16 %v649, %v648
      %v770 = vpack.c.b16 %v651, %v650
      %v771 = vpack.c.b16 %v653, %v652
      %v772 = vpack.c.b16 %v655, %v654
      %v773 = vpack.c.b16 %v657, %v656
      %v774 = vpack.c.b16 %v659, %v658
      %v775 = vpack.c.b16 %v661, %v660
      %v776 = vpack.c.b16 %v663, %v662
      %v777 = vpack.c.b16 %v665, %v664
      %v778 = vpack.c.b16 %v667, %v666
      %v779 = vpack.c.b16 %v669, %v668
      %v780 = vpack.c.b16 %v671, %v670
      %v781 = vpack.c.b16 %v673, %v672
      %v782 = vpack.c.b16 %v675, %v674
      %v783 = vpack.c.b16 %v677, %v676
      %v784 = vpack.c.b16 %v679, %v678
      %v785 = vpack.c.b16 %v681, %v680
      %v786 = vpack.c.b16 %v683, %v682
      %v787 = vpack.c.b16 %v685, %v684
      %v788 = vpack.c.b16 %v687, %v686
      %v789 = vpack.c.b16 %v689, %v688
      %v790 = vpack.c.b16 %v691, %v690
      %v791 = vpack.c.b16 %v693, %v692
      %v792 = vpack.c.b16 %v695, %v694
      %v793 = vpack.c.b16 %v697, %v696
      %v794 = vpack.c.b16 %v699, %v698
      %v795 = vpack.c.b16 %v701, %v700
      %v796 = vpack.c.b16 %v703, %v702
      %v797 = vpack.c.b16 %v705, %v704
      %v798 = vpack.c.b16 %v707, %v706
      %v799 = vpack.c.b16 %v709, %v708
      %v800 = vpack.c.b16 %v711, %v710
      %v801 = vpack.c.b16 %v713, %v712
      %v802 = vpack.c.b16 %v715, %v714
      %v803 = vpack.c.b16 %v717, %v716
      %v804 = vpack.c.b16 %v719, %v718
      %v805 = vpack.c.b16 %v721, %v720
      %v806 = vpack.c.b16 %v723, %v722
      %v807 = vpack.c.b16 %v725, %v724
      %v808 = vpack.c.b16 %v727, %v726
      %v809 = vpack.c.b16 %v729, %v728
      %v810 = vpack.c.b16 %v731, %v730
      %v811 = vpack.c.b16 %v733, %v732
      %v812 = vpack.c.b16 %v735, %v734
      %v813 = vpack.c.b16 %v737, %v736
      %v814 = vpack.c.b16 %v739, %v738
      %v815 = vpack.c.b16 %v741, %v740
      %v816 = vpack.c.b16 %v743, %v742
      %v817 = vpack.c.b16 %v745, %v744
      %890 = vmatprep.subr.bf16.mxu0 0
      %891 = vmatpush1.bf16.msra.mxu0 %v746
      %892 = vmatprep.subr.bf16.mxu0 0
      %893 = vmatpush1.bf16.msra.mxu0 %v747
      %894 = vmatprep.subr.bf16.mxu0 0
      %895 = vmatpush1.bf16.msra.mxu0 %v748
      %896 = vmatprep.subr.bf16.mxu0 0
      %897 = vmatpush1.bf16.msra.mxu0 %v749
      %898 = vmatprep.subr.bf16.mxu0 0
      %899 = vmatpush1.bf16.msra.mxu0 %v750
      %900 = vmatprep.subr.bf16.mxu0 0
      %901 = vmatpush1.bf16.msra.mxu0 %v751
      %902 = vmatprep.subr.bf16.mxu0 0
      %903 = vmatpush1.bf16.msra.mxu0 %v752
      %904 = vmatprep.subr.bf16.mxu0 0
      %905 = vmatpush1.bf16.msra.mxu0 %v753
      %906 = vmatprep.subr.bf16.mxu0 0
      %907 = vmatpush1.bf16.msra.mxu0 %v754
      %908 = vmatprep.subr.bf16.mxu0 0
      %909 = vmatpush1.bf16.msra.mxu0 %v755
      %910 = vmatprep.subr.bf16.mxu0 0
      %911 = vmatpush1.bf16.msra.mxu0 %v756
      %912 = vmatprep.subr.bf16.mxu0 0
      %913 = vmatpush1.bf16.msra.mxu0 %v757
      %914 = vmatprep.subr.bf16.mxu0 0
      %915 = vmatpush1.bf16.msra.mxu0 %v758
      %916 = vmatprep.subr.bf16.mxu0 0
      %917 = vmatpush1.bf16.msra.mxu0 %v759
      %918 = vmatprep.subr.bf16.mxu0 0
      %919 = vmatpush1.bf16.msra.mxu0 %v760
      %920 = vmatprep.subr.bf16.mxu0 0
      %921 = vmatpush1.bf16.msra.mxu0 %v761
      %922 = vmatprep.mubr.bf16.mxu0 %v299
      %923 = vmatmul.mubr.bf16.gmra.mrb[0].mxu0 %v298
      %v924 = vpop.f32.mrb[0].mxu0
      %v925 = vadd.f32 %v456, %v924
      %v926 = vpop.f32.mrb[0].mxu0
      %v927 = vpop.f32.mrb[0].mxu0
      %v928 = vadd.f32 %v456, %v927
      %v929 = vpop.f32.mrb[0].mxu0
      %930 = vdwg.mxu0
      %931 = vmatprep.subr.bf16.mxu0 0
      %932 = vmatpush1.bf16.msra.mxu0 %v762
      %933 = vmatprep.subr.bf16.mxu0 0
      %934 = vmatpush1.bf16.msra.mxu0 %v763
      %935 = vmatprep.subr.bf16.mxu0 0
      %936 = vmatpush1.bf16.msra.mxu0 %v764
      %937 = vmatprep.subr.bf16.mxu0 0
      %938 = vmatpush1.bf16.msra.mxu0 %v765
      %939 = vmatprep.subr.bf16.mxu0 0
      %940 = vmatpush1.bf16.msra.mxu0 %v766
      %941 = vmatprep.subr.bf16.mxu0 0
      %942 = vmatpush1.bf16.msra.mxu0 %v767
      %943 = vmatprep.subr.bf16.mxu0 0
      %944 = vmatpush1.bf16.msra.mxu0 %v768
      %945 = vmatprep.subr.bf16.mxu0 0
      %946 = vmatpush1.bf16.msra.mxu0 %v769
      %947 = vmatprep.subr.bf16.mxu0 0
      %948 = vmatpush1.bf16.msra.mxu0 %v770
      %949 = vmatprep.subr.bf16.mxu0 0
      %950 = vmatpush1.bf16.msra.mxu0 %v771
      %951 = vmatprep.subr.bf16.mxu0 0
      %952 = vmatpush1.bf16.msra.mxu0 %v772
      %953 = vmatprep.subr.bf16.mxu0 0
      %954 = vmatpush1.bf16.msra.mxu0 %v773
      %955 = vmatprep.subr.bf16.mxu0 0
      %956 = vmatpush1.bf16.msra.mxu0 %v774
      %957 = vmatprep.subr.bf16.mxu0 0
      %958 = vmatpush1.bf16.msra.mxu0 %v775
      %959 = vmatprep.subr.bf16.mxu0 0
      %960 = vmatpush1.bf16.msra.mxu0 %v776
      %961 = vmatprep.subr.bf16.mxu0 0
      %962 = vmatpush1.bf16.msra.mxu0 %v777
      %963 = vmatprep.mubr.bf16.mxu0 %v301
      %964 = vmatmul.mubr.bf16.gmra.mrb[0].mxu0 %v300
      %v965 = vpop.f32.mrb[0].mxu0
      %v966 = vadd.f32 %v925, %v965
      %v967 = vpop.f32.mrb[0].mxu0
      %v968 = vpop.f32.mrb[0].mxu0
      %v969 = vadd.f32 %v928, %v968
      %v970 = vpop.f32.mrb[0].mxu0
      %971 = vdwg.mxu0
      %972 = vmatprep.subr.bf16.mxu0 0
      %973 = vmatpush1.bf16.msra.mxu0 %v778
      %974 = vmatprep.subr.bf16.mxu0 0
      %975 = vmatpush1.bf16.msra.mxu0 %v779
      %976 = vmatprep.subr.bf16.mxu0 0
      %977 = vmatpush1.bf16.msra.mxu0 %v780
      %978 = vmatprep.subr.bf16.mxu0 0
      %979 = vmatpush1.bf16.msra.mxu0 %v781
      %980 = vmatprep.subr.bf16.mxu0 0
      %981 = vmatpush1.bf16.msra.mxu0 %v782
      %982 = vmatprep.subr.bf16.mxu0 0
      %983 = vmatpush1.bf16.msra.mxu0 %v783
      %984 = vmatprep.subr.bf16.mxu0 0
      %985 = vmatpush1.bf16.msra.mxu0 %v784
      %986 = vmatprep.subr.bf16.mxu0 0
      %987 = vmatpush1.bf16.msra.mxu0 %v785
      %988 = vmatprep.subr.bf16.mxu0 0
      %989 = vmatpush1.bf16.msra.mxu0 %v786
      %990 = vmatprep.subr.bf16.mxu0 0
      %991 = vmatpush1.bf16.msra.mxu0 %v787
      %992 = vmatprep.subr.bf16.mxu0 0
      %993 = vmatpush1.bf16.msra.mxu0 %v788
      %994 = vmatprep.subr.bf16.mxu0 0
      %995 = vmatpush1.bf16.msra.mxu0 %v789
      %996 = vmatprep.subr.bf16.mxu0 0
      %997 = vmatpush1.bf16.msra.mxu0 %v790
      %998 = vmatprep.subr.bf16.mxu0 0
      %999 = vmatpush1.bf16.msra.mxu0 %v791
      %1000 = vmatprep.subr.bf16.mxu0 0
      %1001 = vmatpush1.bf16.msra.mxu0 %v792
      %1002 = vmatprep.subr.bf16.mxu0 0
      %1003 = vmatpush1.bf16.msra.mxu0 %v793
      %1004 = vmatprep.mubr.bf16.mxu0 %v303
      %1005 = vmatmul.mubr.bf16.gmra.mrb[0].mxu0 %v302
      %v1006 = vpop.f32.mrb[0].mxu0
      %v1007 = vadd.f32 %v966, %v1006
      %v1008 = vpop.f32.mrb[0].mxu0
      %v1009 = vpop.f32.mrb[0].mxu0
      %v1010 = vadd.f32 %v969, %v1009
      %v1011 = vpop.f32.mrb[0].mxu0
      %1012 = vdwg.mxu0
      %1013 = vmatprep.subr.bf16.mxu0 0
      %1014 = vmatpush1.bf16.msra.mxu0 %v794
      %1015 = vmatprep.subr.bf16.mxu0 0
      %1016 = vmatpush1.bf16.msra.mxu0 %v795
      %1017 = vmatprep.subr.bf16.mxu0 0
      %1018 = vmatpush1.bf16.msra.mxu0 %v796
      %1019 = vmatprep.subr.bf16.mxu0 0
      %1020 = vmatpush1.bf16.msra.mxu0 %v797
      %1021 = vmatprep.subr.bf16.mxu0 0
      %1022 = vmatpush1.bf16.msra.mxu0 %v798
      %1023 = vmatprep.subr.bf16.mxu0 0
      %1024 = vmatpush1.bf16.msra.mxu0 %v799
      %1025 = vmatprep.subr.bf16.mxu0 0
      %1026 = vmatpush1.bf16.msra.mxu0 %v800
      %1027 = vmatprep.subr.bf16.mxu0 0
      %1028 = vmatpush1.bf16.msra.mxu0 %v801
      %1029 = vmatprep.subr.bf16.mxu0 0
      %1030 = vmatpush1.bf16.msra.mxu0 %v802
      %1031 = vmatprep.subr.bf16.mxu0 0
      %1032 = vmatpush1.bf16.msra.mxu0 %v803
      %1033 = vmatprep.subr.bf16.mxu0 0
      %1034 = vmatpush1.bf16.msra.mxu0 %v804
      %1035 = vmatprep.subr.bf16.mxu0 0
      %1036 = vmatpush1.bf16.msra.mxu0 %v805
      %1037 = vmatprep.subr.bf16.mxu0 0
      %1038 = vmatpush1.bf16.msra.mxu0 %v806
      %1039 = vmatprep.subr.bf16.mxu0 0
      %1040 = vmatpush1.bf16.msra.mxu0 %v807
      %1041 = vmatprep.subr.bf16.mxu0 0
      %1042 = vmatpush1.bf16.msra.mxu0 %v808
      %1043 = vmatprep.subr.bf16.mxu0 0
      %1044 = vmatpush1.bf16.msra.mxu0 %v809
      %1045 = vmatprep.mubr.bf16.mxu0 %v305
      %1046 = vmatmul.mubr.bf16.gmra.mrb[0].mxu0 %v304
      %v1047 = vpop.f32.mrb[0].mxu0
      %v1048 = vadd.f32 %v1007, %v1047
      %v1049 = vpop.f32.mrb[0].mxu0
      %v1050 = vpop.f32.mrb[0].mxu0
      %v1051 = vadd.f32 %v1010, %v1050
      %v1052 = vpop.f32.mrb[0].mxu0
      %1053 = vdwg.mxu0
      %1054 = vmatprep.subr.bf16.mxu0 0
      %1055 = vmatpush1.bf16.msra.mxu0 %v810
      %1056 = vmatprep.subr.bf16.mxu0 0
      %1057 = vmatpush1.bf16.msra.mxu0 %v811
      %1058 = vmatprep.subr.bf16.mxu0 0
      %1059 = vmatpush1.bf16.msra.mxu0 %v812
      %1060 = vmatprep.subr.bf16.mxu0 0
      %1061 = vmatpush1.bf16.msra.mxu0 %v813
      %1062 = vmatprep.subr.bf16.mxu0 0
      %1063 = vmatpush1.bf16.msra.mxu0 %v814
      %1064 = vmatprep.subr.bf16.mxu0 0
      %1065 = vmatpush1.bf16.msra.mxu0 %v815
      %1066 = vmatprep.subr.bf16.mxu0 0
      %1067 = vmatpush1.bf16.msra.mxu0 %v816
      %1068 = vmatprep.subr.bf16.mxu0 0
      %1069 = vmatpush1.bf16.msra.mxu0 %v817
      %1070 = vmatprep.subr.bf16.mxu0 0
      %1071 = vmatpush1.bf16.msra.mxu0 0
      %1072 = vmatprep.subr.bf16.mxu0 0
      %1073 = vmatpush1.bf16.msra.mxu0 0
      %1074 = vmatprep.subr.bf16.mxu0 0
      %1075 = vmatpush1.bf16.msra.mxu0 0
      %1076 = vmatprep.subr.bf16.mxu0 0
      %1077 = vmatpush1.bf16.msra.mxu0 0
      %1078 = vmatprep.subr.bf16.mxu0 0
      %1079 = vmatpush1.bf16.msra.mxu0 0
      %1080 = vmatprep.subr.bf16.mxu0 0
      %1081 = vmatpush1.bf16.msra.mxu0 0
      %1082 = vmatprep.subr.bf16.mxu0 0
      %1083 = vmatpush1.bf16.msra.mxu0 0
      %1084 = vmatprep.subr.bf16.mxu0 0
      %1085 = vmatpush1.bf16.msra.mxu0 0
      %1086 = vmatprep.mubr.bf16.mxu0 0
      %1087 = vmatmul.mubr.bf16.gmra.mrb[0].mxu0 %v306
      %v1088 = vpop.f32.mrb[0].mxu0
      %v1089 = vadd.f32 %v1048, %v1088
      %v1090 = vpop.f32.mrb[0].mxu0
      %v1091 = vpop.f32.mrb[0].mxu0
      %v1092 = vadd.f32 %v1051, %v1091
      %v1093 = vpop.f32.mrb[0].mxu0
      %1094 = vdwg.mxu0
      %v1097 = vcombine.high %v1089, %v1089
      %v1098 = vcombine.high %v1092, %v1092
      %1101 = vst [vmem:[%s170] sm:$0xf] %v1089
      %1102 = vst [vmem:[%s170 + $0x4] sm:$0xf] %v1097
      %1103 = vst [vmem:[%s170 + $0x8] sm:$0xf] %v1092
      %1104 = vst [vmem:[%s170 + $0xc] sm:$0xf] %v1098
      %p1105 = scmp.lt.s32.totalorder %s14, 1
      %s1106 = scalar_select %p1105, %s14, 1
      %s1107 = smul.addr %s1106, 4
      %s1108 = smul.addr %s1107, 4
      %s1109 = scalar_lea.vmem %s3, %s1108
      // Predicated region
      $region33: #{detector_backbone_with_fpn.15} parent=31 // pred_check
        %p1110 = pneg %p100
      $region34: #{detector_backbone_with_fpn.15} parent=31 // pred_check_branch
        %1112 = sbr.rel (%p1110) target = $region36
      $region35: #{detector_backbone_with_fpn.15} parent=31 // pred_region
        _
      $region36: #{detector_backbone_with_fpn.15} parent=31 // pred_fallthru
        _
    $region32: #{detector_backbone_with_fpn.15} parent=5 // pred_fallthru
      _
    %p1113 = scmp.le.s32.totalorder 2, %s9
    // Predicated region
    $region37: #{detector_backbone_with_fpn.15} parent=5 // pred_check
      %p1114 = pneg %p1113
    $region38: #{detector_backbone_with_fpn.15} parent=5 // pred_check_branch
      %1116 = sbr.rel (%p1114) target = $region40
    $region39: #{detector_backbone_with_fpn.15} parent=5 // pred_region
      %s1117 = ssub.s32 %s9, 2
      // Predicated region
      $region41: #{detector_backbone_with_fpn.15} parent=39 // pred_check
        %p1118 = pneg %p106
      $region42: #{detector_backbone_with_fpn.15} parent=39 // pred_check_branch
        %1120 = sbr.rel (%p1118) target = $region44
      $region43: #{detector_backbone_with_fpn.15} parent=39 // pred_region
        %p1121 = scmp.lt.s32.totalorder %s15, 1
        %s1122 = scalar_select %p1121, %s15, 1
        %s1123 = smul.addr %s1122, 4
        %s1124 = smul.addr %s1123, 4
        %s1125 = scalar_lea.vmem %s3, %s1124
      $region44: #{detector_backbone_with_fpn.15} parent=39 // pred_fallthru
        _
    $region40: #{detector_backbone_with_fpn.15} parent=5 // pred_fallthru
      _
  $region6: #{detector_backbone_with_fpn.15} parent=0 // loop_footer
    %s13 = sadd.s32 1, %s9
  $region7: #{detector_backbone_with_fpn.15} parent=0 // loop_footer_branch
    %8 = sbr.rel target = $region3
  $region8: #{detector_backbone_with_fpn.15} parent=0 // loop_exit
    _

// kernel: detector_backbone_with_fpn.13
$region0: #{detector_backbone_with_fpn.13}
  #allocation0 [shape = 'u32[]', space=smem, size = 0x4, offset = 0x4, fixed_abs, tag = 'smem constant byte address 0x4 - core index']
  #allocation1 [shape = 'u32[144,128]{1,0:T(1,128)}', space=vmem, size = 0x12000, scoped, tag = 'internal scratch']
  %s0 = inlined_call_operand.vmem [shape: f32[2,4,4,128], index: 0, kind: input, shape index: {}]
  %s1 = inlined_call_operand.vmem [shape: bf16[1152,128], index: 1, kind: input, shape index: {}]
  %s2 = inlined_call_operand.vmem [shape: f32[1,128], index: 2, kind: input, shape index: {}]
  %s3 = inlined_call_operand.vmem [shape: f32[2,2,2,128], index: 3, kind: output, shape index: {}]
  %s4 = sld [smem:[#allocation0]]
  $region45: #{detector_backbone_with_fpn.13} parent=0
    _
  %s6 = ssub.s32 1, %s4
  %s7 = scalar_select 0, %s6, %s4
  loop: start=0, step=1, limit=4
  $region2: #{detector_backbone_with_fpn.13} parent=0 // loop_pre_header
    _
  $region3: #{detector_backbone_with_fpn.13} parent=0 // loop_header
    %s9 = sphi 0, %s13
    %p10 = scmp.ge.s32.totalorder %s9, 4
    %s19 = sphi 0, %s21
    %s22 = sphi 0, %s19
    %s23 = sphi 0, %s22
    %s39 = sphi 0, %s23
    %s43 = sphi 0, %s43
    %s45 = sphi 0, %s43
    %s46 = sphi 0, %s45
    %s60 = sphi 0, %s46
    %s64 = sphi 0, %s64
    %s66 = sphi 0, %s64
    %s67 = sphi 0, %s66
    %s81 = sphi 0, %s67
    %s87 = sphi 0, %s89
    %s90 = sphi 0, %s87
    %s91 = sphi 0, %s90
    %s107 = sphi 0, %s91
  $region4: #{detector_backbone_with_fpn.13} parent=0 // loop_header_branch
    %12 = sbr.rel (%p10) target = $region8
  $region5: #{detector_backbone_with_fpn.13} parent=0 // loop_body
    %s14 = ssub.s32 %s9, 1
    %s15 = ssub.s32 %s9, 2
    %s16 = sadd.s32 %s9, 1
    %s17 = ssub.s32 %s9, %s16
    %p18 = scmp.eq.s32.totalorder %s17, 0
    %s20 = sadd.s32 %s19, 1
    %s21 = scalar_select %p18, %s19, %s20
    %p24 = pneg %p18
    %p25 = scmp.eq.s32.totalorder %s9, 1
    %p26 = por %p24, %p25
    %p27 = scmp.ne.s32.totalorder %s19, %s22
    %p28 = scmp.eq.s32.totalorder %s9, 0
    %p29 = por %p27, %p28
    %p30 = scmp.ne.s32.totalorder %s19, %s22
    %p31 = scmp.eq.s32.totalorder %s14, 1
    %p32 = por %p30, %p31
    %p33 = scmp.ne.s32.totalorder %s22, %s23
    %p34 = scmp.eq.s32.totalorder %s14, 0
    %p35 = por %p33, %p34
    %p36 = scmp.ne.s32.totalorder %s22, %s23
    %p37 = scmp.eq.s32.totalorder %s15, 1
    %p38 = por %p36, %p37
    %p40 = scmp.ne.s32.totalorder %s23, %s39
    %p41 = scmp.eq.s32.totalorder %s15, 0
    %p42 = por %p40, %p41
    %s44 = sadd.s32 %s43, 1
    %p47 = scmp.eq.s32.totalorder %s9, 1
    %p48 = scmp.ne.s32.totalorder %s43, %s45
    %p49 = scmp.eq.s32.totalorder %s9, 0
    %p50 = por %p48, %p49
    %p51 = scmp.ne.s32.totalorder %s43, %s45
    %p52 = scmp.eq.s32.totalorder %s14, 1
    %p53 = por %p51, %p52
    %p54 = scmp.ne.s32.totalorder %s45, %s46
    %p55 = scmp.eq.s32.totalorder %s14, 0
    %p56 = por %p54, %p55
    %p57 = scmp.ne.s32.totalorder %s45, %s46
    %p58 = scmp.eq.s32.totalorder %s15, 1
    %p59 = por %p57, %p58
    %p61 = scmp.ne.s32.totalorder %s46, %s60
    %p62 = scmp.eq.s32.totalorder %s15, 0
    %p63 = por %p61, %p62
    %s65 = sadd.s32 %s64, 1
    %p68 = scmp.eq.s32.totalorder %s9, 1
    %p69 = scmp.ne.s32.totalorder %s64, %s66
    %p70 = scmp.eq.s32.totalorder %s9, 0
    %p71 = por %p69, %p70
    %p72 = scmp.ne.s32.totalorder %s64, %s66
    %p73 = scmp.eq.s32.totalorder %s14, 1
    %p74 = por %p72, %p73
    %p75 = scmp.ne.s32.totalorder %s66, %s67
    %p76 = scmp.eq.s32.totalorder %s14, 0
    %p77 = por %p75, %p76
    %p78 = scmp.ne.s32.totalorder %s66, %s67
    %p79 = scmp.eq.s32.totalorder %s15, 1
    %p80 = por %p78, %p79
    %p82 = scmp.ne.s32.totalorder %s67, %s81
    %p83 = scmp.eq.s32.totalorder %s15, 0
    %p84 = por %p82, %p83
    %s85 = ssub.s32 %s9, %s16
    %p86 = scmp.eq.s32.totalorder %s85, 0
    %s88 = sadd.s32 %s87, 1
    %s89 = scalar_select %p86, %s87, %s88
    %p92 = pneg %p86
    %p93 = scmp.eq.s32.totalorder %s9, 1
    %p94 = por %p92, %p93
    %p95 = scmp.ne.s32.totalorder %s87, %s90
    %p96 = scmp.eq.s32.totalorder %s9, 0
    %p97 = por %p95, %p96
    %p98 = scmp.ne.s32.totalorder %s87, %s90
    %p99 = scmp.eq.s32.totalorder %s14, 1
    %p100 = por %p98, %p99
    %p101 = scmp.ne.s32.totalorder %s90, %s91
    %p102 = scmp.eq.s32.totalorder %s14, 0
    %p103 = por %p101, %p102
    %p104 = scmp.ne.s32.totalorder %s90, %s91
    %p105 = scmp.eq.s32.totalorder %s15, 1
    %p106 = por %p104, %p105
    %p108 = scmp.ne.s32.totalorder %s91, %s107
    %p109 = scmp.eq.s32.totalorder %s15, 0
    %p110 = por %p108, %p109
    %p111 = scmp.le.s32.totalorder 1, %s9
    %p112 = scmp.lt.s32.totalorder %s9, 3
    %p113 = pnand %p111, %p112
    %p114 = pneg %p113
    // Predicated region
    $region9: #{detector_backbone_with_fpn.13} parent=5 // pred_check
      _
    $region10: #{detector_backbone_with_fpn.13} parent=5 // pred_check_branch
      %116 = sbr.rel (%p113) target = $region12
    $region11: #{detector_backbone_with_fpn.13} parent=5 // pred_region
      %s117 = ssub.s32 %s9, 1
      // Predicated region
      $region13: #{detector_backbone_with_fpn.13} parent=11 // pred_check
        %p118 = pneg %p56
      $region14: #{detector_backbone_with_fpn.13} parent=11 // pred_check_branch
        %120 = sbr.rel (%p118) target = $region16
      $region15: #{detector_backbone_with_fpn.13} parent=11 // pred_region
        _
      $region16: #{detector_backbone_with_fpn.13} parent=11 // pred_fallthru
        _
      // Predicated region
      $region17: #{detector_backbone_with_fpn.13} parent=11 // pred_check
        %p121 = pneg %p77
      $region18: #{detector_backbone_with_fpn.13} parent=11 // pred_check_branch
        %123 = sbr.rel (%p121) target = $region20
      $region19: #{detector_backbone_with_fpn.13} parent=11 // pred_region
        _
      $region20: #{detector_backbone_with_fpn.13} parent=11 // pred_fallthru
        _
    $region12: #{detector_backbone_with_fpn.13} parent=5 // pred_fallthru
      _
    %p124 = scmp.lt.s32.totalorder %s9, 2
    // Predicated region
    $region21: #{detector_backbone_with_fpn.13} parent=5 // pred_check
      %p125 = pneg %p124
    $region22: #{detector_backbone_with_fpn.13} parent=5 // pred_check_branch
      %127 = sbr.rel (%p125) target = $region24
    $region23: #{detector_backbone_with_fpn.13} parent=5 // pred_region
      // Predicated region
      $region25: #{detector_backbone_with_fpn.13} parent=23 // pred_check
        %p128 = pneg %p29
      $region26: #{detector_backbone_with_fpn.13} parent=23 // pred_check_branch
        %130 = sbr.rel (%p128) target = $region28
      $region27: #{detector_backbone_with_fpn.13} parent=23 // pred_region
        %p131 = scmp.lt.s32.totalorder %s9, 1
        %s132 = scalar_select %p131, %s9, 1
        %s133 = smul.addr %s132, 4
        %s134 = smul.addr %s133, 4
        %s135 = scalar_lea.vmem %s0, %s134
      $region28: #{detector_backbone_with_fpn.13} parent=23 // pred_fallthru
        _
    $region24: #{detector_backbone_with_fpn.13} parent=5 // pred_fallthru
      _
    %p136 = scmp.le.s32.totalorder 1, %s9
    %p137 = scmp.lt.s32.totalorder %s9, 3
    %p138 = pnand %p136, %p137
    %p139 = pneg %p138
    // Predicated region
    $region29: #{detector_backbone_with_fpn.13} parent=5 // pred_check
      _
    $region30: #{detector_backbone_with_fpn.13} parent=5 // pred_check_branch
      %141 = sbr.rel (%p138) target = $region32
    $region31: #{detector_backbone_with_fpn.13} parent=5 // pred_region
      %s142 = ssub.s32 %s9, 1
      %p143 = scmp.lt.s32.totalorder %s14, 1
      %s144 = scalar_select %p143, %s14, 1
      %s145 = smul.addr %s144, 4
      %s146 = smul.addr %s145, 4
      %s147 = scalar_lea.vmem %s0, %s146
      %p148 = pneg %p35
      %p149 = pneg %p32
      %p150 = pneg %p56
      %p151 = pneg %p53
      %p152 = pneg %p77
      %p153 = pneg %p74
      %p154 = pneg %p103
      %p155 = pneg %p100
      %p156 = scmp.lt.s32.totalorder %s14, 1
      %s157 = scalar_select %p156, %s14, 1
      %s158 = smul.addr %s157, 2
      %s159 = smul.addr %s158, 2
      %s160 = scalar_lea.vmem %s3, %s159
      %p161 = scmp.lt.s32.totalorder %s14, 1
      %s162 = scalar_select %p161, %s14, 1
      %s163 = smul.addr %s162, 4
      %s164 = smul.addr %s163, 4
      %s165 = scalar_lea.vmem %s0, %s164
      %p166 = scmp.lt.s32.totalorder %s14, 1
      %s167 = scalar_select %p166, %s14, 1
      %s168 = smul.addr %s167, 2
      %s169 = smul.addr %s168, 2
      %s170 = scalar_lea.vmem %s3, %s169
      %v172 = vld [vmem:[%s165] sm:$0x3]
      %v173 = vld [vmem:[%s165 + $0x4] sm:$0x3]
      %v174 = vld [vmem:[%s165 + $0x1] sm:$0x3]
      %v175 = vld [vmem:[%s165 + $0x5] sm:$0x3]
      %v176 = vld [vmem:[%s165 + $0x2] sm:$0x3]
      %v177 = vld [vmem:[%s165 + $0x6] sm:$0x3]
      %s178 = scalar_lea.vmem %s165, 4
      %v179 = vld [vmem:[%s178] sm:$0x3]
      %v180 = vld [vmem:[%s178 + $0x4] sm:$0x3]
      %v181 = vld [vmem:[%s178 + $0x1] sm:$0x3]
      %v182 = vld [vmem:[%s178 + $0x5] sm:$0x3]
      %v183 = vld [vmem:[%s178 + $0x2] sm:$0x3]
      %v184 = vld [vmem:[%s178 + $0x6] sm:$0x3]
      %s185 = scalar_lea.vmem %s165, 8
      %v186 = vld [vmem:[%s185] sm:$0x3]
      %v187 = vld [vmem:[%s185 + $0x4] sm:$0x3]
      %v188 = vld [vmem:[%s185 + $0x1] sm:$0x3]
      %v189 = vld [vmem:[%s185 + $0x5] sm:$0x3]
      %v190 = vld [vmem:[%s185 + $0x2] sm:$0x3]
      %v191 = vld [vmem:[%s185 + $0x6] sm:$0x3]
      %v210 = vcombine.low %v172, %v174
      %v211 = vcombine.low %v176, %v179
      %v213 = vunpack.c.l.s4 1983009808
      %v214 = vunpack.c.0.s8 %v213
      %v215 = vlaneseq
      %v216 = vshrl.u32 %v215, 7
      %v217 = vsub.s32 %v214, %v216
      %v218 = vrot.slane %v210, %v217
      %v220 = vunpack.c.l.s4 1983009808
      %v221 = vunpack.c.0.s8 %v220
      %v222 = vlaneseq
      %v223 = vshrl.u32 %v222, 7
      %v224 = vsub.s32 %v221, %v223
      %v225 = vrot.slane %v211, %v224
      %v226 = vcombine.low %v218, %v225
      %v227 = vcombine.low %v181, %v183
      %v228 = vcombine.low %v186, %v188
      %v230 = vunpack.c.l.s4 1983009808
      %v231 = vunpack.c.0.s8 %v230
      %v232 = vlaneseq
      %v233 = vshrl.u32 %v232, 7
      %v234 = vsub.s32 %v231, %v233
      %v235 = vrot.slane %v227, %v234
      %v237 = vunpack.c.l.s4 1983009808
      %v238 = vunpack.c.0.s8 %v237
      %v239 = vlaneseq
      %v240 = vshrl.u32 %v239, 7
      %v241 = vsub.s32 %v238, %v240
      %v242 = vrot.slane %v228, %v241
      %v243 = vcombine.low %v235, %v242
      %v245 = vunpack.c.l.s4 1983009808
      %v246 = vunpack.c.0.s8 %v245
      %v247 = vlaneseq
      %v248 = vshrl.u32 %v247, 7
      %v249 = vsub.s32 %v246, %v248
      %v250 = vrot.slane %v190, %v249
      %v251 = vcombine.low %v173, %v175
      %v252 = vcombine.low %v177, %v180
      %v254 = vunpack.c.l.s4 1983009808
      %v255 = vunpack.c.0.s8 %v254
      %v256 = vlaneseq
      %v257 = vshrl.u32 %v256, 7
      %v258 = vsub.s32 %v255, %v257
      %v259 = vrot.slane %v251, %v258
      %v261 = vunpack.c.l.s4 1983009808
      %v262 = vunpack.c.0.s8 %v261
      %v263 = vlaneseq
      %v264 = vshrl.u32 %v263, 7
      %v265 = vsub.s32 %v262, %v264
      %v266 = vrot.slane %v252, %v265
      %v267 = vcombine.low %v259, %v266
      %v268 = vcombine.low %v182, %v184
      %v269 = vcombine.low %v187, %v189
      %v271 = vunpack.c.l.s4 1983009808
      %v272 = vunpack.c.0.s8 %v271
      %v273 = vlaneseq
      %v274 = vshrl.u32 %v273, 7
      %v275 = vsub.s32 %v272, %v274
      %v276 = vrot.slane %v268, %v275
      %v278 = vunpack.c.l.s4 1983009808
      %v279 = vunpack.c.0.s8 %v278
      %v280 = vlaneseq
      %v281 = vshrl.u32 %v280, 7
      %v282 = vsub.s32 %v279, %v281
      %v283 = vrot.slane %v269, %v282
      %v284 = vcombine.low %v276, %v283
      %v286 = vunpack.c.l.s4 1983009808
      %v287 = vunpack.c.0.s8 %v286
      %v288 = vlaneseq
      %v289 = vshrl.u32 %v288, 7
      %v290 = vsub.s32 %v287, %v289
      %v291 = vrot.slane %v191, %v290
      %v292 = vcombine.low %v226, %v267
      %v293 = vcombine.high %v226, %v267
      %v295 = vunpack.c.l.s4 1983009808
      %v296 = vunpack.c.0.s8 %v295
      %v297 = vlaneseq
      %v298 = vshrl.u32 %v297, 7
      %v299 = vsub.s32 %v296, %v298
      %v300 = vrot.slane %v292, %v299
      %v302 = vunpack.c.l.s4 1983009808
      %v303 = vunpack.c.0.s8 %v302
      %v304 = vlaneseq
      %v305 = vshrl.u32 %v304, 7
      %v306 = vsub.s32 %v303, %v305
      %v307 = vrot.slane %v293, %v306
      %v308 = vcombine.high %v300, %v300
      %v309 = vcombine.high %v307, %v307
      %v310 = vcombine.low %v243, %v284
      %v311 = vcombine.high %v243, %v284
      %v313 = vunpack.c.l.s4 1983009808
      %v314 = vunpack.c.0.s8 %v313
      %v315 = vlaneseq
      %v316 = vshrl.u32 %v315, 7
      %v317 = vsub.s32 %v314, %v316
      %v318 = vrot.slane %v310, %v317
      %v320 = vunpack.c.l.s4 1983009808
      %v321 = vunpack.c.0.s8 %v320
      %v322 = vlaneseq
      %v323 = vshrl.u32 %v322, 7
      %v324 = vsub.s32 %v321, %v323
      %v325 = vrot.slane %v311, %v324
      %v326 = vcombine.high %v318, %v318
      %v327 = vcombine.high %v325, %v325
      %v328 = vcombine.low %v250, %v291
      %v330 = vunpack.c.l.s4 1983009808
      %v331 = vunpack.c.0.s8 %v330
      %v332 = vlaneseq
      %v333 = vshrl.u32 %v332, 7
      %v334 = vsub.s32 %v331, %v333
      %v335 = vrot.slane %v328, %v334
      %v345 = vpack.c.bf16 %v300, %v300
      %v346 = vpack.c.bf16 %v308, %v308
      %v347 = vpack.c.bf16 %v307, %v307
      %v348 = vpack.c.bf16 %v309, %v309
      %v349 = vpack.c.bf16 %v318, %v318
      %v350 = vpack.c.bf16 %v326, %v326
      %v351 = vpack.c.bf16 %v325, %v325
      %v352 = vpack.c.bf16 %v327, %v327
      %v353 = vpack.c.bf16 %v335, %v335
      %v354 = vld [vmem:[%s1] sm:$0xf]
      %v355 = vld [vmem:[%s1 + $0x4] sm:$0xf]
      %v356 = vld [vmem:[%s1 + $0x8] sm:$0xf]
      %v357 = vld [vmem:[%s1 + $0xc] sm:$0xf]
      %v358 = vld [vmem:[%s1 + $0x10] sm:$0xf]
      %v359 = vld [vmem:[%s1 + $0x14] sm:$0xf]
      %v360 = vld [vmem:[%s1 + $0x18] sm:$0xf]
      %v361 = vld [vmem:[%s1 + $0x1c] sm:$0xf]
      %v362 = vld [vmem:[%s1 + $0x20] sm:$0xf]
      %v363 = vld [vmem:[%s1 + $0x24] sm:$0xf]
      %v364 = vld [vmem:[%s1 + $0x28] sm:$0xf]
      %v365 = vld [vmem:[%s1 + $0x2c] sm:$0xf]
      %v366 = vld [vmem:[%s1 + $0x30] sm:$0xf]
      %v367 = vld [vmem:[%s1 + $0x34] sm:$0xf]
      %v368 = vld [vmem:[%s1 + $0x38] sm:$0xf]
      %v369 = vld [vmem:[%s1 + $0x3c] sm:$0xf]
      %v370 = vld [vmem:[%s1 + $0x40] sm:$0xf]
      %v371 = vld [vmem:[%s1 + $0x44] sm:$0xf]
      %v372 = vld [vmem:[%s1 + $0x48] sm:$0xf]
      %v373 = vld [vmem:[%s1 + $0x4c] sm:$0xf]
      %v374 = vld [vmem:[%s1 + $0x50] sm:$0xf]
      %v375 = vld [vmem:[%s1 + $0x54] sm:$0xf]
      %v376 = vld [vmem:[%s1 + $0x58] sm:$0xf]
      %v377 = vld [vmem:[%s1 + $0x5c] sm:$0xf]
      %v378 = vld [vmem:[%s1 + $0x60] sm:$0xf]
      %v379 = vld [vmem:[%s1 + $0x64] sm:$0xf]
      %v380 = vld [vmem:[%s1 + $0x68] sm:$0xf]
      %v381 = vld [vmem:[%s1 + $0x6c] sm:$0xf]
      %v382 = vld [vmem:[%s1 + $0x70] sm:$0xf]
      %v383 = vld [vmem:[%s1 + $0x74] sm:$0xf]
      %v384 = vld [vmem:[%s1 + $0x78] sm:$0xf]
      %v385 = vld [vmem:[%s1 + $0x7c] sm:$0xf]
      %v386 = vld [vmem:[%s1 + $0x80] sm:$0xf]
      %v387 = vld [vmem:[%s1 + $0x84] sm:$0xf]
      %v388 = vld [vmem:[%s1 + $0x88] sm:$0xf]
      %v389 = vld [vmem:[%s1 + $0x8c] sm:$0xf]
      %v390 = vld [vmem:[%s1 + $0x90] sm:$0xf]
      %v391 = vld [vmem:[%s1 + $0x94] sm:$0xf]
      %v392 = vld [vmem:[%s1 + $0x98] sm:$0xf]
      %v393 = vld [vmem:[%s1 + $0x9c] sm:$0xf]
      %v394 = vld [vmem:[%s1 + $0xa0] sm:$0xf]
      %v395 = vld [vmem:[%s1 + $0xa4] sm:$0xf]
      %v396 = vld [vmem:[%s1 + $0xa8] sm:$0xf]
      %v397 = vld [vmem:[%s1 + $0xac] sm:$0xf]
      %v398 = vld [vmem:[%s1 + $0xb0] sm:$0xf]
      %v399 = vld [vmem:[%s1 + $0xb4] sm:$0xf]
      %v400 = vld [vmem:[%s1 + $0xb8] sm:$0xf]
      %v401 = vld [vmem:[%s1 + $0xbc] sm:$0xf]
      %v402 = vld [vmem:[%s1 + $0xc0] sm:$0xf]
      %v403 = vld [vmem:[%s1 + $0xc4] sm:$0xf]
      %v404 = vld [vmem:[%s1 + $0xc8] sm:$0xf]
      %v405 = vld [vmem:[%s1 + $0xcc] sm:$0xf]
      %v406 = vld [vmem:[%s1 + $0xd0] sm:$0xf]
      %v407 = vld [vmem:[%s1 + $0xd4] sm:$0xf]
      %v408 = vld [vmem:[%s1 + $0xd8] sm:$0xf]
      %v409 = vld [vmem:[%s1 + $0xdc] sm:$0xf]
      %v410 = vld [vmem:[%s1 + $0xe0] sm:$0xf]
      %v411 = vld [vmem:[%s1 + $0xe4] sm:$0xf]
      %v412 = vld [vmem:[%s1 + $0xe8] sm:$0xf]
      %v413 = vld [vmem:[%s1 + $0xec] sm:$0xf]
      %v414 = vld [vmem:[%s1 + $0xf0] sm:$0xf]
      %v415 = vld [vmem:[%s1 + $0xf4] sm:$0xf]
      %v416 = vld [vmem:[%s1 + $0xf8] sm:$0xf]
      %v417 = vld [vmem:[%s1 + $0xfc] sm:$0xf]
      %v418 = vld [vmem:[%s1 + $0x100] sm:$0xf]
      %v419 = vld [vmem:[%s1 + $0x104] sm:$0xf]
      %v420 = vld [vmem:[%s1 + $0x108] sm:$0xf]
      %v421 = vld [vmem:[%s1 + $0x10c] sm:$0xf]
      %v422 = vld [vmem:[%s1 + $0x110] sm:$0xf]
      %v423 = vld [vmem:[%s1 + $0x114] sm:$0xf]
      %v424 = vld [vmem:[%s1 + $0x118] sm:$0xf]
      %v425 = vld [vmem:[%s1 + $0x11c] sm:$0xf]
      %v426 = vld [vmem:[%s1 + $0x120] sm:$0xf]
      %v427 = vld [vmem:[%s1 + $0x124] sm:$0xf]
      %v428 = vld [vmem:[%s1 + $0x128] sm:$0xf]
      %v429 = vld [vmem:[%s1 + $0x12c] sm:$0xf]
      %v430 = vld [vmem:[%s1 + $0x130] sm:$0xf]
      %v431 = vld [vmem:[%s1 + $0x134] sm:$0xf]
      %v432 = vld [vmem:[%s1 + $0x138] sm:$0xf]
      %v433 = vld [vmem:[%s1 + $0x13c] sm:$0xf]
      %v434 = vld [vmem:[%s1 + $0x140] sm:$0xf]
      %v435 = vld [vmem:[%s1 + $0x144] sm:$0xf]
      %v436 = vld [vmem:[%s1 + $0x148] sm:$0xf]
      %v437 = vld [vmem:[%s1 + $0x14c] sm:$0xf]
      %v438 = vld [vmem:[%s1 + $0x150] sm:$0xf]
      %v439 = vld [vmem:[%s1 + $0x154] sm:$0xf]
      %v440 = vld [vmem:[%s1 + $0x158] sm:$0xf]
      %v441 = vld [vmem:[%s1 + $0x15c] sm:$0xf]
      %v442 = vld [vmem:[%s1 + $0x160] sm:$0xf]
      %v443 = vld [vmem:[%s1 + $0x164] sm:$0xf]
      %v444 = vld [vmem:[%s1 + $0x168] sm:$0xf]
      %v445 = vld [vmem:[%s1 + $0x16c] sm:$0xf]
      %v446 = vld [vmem:[%s1 + $0x170] sm:$0xf]
      %v447 = vld [vmem:[%s1 + $0x174] sm:$0xf]
      %v448 = vld [vmem:[%s1 + $0x178] sm:$0xf]
      %v449 = vld [vmem:[%s1 + $0x17c] sm:$0xf]
      %v450 = vld [vmem:[%s1 + $0x180] sm:$0xf]
      %v451 = vld [vmem:[%s1 + $0x184] sm:$0xf]
      %v452 = vld [vmem:[%s1 + $0x188] sm:$0xf]
      %v453 = vld [vmem:[%s1 + $0x18c] sm:$0xf]
      %v454 = vld [vmem:[%s1 + $0x190] sm:$0xf]
      %v455 = vld [vmem:[%s1 + $0x194] sm:$0xf]
      %v456 = vld [vmem:[%s1 + $0x198] sm:$0xf]
      %v457 = vld [vmem:[%s1 + $0x19c] sm:$0xf]
      %v458 = vld [vmem:[%s1 + $0x1a0] sm:$0xf]
      %v459 = vld [vmem:[%s1 + $0x1a4] sm:$0xf]
      %v460 = vld [vmem:[%s1 + $0x1a8] sm:$0xf]
      %v461 = vld [vmem:[%s1 + $0x1ac] sm:$0xf]
      %v462 = vld [vmem:[%s1 + $0x1b0] sm:$0xf]
      %v463 = vld [vmem:[%s1 + $0x1b4] sm:$0xf]
      %v464 = vld [vmem:[%s1 + $0x1b8] sm:$0xf]
      %v465 = vld [vmem:[%s1 + $0x1bc] sm:$0xf]
      %v466 = vld [vmem:[%s1 + $0x1c0] sm:$0xf]
      %v467 = vld [vmem:[%s1 + $0x1c4] sm:$0xf]
      %v468 = vld [vmem:[%s1 + $0x1c8] sm:$0xf]
      %v469 = vld [vmem:[%s1 + $0x1cc] sm:$0xf]
      %v470 = vld [vmem:[%s1 + $0x1d0] sm:$0xf]
      %v471 = vld [vmem:[%s1 + $0x1d4] sm:$0xf]
      %v472 = vld [vmem:[%s1 + $0x1d8] sm:$0xf]
      %v473 = vld [vmem:[%s1 + $0x1dc] sm:$0xf]
      %v474 = vld [vmem:[%s1 + $0x1e0] sm:$0xf]
      %v475 = vld [vmem:[%s1 + $0x1e4] sm:$0xf]
      %v476 = vld [vmem:[%s1 + $0x1e8] sm:$0xf]
      %v477 = vld [vmem:[%s1 + $0x1ec] sm:$0xf]
      %v478 = vld [vmem:[%s1 + $0x1f0] sm:$0xf]
      %v479 = vld [vmem:[%s1 + $0x1f4] sm:$0xf]
      %v480 = vld [vmem:[%s1 + $0x1f8] sm:$0xf]
      %v481 = vld [vmem:[%s1 + $0x1fc] sm:$0xf]
      %v482 = vld [vmem:[%s1 + $0x200] sm:$0xf]
      %v483 = vld [vmem:[%s1 + $0x204] sm:$0xf]
      %v484 = vld [vmem:[%s1 + $0x208] sm:$0xf]
      %v485 = vld [vmem:[%s1 + $0x20c] sm:$0xf]
      %v486 = vld [vmem:[%s1 + $0x210] sm:$0xf]
      %v487 = vld [vmem:[%s1 + $0x214] sm:$0xf]
      %v488 = vld [vmem:[%s1 + $0x218] sm:$0xf]
      %v489 = vld [vmem:[%s1 + $0x21c] sm:$0xf]
      %v490 = vld [vmem:[%s1 + $0x220] sm:$0xf]
      %v491 = vld [vmem:[%s1 + $0x224] sm:$0xf]
      %v492 = vld [vmem:[%s1 + $0x228] sm:$0xf]
      %v493 = vld [vmem:[%s1 + $0x22c] sm:$0xf]
      %v494 = vld [vmem:[%s1 + $0x230] sm:$0xf]
      %v495 = vld [vmem:[%s1 + $0x234] sm:$0xf]
      %v496 = vld [vmem:[%s1 + $0x238] sm:$0xf]
      %v497 = vld [vmem:[%s1 + $0x23c] sm:$0xf]
      %v498 = vld [vmem:[%s2] sm:$0x1]
      %v500 = vlaneseq
      %v501 = vshrl.u32 %v500, 7
      %v502 = vsub.s32 0, %v501
      %v503 = vrot.slane %v498, %v502
      %v649 = vunpack.c.l.b16 %v354
      %v650 = vunpack.c.l.b16 %v355
      %v651 = vunpack.c.l.b16 %v356
      %v652 = vunpack.c.l.b16 %v357
      %v653 = vunpack.c.l.b16 %v358
      %v654 = vunpack.c.l.b16 %v359
      %v655 = vunpack.c.l.b16 %v360
      %v656 = vunpack.c.l.b16 %v361
      %v657 = vunpack.c.l.b16 %v362
      %v658 = vunpack.c.l.b16 %v363
      %v659 = vunpack.c.l.b16 %v364
      %v660 = vunpack.c.l.b16 %v365
      %v661 = vunpack.c.l.b16 %v366
      %v662 = vunpack.c.l.b16 %v367
      %v663 = vunpack.c.l.b16 %v368
      %v664 = vunpack.c.l.b16 %v369
      %v665 = vunpack.c.l.b16 %v370
      %v666 = vunpack.c.l.b16 %v371
      %v667 = vunpack.c.l.b16 %v372
      %v668 = vunpack.c.l.b16 %v373
      %v669 = vunpack.c.l.b16 %v374
      %v670 = vunpack.c.l.b16 %v375
      %v671 = vunpack.c.l.b16 %v376
      %v672 = vunpack.c.l.b16 %v377
      %v673 = vunpack.c.l.b16 %v378
      %v674 = vunpack.c.l.b16 %v379
      %v675 = vunpack.c.l.b16 %v380
      %v676 = vunpack.c.l.b16 %v381
      %v677 = vunpack.c.l.b16 %v382
      %v678 = vunpack.c.l.b16 %v383
      %v679 = vunpack.c.l.b16 %v384
      %v680 = vunpack.c.l.b16 %v385
      %v681 = vunpack.c.l.b16 %v386
      %v682 = vunpack.c.l.b16 %v387
      %v683 = vunpack.c.l.b16 %v388
      %v684 = vunpack.c.l.b16 %v389
      %v685 = vunpack.c.l.b16 %v390
      %v686 = vunpack.c.l.b16 %v391
      %v687 = vunpack.c.l.b16 %v392
      %v688 = vunpack.c.l.b16 %v393
      %v689 = vunpack.c.l.b16 %v394
      %v690 = vunpack.c.l.b16 %v395
      %v691 = vunpack.c.l.b16 %v396
      %v692 = vunpack.c.l.b16 %v397
      %v693 = vunpack.c.l.b16 %v398
      %v694 = vunpack.c.l.b16 %v399
      %v695 = vunpack.c.l.b16 %v400
      %v696 = vunpack.c.l.b16 %v401
      %v697 = vunpack.c.l.b16 %v402
      %v698 = vunpack.c.l.b16 %v403
      %v699 = vunpack.c.l.b16 %v404
      %v700 = vunpack.c.l.b16 %v405
      %v701 = vunpack.c.l.b16 %v406
      %v702 = vunpack.c.l.b16 %v407
      %v703 = vunpack.c.l.b16 %v408
      %v704 = vunpack.c.l.b16 %v409
      %v705 = vunpack.c.l.b16 %v410
      %v706 = vunpack.c.l.b16 %v411
      %v707 = vunpack.c.l.b16 %v412
      %v708 = vunpack.c.l.b16 %v413
      %v709 = vunpack.c.l.b16 %v414
      %v710 = vunpack.c.l.b16 %v415
      %v711 = vunpack.c.l.b16 %v416
      %v712 = vunpack.c.l.b16 %v417
      %v713 = vunpack.c.l.b16 %v418
      %v714 = vunpack.c.l.b16 %v419
      %v715 = vunpack.c.l.b16 %v420
      %v716 = vunpack.c.l.b16 %v421
      %v717 = vunpack.c.l.b16 %v422
      %v718 = vunpack.c.l.b16 %v423
      %v719 = vunpack.c.l.b16 %v424
      %v720 = vunpack.c.l.b16 %v425
      %v721 = vunpack.c.l.b16 %v426
      %v722 = vunpack.c.l.b16 %v427
      %v723 = vunpack.c.l.b16 %v428
      %v724 = vunpack.c.l.b16 %v429
      %v725 = vunpack.c.l.b16 %v430
      %v726 = vunpack.c.l.b16 %v431
      %v727 = vunpack.c.l.b16 %v432
      %v728 = vunpack.c.l.b16 %v433
      %v729 = vunpack.c.l.b16 %v434
      %v730 = vunpack.c.l.b16 %v435
      %v731 = vunpack.c.l.b16 %v436
      %v732 = vunpack.c.l.b16 %v437
      %v733 = vunpack.c.l.b16 %v438
      %v734 = vunpack.c.l.b16 %v439
      %v735 = vunpack.c.l.b16 %v440
      %v736 = vunpack.c.l.b16 %v441
      %v737 = vunpack.c.l.b16 %v442
      %v738 = vunpack.c.l.b16 %v443
      %v739 = vunpack.c.l.b16 %v444
      %v740 = vunpack.c.l.b16 %v445
      %v741 = vunpack.c.l.b16 %v446
      %v742 = vunpack.c.l.b16 %v447
      %v743 = vunpack.c.l.b16 %v448
      %v744 = vunpack.c.l.b16 %v449
      %v745 = vunpack.c.l.b16 %v450
      %v746 = vunpack.c.l.b16 %v451
      %v747 = vunpack.c.l.b16 %v452
      %v748 = vunpack.c.l.b16 %v453
      %v749 = vunpack.c.l.b16 %v454
      %v750 = vunpack.c.l.b16 %v455
      %v751 = vunpack.c.l.b16 %v456
      %v752 = vunpack.c.l.b16 %v457
      %v753 = vunpack.c.l.b16 %v458
      %v754 = vunpack.c.l.b16 %v459
      %v755 = vunpack.c.l.b16 %v460
      %v756 = vunpack.c.l.b16 %v461
      %v757 = vunpack.c.l.b16 %v462
      %v758 = vunpack.c.l.b16 %v463
      %v759 = vunpack.c.l.b16 %v464
      %v760 = vunpack.c.l.b16 %v465
      %v761 = vunpack.c.l.b16 %v466
      %v762 = vunpack.c.l.b16 %v467
      %v763 = vunpack.c.l.b16 %v468
      %v764 = vunpack.c.l.b16 %v469
      %v765 = vunpack.c.l.b16 %v470
      %v766 = vunpack.c.l.b16 %v471
      %v767 = vunpack.c.l.b16 %v472
      %v768 = vunpack.c.l.b16 %v473
      %v769 = vunpack.c.l.b16 %v474
      %v770 = vunpack.c.l.b16 %v475
      %v771 = vunpack.c.l.b16 %v476
      %v772 = vunpack.c.l.b16 %v477
      %v773 = vunpack.c.l.b16 %v478
      %v774 = vunpack.c.l.b16 %v479
      %v775 = vunpack.c.l.b16 %v480
      %v776 = vunpack.c.l.b16 %v481
      %v777 = vunpack.c.l.b16 %v482
      %v778 = vunpack.c.l.b16 %v483
      %v779 = vunpack.c.l.b16 %v484
      %v780 = vunpack.c.l.b16 %v485
      %v781 = vunpack.c.l.b16 %v486
      %v782 = vunpack.c.l.b16 %v487
      %v783 = vunpack.c.l.b16 %v488
      %v784 = vunpack.c.l.b16 %v489
      %v785 = vunpack.c.l.b16 %v490
      %v786 = vunpack.c.l.b16 %v491
      %v787 = vunpack.c.l.b16 %v492
      %v788 = vunpack.c.l.b16 %v493
      %v789 = vunpack.c.l.b16 %v494
      %v790 = vunpack.c.l.b16 %v495
      %v791 = vunpack.c.l.b16 %v496
      %v792 = vunpack.c.l.b16 %v497
      %v793 = vpack.c.b16 %v650, %v649
      %v794 = vpack.c.b16 %v652, %v651
      %v795 = vpack.c.b16 %v654, %v653
      %v796 = vpack.c.b16 %v656, %v655
      %v797 = vpack.c.b16 %v658, %v657
      %v798 = vpack.c.b16 %v660, %v659
      %v799 = vpack.c.b16 %v662, %v661
      %v800 = vpack.c.b16 %v664, %v663
      %v801 = vpack.c.b16 %v666, %v665
      %v802 = vpack.c.b16 %v668, %v667
      %v803 = vpack.c.b16 %v670, %v669
      %v804 = vpack.c.b16 %v672, %v671
      %v805 = vpack.c.b16 %v674, %v673
      %v806 = vpack.c.b16 %v676, %v675
      %v807 = vpack.c.b16 %v678, %v677
      %v808 = vpack.c.b16 %v680, %v679
      %v809 = vpack.c.b16 %v682, %v681
      %v810 = vpack.c.b16 %v684, %v683
      %v811 = vpack.c.b16 %v686, %v685
      %v812 = vpack.c.b16 %v688, %v687
      %v813 = vpack.c.b16 %v690, %v689
      %v814 = vpack.c.b16 %v692, %v691
      %v815 = vpack.c.b16 %v694, %v693
      %v816 = vpack.c.b16 %v696, %v695
      %v817 = vpack.c.b16 %v698, %v697
      %v818 = vpack.c.b16 %v700, %v699
      %v819 = vpack.c.b16 %v702, %v701
      %v820 = vpack.c.b16 %v704, %v703
      %v821 = vpack.c.b16 %v706, %v705
      %v822 = vpack.c.b16 %v708, %v707
      %v823 = vpack.c.b16 %v710, %v709
      %v824 = vpack.c.b16 %v712, %v711
      %v825 = vpack.c.b16 %v714, %v713
      %v826 = vpack.c.b16 %v716, %v715
      %v827 = vpack.c.b16 %v718, %v717
      %v828 = vpack.c.b16 %v720, %v719
      %v829 = vpack.c.b16 %v722, %v721
      %v830 = vpack.c.b16 %v724, %v723
      %v831 = vpack.c.b16 %v726, %v725
      %v832 = vpack.c.b16 %v728, %v727
      %v833 = vpack.c.b16 %v730, %v729
      %v834 = vpack.c.b16 %v732, %v731
      %v835 = vpack.c.b16 %v734, %v733
      %v836 = vpack.c.b16 %v736, %v735
      %v837 = vpack.c.b16 %v738, %v737
      %v838 = vpack.c.b16 %v740, %v739
      %v839 = vpack.c.b16 %v742, %v741
      %v840 = vpack.c.b16 %v744, %v743
      %v841 = vpack.c.b16 %v746, %v745
      %v842 = vpack.c.b16 %v748, %v747
      %v843 = vpack.c.b16 %v750, %v749
      %v844 = vpack.c.b16 %v752, %v751
      %v845 = vpack.c.b16 %v754, %v753
      %v846 = vpack.c.b16 %v756, %v755
      %v847 = vpack.c.b16 %v758, %v757
      %v848 = vpack.c.b16 %v760, %v759
      %v849 = vpack.c.b16 %v762, %v761
      %v850 = vpack.c.b16 %v764, %v763
      %v851 = vpack.c.b16 %v766, %v765
      %v852 = vpack.c.b16 %v768, %v767
      %v853 = vpack.c.b16 %v770, %v769
      %v854 = vpack.c.b16 %v772, %v771
      %v855 = vpack.c.b16 %v774, %v773
      %v856 = vpack.c.b16 %v776, %v775
      %v857 = vpack.c.b16 %v778, %v777
      %v858 = vpack.c.b16 %v780, %v779
      %v859 = vpack.c.b16 %v782, %v781
      %v860 = vpack.c.b16 %v784, %v783
      %v861 = vpack.c.b16 %v786, %v785
      %v862 = vpack.c.b16 %v788, %v787
      %v863 = vpack.c.b16 %v790, %v789
      %v864 = vpack.c.b16 %v792, %v791
      %937 = vmatprep.subr.bf16.mxu0 0
      %938 = vmatpush1.bf16.msra.mxu0 %v793
      %939 = vmatprep.subr.bf16.mxu0 0
      %940 = vmatpush1.bf16.msra.mxu0 %v794
      %941 = vmatprep.subr.bf16.mxu0 0
      %942 = vmatpush1.bf16.msra.mxu0 %v795
      %943 = vmatprep.subr.bf16.mxu0 0
      %944 = vmatpush1.bf16.msra.mxu0 %v796
      %945 = vmatprep.subr.bf16.mxu0 0
      %946 = vmatpush1.bf16.msra.mxu0 %v797
      %947 = vmatprep.subr.bf16.mxu0 0
      %948 = vmatpush1.bf16.msra.mxu0 %v798
      %949 = vmatprep.subr.bf16.mxu0 0
      %950 = vmatpush1.bf16.msra.mxu0 %v799
      %951 = vmatprep.subr.bf16.mxu0 0
      %952 = vmatpush1.bf16.msra.mxu0 %v800
      %953 = vmatprep.subr.bf16.mxu0 0
      %954 = vmatpush1.bf16.msra.mxu0 %v801
      %955 = vmatprep.subr.bf16.mxu0 0
      %956 = vmatpush1.bf16.msra.mxu0 %v802
      %957 = vmatprep.subr.bf16.mxu0 0
      %958 = vmatpush1.bf16.msra.mxu0 %v803
      %959 = vmatprep.subr.bf16.mxu0 0
      %960 = vmatpush1.bf16.msra.mxu0 %v804
      %961 = vmatprep.subr.bf16.mxu0 0
      %962 = vmatpush1.bf16.msra.mxu0 %v805
      %963 = vmatprep.subr.bf16.mxu0 0
      %964 = vmatpush1.bf16.msra.mxu0 %v806
      %965 = vmatprep.subr.bf16.mxu0 0
      %966 = vmatpush1.bf16.msra.mxu0 %v807
      %967 = vmatprep.subr.bf16.mxu0 0
      %968 = vmatpush1.bf16.msra.mxu0 %v808
      %969 = vmatprep.mubr.bf16.mxu0 %v346
      %970 = vmatmul.mubr.bf16.gmra.mrb[0].mxu0 %v345
      %v971 = vpop.f32.mrb[0].mxu0
      %v972 = vadd.f32 %v503, %v971
      %v973 = vpop.f32.mrb[0].mxu0
      %v974 = vpop.f32.mrb[0].mxu0
      %v975 = vpop.f32.mrb[0].mxu0
      %976 = vdwg.mxu0
      %977 = vmatprep.subr.bf16.mxu0 0
      %978 = vmatpush1.bf16.msra.mxu0 %v809
      %979 = vmatprep.subr.bf16.mxu0 0
      %980 = vmatpush1.bf16.msra.mxu0 %v810
      %981 = vmatprep.subr.bf16.mxu0 0
      %982 = vmatpush1.bf16.msra.mxu0 %v811
      %983 = vmatprep.subr.bf16.mxu0 0
      %984 = vmatpush1.bf16.msra.mxu0 %v812
      %985 = vmatprep.subr.bf16.mxu0 0
      %986 = vmatpush1.bf16.msra.mxu0 %v813
      %987 = vmatprep.subr.bf16.mxu0 0
      %988 = vmatpush1.bf16.msra.mxu0 %v814
      %989 = vmatprep.subr.bf16.mxu0 0
      %990 = vmatpush1.bf16.msra.mxu0 %v815
      %991 = vmatprep.subr.bf16.mxu0 0
      %992 = vmatpush1.bf16.msra.mxu0 %v816
      %993 = vmatprep.subr.bf16.mxu0 0
      %994 = vmatpush1.bf16.msra.mxu0 %v817
      %995 = vmatprep.subr.bf16.mxu0 0
      %996 = vmatpush1.bf16.msra.mxu0 %v818
      %997 = vmatprep.subr.bf16.mxu0 0
      %998 = vmatpush1.bf16.msra.mxu0 %v819
      %999 = vmatprep.subr.bf16.mxu0 0
      %1000 = vmatpush1.bf16.msra.mxu0 %v820
      %1001 = vmatprep.subr.bf16.mxu0 0
      %1002 = vmatpush1.bf16.msra.mxu0 %v821
      %1003 = vmatprep.subr.bf16.mxu0 0
      %1004 = vmatpush1.bf16.msra.mxu0 %v822
      %1005 = vmatprep.subr.bf16.mxu0 0
      %1006 = vmatpush1.bf16.msra.mxu0 %v823
      %1007 = vmatprep.subr.bf16.mxu0 0
      %1008 = vmatpush1.bf16.msra.mxu0 %v824
      %1009 = vmatprep.mubr.bf16.mxu0 %v348
      %1010 = vmatmul.mubr.bf16.gmra.mrb[0].mxu0 %v347
      %v1011 = vpop.f32.mrb[0].mxu0
      %v1012 = vadd.f32 %v972, %v1011
      %v1013 = vpop.f32.mrb[0].mxu0
      %v1014 = vpop.f32.mrb[0].mxu0
      %v1015 = vpop.f32.mrb[0].mxu0
      %1016 = vdwg.mxu0
      %1017 = vmatprep.subr.bf16.mxu0 0
      %1018 = vmatpush1.bf16.msra.mxu0 %v825
      %1019 = vmatprep.subr.bf16.mxu0 0
      %1020 = vmatpush1.bf16.msra.mxu0 %v826
      %1021 = vmatprep.subr.bf16.mxu0 0
      %1022 = vmatpush1.bf16.msra.mxu0 %v827
      %1023 = vmatprep.subr.bf16.mxu0 0
      %1024 = vmatpush1.bf16.msra.mxu0 %v828
      %1025 = vmatprep.subr.bf16.mxu0 0
      %1026 = vmatpush1.bf16.msra.mxu0 %v829
      %1027 = vmatprep.subr.bf16.mxu0 0
      %1028 = vmatpush1.bf16.msra.mxu0 %v830
      %1029 = vmatprep.subr.bf16.mxu0 0
      %1030 = vmatpush1.bf16.msra.mxu0 %v831
      %1031 = vmatprep.subr.bf16.mxu0 0
      %1032 = vmatpush1.bf16.msra.mxu0 %v832
      %1033 = vmatprep.subr.bf16.mxu0 0
      %1034 = vmatpush1.bf16.msra.mxu0 %v833
      %1035 = vmatprep.subr.bf16.mxu0 0
      %1036 = vmatpush1.bf16.msra.mxu0 %v834
      %1037 = vmatprep.subr.bf16.mxu0 0
      %1038 = vmatpush1.bf16.msra.mxu0 %v835
      %1039 = vmatprep.subr.bf16.mxu0 0
      %1040 = vmatpush1.bf16.msra.mxu0 %v836
      %1041 = vmatprep.subr.bf16.mxu0 0
      %1042 = vmatpush1.bf16.msra.mxu0 %v837
      %1043 = vmatprep.subr.bf16.mxu0 0
      %1044 = vmatpush1.bf16.msra.mxu0 %v838
      %1045 = vmatprep.subr.bf16.mxu0 0
      %1046 = vmatpush1.bf16.msra.mxu0 %v839
      %1047 = vmatprep.subr.bf16.mxu0 0
      %1048 = vmatpush1.bf16.msra.mxu0 %v840
      %1049 = vmatprep.mubr.bf16.mxu0 %v350
      %1050 = vmatmul.mubr.bf16.gmra.mrb[0].mxu0 %v349
      %v1051 = vpop.f32.mrb[0].mxu0
      %v1052 = vadd.f32 %v1012, %v1051
      %v1053 = vpop.f32.mrb[0].mxu0
      %v1054 = vpop.f32.mrb[0].mxu0
      %v1055 = vpop.f32.mrb[0].mxu0
      %1056 = vdwg.mxu0
      %1057 = vmatprep.subr.bf16.mxu0 0
      %1058 = vmatpush1.bf16.msra.mxu0 %v841
      %1059 = vmatprep.subr.bf16.mxu0 0
      %1060 = vmatpush1.bf16.msra.mxu0 %v842
      %1061 = vmatprep.subr.bf16.mxu0 0
      %1062 = vmatpush1.bf16.msra.mxu0 %v843
      %1063 = vmatprep.subr.bf16.mxu0 0
      %1064 = vmatpush1.bf16.msra.mxu0 %v844
      %1065 = vmatprep.subr.bf16.mxu0 0
      %1066 = vmatpush1.bf16.msra.mxu0 %v845
      %1067 = vmatprep.subr.bf16.mxu0 0
      %1068 = vmatpush1.bf16.msra.mxu0 %v846
      %1069 = vmatprep.subr.bf16.mxu0 0
      %1070 = vmatpush1.bf16.msra.mxu0 %v847
      %1071 = vmatprep.subr.bf16.mxu0 0
      %1072 = vmatpush1.bf16.msra.mxu0 %v848
      %1073 = vmatprep.subr.bf16.mxu0 0
      %1074 = vmatpush1.bf16.msra.mxu0 %v849
      %1075 = vmatprep.subr.bf16.mxu0 0
      %1076 = vmatpush1.bf16.msra.mxu0 %v850
      %1077 = vmatprep.subr.bf16.mxu0 0
      %1078 = vmatpush1.bf16.msra.mxu0 %v851
      %1079 = vmatprep.subr.bf16.mxu0 0
      %1080 = vmatpush1.bf16.msra.mxu0 %v852
      %1081 = vmatprep.subr.bf16.mxu0 0
      %1082 = vmatpush1.bf16.msra.mxu0 %v853
      %1083 = vmatprep.subr.bf16.mxu0 0
      %1084 = vmatpush1.bf16.msra.mxu0 %v854
      %1085 = vmatprep.subr.bf16.mxu0 0
      %1086 = vmatpush1.bf16.msra.mxu0 %v855
      %1087 = vmatprep.subr.bf16.mxu0 0
      %1088 = vmatpush1.bf16.msra.mxu0 %v856
      %1089 = vmatprep.mubr.bf16.mxu0 %v352
      %1090 = vmatmul.mubr.bf16.gmra.mrb[0].mxu0 %v351
      %v1091 = vpop.f32.mrb[0].mxu0
      %v1092 = vadd.f32 %v1052, %v1091
      %v1093 = vpop.f32.mrb[0].mxu0
      %v1094 = vpop.f32.mrb[0].mxu0
      %v1095 = vpop.f32.mrb[0].mxu0
      %1096 = vdwg.mxu0
      %1097 = vmatprep.subr.bf16.mxu0 0
      %1098 = vmatpush1.bf16.msra.mxu0 %v857
      %1099 = vmatprep.subr.bf16.mxu0 0
      %1100 = vmatpush1.bf16.msra.mxu0 %v858
      %1101 = vmatprep.subr.bf16.mxu0 0
      %1102 = vmatpush1.bf16.msra.mxu0 %v859
      %1103 = vmatprep.subr.bf16.mxu0 0
      %1104 = vmatpush1.bf16.msra.mxu0 %v860
      %1105 = vmatprep.subr.bf16.mxu0 0
      %1106 = vmatpush1.bf16.msra.mxu0 %v861
      %1107 = vmatprep.subr.bf16.mxu0 0
      %1108 = vmatpush1.bf16.msra.mxu0 %v862
      %1109 = vmatprep.subr.bf16.mxu0 0
      %1110 = vmatpush1.bf16.msra.mxu0 %v863
      %1111 = vmatprep.subr.bf16.mxu0 0
      %1112 = vmatpush1.bf16.msra.mxu0 %v864
      %1113 = vmatprep.subr.bf16.mxu0 0
      %1114 = vmatpush1.bf16.msra.mxu0 0
      %1115 = vmatprep.subr.bf16.mxu0 0
      %1116 = vmatpush1.bf16.msra.mxu0 0
      %1117 = vmatprep.subr.bf16.mxu0 0
      %1118 = vmatpush1.bf16.msra.mxu0 0
      %1119 = vmatprep.subr.bf16.mxu0 0
      %1120 = vmatpush1.bf16.msra.mxu0 0
      %1121 = vmatprep.subr.bf16.mxu0 0
      %1122 = vmatpush1.bf16.msra.mxu0 0
      %1123 = vmatprep.subr.bf16.mxu0 0
      %1124 = vmatpush1.bf16.msra.mxu0 0
      %1125 = vmatprep.subr.bf16.mxu0 0
      %1126 = vmatpush1.bf16.msra.mxu0 0
      %1127 = vmatprep.subr.bf16.mxu0 0
      %1128 = vmatpush1.bf16.msra.mxu0 0
      %1129 = vmatprep.mubr.bf16.mxu0 0
      %1130 = vmatmul.mubr.bf16.gmra.mrb[0].mxu0 %v353
      %v1131 = vpop.f32.mrb[0].mxu0
      %v1132 = vadd.f32 %v1092, %v1131
      %v1133 = vpop.f32.mrb[0].mxu0
      %v1134 = vpop.f32.mrb[0].mxu0
      %v1135 = vpop.f32.mrb[0].mxu0
      %1136 = vdwg.mxu0
      %v1139 = vunpack.c.l.s4 1983009808
      %v1140 = vunpack.c.0.s8 %v1139
      %v1141 = vlaneseq
      %v1142 = vshrl.u32 %v1141, 7
      %v1143 = vsub.s32 %v1140, %v1142
      %v1144 = vrot.slane %v1132, %v1143
      %v1145 = vcombine.high %v1144, %v1144
      %1148 = vst [vmem:[%s170] sm:$0x3] %v1144
      %1149 = vst [vmem:[%s170 + $0x2] sm:$0x3] %v1145
      %p1150 = scmp.lt.s32.totalorder %s14, 1
      %s1151 = scalar_select %p1150, %s14, 1
      %s1152 = smul.addr %s1151, 2
      %s1153 = smul.addr %s1152, 2
      %s1154 = scalar_lea.vmem %s3, %s1153
      // Predicated region
      $region33: #{detector_backbone_with_fpn.13} parent=31 // pred_check
        %p1155 = pneg %p100
      $region34: #{detector_backbone_with_fpn.13} parent=31 // pred_check_branch
        %1157 = sbr.rel (%p1155) target = $region36
      $region35: #{detector_backbone_with_fpn.13} parent=31 // pred_region
        _
      $region36: #{detector_backbone_with_fpn.13} parent=31 // pred_fallthru
        _
    $region32: #{detector_backbone_with_fpn.13} parent=5 // pred_fallthru
      _
    %p1158 = scmp.le.s32.totalorder 2, %s9
    // Predicated region
    $region37: #{detector_backbone_with_fpn.13} parent=5 // pred_check
      %p1159 = pneg %p1158
    $region38: #{detector_backbone_with_fpn.13} parent=5 // pred_check_branch
      %1161 = sbr.rel (%p1159) target = $region40
    $region39: #{detector_backbone_with_fpn.13} parent=5 // pred_region
      %s1162 = ssub.s32 %s9, 2
      // Predicated region
      $region41: #{detector_backbone_with_fpn.13} parent=39 // pred_check
        %p1163 = pneg %p106
      $region42: #{detector_backbone_with_fpn.13} parent=39 // pred_check_branch
        %1165 = sbr.rel (%p1163) target = $region44
      $region43: #{detector_backbone_with_fpn.13} parent=39 // pred_region
        %p1166 = scmp.lt.s32.totalorder %s15, 1
        %s1167 = scalar_select %p1166, %s15, 1
        %s1168 = smul.addr %s1167, 2
        %s1169 = smul.addr %s1168, 2
        %s1170 = scalar_lea.vmem %s3, %s1169
      $region44: #{detector_backbone_with_fpn.13} parent=39 // pred_fallthru
        _
    $region40: #{detector_backbone_with_fpn.13} parent=5 // pred_fallthru
      _
  $region6: #{detector_backbone_with_fpn.13} parent=0 // loop_footer
    %s13 = sadd.s32 1, %s9
  $region7: #{detector_backbone_with_fpn.13} parent=0 // loop_footer_branch
    %8 = sbr.rel target = $region3
  $region8: #{detector_backbone_with_fpn.13} parent=0 // loop_exit
    _

</llo_original>
